<compile_context>
chip_gen: v6e
topology: v6e:2x2x1
jax: 0.10.0
libtpu: 0.0.40
codegen_flags: <defaults>
</compile_context>

<pallas_src>
import math
from functools import partial

import jax
import jax.numpy as jnp
from jax.experimental import pallas as pl
from jax.experimental.pallas import tpu as pltpu

PI = math.pi

# ---------------- config (small, consistent with the module defaults) ----------------
CUTOFF = 5.0
EPS = 1e-10
HIDDEN = 32          # hidden_channels
NUM_RADIAL = 16      # num_radial
NUM_LAYERS = 2       # num_layers
MAX_ATOMIC_NUM = 10
VMEM_LIMIT = 32 * 1024 * 1024   # conservative: v7x scoped default; fine on v5e/v6e


# ---------------------------------------------------------------------------
# Kernel 1: edge MLPs (RBF -> radial_lin, coff_feat -> edge_proj), tiled over E
# ---------------------------------------------------------------------------
def edge_mlp_kernel(cutoff,
                    dist_ref, cf_ref, means_ref, betas_ref,
                    w1r_ref, b1r_ref, w2r_ref, b2r_ref,
                    w1e_ref, b1e_ref, w2e_ref, b2e_ref,
                    ew_ref, ef_ref):
    d = dist_ref[...]                                        # (T, 1)
    rb = 0.5 * (jnp.cos(d * (PI / cutoff)) + 1.0)            # (T, 1)
    rb_ind = rb * (d < cutoff).astype(jnp.float32)
    # RBFEmb
    rbf = rb_ind * jnp.exp(-betas_ref[...] *
                           (jnp.exp(-d) - means_ref[...]) ** 2)        # (T, R)
    # radial_lin: Linear -> SiLU -> Linear
    h = jnp.dot(rbf, w1r_ref[...], preferred_element_type=jnp.float32) + b1r_ref[...]
    h = h * jax.nn.sigmoid(h)
    h = jnp.dot(h, w2r_ref[...], preferred_element_type=jnp.float32) + b2r_ref[...]
    ew_ref[...] = rb * h                                     # edgeweight (T, H)
    # edge_proj: Linear -> SiLU -> Linear on coff_feat (T, 8)
    e = jnp.dot(cf_ref[...], w1e_ref[...], preferred_element_type=jnp.float32) + b1e_ref[...]
    e = e * jax.nn.sigmoid(e)
    ef_ref[...] = jnp.dot(e, w2e_ref[...], preferred_element_type=jnp.float32) + b2e_ref[...]


def edge_mlp(dist2, cf2, p, max_tile=1024):
    E = dist2.shape[0]
    H, H4, R = HIDDEN, HIDDEN // 4, NUM_RADIAL
    tile = min(max_tile, E)
    e_pad = ((E + tile - 1) // tile) * tile
    if e_pad != E:
        dist2 = jnp.pad(dist2, ((0, e_pad - E), (0, 0)))
        cf2 = jnp.pad(cf2, ((0, e_pad - E), (0, 0)))

    rep = lambda i: (0, 0)        # resident weights / buffers
    grid_spec = pltpu.PrefetchScalarGridSpec(
        num_scalar_prefetch=0,
        grid=(e_pad // tile,),
        in_specs=[
            pl.BlockSpec((tile, 1), lambda i: (i, 0)),      # dist
            pl.BlockSpec((tile, 8), lambda i: (i, 0)),      # coff_feat
            pl.BlockSpec((1, R), rep), pl.BlockSpec((1, R), rep),      # means, betas
            pl.BlockSpec((R, H), rep), pl.BlockSpec((1, H), rep),      # radial_lin 1
            pl.BlockSpec((H, H), rep), pl.BlockSpec((1, H), rep),      # radial_lin 2
            pl.BlockSpec((8, H4), rep), pl.BlockSpec((1, H4), rep),    # edge_proj 1
            pl.BlockSpec((H4, H), rep), pl.BlockSpec((1, H), rep),     # edge_proj 2
        ],
        out_specs=[
            pl.BlockSpec((tile, H), lambda i: (i, 0)),
            pl.BlockSpec((tile, H), lambda i: (i, 0)),
        ],
    )
    cost = pl.CostEstimate(
        flops=int(e_pad * (2 * R * H + 2 * H * H + 2 * 8 * H4 + 2 * H4 * H + 8 * H)),
        transcendentals=int(e_pad * (R + H + H4 + 2)),
        bytes_accessed=int(4 * e_pad * (1 + 8 + 2 * H)))
    ew, ef = pl.pallas_call(
        partial(edge_mlp_kernel, CUTOFF),
        out_shape=(jax.ShapeDtypeStruct((e_pad, H), jnp.float32),
                   jax.ShapeDtypeStruct((e_pad, H), jnp.float32)),
        grid_spec=grid_spec,
        compiler_params=pltpu.CompilerParams(
            dimension_semantics=("parallel",),
            vmem_limit_bytes=VMEM_LIMIT),
        cost_estimate=cost,
    )(dist2, cf2, p['means'], p['betas'],
      p['w1r'], p['b1r'], p['w2r'], p['b2r'],
      p['w1e'], p['b1e'], p['w2e'], p['b2e'])
    return ew[:E], ef[:E]


# ---------------------------------------------------------------------------
# Kernel 2a: per-layer node projections (q/k/value) + hoisted score precompute
# ---------------------------------------------------------------------------
def node_proj_kernel(x_ref, wq_ref, bq_ref, wk_ref, bk_ref, wv_ref, bv_ref, we_ref,
                     qk_ref, qw_ref, val_ref):
    x = x_ref[...]                                                       # (N, H)
    inv_sqrt_h = 1.0 / math.sqrt(x.shape[1])
    q = (jnp.dot(x, wq_ref[...], preferred_element_type=jnp.float32)
         + bq_ref[...]) * inv_sqrt_h                                     # scale folded in
    k = jnp.dot(x, wk_ref[...], preferred_element_type=jnp.float32) + bk_ref[...]
    v0 = jnp.dot(x, wv_ref[...], preferred_element_type=jnp.float32) + bv_ref[...]
    # lin_value: LayerNorm (no affine) + SiLU
    mu = jnp.mean(v0, axis=1, keepdims=True)
    var = jnp.mean((v0 - mu) ** 2, axis=1, keepdims=True)
    vn = (v0 - mu) * jax.lax.rsqrt(var + 1e-5)
    val_ref[...] = vn * jax.nn.sigmoid(vn)
    # score[t,s] = q_t.k_s + ef[t,s].(We q_t)   (lin_edge hoisted out of the grid)
    qk_ref[...] = jax.lax.dot_general(q, k, (((1,), (1,)), ((), ())),
                                      preferred_element_type=jnp.float32)     # (N, N)
    qw_ref[...] = jax.lax.dot_general(q, we_ref[...], (((1,), (1,)), ((), ())),
                                      preferred_element_type=jnp.float32)     # (N, H)


# ---------------------------------------------------------------------------
# Kernel 2b: target-blocked attention message passing + equivariant update + ELN
# ---------------------------------------------------------------------------
def layer_kernel(qk_ref, qw_ref, ef_ref, ew_ref, coff_ref, mask_ref,
                 x_ref, vin_ref, val_ref, vlnw_ref,
                 zo_ref, vo_ref):
    qk = qk_ref[...]                                  # (TB, N)   q.k / sqrt(H)
    qw = qw_ref[...]                                  # (TB, H)   (We q_t) / sqrt(H)
    ef = ef_ref[...]                                  # (TB, N, H) edgefeature slab
    ew = ew_ref[...]                                  # (TB, N, H) edgeweight slab
    mask = mask_ref[...]                              # (TB, N)   adjacency {0,1}
    val = val_ref[...]                                # (N, H)    value (resident)

    # --- attention scores + masked softmax over sources, per target ---
    escore = jnp.sum(ef * qw[:, None, :], axis=-1)    # (TB, N)
    score = jnp.where(mask > 0, qk + escore, -1e30)
    m = jnp.max(score, axis=-1, keepdims=True)        # (TB, 1)
    pexp = jnp.exp(score - m) * mask
    denom = jnp.sum(pexp, axis=-1, keepdims=True)
    alpha = pexp / jnp.where(denom > 0, denom, 1.0)   # (TB, N)

    # --- per-edge messages, add-aggregation, root_weight residual ---
    m_ij = (alpha[:, :, None] * ew) * val[None, :, :]          # (TB, N, H)
    agg = jnp.sum(m_ij, axis=1)                                # (TB, H)
    zo_ref[...] = x_ref[...] + agg

    # --- equivariant update (coff pre-scaled by 1/deg(t) -> scatter-mean) ---
    coff = coff_ref[...]                                       # (TB, 3, N)
    vin = vin_ref[...]                                         # (3, TB, H)
    vlnw = vlnw_ref[...]                                       # (1, H)

    v_new = []
    for c in range(3):
        coff_c = coff[:, c, :]                                 # (TB, N)
        v_new.append(vin[c] + jnp.sum(coff_c[:, :, None] * m_ij, axis=1))   # (TB, H)

    # --- EquivariantLayerNorm (mean over hidden per xyz, norm over xyz) ---
    cent = []
    norm2 = jnp.zeros_like(v_new[0])
    for c in range(3):
        fmean_c = jnp.mean(v_new[c], axis=1, keepdims=True)    # (TB, 1)
        cc = v_new[c] - fmean_c
        cent.append(cc)
        norm2 = norm2 + cc * cc                                # (TB, H)
    fnorm = jnp.mean(norm2, axis=1, keepdims=True)             # (TB, 1)
    scale = jax.lax.rsqrt(fnorm + 1e-5) * vlnw                 # (TB, H)
    for c in range(3):
        vo_ref[c] = cent[c] * scale


def _choose_tb(n, h):
    """Largest multiple-of-8 target block dividing n with a bounded VMEM slab."""
    budget = 1 * 1024 * 1024                    # per (TB, N, H) f32 slab
    for tb in (128, 64, 32, 16, 8):
        if n % tb == 0 and tb * n * h * 4 <= budget:
            return tb
    return 8 if n % 8 == 0 else n


def transformer_block(z_emb, v_emb, ef3, ew3, coff_scaled, mask2, lp):
    N, H = z_emb.shape

    # per-layer projections once (also enables "parallel" target grid below)
    qk, qw, val = pl.pallas_call(
        node_proj_kernel,
        out_shape=(jax.ShapeDtypeStruct((N, N), jnp.float32),
                   jax.ShapeDtypeStruct((N, H), jnp.float32),
                   jax.ShapeDtypeStruct((N, H), jnp.float32)),
        compiler_params=pltpu.CompilerParams(vmem_limit_bytes=VMEM_LIMIT),
    )(z_emb, lp['wq'], lp['bq'], lp['wk'], lp['bk'], lp['wv'], lp['bv'], lp['we'])

    TB = _choose_tb(N, H)
    blk2 = lambda t: (t, 0)
    blk3 = lambda t: (t, 0, 0)
    vblk = lambda t: (0, t, 0)
    rep2 = lambda t: (0, 0)
    grid_spec = pltpu.PrefetchScalarGridSpec(
        num_scalar_prefetch=0,
        grid=(N // TB,),
        in_specs=[
            pl.BlockSpec((TB, N), blk2),          # qk
            pl.BlockSpec((TB, H), blk2),          # qw
            pl.BlockSpec((TB, N, H), blk3),       # edgefeature slab
            pl.BlockSpec((TB, N, H), blk3),       # edgeweight slab
            pl.BlockSpec((TB, 3, N), blk3),       # coff (pre-scaled by 1/deg)
            pl.BlockSpec((TB, N), blk2),          # adjacency mask (lane-dense)
            pl.BlockSpec((TB, H), blk2),          # x (root residual)
            pl.BlockSpec((3, TB, H), vblk),       # v_in
            pl.BlockSpec((N, H), rep2),           # value (resident)
            pl.BlockSpec((1, H), rep2),           # v_ln affine weight
        ],
        out_specs=[
            pl.BlockSpec((TB, H), blk2),          # z_out
            pl.BlockSpec((3, TB, H), vblk),       # v_out
        ],
    )
    cost = pl.CostEstimate(
        flops=int(12 * N * N * H + 8 * N * N),
        transcendentals=int(N * N + 4 * N),
        bytes_accessed=int(4 * (2 * N * N * H + 4 * N * N + 10 * N * H)))
    z_out, v_out = pl.pallas_call(
        layer_kernel,
        out_shape=(jax.ShapeDtypeStruct((N, H), jnp.float32),
                   jax.ShapeDtypeStruct((3, N, H), jnp.float32)),
        grid_spec=grid_spec,
        compiler_params=pltpu.CompilerParams(
            dimension_semantics=("parallel",),    # no cross-step scratch -> megacore OK
            vmem_limit_bytes=VMEM_LIMIT),
        cost_estimate=cost,
    )(qk, qw, ef3, ew3, coff_scaled, mask2, z_emb, v_emb, val, lp['vln_w'])
    return z_out, v_out


# ---------------------------------------------------------------------------
# Kernel 3: readout (||v||_2 over xyz, then per-graph sum)  -- native (3,N,H) layout
# ---------------------------------------------------------------------------
def readout_kernel(v_ref, oh_ref, s_ref):
    inv = jnp.sqrt(v_ref[0] ** 2 + v_ref[1] ** 2 + v_ref[2] ** 2)   # (N, H)
    s_ref[...] = jnp.dot(oh_ref[...], inv, preferred_element_type=jnp.float32)


def readout(v_emb, onehot):
    B = onehot.shape[0]
    H = v_emb.shape[2]
    return pl.pallas_call(
        readout_kernel,
        out_shape=jax.ShapeDtypeStruct((B, H), jnp.float32),
        compiler_params=pltpu.CompilerParams(vmem_limit_bytes=VMEM_LIMIT),
    )(v_emb, onehot)


# ---------------------------------------------------------------------------
# Plain-JAX glue: parameters, embedding gather, geometric features
# ---------------------------------------------------------------------------
def layer_norm_no_affine(x, eps=1e-5):
    mu = jnp.mean(x, axis=-1, keepdims=True)
    var = jnp.mean((x - mu) ** 2, axis=-1, keepdims=True)
    return (x - mu) / jnp.sqrt(var + eps)


def init_params(key):
    ks = list(jax.random.split(key, 32))
    it = iter(ks)

    def lin(fan_in, fan_out, bias=True):
        w = jax.random.normal(next(it), (fan_in, fan_out), jnp.float32) / math.sqrt(fan_in)
        b = (0.01 * jax.random.normal(next(it), (1, fan_out), jnp.float32)) if bias else None
        return w, b

    p = {}
    p['z_emb'] = jax.random.normal(next(it), (MAX_ATOMIC_NUM, HIDDEN), jnp.float32)
    p['w1r'], p['b1r'] = lin(NUM_RADIAL, HIDDEN)
    p['w2r'], p['b2r'] = lin(HIDDEN, HIDDEN)
    p['w1e'], p['b1e'] = lin(8, HIDDEN // 4)
    p['w2e'], p['b2e'] = lin(HIDDEN // 4, HIDDEN)
    layers = []
    for _ in range(NUM_LAYERS):
        lp = {}
        lp['wq'], lp['bq'] = lin(HIDDEN, HIDDEN)
        lp['wk'], lp['bk'] = lin(HIDDEN, HIDDEN)
        lp['wv'], lp['bv'] = lin(HIDDEN, HIDDEN)
        lp['we'], _ = lin(HIDDEN, HIDDEN, bias=False)
        lp['vln_w'] = jnp.ones((1, HIDDEN), jnp.float32)   # EquivariantLayerNorm weight
        layers.append(lp)
    p['layers'] = layers
    # RBFEmb buffers
    start, end = math.exp(-CUTOFF), 1.0
    p['means'] = jnp.linspace(start, end, NUM_RADIAL, dtype=jnp.float32).reshape(1, NUM_RADIAL)
    p['betas'] = jnp.full((1, NUM_RADIAL),
                          (2.0 / NUM_RADIAL * (end - start)) ** (-2), jnp.float32)
    return p


@partial(jax.jit, static_argnums=(4,))
def clofnet_forward(params, z, pos, batch, num_graphs):
    N = pos.shape[0]
    H = HIDDEN

    # node embedding + LayerNorm (no affine)   -- gather kept in JAX
    z_emb = layer_norm_no_affine(params['z_emb'][z])

    # dense pairwise geometry [target t, source s]  (source = edge_index[0] "i")
    diff = pos[None, :, :] - pos[:, None, :]            # diff[t,s] = pos[s] - pos[t]
    dist = jnp.sqrt(jnp.sum(diff * diff, axis=-1))      # (N, N)
    same = batch[:, None] == batch[None, :]
    mask = same & (~jnp.eye(N, dtype=bool)) & (dist < CUTOFF)
    # TODO(synk): radius_graph's max_num_neighbors=32 truncation is not modeled
    # (dense mask keeps all in-range pairs).

    edge_diff = diff / (dist[..., None] + EPS)
    pos_s = jnp.broadcast_to(pos[None, :, :], (N, N, 3))    # pos[i] (source)
    pos_t = jnp.broadcast_to(pos[:, None, :], (N, N, 3))    # pos[j] (target)
    cross = jnp.cross(pos_s, pos_t)
    edge_cross = cross / (jnp.sqrt(jnp.sum(cross * cross, -1, keepdims=True)) + EPS)
    edge_vertical = jnp.cross(edge_diff, edge_cross)

    def frame_mul(p):   # matches torch.matmul(edge_frame, p.unsqueeze(-1)).squeeze(-1)
        return (edge_diff * p[..., 0:1] + edge_cross * p[..., 1:2]
                + edge_vertical * p[..., 2:3])

    coff_i = frame_mul(pos_s)                            # (N, N, 3)
    coff_j = frame_mul(pos_t)
    ci_n = jnp.sqrt(jnp.sum(coff_i ** 2, -1, keepdims=True)) + 1e-5
    cj_n = jnp.sqrt(jnp.sum(coff_j ** 2, -1, keepdims=True)) + 1e-5
    pcos = jnp.sum(coff_i * coff_j, -1, keepdims=True) / ci_n / cj_n
    # clamp: fp rounding can push |pcos| slightly past 1 -> NaN in sqrt otherwise
    psin = jnp.sqrt(jnp.clip(1.0 - pcos * pcos, 0.0))
    coff_feat = jnp.concatenate([psin, pcos, coff_i, coff_j], axis=-1)   # (N, N, 8)

    # edge MLPs in Pallas (tiled over E rows)
    E = N * N
    ew, ef = edge_mlp(dist.reshape(E, 1), coff_feat.reshape(E, 8), params)
    ew3 = ew.reshape(N, N, H)       # edgeweight
    ef3 = ef.reshape(N, N, H)       # edgefeature

    mask2 = mask.astype(jnp.float32)                     # (N, N), lane-dense
    deg = jnp.sum(mask2, axis=1)                         # in-degree per target
    inv_deg = jnp.where(deg > 0, 1.0 / deg, 0.0)
    coff_scaled = jnp.transpose(coff_i, (0, 2, 1)) * inv_deg[:, None, None]   # (N, 3, N)

    v_emb = jnp.zeros((3, N, H), jnp.float32)            # internal (3, N, H) layout
    for lp in params['layers']:
        z_emb, v_emb = transformer_block(z_emb, v_emb, ef3, ew3, coff_scaled, mask2, lp)

    onehot = (jnp.arange(num_graphs)[:, None] == batch[None, :]).astype(jnp.float32)  # (B, N)
    return readout(v_emb, onehot)


if __name__ == "__main__":
    key = jax.random.PRNGKey(0)
    kp, kz, kpos = jax.random.split(key, 3)
    params = init_params(kp)

    N = 16            # total atoms
    B = 2             # graphs in the batch
    z = jax.random.randint(kz, (N,), 0, MAX_ATOMIC_NUM)
    pos = jax.random.normal(kpos, (N, 3), jnp.float32)
    batch = jnp.repeat(jnp.arange(B, dtype=jnp.int32), N // B)

    s = clofnet_forward(params, z, pos, batch, B)
    s = jax.block_until_ready(s)

    assert s.shape == (B, HIDDEN), s.shape
    assert bool(jnp.all(jnp.isfinite(s)))
    print("KERNEL_OK")
</pallas_src>

<mosaic_0001>
module attributes {stable_mosaic.version = 11 : i64} {
  func.func @edge_mlp_kernel(%arg0: i32, %arg1: memref<256x1xf32, #tpu.memory_space<vmem>>, %arg2: memref<256x8xf32, #tpu.memory_space<vmem>>, %arg3: memref<1x16xf32, #tpu.memory_space<vmem>>, %arg4: memref<1x16xf32, #tpu.memory_space<vmem>>, %arg5: memref<16x32xf32, #tpu.memory_space<vmem>>, %arg6: memref<1x32xf32, #tpu.memory_space<vmem>>, %arg7: memref<32x32xf32, #tpu.memory_space<vmem>>, %arg8: memref<1x32xf32, #tpu.memory_space<vmem>>, %arg9: memref<8x8xf32, #tpu.memory_space<vmem>>, %arg10: memref<1x8xf32, #tpu.memory_space<vmem>>, %arg11: memref<8x32xf32, #tpu.memory_space<vmem>>, %arg12: memref<1x32xf32, #tpu.memory_space<vmem>>, %arg13: memref<256x32xf32, #tpu.memory_space<vmem>>, %arg14: memref<256x32xf32, #tpu.memory_space<vmem>>) attributes {dimension_semantics = [#tpu.dimension_semantics<parallel>], iteration_bounds = array<i64: 1>, scalar_prefetch = 0 : i64, scratch_operands = 0 : i64, tpu.core_type = #tpu.core_type<tc>, window_params = [{transform_indices = @transform_0, window_bounds = array<i64: 256, 1>}, {transform_indices = @transform_1, window_bounds = array<i64: 256, 8>}, {pipeline_mode = #tpu.pipeline_mode<synchronous>, transform_indices = @transform_2, window_bounds = array<i64: 1, 16>}, {pipeline_mode = #tpu.pipeline_mode<synchronous>, transform_indices = @transform_3, window_bounds = array<i64: 1, 16>}, {pipeline_mode = #tpu.pipeline_mode<synchronous>, transform_indices = @transform_4, window_bounds = array<i64: 16, 32>}, {pipeline_mode = #tpu.pipeline_mode<synchronous>, transform_indices = @transform_5, window_bounds = array<i64: 1, 32>}, {pipeline_mode = #tpu.pipeline_mode<synchronous>, transform_indices = @transform_6, window_bounds = array<i64: 32, 32>}, {pipeline_mode = #tpu.pipeline_mode<synchronous>, transform_indices = @transform_7, window_bounds = array<i64: 1, 32>}, {pipeline_mode = #tpu.pipeline_mode<synchronous>, transform_indices = @transform_8, window_bounds = array<i64: 8, 8>}, {pipeline_mode = #tpu.pipeline_mode<synchronous>, transform_indices = @transform_9, window_bounds = array<i64: 1, 8>}, {pipeline_mode = #tpu.pipeline_mode<synchronous>, transform_indices = @transform_10, window_bounds = array<i64: 8, 32>}, {pipeline_mode = #tpu.pipeline_mode<synchronous>, transform_indices = @transform_11, window_bounds = array<i64: 1, 32>}, {transform_indices = @transform_12, window_bounds = array<i64: 256, 32>}, {transform_indices = @transform_13, window_bounds = array<i64: 256, 32>}]} {
    %c0 = arith.constant 0 : index
    %c0_0 = arith.constant 0 : index
    %0 = vector.load %arg1[%c0, %c0_0] : memref<256x1xf32, #tpu.memory_space<vmem>>, vector<256x1xf32>
    %cst = arith.constant 0.628318548 : f32
    %1 = vector.broadcast %cst : f32 to vector<256x1xf32>
    %2 = arith.mulf %0, %1 : vector<256x1xf32>
    %3 = math.cos %2 : vector<256x1xf32>
    %cst_1 = arith.constant 1.000000e+00 : f32
    %4 = vector.broadcast %cst_1 : f32 to vector<256x1xf32>
    %5 = arith.addf %3, %4 : vector<256x1xf32>
    %cst_2 = arith.constant 5.000000e-01 : f32
    %6 = vector.broadcast %cst_2 : f32 to vector<256x1xf32>
    %7 = arith.mulf %6, %5 : vector<256x1xf32>
    %cst_3 = arith.constant 5.000000e+00 : f32
    %8 = vector.broadcast %cst_3 : f32 to vector<256x1xf32>
    %9 = arith.cmpf olt, %0, %8 : vector<256x1xf32>
    %10 = arith.extui %9 : vector<256x1xi1> to vector<256x1xi32>
    %11 = arith.sitofp %10 : vector<256x1xi32> to vector<256x1xf32>
    %12 = arith.mulf %7, %11 : vector<256x1xf32>
    %c0_4 = arith.constant 0 : index
    %c0_5 = arith.constant 0 : index
    %13 = vector.load %arg4[%c0_4, %c0_5] : memref<1x16xf32, #tpu.memory_space<vmem>>, vector<1x16xf32>
    %cst_6 = arith.constant 0.000000e+00 : f32
    %14 = vector.broadcast %cst_6 : f32 to vector<1x16xf32>
    %15 = arith.subf %14, %13 : vector<1x16xf32>
    %cst_7 = arith.constant 0.000000e+00 : f32
    %16 = vector.broadcast %cst_7 : f32 to vector<256x1xf32>
    %17 = arith.subf %16, %0 : vector<256x1xf32>
    %18 = math.exp %17 : vector<256x1xf32>
    %c0_8 = arith.constant 0 : index
    %c0_9 = arith.constant 0 : index
    %19 = vector.load %arg3[%c0_8, %c0_9] : memref<1x16xf32, #tpu.memory_space<vmem>>, vector<1x16xf32>
    %20 = vector.broadcast %18 : vector<256x1xf32> to vector<256x16xf32>
    %21 = vector.broadcast %19 : vector<1x16xf32> to vector<256x16xf32>
    %22 = arith.subf %20, %21 : vector<256x16xf32>
    %23 = arith.mulf %22, %22 : vector<256x16xf32>
    %24 = vector.broadcast %15 : vector<1x16xf32> to vector<256x16xf32>
    %25 = arith.mulf %24, %23 : vector<256x16xf32>
    %26 = math.exp %25 : vector<256x16xf32>
    %27 = vector.broadcast %12 : vector<256x1xf32> to vector<256x16xf32>
    %28 = arith.mulf %27, %26 : vector<256x16xf32>
    %c0_10 = arith.constant 0 : index
    %c0_11 = arith.constant 0 : index
    %29 = vector.load %arg5[%c0_10, %c0_11] : memref<16x32xf32, #tpu.memory_space<vmem>>, vector<16x32xf32>
    %cst_12 = arith.constant dense<0.000000e+00> : vector<256x32xf32>
    %30 = tpu.matmul %28, %29, %cst_12 {dimension_numbers = #tpu.dot_dimension_numbers<[1], [0], [0], [1], [0, 0, 1, 1], [], []>} : vector<256x16xf32>, vector<16x32xf32>, vector<256x32xf32> -> vector<256x32xf32>
    %c0_13 = arith.constant 0 : index
    %c0_14 = arith.constant 0 : index
    %31 = vector.load %arg6[%c0_13, %c0_14] : memref<1x32xf32, #tpu.memory_space<vmem>>, vector<1x32xf32>
    %32 = vector.broadcast %31 : vector<1x32xf32> to vector<256x32xf32>
    %33 = arith.addf %30, %32 : vector<256x32xf32>
    %34 = arith.negf %33 : vector<256x32xf32>
    %35 = math.exp %34 : vector<256x32xf32>
    %cst_15 = arith.constant 1.000000e+00 : f32
    %36 = vector.broadcast %cst_15 : f32 to vector<256x32xf32>
    %37 = arith.addf %36, %35 : vector<256x32xf32>
    %38 = arith.divf %36, %37 : vector<256x32xf32>
    %39 = arith.mulf %33, %38 : vector<256x32xf32>
    %c0_16 = arith.constant 0 : index
    %c0_17 = arith.constant 0 : index
    %40 = vector.load %arg7[%c0_16, %c0_17] : memref<32x32xf32, #tpu.memory_space<vmem>>, vector<32x32xf32>
    %cst_18 = arith.constant dense<0.000000e+00> : vector<256x32xf32>
    %41 = tpu.matmul %39, %40, %cst_18 {dimension_numbers = #tpu.dot_dimension_numbers<[1], [0], [0], [1], [0, 0, 1, 1], [], []>} : vector<256x32xf32>, vector<32x32xf32>, vector<256x32xf32> -> vector<256x32xf32>
    %c0_19 = arith.constant 0 : index
    %c0_20 = arith.constant 0 : index
    %42 = vector.load %arg8[%c0_19, %c0_20] : memref<1x32xf32, #tpu.memory_space<vmem>>, vector<1x32xf32>
    %43 = vector.broadcast %42 : vector<1x32xf32> to vector<256x32xf32>
    %44 = arith.addf %41, %43 : vector<256x32xf32>
    %45 = vector.broadcast %7 : vector<256x1xf32> to vector<256x32xf32>
    %46 = arith.mulf %45, %44 : vector<256x32xf32>
    %c0_21 = arith.constant 0 : index
    %c0_22 = arith.constant 0 : index
    %47 = vector.load %arg13[%c0_21, %c0_22] : memref<256x32xf32, #tpu.memory_space<vmem>>, vector<256x32xf32>
    tpu.vector_store %arg13[%c0_21, %c0_22], %46 {strides = array<i32>} : memref<256x32xf32, #tpu.memory_space<vmem>>, vector<256x32xf32>,
    %c0_23 = arith.constant 0 : index
    %c0_24 = arith.constant 0 : index
    %48 = vector.load %arg2[%c0_23, %c0_24] : memref<256x8xf32, #tpu.memory_space<vmem>>, vector<256x8xf32>
    %c0_25 = arith.constant 0 : index
    %c0_26 = arith.constant 0 : index
    %49 = vector.load %arg9[%c0_25, %c0_26] : memref<8x8xf32, #tpu.memory_space<vmem>>, vector<8x8xf32>
    %cst_27 = arith.constant dense<0.000000e+00> : vector<256x8xf32>
    %50 = tpu.matmul %48, %49, %cst_27 {dimension_numbers = #tpu.dot_dimension_numbers<[1], [0], [0], [1], [0, 0, 1, 1], [], []>} : vector<256x8xf32>, vector<8x8xf32>, vector<256x8xf32> -> vector<256x8xf32>
    %c0_28 = arith.constant 0 : index
    %c0_29 = arith.constant 0 : index
    %51 = vector.load %arg10[%c0_28, %c0_29] : memref<1x8xf32, #tpu.memory_space<vmem>>, vector<1x8xf32>
    %52 = vector.broadcast %51 : vector<1x8xf32> to vector<256x8xf32>
    %53 = arith.addf %50, %52 : vector<256x8xf32>
    %54 = arith.negf %53 : vector<256x8xf32>
    %55 = math.exp %54 : vector<256x8xf32>
    %cst_30 = arith.constant 1.000000e+00 : f32
    %56 = vector.broadcast %cst_30 : f32 to vector<256x8xf32>
    %57 = arith.addf %56, %55 : vector<256x8xf32>
    %58 = arith.divf %56, %57 : vector<256x8xf32>
    %59 = arith.mulf %53, %58 : vector<256x8xf32>
    %c0_31 = arith.constant 0 : index
    %c0_32 = arith.constant 0 : index
    %60 = vector.load %arg11[%c0_31, %c0_32] : memref<8x32xf32, #tpu.memory_space<vmem>>, vector<8x32xf32>
    %cst_33 = arith.constant dense<0.000000e+00> : vector<256x32xf32>
    %61 = tpu.matmul %59, %60, %cst_33 {dimension_numbers = #tpu.dot_dimension_numbers<[1], [0], [0], [1], [0, 0, 1, 1], [], []>} : vector<256x8xf32>, vector<8x32xf32>, vector<256x32xf32> -> vector<256x32xf32>
    %c0_34 = arith.constant 0 : index
    %c0_35 = arith.constant 0 : index
    %62 = vector.load %arg12[%c0_34, %c0_35] : memref<1x32xf32, #tpu.memory_space<vmem>>, vector<1x32xf32>
    %63 = vector.broadcast %62 : vector<1x32xf32> to vector<256x32xf32>
    %64 = arith.addf %61, %63 : vector<256x32xf32>
    %c0_36 = arith.constant 0 : index
    %c0_37 = arith.constant 0 : index
    %65 = vector.load %arg14[%c0_36, %c0_37] : memref<256x32xf32, #tpu.memory_space<vmem>>, vector<256x32xf32>
    tpu.vector_store %arg14[%c0_36, %c0_37], %64 {strides = array<i32>} : memref<256x32xf32, #tpu.memory_space<vmem>>, vector<256x32xf32>,
    return
  }
  func.func @transform_0(%arg0: i32) -> (i32, i32) {
    %c0_i32 = arith.constant 0 : i32
    %c0_i32_0 = arith.constant 0 : i32
    return %arg0, %c0_i32 : i32, i32
  }
  func.func @transform_1(%arg0: i32) -> (i32, i32) {
    %c0_i32 = arith.constant 0 : i32
    %c0_i32_0 = arith.constant 0 : i32
    return %arg0, %c0_i32 : i32, i32
  }
  func.func @transform_2(%arg0: i32) -> (i32, i32) {
    %c0_i32 = arith.constant 0 : i32
    %c0_i32_0 = arith.constant 0 : i32
    %c0_i32_1 = arith.constant 0 : i32
    return %c0_i32, %c0_i32_0 : i32, i32
  }
  func.func @transform_3(%arg0: i32) -> (i32, i32) {
    %c0_i32 = arith.constant 0 : i32
    %c0_i32_0 = arith.constant 0 : i32
    %c0_i32_1 = arith.constant 0 : i32
    return %c0_i32, %c0_i32_0 : i32, i32
  }
  func.func @transform_4(%arg0: i32) -> (i32, i32) {
    %c0_i32 = arith.constant 0 : i32
    %c0_i32_0 = arith.constant 0 : i32
    %c0_i32_1 = arith.constant 0 : i32
    return %c0_i32, %c0_i32_0 : i32, i32
  }
  func.func @transform_5(%arg0: i32) -> (i32, i32) {
    %c0_i32 = arith.constant 0 : i32
    %c0_i32_0 = arith.constant 0 : i32
    %c0_i32_1 = arith.constant 0 : i32
    return %c0_i32, %c0_i32_0 : i32, i32
  }
  func.func @transform_6(%arg0: i32) -> (i32, i32) {
    %c0_i32 = arith.constant 0 : i32
    %c0_i32_0 = arith.constant 0 : i32
    %c0_i32_1 = arith.constant 0 : i32
    return %c0_i32, %c0_i32_0 : i32, i32
  }
  func.func @transform_7(%arg0: i32) -> (i32, i32) {
    %c0_i32 = arith.constant 0 : i32
    %c0_i32_0 = arith.constant 0 : i32
    %c0_i32_1 = arith.constant 0 : i32
    return %c0_i32, %c0_i32_0 : i32, i32
  }
  func.func @transform_8(%arg0: i32) -> (i32, i32) {
    %c0_i32 = arith.constant 0 : i32
    %c0_i32_0 = arith.constant 0 : i32
    %c0_i32_1 = arith.constant 0 : i32
    return %c0_i32, %c0_i32_0 : i32, i32
  }
  func.func @transform_9(%arg0: i32) -> (i32, i32) {
    %c0_i32 = arith.constant 0 : i32
    %c0_i32_0 = arith.constant 0 : i32
    %c0_i32_1 = arith.constant 0 : i32
    return %c0_i32, %c0_i32_0 : i32, i32
  }
  func.func @transform_10(%arg0: i32) -> (i32, i32) {
    %c0_i32 = arith.constant 0 : i32
    %c0_i32_0 = arith.constant 0 : i32
    %c0_i32_1 = arith.constant 0 : i32
    return %c0_i32, %c0_i32_0 : i32, i32
  }
  func.func @transform_11(%arg0: i32) -> (i32, i32) {
    %c0_i32 = arith.constant 0 : i32
    %c0_i32_0 = arith.constant 0 : i32
    %c0_i32_1 = arith.constant 0 : i32
    return %c0_i32, %c0_i32_0 : i32, i32
  }
  func.func @transform_12(%arg0: i32) -> (i32, i32) {
    %c0_i32 = arith.constant 0 : i32
    %c0_i32_0 = arith.constant 0 : i32
    return %arg0, %c0_i32 : i32, i32
  }
  func.func @transform_13(%arg0: i32) -> (i32, i32) {
    %c0_i32 = arith.constant 0 : i32
    %c0_i32_0 = arith.constant 0 : i32
    return %arg0, %c0_i32 : i32, i32
  }
}

module attributes {stable_mosaic.version = 11 : i64} {
  func.func @node_proj_kernel(%arg0: memref<16x32xf32, #tpu.memory_space<vmem>>, %arg1: memref<32x32xf32, #tpu.memory_space<vmem>>, %arg2: memref<1x32xf32, #tpu.memory_space<vmem>>, %arg3: memref<32x32xf32, #tpu.memory_space<vmem>>, %arg4: memref<1x32xf32, #tpu.memory_space<vmem>>, %arg5: memref<32x32xf32, #tpu.memory_space<vmem>>, %arg6: memref<1x32xf32, #tpu.memory_space<vmem>>, %arg7: memref<32x32xf32, #tpu.memory_space<vmem>>, %arg8: memref<16x16xf32, #tpu.memory_space<vmem>>, %arg9: memref<16x32xf32, #tpu.memory_space<vmem>>, %arg10: memref<16x32xf32, #tpu.memory_space<vmem>>) attributes {dimension_semantics = [], scalar_prefetch = 0 : i64, scratch_operands = 0 : i64, tpu.core_type = #tpu.core_type<tc>} {
    %c0 = arith.constant 0 : index
    %c0_0 = arith.constant 0 : index
    %0 = vector.load %arg0[%c0, %c0_0] : memref<16x32xf32, #tpu.memory_space<vmem>>, vector<16x32xf32>
    %c0_1 = arith.constant 0 : index
    %c0_2 = arith.constant 0 : index
    %1 = vector.load %arg1[%c0_1, %c0_2] : memref<32x32xf32, #tpu.memory_space<vmem>>, vector<32x32xf32>
    %cst = arith.constant dense<0.000000e+00> : vector<16x32xf32>
    %2 = tpu.matmul %0, %1, %cst {dimension_numbers = #tpu.dot_dimension_numbers<[1], [0], [0], [1], [0, 0, 1, 1], [], []>} : vector<16x32xf32>, vector<32x32xf32>, vector<16x32xf32> -> vector<16x32xf32>
    %c0_3 = arith.constant 0 : index
    %c0_4 = arith.constant 0 : index
    %3 = vector.load %arg2[%c0_3, %c0_4] : memref<1x32xf32, #tpu.memory_space<vmem>>, vector<1x32xf32>
    %4 = vector.broadcast %3 : vector<1x32xf32> to vector<16x32xf32>
    %5 = arith.addf %2, %4 : vector<16x32xf32>
    %cst_5 = arith.constant 0.176776692 : f32
    %6 = vector.broadcast %cst_5 : f32 to vector<16x32xf32>
    %7 = arith.mulf %5, %6 : vector<16x32xf32>
    %c0_6 = arith.constant 0 : index
    %c0_7 = arith.constant 0 : index
    %8 = vector.load %arg3[%c0_6, %c0_7] : memref<32x32xf32, #tpu.memory_space<vmem>>, vector<32x32xf32>
    %cst_8 = arith.constant dense<0.000000e+00> : vector<16x32xf32>
    %9 = tpu.matmul %0, %8, %cst_8 {dimension_numbers = #tpu.dot_dimension_numbers<[1], [0], [0], [1], [0, 0, 1, 1], [], []>} : vector<16x32xf32>, vector<32x32xf32>, vector<16x32xf32> -> vector<16x32xf32>
    %c0_9 = arith.constant 0 : index
    %c0_10 = arith.constant 0 : index
    %10 = vector.load %arg4[%c0_9, %c0_10] : memref<1x32xf32, #tpu.memory_space<vmem>>, vector<1x32xf32>
    %11 = vector.broadcast %10 : vector<1x32xf32> to vector<16x32xf32>
    %12 = arith.addf %9, %11 : vector<16x32xf32>
    %c0_11 = arith.constant 0 : index
    %c0_12 = arith.constant 0 : index
    %13 = vector.load %arg5[%c0_11, %c0_12] : memref<32x32xf32, #tpu.memory_space<vmem>>, vector<32x32xf32>
    %cst_13 = arith.constant dense<0.000000e+00> : vector<16x32xf32>
    %14 = tpu.matmul %0, %13, %cst_13 {dimension_numbers = #tpu.dot_dimension_numbers<[1], [0], [0], [1], [0, 0, 1, 1], [], []>} : vector<16x32xf32>, vector<32x32xf32>, vector<16x32xf32> -> vector<16x32xf32>
    %c0_14 = arith.constant 0 : index
    %c0_15 = arith.constant 0 : index
    %15 = vector.load %arg6[%c0_14, %c0_15] : memref<1x32xf32, #tpu.memory_space<vmem>>, vector<1x32xf32>
    %16 = vector.broadcast %15 : vector<1x32xf32> to vector<16x32xf32>
    %17 = arith.addf %14, %16 : vector<16x32xf32>
    %cst_16 = arith.constant dense<0.000000e+00> : vector<16xf32>
    %18 = vector.multi_reduction <add>, %17, %cst_16 [1] : vector<16x32xf32> to vector<16xf32>
    %19 = vector.shape_cast %18 : vector<16xf32> to vector<16x1xf32>
    %cst_17 = arith.constant 3.200000e+01 : f32
    %20 = vector.broadcast %cst_17 : f32 to vector<16x1xf32>
    %21 = arith.divf %19, %20 : vector<16x1xf32>
    %22 = vector.broadcast %21 : vector<16x1xf32> to vector<16x32xf32>
    %23 = arith.subf %17, %22 : vector<16x32xf32>
    %24 = arith.mulf %23, %23 : vector<16x32xf32>
    %cst_18 = arith.constant dense<0.000000e+00> : vector<16xf32>
    %25 = vector.multi_reduction <add>, %24, %cst_18 [1] : vector<16x32xf32> to vector<16xf32>
    %26 = vector.shape_cast %25 : vector<16xf32> to vector<16x1xf32>
    %cst_19 = arith.constant 3.200000e+01 : f32
    %27 = vector.broadcast %cst_19 : f32 to vector<16x1xf32>
    %28 = arith.divf %26, %27 : vector<16x1xf32>
    %29 = vector.broadcast %21 : vector<16x1xf32> to vector<16x32xf32>
    %30 = arith.subf %17, %29 : vector<16x32xf32>
    %cst_20 = arith.constant 9.99999974E-6 : f32
    %31 = vector.broadcast %cst_20 : f32 to vector<16x1xf32>
    %32 = arith.addf %28, %31 : vector<16x1xf32>
    %33 = math.rsqrt %32 : vector<16x1xf32>
    %34 = vector.broadcast %33 : vector<16x1xf32> to vector<16x32xf32>
    %35 = arith.mulf %30, %34 : vector<16x32xf32>
    %36 = arith.negf %35 : vector<16x32xf32>
    %37 = math.exp %36 : vector<16x32xf32>
    %cst_21 = arith.constant 1.000000e+00 : f32
    %38 = vector.broadcast %cst_21 : f32 to vector<16x32xf32>
    %39 = arith.addf %38, %37 : vector<16x32xf32>
    %40 = arith.divf %38, %39 : vector<16x32xf32>
    %41 = arith.mulf %35, %40 : vector<16x32xf32>
    %c0_22 = arith.constant 0 : index
    %c0_23 = arith.constant 0 : index
    %42 = vector.load %arg10[%c0_22, %c0_23] : memref<16x32xf32, #tpu.memory_space<vmem>>, vector<16x32xf32>
    tpu.vector_store %arg10[%c0_22, %c0_23], %41 {strides = array<i32>} : memref<16x32xf32, #tpu.memory_space<vmem>>, vector<16x32xf32>,
    %cst_24 = arith.constant dense<0.000000e+00> : vector<16x16xf32>
    %43 = tpu.matmul %7, %12, %cst_24 {dimension_numbers = #tpu.dot_dimension_numbers<[1], [1], [0], [0], [0, 0, 1, 0], [], []>} : vector<16x32xf32>, vector<16x32xf32>, vector<16x16xf32> -> vector<16x16xf32>
    %c0_25 = arith.constant 0 : index
    %c0_26 = arith.constant 0 : index
    %44 = vector.load %arg8[%c0_25, %c0_26] : memref<16x16xf32, #tpu.memory_space<vmem>>, vector<16x16xf32>
    tpu.vector_store %arg8[%c0_25, %c0_26], %43 {strides = array<i32>} : memref<16x16xf32, #tpu.memory_space<vmem>>, vector<16x16xf32>,
    %c0_27 = arith.constant 0 : index
    %c0_28 = arith.constant 0 : index
    %45 = vector.load %arg7[%c0_27, %c0_28] : memref<32x32xf32, #tpu.memory_space<vmem>>, vector<32x32xf32>
    %cst_29 = arith.constant dense<0.000000e+00> : vector<16x32xf32>
    %46 = tpu.matmul %7, %45, %cst_29 {dimension_numbers = #tpu.dot_dimension_numbers<[1], [1], [0], [0], [0, 0, 1, 0], [], []>} : vector<16x32xf32>, vector<32x32xf32>, vector<16x32xf32> -> vector<16x32xf32>
    %c0_30 = arith.constant 0 : index
    %c0_31 = arith.constant 0 : index
    %47 = vector.load %arg9[%c0_30, %c0_31] : memref<16x32xf32, #tpu.memory_space<vmem>>, vector<16x32xf32>
    tpu.vector_store %arg9[%c0_30, %c0_31], %46 {strides = array<i32>} : memref<16x32xf32, #tpu.memory_space<vmem>>, vector<16x32xf32>,
    return
  }
}

module attributes {stable_mosaic.version = 11 : i64} {
  func.func @layer_kernel(%arg0: i32, %arg1: memref<16x16xf32, #tpu.memory_space<vmem>>, %arg2: memref<16x32xf32, #tpu.memory_space<vmem>>, %arg3: memref<16x16x32xf32, #tpu.memory_space<vmem>>, %arg4: memref<16x16x32xf32, #tpu.memory_space<vmem>>, %arg5: memref<16x3x16xf32, #tpu.memory_space<vmem>>, %arg6: memref<16x16xf32, #tpu.memory_space<vmem>>, %arg7: memref<16x32xf32, #tpu.memory_space<vmem>>, %arg8: memref<3x16x32xf32, #tpu.memory_space<vmem>>, %arg9: memref<16x32xf32, #tpu.memory_space<vmem>>, %arg10: memref<1x32xf32, #tpu.memory_space<vmem>>, %arg11: memref<16x32xf32, #tpu.memory_space<vmem>>, %arg12: memref<3x16x32xf32, #tpu.memory_space<vmem>>) attributes {dimension_semantics = [#tpu.dimension_semantics<parallel>], iteration_bounds = array<i64: 1>, scalar_prefetch = 0 : i64, scratch_operands = 0 : i64, tpu.core_type = #tpu.core_type<tc>, window_params = [{transform_indices = @transform_0, window_bounds = array<i64: 16, 16>}, {transform_indices = @transform_1, window_bounds = array<i64: 16, 32>}, {transform_indices = @transform_2, window_bounds = array<i64: 16, 16, 32>}, {transform_indices = @transform_3, window_bounds = array<i64: 16, 16, 32>}, {transform_indices = @transform_4, window_bounds = array<i64: 16, 3, 16>}, {transform_indices = @transform_5, window_bounds = array<i64: 16, 16>}, {transform_indices = @transform_6, window_bounds = array<i64: 16, 32>}, {transform_indices = @transform_7, window_bounds = array<i64: 3, 16, 32>}, {pipeline_mode = #tpu.pipeline_mode<synchronous>, transform_indices = @transform_8, window_bounds = array<i64: 16, 32>}, {pipeline_mode = #tpu.pipeline_mode<synchronous>, transform_indices = @transform_9, window_bounds = array<i64: 1, 32>}, {transform_indices = @transform_10, window_bounds = array<i64: 16, 32>}, {transform_indices = @transform_11, window_bounds = array<i64: 3, 16, 32>}]} {
    %c0 = arith.constant 0 : index
    %c0_0 = arith.constant 0 : index
    %0 = vector.load %arg1[%c0, %c0_0] : memref<16x16xf32, #tpu.memory_space<vmem>>, vector<16x16xf32>
    %c0_1 = arith.constant 0 : index
    %c0_2 = arith.constant 0 : index
    %1 = vector.load %arg2[%c0_1, %c0_2] : memref<16x32xf32, #tpu.memory_space<vmem>>, vector<16x32xf32>
    %c0_3 = arith.constant 0 : index
    %c0_4 = arith.constant 0 : index
    %c0_5 = arith.constant 0 : index
    %2 = vector.load %arg3[%c0_3, %c0_4, %c0_5] : memref<16x16x32xf32, #tpu.memory_space<vmem>>, vector<16x16x32xf32>
    %c0_6 = arith.constant 0 : index
    %c0_7 = arith.constant 0 : index
    %c0_8 = arith.constant 0 : index
    %3 = vector.load %arg4[%c0_6, %c0_7, %c0_8] : memref<16x16x32xf32, #tpu.memory_space<vmem>>, vector<16x16x32xf32>
    %c0_9 = arith.constant 0 : index
    %c0_10 = arith.constant 0 : index
    %4 = vector.load %arg6[%c0_9, %c0_10] : memref<16x16xf32, #tpu.memory_space<vmem>>, vector<16x16xf32>
    %c0_11 = arith.constant 0 : index
    %c0_12 = arith.constant 0 : index
    %5 = vector.load %arg9[%c0_11, %c0_12] : memref<16x32xf32, #tpu.memory_space<vmem>>, vector<16x32xf32>
    %6 = vector.shape_cast %1 : vector<16x32xf32> to vector<16x1x32xf32>
    %7 = vector.broadcast %6 : vector<16x1x32xf32> to vector<16x16x32xf32>
    %8 = arith.mulf %2, %7 : vector<16x16x32xf32>
    %cst = arith.constant dense<0.000000e+00> : vector<16x16xf32>
    %9 = vector.multi_reduction <add>, %8, %cst [2] : vector<16x16x32xf32> to vector<16x16xf32>
    %cst_13 = arith.constant 0.000000e+00 : f32
    %10 = vector.broadcast %cst_13 : f32 to vector<16x16xf32>
    %11 = arith.cmpf ogt, %4, %10 : vector<16x16xf32>
    %12 = arith.addf %0, %9 : vector<16x16xf32>
    %cst_14 = arith.constant -1.000000e+30 : f32
    %13 = vector.broadcast %cst_14 : f32 to vector<16x16xf32>
    %14 = arith.select %11, %12, %13 : vector<16x16xi1>, vector<16x16xf32>
    %cst_15 = arith.constant dense<0xFF800000> : vector<16xf32>
    %15 = vector.multi_reduction <maximumf>, %14, %cst_15 [1] : vector<16x16xf32> to vector<16xf32>
    %16 = vector.shape_cast %15 : vector<16xf32> to vector<16x1xf32>
    %17 = vector.broadcast %16 : vector<16x1xf32> to vector<16x16xf32>
    %18 = arith.subf %14, %17 : vector<16x16xf32>
    %19 = math.exp %18 : vector<16x16xf32>
    %20 = arith.mulf %19, %4 : vector<16x16xf32>
    %cst_16 = arith.constant dense<0.000000e+00> : vector<16xf32>
    %21 = vector.multi_reduction <add>, %20, %cst_16 [1] : vector<16x16xf32> to vector<16xf32>
    %22 = vector.shape_cast %21 : vector<16xf32> to vector<16x1xf32>
    %cst_17 = arith.constant 0.000000e+00 : f32
    %23 = vector.broadcast %cst_17 : f32 to vector<16x1xf32>
    %24 = arith.cmpf ogt, %22, %23 : vector<16x1xf32>
    %cst_18 = arith.constant 1.000000e+00 : f32
    %25 = vector.broadcast %cst_18 : f32 to vector<16x1xf32>
    %26 = arith.select %24, %22, %25 : vector<16x1xi1>, vector<16x1xf32>
    %27 = vector.broadcast %26 : vector<16x1xf32> to vector<16x16xf32>
    %28 = arith.divf %20, %27 : vector<16x16xf32>
    %29 = vector.shape_cast %28 : vector<16x16xf32> to vector<16x16x1xf32>
    %30 = vector.broadcast %29 : vector<16x16x1xf32> to vector<16x16x32xf32>
    %31 = arith.mulf %30, %3 : vector<16x16x32xf32>
    %32 = vector.shape_cast %5 : vector<16x32xf32> to vector<1x16x32xf32>
    %33 = vector.broadcast %32 : vector<1x16x32xf32> to vector<16x16x32xf32>
    %34 = arith.mulf %31, %33 : vector<16x16x32xf32>
    %cst_19 = arith.constant dense<0.000000e+00> : vector<16x32xf32>
    %35 = vector.multi_reduction <add>, %34, %cst_19 [1] : vector<16x16x32xf32> to vector<16x32xf32>
    %c0_20 = arith.constant 0 : index
    %c0_21 = arith.constant 0 : index
    %36 = vector.load %arg7[%c0_20, %c0_21] : memref<16x32xf32, #tpu.memory_space<vmem>>, vector<16x32xf32>
    %37 = arith.addf %36, %35 : vector<16x32xf32>
    %c0_22 = arith.constant 0 : index
    %c0_23 = arith.constant 0 : index
    %38 = vector.load %arg11[%c0_22, %c0_23] : memref<16x32xf32, #tpu.memory_space<vmem>>, vector<16x32xf32>
    tpu.vector_store %arg11[%c0_22, %c0_23], %37 {strides = array<i32>} : memref<16x32xf32, #tpu.memory_space<vmem>>, vector<16x32xf32>,
    %c0_24 = arith.constant 0 : index
    %c0_25 = arith.constant 0 : index
    %c0_26 = arith.constant 0 : index
    %39 = vector.load %arg5[%c0_24, %c0_25, %c0_26] : memref<16x3x16xf32, #tpu.memory_space<vmem>>, vector<16x3x16xf32>
    %c0_27 = arith.constant 0 : index
    %c0_28 = arith.constant 0 : index
    %c0_29 = arith.constant 0 : index
    %40 = vector.load %arg8[%c0_27, %c0_28, %c0_29] : memref<3x16x32xf32, #tpu.memory_space<vmem>>, vector<3x16x32xf32>
    %c0_30 = arith.constant 0 : index
    %c0_31 = arith.constant 0 : index
    %41 = vector.load %arg10[%c0_30, %c0_31] : memref<1x32xf32, #tpu.memory_space<vmem>>, vector<1x32xf32>
    %42 = vector.extract_strided_slice %39 {offsets = [0, 0, 0], sizes = [16, 1, 16], strides = [1, 1, 1]} : vector<16x3x16xf32> to vector<16x1x16xf32>
    %43 = vector.shape_cast %42 : vector<16x1x16xf32> to vector<16x16xf32>
    %44 = vector.extract_strided_slice %40 {offsets = [0, 0, 0], sizes = [1, 16, 32], strides = [1, 1, 1]} : vector<3x16x32xf32> to vector<1x16x32xf32>
    %45 = vector.shape_cast %44 : vector<1x16x32xf32> to vector<16x32xf32>
    %46 = vector.shape_cast %43 : vector<16x16xf32> to vector<16x16x1xf32>
    %47 = vector.broadcast %46 : vector<16x16x1xf32> to vector<16x16x32xf32>
    %48 = arith.mulf %47, %34 : vector<16x16x32xf32>
    %cst_32 = arith.constant dense<0.000000e+00> : vector<16x32xf32>
    %49 = vector.multi_reduction <add>, %48, %cst_32 [1] : vector<16x16x32xf32> to vector<16x32xf32>
    %50 = arith.addf %45, %49 : vector<16x32xf32>
    %51 = vector.extract_strided_slice %39 {offsets = [0, 1, 0], sizes = [16, 1, 16], strides = [1, 1, 1]} : vector<16x3x16xf32> to vector<16x1x16xf32>
    %52 = vector.shape_cast %51 : vector<16x1x16xf32> to vector<16x16xf32>
    %53 = vector.extract_strided_slice %40 {offsets = [1, 0, 0], sizes = [1, 16, 32], strides = [1, 1, 1]} : vector<3x16x32xf32> to vector<1x16x32xf32>
    %54 = vector.shape_cast %53 : vector<1x16x32xf32> to vector<16x32xf32>
    %55 = vector.shape_cast %52 : vector<16x16xf32> to vector<16x16x1xf32>
    %56 = vector.broadcast %55 : vector<16x16x1xf32> to vector<16x16x32xf32>
    %57 = arith.mulf %56, %34 : vector<16x16x32xf32>
    %cst_33 = arith.constant dense<0.000000e+00> : vector<16x32xf32>
    %58 = vector.multi_reduction <add>, %57, %cst_33 [1] : vector<16x16x32xf32> to vector<16x32xf32>
    %59 = arith.addf %54, %58 : vector<16x32xf32>
    %60 = vector.extract_strided_slice %39 {offsets = [0, 2, 0], sizes = [16, 1, 16], strides = [1, 1, 1]} : vector<16x3x16xf32> to vector<16x1x16xf32>
    %61 = vector.shape_cast %60 : vector<16x1x16xf32> to vector<16x16xf32>
    %62 = vector.extract_strided_slice %40 {offsets = [2, 0, 0], sizes = [1, 16, 32], strides = [1, 1, 1]} : vector<3x16x32xf32> to vector<1x16x32xf32>
    %63 = vector.shape_cast %62 : vector<1x16x32xf32> to vector<16x32xf32>
    %64 = vector.shape_cast %61 : vector<16x16xf32> to vector<16x16x1xf32>
    %65 = vector.broadcast %64 : vector<16x16x1xf32> to vector<16x16x32xf32>
    %66 = arith.mulf %65, %34 : vector<16x16x32xf32>
    %cst_34 = arith.constant dense<0.000000e+00> : vector<16x32xf32>
    %67 = vector.multi_reduction <add>, %66, %cst_34 [1] : vector<16x16x32xf32> to vector<16x32xf32>
    %68 = arith.addf %63, %67 : vector<16x32xf32>
    %cst_35 = arith.constant 0.000000e+00 : f32
    %69 = vector.broadcast %cst_35 : f32 to vector<16x32xf32>
    %cst_36 = arith.constant dense<0.000000e+00> : vector<16xf32>
    %70 = vector.multi_reduction <add>, %50, %cst_36 [1] : vector<16x32xf32> to vector<16xf32>
    %71 = vector.shape_cast %70 : vector<16xf32> to vector<16x1xf32>
    %cst_37 = arith.constant 3.200000e+01 : f32
    %72 = vector.broadcast %cst_37 : f32 to vector<16x1xf32>
    %73 = arith.divf %71, %72 : vector<16x1xf32>
    %74 = vector.broadcast %73 : vector<16x1xf32> to vector<16x32xf32>
    %75 = arith.subf %50, %74 : vector<16x32xf32>
    %76 = arith.mulf %75, %75 : vector<16x32xf32>
    %77 = arith.addf %69, %76 : vector<16x32xf32>
    %cst_38 = arith.constant dense<0.000000e+00> : vector<16xf32>
    %78 = vector.multi_reduction <add>, %59, %cst_38 [1] : vector<16x32xf32> to vector<16xf32>
    %79 = vector.shape_cast %78 : vector<16xf32> to vector<16x1xf32>
    %cst_39 = arith.constant 3.200000e+01 : f32
    %80 = vector.broadcast %cst_39 : f32 to vector<16x1xf32>
    %81 = arith.divf %79, %80 : vector<16x1xf32>
    %82 = vector.broadcast %81 : vector<16x1xf32> to vector<16x32xf32>
    %83 = arith.subf %59, %82 : vector<16x32xf32>
    %84 = arith.mulf %83, %83 : vector<16x32xf32>
    %85 = arith.addf %77, %84 : vector<16x32xf32>
    %cst_40 = arith.constant dense<0.000000e+00> : vector<16xf32>
    %86 = vector.multi_reduction <add>, %68, %cst_40 [1] : vector<16x32xf32> to vector<16xf32>
    %87 = vector.shape_cast %86 : vector<16xf32> to vector<16x1xf32>
    %cst_41 = arith.constant 3.200000e+01 : f32
    %88 = vector.broadcast %cst_41 : f32 to vector<16x1xf32>
    %89 = arith.divf %87, %88 : vector<16x1xf32>
    %90 = vector.broadcast %89 : vector<16x1xf32> to vector<16x32xf32>
    %91 = arith.subf %68, %90 : vector<16x32xf32>
    %92 = arith.mulf %91, %91 : vector<16x32xf32>
    %93 = arith.addf %85, %92 : vector<16x32xf32>
    %cst_42 = arith.constant dense<0.000000e+00> : vector<16xf32>
    %94 = vector.multi_reduction <add>, %93, %cst_42 [1] : vector<16x32xf32> to vector<16xf32>
    %95 = vector.shape_cast %94 : vector<16xf32> to vector<16x1xf32>
    %cst_43 = arith.constant 3.200000e+01 : f32
    %96 = vector.broadcast %cst_43 : f32 to vector<16x1xf32>
    %97 = arith.divf %95, %96 : vector<16x1xf32>
    %cst_44 = arith.constant 9.99999974E-6 : f32
    %98 = vector.broadcast %cst_44 : f32 to vector<16x1xf32>
    %99 = arith.addf %97, %98 : vector<16x1xf32>
    %100 = math.rsqrt %99 : vector<16x1xf32>
    %101 = vector.broadcast %100 : vector<16x1xf32> to vector<16x32xf32>
    %102 = vector.broadcast %41 : vector<1x32xf32> to vector<16x32xf32>
    %103 = arith.mulf %101, %102 : vector<16x32xf32>
    %104 = arith.mulf %75, %103 : vector<16x32xf32>
    %c0_45 = arith.constant 0 : index
    %c0_46 = arith.constant 0 : index
    %c0_47 = arith.constant 0 : index
    %105 = vector.load %arg12[%c0_45, %c0_46, %c0_47] : memref<3x16x32xf32, #tpu.memory_space<vmem>>, vector<1x16x32xf32>
    %106 = vector.shape_cast %105 : vector<1x16x32xf32> to vector<16x32xf32>
    %107 = vector.shape_cast %104 : vector<16x32xf32> to vector<1x16x32xf32>
    tpu.vector_store %arg12[%c0_45, %c0_46, %c0_47], %107 {strides = array<i32>} : memref<3x16x32xf32, #tpu.memory_space<vmem>>, vector<1x16x32xf32>,
    %108 = arith.mulf %83, %103 : vector<16x32xf32>
    %c1 = arith.constant 1 : index
    %c0_48 = arith.constant 0 : index
    %c0_49 = arith.constant 0 : index
    %109 = vector.load %arg12[%c1, %c0_48, %c0_49] : memref<3x16x32xf32, #tpu.memory_space<vmem>>, vector<1x16x32xf32>
    %110 = vector.shape_cast %109 : vector<1x16x32xf32> to vector<16x32xf32>
    %111 = vector.shape_cast %108 : vector<16x32xf32> to vector<1x16x32xf32>
    tpu.vector_store %arg12[%c1, %c0_48, %c0_49], %111 {strides = array<i32>} : memref<3x16x32xf32, #tpu.memory_space<vmem>>, vector<1x16x32xf32>,
    %112 = arith.mulf %91, %103 : vector<16x32xf32>
    %c2 = arith.constant 2 : index
    %c0_50 = arith.constant 0 : index
    %c0_51 = arith.constant 0 : index
    %113 = vector.load %arg12[%c2, %c0_50, %c0_51] : memref<3x16x32xf32, #tpu.memory_space<vmem>>, vector<1x16x32xf32>
    %114 = vector.shape_cast %113 : vector<1x16x32xf32> to vector<16x32xf32>
    %115 = vector.shape_cast %112 : vector<16x32xf32> to vector<1x16x32xf32>
    tpu.vector_store %arg12[%c2, %c0_50, %c0_51], %115 {strides = array<i32>} : memref<3x16x32xf32, #tpu.memory_space<vmem>>, vector<1x16x32xf32>,
    return
  }
  func.func @transform_0(%arg0: i32) -> (i32, i32) {
    %c0_i32 = arith.constant 0 : i32
    %c0_i32_0 = arith.constant 0 : i32
    return %arg0, %c0_i32 : i32, i32
  }
  func.func @transform_1(%arg0: i32) -> (i32, i32) {
    %c0_i32 = arith.constant 0 : i32
    %c0_i32_0 = arith.constant 0 : i32
    return %arg0, %c0_i32 : i32, i32
  }
  func.func @transform_2(%arg0: i32) -> (i32, i32, i32) {
    %c0_i32 = arith.constant 0 : i32
    %c0_i32_0 = arith.constant 0 : i32
    %c0_i32_1 = arith.constant 0 : i32
    return %arg0, %c0_i32, %c0_i32_0 : i32, i32, i32
  }
  func.func @transform_3(%arg0: i32) -> (i32, i32, i32) {
    %c0_i32 = arith.constant 0 : i32
    %c0_i32_0 = arith.constant 0 : i32
    %c0_i32_1 = arith.constant 0 : i32
    return %arg0, %c0_i32, %c0_i32_0 : i32, i32, i32
  }
  func.func @transform_4(%arg0: i32) -> (i32, i32, i32) {
    %c0_i32 = arith.constant 0 : i32
    %c0_i32_0 = arith.constant 0 : i32
    %c0_i32_1 = arith.constant 0 : i32
    return %arg0, %c0_i32, %c0_i32_0 : i32, i32, i32
  }
  func.func @transform_5(%arg0: i32) -> (i32, i32) {
    %c0_i32 = arith.constant 0 : i32
    %c0_i32_0 = arith.constant 0 : i32
    return %arg0, %c0_i32 : i32, i32
  }
  func.func @transform_6(%arg0: i32) -> (i32, i32) {
    %c0_i32 = arith.constant 0 : i32
    %c0_i32_0 = arith.constant 0 : i32
    return %arg0, %c0_i32 : i32, i32
  }
  func.func @transform_7(%arg0: i32) -> (i32, i32, i32) {
    %c0_i32 = arith.constant 0 : i32
    %c0_i32_0 = arith.constant 0 : i32
    %c0_i32_1 = arith.constant 0 : i32
    return %c0_i32, %arg0, %c0_i32_0 : i32, i32, i32
  }
  func.func @transform_8(%arg0: i32) -> (i32, i32) {
    %c0_i32 = arith.constant 0 : i32
    %c0_i32_0 = arith.constant 0 : i32
    %c0_i32_1 = arith.constant 0 : i32
    return %c0_i32, %c0_i32_0 : i32, i32
  }
  func.func @transform_9(%arg0: i32) -> (i32, i32) {
    %c0_i32 = arith.constant 0 : i32
    %c0_i32_0 = arith.constant 0 : i32
    %c0_i32_1 = arith.constant 0 : i32
    return %c0_i32, %c0_i32_0 : i32, i32
  }
  func.func @transform_10(%arg0: i32) -> (i32, i32) {
    %c0_i32 = arith.constant 0 : i32
    %c0_i32_0 = arith.constant 0 : i32
    return %arg0, %c0_i32 : i32, i32
  }
  func.func @transform_11(%arg0: i32) -> (i32, i32, i32) {
    %c0_i32 = arith.constant 0 : i32
    %c0_i32_0 = arith.constant 0 : i32
    %c0_i32_1 = arith.constant 0 : i32
    return %c0_i32, %arg0, %c0_i32_0 : i32, i32, i32
  }
}

module attributes {stable_mosaic.version = 11 : i64} {
  func.func @layer_kernel(%arg0: i32, %arg1: memref<16x16xf32, #tpu.memory_space<vmem>>, %arg2: memref<16x32xf32, #tpu.memory_space<vmem>>, %arg3: memref<16x16x32xf32, #tpu.memory_space<vmem>>, %arg4: memref<16x16x32xf32, #tpu.memory_space<vmem>>, %arg5: memref<16x3x16xf32, #tpu.memory_space<vmem>>, %arg6: memref<16x16xf32, #tpu.memory_space<vmem>>, %arg7: memref<16x32xf32, #tpu.memory_space<vmem>>, %arg8: memref<3x16x32xf32, #tpu.memory_space<vmem>>, %arg9: memref<16x32xf32, #tpu.memory_space<vmem>>, %arg10: memref<1x32xf32, #tpu.memory_space<vmem>>, %arg11: memref<16x32xf32, #tpu.memory_space<vmem>>, %arg12: memref<3x16x32xf32, #tpu.memory_space<vmem>>) attributes {dimension_semantics = [#tpu.dimension_semantics<parallel>], iteration_bounds = array<i64: 1>, scalar_prefetch = 0 : i64, scratch_operands = 0 : i64, tpu.core_type = #tpu.core_type<tc>, window_params = [{transform_indices = @transform_0, window_bounds = array<i64: 16, 16>}, {transform_indices = @transform_1, window_bounds = array<i64: 16, 32>}, {transform_indices = @transform_2, window_bounds = array<i64: 16, 16, 32>}, {transform_indices = @transform_3, window_bounds = array<i64: 16, 16, 32>}, {transform_indices = @transform_4, window_bounds = array<i64: 16, 3, 16>}, {transform_indices = @transform_5, window_bounds = array<i64: 16, 16>}, {transform_indices = @transform_6, window_bounds = array<i64: 16, 32>}, {transform_indices = @transform_7, window_bounds = array<i64: 3, 16, 32>}, {pipeline_mode = #tpu.pipeline_mode<synchronous>, transform_indices = @transform_8, window_bounds = array<i64: 16, 32>}, {pipeline_mode = #tpu.pipeline_mode<synchronous>, transform_indices = @transform_9, window_bounds = array<i64: 1, 32>}, {transform_indices = @transform_10, window_bounds = array<i64: 16, 32>}, {transform_indices = @transform_11, window_bounds = array<i64: 3, 16, 32>}]} {
    %c0 = arith.constant 0 : index
    %c0_0 = arith.constant 0 : index
    %0 = vector.load %arg1[%c0, %c0_0] : memref<16x16xf32, #tpu.memory_space<vmem>>, vector<16x16xf32>
    %c0_1 = arith.constant 0 : index
    %c0_2 = arith.constant 0 : index
    %1 = vector.load %arg2[%c0_1, %c0_2] : memref<16x32xf32, #tpu.memory_space<vmem>>, vector<16x32xf32>
    %c0_3 = arith.constant 0 : index
    %c0_4 = arith.constant 0 : index
    %c0_5 = arith.constant 0 : index
    %2 = vector.load %arg3[%c0_3, %c0_4, %c0_5] : memref<16x16x32xf32, #tpu.memory_space<vmem>>, vector<16x16x32xf32>
    %c0_6 = arith.constant 0 : index
    %c0_7 = arith.constant 0 : index
    %c0_8 = arith.constant 0 : index
    %3 = vector.load %arg4[%c0_6, %c0_7, %c0_8] : memref<16x16x32xf32, #tpu.memory_space<vmem>>, vector<16x16x32xf32>
    %c0_9 = arith.constant 0 : index
    %c0_10 = arith.constant 0 : index
    %4 = vector.load %arg6[%c0_9, %c0_10] : memref<16x16xf32, #tpu.memory_space<vmem>>, vector<16x16xf32>
    %c0_11 = arith.constant 0 : index
    %c0_12 = arith.constant 0 : index
    %5 = vector.load %arg9[%c0_11, %c0_12] : memref<16x32xf32, #tpu.memory_space<vmem>>, vector<16x32xf32>
    %6 = vector.shape_cast %1 : vector<16x32xf32> to vector<16x1x32xf32>
    %7 = vector.broadcast %6 : vector<16x1x32xf32> to vector<16x16x32xf32>
    %8 = arith.mulf %2, %7 : vector<16x16x32xf32>
    %cst = arith.constant dense<0.000000e+00> : vector<16x16xf32>
    %9 = vector.multi_reduction <add>, %8, %cst [2] : vector<16x16x32xf32> to vector<16x16xf32>
    %cst_13 = arith.constant 0.000000e+00 : f32
    %10 = vector.broadcast %cst_13 : f32 to vector<16x16xf32>
    %11 = arith.cmpf ogt, %4, %10 : vector<16x16xf32>
    %12 = arith.addf %0, %9 : vector<16x16xf32>
    %cst_14 = arith.constant -1.000000e+30 : f32
    %13 = vector.broadcast %cst_14 : f32 to vector<16x16xf32>
    %14 = arith.select %11, %12, %13 : vector<16x16xi1>, vector<16x16xf32>
    %cst_15 = arith.constant dense<0xFF800000> : vector<16xf32>
    %15 = vector.multi_reduction <maximumf>, %14, %cst_15 [1] : vector<16x16xf32> to vector<16xf32>
    %16 = vector.shape_cast %15 : vector<16xf32> to vector<16x1xf32>
    %17 = vector.broadcast %16 : vector<16x1xf32> to vector<16x16xf32>
    %18 = arith.subf %14, %17 : vector<16x16xf32>
    %19 = math.exp %18 : vector<16x16xf32>
    %20 = arith.mulf %19, %4 : vector<16x16xf32>
    %cst_16 = arith.constant dense<0.000000e+00> : vector<16xf32>
    %21 = vector.multi_reduction <add>, %20, %cst_16 [1] : vector<16x16xf32> to vector<16xf32>
    %22 = vector.shape_cast %21 : vector<16xf32> to vector<16x1xf32>
    %cst_17 = arith.constant 0.000000e+00 : f32
    %23 = vector.broadcast %cst_17 : f32 to vector<16x1xf32>
    %24 = arith.cmpf ogt, %22, %23 : vector<16x1xf32>
    %cst_18 = arith.constant 1.000000e+00 : f32
    %25 = vector.broadcast %cst_18 : f32 to vector<16x1xf32>
    %26 = arith.select %24, %22, %25 : vector<16x1xi1>, vector<16x1xf32>
    %27 = vector.broadcast %26 : vector<16x1xf32> to vector<16x16xf32>
    %28 = arith.divf %20, %27 : vector<16x16xf32>
    %29 = vector.shape_cast %28 : vector<16x16xf32> to vector<16x16x1xf32>
    %30 = vector.broadcast %29 : vector<16x16x1xf32> to vector<16x16x32xf32>
    %31 = arith.mulf %30, %3 : vector<16x16x32xf32>
    %32 = vector.shape_cast %5 : vector<16x32xf32> to vector<1x16x32xf32>
    %33 = vector.broadcast %32 : vector<1x16x32xf32> to vector<16x16x32xf32>
    %34 = arith.mulf %31, %33 : vector<16x16x32xf32>
    %cst_19 = arith.constant dense<0.000000e+00> : vector<16x32xf32>
    %35 = vector.multi_reduction <add>, %34, %cst_19 [1] : vector<16x16x32xf32> to vector<16x32xf32>
    %c0_20 = arith.constant 0 : index
    %c0_21 = arith.constant 0 : index
    %36 = vector.load %arg7[%c0_20, %c0_21] : memref<16x32xf32, #tpu.memory_space<vmem>>, vector<16x32xf32>
    %37 = arith.addf %36, %35 : vector<16x32xf32>
    %c0_22 = arith.constant 0 : index
    %c0_23 = arith.constant 0 : index
    %38 = vector.load %arg11[%c0_22, %c0_23] : memref<16x32xf32, #tpu.memory_space<vmem>>, vector<16x32xf32>
    tpu.vector_store %arg11[%c0_22, %c0_23], %37 {strides = array<i32>} : memref<16x32xf32, #tpu.memory_space<vmem>>, vector<16x32xf32>,
    %c0_24 = arith.constant 0 : index
    %c0_25 = arith.constant 0 : index
    %c0_26 = arith.constant 0 : index
    %39 = vector.load %arg5[%c0_24, %c0_25, %c0_26] : memref<16x3x16xf32, #tpu.memory_space<vmem>>, vector<16x3x16xf32>
    %c0_27 = arith.constant 0 : index
    %c0_28 = arith.constant 0 : index
    %c0_29 = arith.constant 0 : index
    %40 = vector.load %arg8[%c0_27, %c0_28, %c0_29] : memref<3x16x32xf32, #tpu.memory_space<vmem>>, vector<3x16x32xf32>
    %c0_30 = arith.constant 0 : index
    %c0_31 = arith.constant 0 : index
    %41 = vector.load %arg10[%c0_30, %c0_31] : memref<1x32xf32, #tpu.memory_space<vmem>>, vector<1x32xf32>
    %42 = vector.extract_strided_slice %39 {offsets = [0, 0, 0], sizes = [16, 1, 16], strides = [1, 1, 1]} : vector<16x3x16xf32> to vector<16x1x16xf32>
    %43 = vector.shape_cast %42 : vector<16x1x16xf32> to vector<16x16xf32>
    %44 = vector.extract_strided_slice %40 {offsets = [0, 0, 0], sizes = [1, 16, 32], strides = [1, 1, 1]} : vector<3x16x32xf32> to vector<1x16x32xf32>
    %45 = vector.shape_cast %44 : vector<1x16x32xf32> to vector<16x32xf32>
    %46 = vector.shape_cast %43 : vector<16x16xf32> to vector<16x16x1xf32>
    %47 = vector.broadcast %46 : vector<16x16x1xf32> to vector<16x16x32xf32>
    %48 = arith.mulf %47, %34 : vector<16x16x32xf32>
    %cst_32 = arith.constant dense<0.000000e+00> : vector<16x32xf32>
    %49 = vector.multi_reduction <add>, %48, %cst_32 [1] : vector<16x16x32xf32> to vector<16x32xf32>
    %50 = arith.addf %45, %49 : vector<16x32xf32>
    %51 = vector.extract_strided_slice %39 {offsets = [0, 1, 0], sizes = [16, 1, 16], strides = [1, 1, 1]} : vector<16x3x16xf32> to vector<16x1x16xf32>
    %52 = vector.shape_cast %51 : vector<16x1x16xf32> to vector<16x16xf32>
    %53 = vector.extract_strided_slice %40 {offsets = [1, 0, 0], sizes = [1, 16, 32], strides = [1, 1, 1]} : vector<3x16x32xf32> to vector<1x16x32xf32>
    %54 = vector.shape_cast %53 : vector<1x16x32xf32> to vector<16x32xf32>
    %55 = vector.shape_cast %52 : vector<16x16xf32> to vector<16x16x1xf32>
    %56 = vector.broadcast %55 : vector<16x16x1xf32> to vector<16x16x32xf32>
    %57 = arith.mulf %56, %34 : vector<16x16x32xf32>
    %cst_33 = arith.constant dense<0.000000e+00> : vector<16x32xf32>
    %58 = vector.multi_reduction <add>, %57, %cst_33 [1] : vector<16x16x32xf32> to vector<16x32xf32>
    %59 = arith.addf %54, %58 : vector<16x32xf32>
    %60 = vector.extract_strided_slice %39 {offsets = [0, 2, 0], sizes = [16, 1, 16], strides = [1, 1, 1]} : vector<16x3x16xf32> to vector<16x1x16xf32>
    %61 = vector.shape_cast %60 : vector<16x1x16xf32> to vector<16x16xf32>
    %62 = vector.extract_strided_slice %40 {offsets = [2, 0, 0], sizes = [1, 16, 32], strides = [1, 1, 1]} : vector<3x16x32xf32> to vector<1x16x32xf32>
    %63 = vector.shape_cast %62 : vector<1x16x32xf32> to vector<16x32xf32>
    %64 = vector.shape_cast %61 : vector<16x16xf32> to vector<16x16x1xf32>
    %65 = vector.broadcast %64 : vector<16x16x1xf32> to vector<16x16x32xf32>
    %66 = arith.mulf %65, %34 : vector<16x16x32xf32>
    %cst_34 = arith.constant dense<0.000000e+00> : vector<16x32xf32>
    %67 = vector.multi_reduction <add>, %66, %cst_34 [1] : vector<16x16x32xf32> to vector<16x32xf32>
    %68 = arith.addf %63, %67 : vector<16x32xf32>
    %cst_35 = arith.constant 0.000000e+00 : f32
    %69 = vector.broadcast %cst_35 : f32 to vector<16x32xf32>
    %cst_36 = arith.constant dense<0.000000e+00> : vector<16xf32>
    %70 = vector.multi_reduction <add>, %50, %cst_36 [1] : vector<16x32xf32> to vector<16xf32>
    %71 = vector.shape_cast %70 : vector<16xf32> to vector<16x1xf32>
    %cst_37 = arith.constant 3.200000e+01 : f32
    %72 = vector.broadcast %cst_37 : f32 to vector<16x1xf32>
    %73 = arith.divf %71, %72 : vector<16x1xf32>
    %74 = vector.broadcast %73 : vector<16x1xf32> to vector<16x32xf32>
    %75 = arith.subf %50, %74 : vector<16x32xf32>
    %76 = arith.mulf %75, %75 : vector<16x32xf32>
    %77 = arith.addf %69, %76 : vector<16x32xf32>
    %cst_38 = arith.constant dense<0.000000e+00> : vector<16xf32>
    %78 = vector.multi_reduction <add>, %59, %cst_38 [1] : vector<16x32xf32> to vector<16xf32>
    %79 = vector.shape_cast %78 : vector<16xf32> to vector<16x1xf32>
    %cst_39 = arith.constant 3.200000e+01 : f32
    %80 = vector.broadcast %cst_39 : f32 to vector<16x1xf32>
    %81 = arith.divf %79, %80 : vector<16x1xf32>
    %82 = vector.broadcast %81 : vector<16x1xf32> to vector<16x32xf32>
    %83 = arith.subf %59, %82 : vector<16x32xf32>
    %84 = arith.mulf %83, %83 : vector<16x32xf32>
    %85 = arith.addf %77, %84 : vector<16x32xf32>
    %cst_40 = arith.constant dense<0.000000e+00> : vector<16xf32>
    %86 = vector.multi_reduction <add>, %68, %cst_40 [1] : vector<16x32xf32> to vector<16xf32>
    %87 = vector.shape_cast %86 : vector<16xf32> to vector<16x1xf32>
    %cst_41 = arith.constant 3.200000e+01 : f32
    %88 = vector.broadcast %cst_41 : f32 to vector<16x1xf32>
    %89 = arith.divf %87, %88 : vector<16x1xf32>
    %90 = vector.broadcast %89 : vector<16x1xf32> to vector<16x32xf32>
    %91 = arith.subf %68, %90 : vector<16x32xf32>
    %92 = arith.mulf %91, %91 : vector<16x32xf32>
    %93 = arith.addf %85, %92 : vector<16x32xf32>
    %cst_42 = arith.constant dense<0.000000e+00> : vector<16xf32>
    %94 = vector.multi_reduction <add>, %93, %cst_42 [1] : vector<16x32xf32> to vector<16xf32>
    %95 = vector.shape_cast %94 : vector<16xf32> to vector<16x1xf32>
    %cst_43 = arith.constant 3.200000e+01 : f32
    %96 = vector.broadcast %cst_43 : f32 to vector<16x1xf32>
    %97 = arith.divf %95, %96 : vector<16x1xf32>
    %cst_44 = arith.constant 9.99999974E-6 : f32
    %98 = vector.broadcast %cst_44 : f32 to vector<16x1xf32>
    %99 = arith.addf %97, %98 : vector<16x1xf32>
    %100 = math.rsqrt %99 : vector<16x1xf32>
    %101 = vector.broadcast %100 : vector<16x1xf32> to vector<16x32xf32>
    %102 = vector.broadcast %41 : vector<1x32xf32> to vector<16x32xf32>
    %103 = arith.mulf %101, %102 : vector<16x32xf32>
    %104 = arith.mulf %75, %103 : vector<16x32xf32>
    %c0_45 = arith.constant 0 : index
    %c0_46 = arith.constant 0 : index
    %c0_47 = arith.constant 0 : index
    %105 = vector.load %arg12[%c0_45, %c0_46, %c0_47] : memref<3x16x32xf32, #tpu.memory_space<vmem>>, vector<1x16x32xf32>
    %106 = vector.shape_cast %105 : vector<1x16x32xf32> to vector<16x32xf32>
    %107 = vector.shape_cast %104 : vector<16x32xf32> to vector<1x16x32xf32>
    tpu.vector_store %arg12[%c0_45, %c0_46, %c0_47], %107 {strides = array<i32>} : memref<3x16x32xf32, #tpu.memory_space<vmem>>, vector<1x16x32xf32>,
    %108 = arith.mulf %83, %103 : vector<16x32xf32>
    %c1 = arith.constant 1 : index
    %c0_48 = arith.constant 0 : index
    %c0_49 = arith.constant 0 : index
    %109 = vector.load %arg12[%c1, %c0_48, %c0_49] : memref<3x16x32xf32, #tpu.memory_space<vmem>>, vector<1x16x32xf32>
    %110 = vector.shape_cast %109 : vector<1x16x32xf32> to vector<16x32xf32>
    %111 = vector.shape_cast %108 : vector<16x32xf32> to vector<1x16x32xf32>
    tpu.vector_store %arg12[%c1, %c0_48, %c0_49], %111 {strides = array<i32>} : memref<3x16x32xf32, #tpu.memory_space<vmem>>, vector<1x16x32xf32>,
    %112 = arith.mulf %91, %103 : vector<16x32xf32>
    %c2 = arith.constant 2 : index
    %c0_50 = arith.constant 0 : index
    %c0_51 = arith.constant 0 : index
    %113 = vector.load %arg12[%c2, %c0_50, %c0_51] : memref<3x16x32xf32, #tpu.memory_space<vmem>>, vector<1x16x32xf32>
    %114 = vector.shape_cast %113 : vector<1x16x32xf32> to vector<16x32xf32>
    %115 = vector.shape_cast %112 : vector<16x32xf32> to vector<1x16x32xf32>
    tpu.vector_store %arg12[%c2, %c0_50, %c0_51], %115 {strides = array<i32>} : memref<3x16x32xf32, #tpu.memory_space<vmem>>, vector<1x16x32xf32>,
    return
  }
  func.func @transform_0(%arg0: i32) -> (i32, i32) {
    %c0_i32 = arith.constant 0 : i32
    %c0_i32_0 = arith.constant 0 : i32
    return %arg0, %c0_i32 : i32, i32
  }
  func.func @transform_1(%arg0: i32) -> (i32, i32) {
    %c0_i32 = arith.constant 0 : i32
    %c0_i32_0 = arith.constant 0 : i32
    return %arg0, %c0_i32 : i32, i32
  }
  func.func @transform_2(%arg0: i32) -> (i32, i32, i32) {
    %c0_i32 = arith.constant 0 : i32
    %c0_i32_0 = arith.constant 0 : i32
    %c0_i32_1 = arith.constant 0 : i32
    return %arg0, %c0_i32, %c0_i32_0 : i32, i32, i32
  }
  func.func @transform_3(%arg0: i32) -> (i32, i32, i32) {
    %c0_i32 = arith.constant 0 : i32
    %c0_i32_0 = arith.constant 0 : i32
    %c0_i32_1 = arith.constant 0 : i32
    return %arg0, %c0_i32, %c0_i32_0 : i32, i32, i32
  }
  func.func @transform_4(%arg0: i32) -> (i32, i32, i32) {
    %c0_i32 = arith.constant 0 : i32
    %c0_i32_0 = arith.constant 0 : i32
    %c0_i32_1 = arith.constant 0 : i32
    return %arg0, %c0_i32, %c0_i32_0 : i32, i32, i32
  }
  func.func @transform_5(%arg0: i32) -> (i32, i32) {
    %c0_i32 = arith.constant 0 : i32
    %c0_i32_0 = arith.constant 0 : i32
    return %arg0, %c0_i32 : i32, i32
  }
  func.func @transform_6(%arg0: i32) -> (i32, i32) {
    %c0_i32 = arith.constant 0 : i32
    %c0_i32_0 = arith.constant 0 : i32
    return %arg0, %c0_i32 : i32, i32
  }
  func.func @transform_7(%arg0: i32) -> (i32, i32, i32) {
    %c0_i32 = arith.constant 0 : i32
    %c0_i32_0 = arith.constant 0 : i32
    %c0_i32_1 = arith.constant 0 : i32
    return %c0_i32, %arg0, %c0_i32_0 : i32, i32, i32
  }
  func.func @transform_8(%arg0: i32) -> (i32, i32) {
    %c0_i32 = arith.constant 0 : i32
    %c0_i32_0 = arith.constant 0 : i32
    %c0_i32_1 = arith.constant 0 : i32
    return %c0_i32, %c0_i32_0 : i32, i32
  }
  func.func @transform_9(%arg0: i32) -> (i32, i32) {
    %c0_i32 = arith.constant 0 : i32
    %c0_i32_0 = arith.constant 0 : i32
    %c0_i32_1 = arith.constant 0 : i32
    return %c0_i32, %c0_i32_0 : i32, i32
  }
  func.func @transform_10(%arg0: i32) -> (i32, i32) {
    %c0_i32 = arith.constant 0 : i32
    %c0_i32_0 = arith.constant 0 : i32
    return %arg0, %c0_i32 : i32, i32
  }
  func.func @transform_11(%arg0: i32) -> (i32, i32, i32) {
    %c0_i32 = arith.constant 0 : i32
    %c0_i32_0 = arith.constant 0 : i32
    %c0_i32_1 = arith.constant 0 : i32
    return %c0_i32, %arg0, %c0_i32_0 : i32, i32, i32
  }
}

module attributes {stable_mosaic.version = 11 : i64} {
  func.func @readout_kernel(%arg0: memref<3x16x32xf32, #tpu.memory_space<vmem>>, %arg1: memref<2x16xf32, #tpu.memory_space<vmem>>, %arg2: memref<2x32xf32, #tpu.memory_space<vmem>>) attributes {dimension_semantics = [], scalar_prefetch = 0 : i64, scratch_operands = 0 : i64, tpu.core_type = #tpu.core_type<tc>} {
    %c0 = arith.constant 0 : index
    %c0_0 = arith.constant 0 : index
    %c0_1 = arith.constant 0 : index
    %0 = vector.load %arg0[%c0, %c0_0, %c0_1] : memref<3x16x32xf32, #tpu.memory_space<vmem>>, vector<1x16x32xf32>
    %1 = vector.shape_cast %0 : vector<1x16x32xf32> to vector<16x32xf32>
    %2 = arith.mulf %1, %1 : vector<16x32xf32>
    %c1 = arith.constant 1 : index
    %c0_2 = arith.constant 0 : index
    %c0_3 = arith.constant 0 : index
    %3 = vector.load %arg0[%c1, %c0_2, %c0_3] : memref<3x16x32xf32, #tpu.memory_space<vmem>>, vector<1x16x32xf32>
    %4 = vector.shape_cast %3 : vector<1x16x32xf32> to vector<16x32xf32>
    %5 = arith.mulf %4, %4 : vector<16x32xf32>
    %6 = arith.addf %2, %5 : vector<16x32xf32>
    %c2 = arith.constant 2 : index
    %c0_4 = arith.constant 0 : index
    %c0_5 = arith.constant 0 : index
    %7 = vector.load %arg0[%c2, %c0_4, %c0_5] : memref<3x16x32xf32, #tpu.memory_space<vmem>>, vector<1x16x32xf32>
    %8 = vector.shape_cast %7 : vector<1x16x32xf32> to vector<16x32xf32>
    %9 = arith.mulf %8, %8 : vector<16x32xf32>
    %10 = arith.addf %6, %9 : vector<16x32xf32>
    %11 = math.sqrt %10 : vector<16x32xf32>
    %c0_6 = arith.constant 0 : index
    %c0_7 = arith.constant 0 : index
    %12 = vector.load %arg1[%c0_6, %c0_7] : memref<2x16xf32, #tpu.memory_space<vmem>>, vector<2x16xf32>
    %cst = arith.constant dense<0.000000e+00> : vector<2x32xf32>
    %13 = tpu.matmul %12, %11, %cst {dimension_numbers = #tpu.dot_dimension_numbers<[1], [0], [0], [1], [0, 0, 1, 1], [], []>} : vector<2x16xf32>, vector<16x32xf32>, vector<2x32xf32> -> vector<2x32xf32>
    %c0_8 = arith.constant 0 : index
    %c0_9 = arith.constant 0 : index
    %14 = vector.load %arg2[%c0_8, %c0_9] : memref<2x32xf32, #tpu.memory_space<vmem>>, vector<2x32xf32>
    tpu.vector_store %arg2[%c0_8, %c0_9], %13 {strides = array<i32>} : memref<2x32xf32, #tpu.memory_space<vmem>>, vector<2x32xf32>,
    return
  }
}

</mosaic_0001>

<llo_original>
// kernel: clofnet_forward.7
$region0: #{clofnet_forward.7}
  #allocation0 [shape = 'u32[]', space=smem, size = 0x4, offset = 0x4, fixed_abs, tag = 'smem constant byte address 0x4 - core index']
  #allocation1 [shape = 'u32[144,128]{1,0:T(1,128)}', space=vmem, size = 0x12000, scoped, tag = 'internal scratch']
  %s0 = inlined_call_operand.vmem [shape: f32[16,32], index: 0, kind: input, shape index: {}]
  %s1 = inlined_call_operand.vmem [shape: f32[32,32], index: 1, kind: input, shape index: {}]
  %s2 = inlined_call_operand.vmem [shape: f32[1,32], index: 2, kind: input, shape index: {}]
  %s3 = inlined_call_operand.vmem [shape: f32[32,32], index: 3, kind: input, shape index: {}]
  %s4 = inlined_call_operand.vmem [shape: f32[1,32], index: 4, kind: input, shape index: {}]
  %s5 = inlined_call_operand.vmem [shape: f32[32,32], index: 5, kind: input, shape index: {}]
  %s6 = inlined_call_operand.vmem [shape: f32[1,32], index: 6, kind: input, shape index: {}]
  %s7 = inlined_call_operand.vmem [shape: f32[32,32], index: 7, kind: input, shape index: {}]
  %s8 = inlined_call_operand.vmem [shape: f32[16,16], index: 8, kind: output, shape index: {0}]
  %s9 = inlined_call_operand.vmem [shape: f32[16,32], index: 9, kind: output, shape index: {1}]
  %s10 = inlined_call_operand.vmem [shape: f32[16,32], index: 10, kind: output, shape index: {2}]
  %11 = xla_tuple %s8, %s9, %s10
  %s12 = sld [smem:[#allocation0]]
  $region58: #{clofnet_forward.7} parent=0
    _
  %s14 = ssub.s32 1, %s12
  %s15 = scalar_select 0, %s14, %s12
  // Predicated region
  $region2: #{clofnet_forward.7} parent=0 // pred_check
    _
  $region3: #{clofnet_forward.7} parent=0 // pred_check_branch
    %17 = sbr.rel (0) target = $region5
  $region4: #{clofnet_forward.7} parent=0 // pred_region
    _
  $region5: #{clofnet_forward.7} parent=0 // pred_fallthru
    _
  // Predicated region
  $region6: #{clofnet_forward.7} parent=0 // pred_check
    _
  $region7: #{clofnet_forward.7} parent=0 // pred_check_branch
    %19 = sbr.rel (0) target = $region9
  $region8: #{clofnet_forward.7} parent=0 // pred_region
    _
  $region9: #{clofnet_forward.7} parent=0 // pred_fallthru
    _
  // Predicated region
  $region10: #{clofnet_forward.7} parent=0 // pred_check
    _
  $region11: #{clofnet_forward.7} parent=0 // pred_check_branch
    %21 = sbr.rel (0) target = $region13
  $region12: #{clofnet_forward.7} parent=0 // pred_region
    _
  $region13: #{clofnet_forward.7} parent=0 // pred_fallthru
    _
  // Predicated region
  $region14: #{clofnet_forward.7} parent=0 // pred_check
    _
  $region15: #{clofnet_forward.7} parent=0 // pred_check_branch
    %23 = sbr.rel (0) target = $region17
  $region16: #{clofnet_forward.7} parent=0 // pred_region
    _
  $region17: #{clofnet_forward.7} parent=0 // pred_fallthru
    _
  // Predicated region
  $region18: #{clofnet_forward.7} parent=0 // pred_check
    _
  $region19: #{clofnet_forward.7} parent=0 // pred_check_branch
    %25 = sbr.rel (0) target = $region21
  $region20: #{clofnet_forward.7} parent=0 // pred_region
    _
  $region21: #{clofnet_forward.7} parent=0 // pred_fallthru
    _
  // Predicated region
  $region22: #{clofnet_forward.7} parent=0 // pred_check
    _
  $region23: #{clofnet_forward.7} parent=0 // pred_check_branch
    %27 = sbr.rel (0) target = $region25
  $region24: #{clofnet_forward.7} parent=0 // pred_region
    _
  $region25: #{clofnet_forward.7} parent=0 // pred_fallthru
    _
  // Predicated region
  $region26: #{clofnet_forward.7} parent=0 // pred_check
    _
  $region27: #{clofnet_forward.7} parent=0 // pred_check_branch
    %29 = sbr.rel (0) target = $region29
  $region28: #{clofnet_forward.7} parent=0 // pred_region
    _
  $region29: #{clofnet_forward.7} parent=0 // pred_fallthru
    _
  // Predicated region
  $region30: #{clofnet_forward.7} parent=0 // pred_check
    _
  $region31: #{clofnet_forward.7} parent=0 // pred_check_branch
    %31 = sbr.rel (0) target = $region33
  $region32: #{clofnet_forward.7} parent=0 // pred_region
    _
  $region33: #{clofnet_forward.7} parent=0 // pred_fallthru
    _
  %v32 = vld [vmem:[%s0] sm:$0xff]
  %v33 = vld [vmem:[%s0 + $0x8] sm:$0xff]
  %v34 = vld [vmem:[%s1] sm:$0xff]
  %v35 = vld [vmem:[%s1 + $0x8] sm:$0xff]
  %v36 = vld [vmem:[%s1 + $0x10] sm:$0xff]
  %v37 = vld [vmem:[%s1 + $0x18] sm:$0xff]
  %v38 = vld [vmem:[%s2] sm:$0x1]
  %v40 = vlaneseq
  %v41 = vshrl.u32 %v40, 7
  %v42 = vsub.s32 0, %v41
  %v43 = vrot.slane %v38, %v42
  %vm45 = vcmask 261120
  %v47 = vsel %vm45, %v32, 0
  %v50 = vsel %vm45, %v33, 0
  %52 = vmatprep.subr.mxu0 0.0
  %53 = vmatpush1.msra.mxu0 0.0
  %54 = vmatprep.subr.mxu0 0.0
  %55 = vmatpush1.msra.mxu0 0.0
  %56 = vmatprep.subr.mxu0 0.0
  %57 = vmatpush1.msra.mxu0 0.0
  %58 = vmatprep.subr.mxu0 0.0
  %59 = vmatpush1.msra.mxu0 0.0
  %60 = vmatprep.subr.mxu0 0.0
  %61 = vmatpush1.msra.mxu0 0.0
  %62 = vmatprep.subr.mxu0 0.0
  %63 = vmatpush1.msra.mxu0 0.0
  %64 = vmatprep.subr.mxu0 0.0
  %65 = vmatpush1.msra.mxu0 0.0
  %66 = vmatprep.subr.mxu0 0.0
  %67 = vmatpush1.msra.mxu0 0.0
  %68 = vmatprep.subr.mxu0 0.0
  %69 = vmatpush1.msra.mxu0 0.0
  %70 = vmatprep.subr.mxu0 0.0
  %71 = vmatpush1.msra.mxu0 0.0
  %72 = vmatprep.subr.mxu0 0.0
  %73 = vmatpush1.msra.mxu0 0.0
  %74 = vmatprep.subr.mxu0 0.0
  %75 = vmatpush1.msra.mxu0 0.0
  %76 = vmatprep.subr.mxu0 0.0
  %77 = vmatpush1.msra.mxu0 %v37
  %78 = vmatprep.subr.mxu0 0.0
  %79 = vmatpush1.msra.mxu0 %v36
  %80 = vmatprep.subr.mxu0 0.0
  %81 = vmatpush1.msra.mxu0 %v35
  %82 = vmatprep.subr.mxu0 0.0
  %83 = vmatpush1.msra.mxu0 %v34
  %84 = vmatprep.subr.mxu0 0.0
  %85 = vmatpush2.msra.mxu0 0.0
  %86 = vmatprep.subr.mxu0 0.0
  %87 = vmatpush2.msra.mxu0 0.0
  %88 = vmatprep.subr.mxu0 0.0
  %89 = vmatpush2.msra.mxu0 0.0
  %90 = vmatprep.subr.mxu0 0.0
  %91 = vmatpush2.msra.mxu0 0.0
  %92 = vmatprep.subr.mxu0 0.0
  %93 = vmatpush2.msra.mxu0 0.0
  %94 = vmatprep.subr.mxu0 0.0
  %95 = vmatpush2.msra.mxu0 0.0
  %96 = vmatprep.subr.mxu0 0.0
  %97 = vmatpush2.msra.mxu0 0.0
  %98 = vmatprep.subr.mxu0 0.0
  %99 = vmatpush2.msra.mxu0 0.0
  %100 = vmatprep.subr.mxu0 0.0
  %101 = vmatpush2.msra.mxu0 0.0
  %102 = vmatprep.subr.mxu0 0.0
  %103 = vmatpush2.msra.mxu0 0.0
  %104 = vmatprep.subr.mxu0 0.0
  %105 = vmatpush2.msra.mxu0 0.0
  %106 = vmatprep.subr.mxu0 0.0
  %107 = vmatpush2.msra.mxu0 0.0
  %108 = vmatprep.subr.mxu0 0.0
  %109 = vmatpush2.msra.mxu0 0.0
  %110 = vmatprep.subr.mxu0 0.0
  %111 = vmatpush2.msra.mxu0 0.0
  %112 = vmatprep.subr.mxu0 0.0
  %113 = vmatpush2.msra.mxu0 0.0
  %114 = vmatprep.subr.mxu0 0.0
  %115 = vmatpush2.msra.mxu0 0.0
  %116 = vmatprep.mubr.f32.mxu0 0.0
  %117 = vmatmul.mubr.f32.gmra.mxu0 %v47
  %v118 = vpop.f32.mrf.mxu0
  %v119 = vadd.f32 %v43, %v118
  %v120 = vpop.f32.mrf.mxu0
  %121 = vmatprep.mubr.f32.mxu0 0.0
  %122 = vmatmul.mubr.f32.gmra.mxu0 %v50
  %v123 = vpop.f32.mrf.mxu0
  %v124 = vadd.f32 %v43, %v123
  %v125 = vpop.f32.mrf.mxu0
  %126 = vdwg.mxu0
  %v127 = vmul.f32 %v119, 0.17677669
  %v128 = vmul.f32 %v124, 0.17677669
  %v129 = vld [vmem:[%s3] sm:$0xff]
  %v130 = vld [vmem:[%s3 + $0x8] sm:$0xff]
  %v131 = vld [vmem:[%s3 + $0x10] sm:$0xff]
  %v132 = vld [vmem:[%s3 + $0x18] sm:$0xff]
  %v133 = vld [vmem:[%s4] sm:$0x1]
  %v135 = vlaneseq
  %v136 = vshrl.u32 %v135, 7
  %v137 = vsub.s32 0, %v136
  %v138 = vrot.slane %v133, %v137
  %140 = vmatprep.subr.mxu0 0.0
  %141 = vmatpush1.msra.mxu0 0.0
  %142 = vmatprep.subr.mxu0 0.0
  %143 = vmatpush1.msra.mxu0 0.0
  %144 = vmatprep.subr.mxu0 0.0
  %145 = vmatpush1.msra.mxu0 0.0
  %146 = vmatprep.subr.mxu0 0.0
  %147 = vmatpush1.msra.mxu0 0.0
  %148 = vmatprep.subr.mxu0 0.0
  %149 = vmatpush1.msra.mxu0 0.0
  %150 = vmatprep.subr.mxu0 0.0
  %151 = vmatpush1.msra.mxu0 0.0
  %152 = vmatprep.subr.mxu0 0.0
  %153 = vmatpush1.msra.mxu0 0.0
  %154 = vmatprep.subr.mxu0 0.0
  %155 = vmatpush1.msra.mxu0 0.0
  %156 = vmatprep.subr.mxu0 0.0
  %157 = vmatpush1.msra.mxu0 0.0
  %158 = vmatprep.subr.mxu0 0.0
  %159 = vmatpush1.msra.mxu0 0.0
  %160 = vmatprep.subr.mxu0 0.0
  %161 = vmatpush1.msra.mxu0 0.0
  %162 = vmatprep.subr.mxu0 0.0
  %163 = vmatpush1.msra.mxu0 0.0
  %164 = vmatprep.subr.mxu0 0.0
  %165 = vmatpush1.msra.mxu0 %v132
  %166 = vmatprep.subr.mxu0 0.0
  %167 = vmatpush1.msra.mxu0 %v131
  %168 = vmatprep.subr.mxu0 0.0
  %169 = vmatpush1.msra.mxu0 %v130
  %170 = vmatprep.subr.mxu0 0.0
  %171 = vmatpush1.msra.mxu0 %v129
  %172 = vmatprep.subr.mxu0 0.0
  %173 = vmatpush2.msra.mxu0 0.0
  %174 = vmatprep.subr.mxu0 0.0
  %175 = vmatpush2.msra.mxu0 0.0
  %176 = vmatprep.subr.mxu0 0.0
  %177 = vmatpush2.msra.mxu0 0.0
  %178 = vmatprep.subr.mxu0 0.0
  %179 = vmatpush2.msra.mxu0 0.0
  %180 = vmatprep.subr.mxu0 0.0
  %181 = vmatpush2.msra.mxu0 0.0
  %182 = vmatprep.subr.mxu0 0.0
  %183 = vmatpush2.msra.mxu0 0.0
  %184 = vmatprep.subr.mxu0 0.0
  %185 = vmatpush2.msra.mxu0 0.0
  %186 = vmatprep.subr.mxu0 0.0
  %187 = vmatpush2.msra.mxu0 0.0
  %188 = vmatprep.subr.mxu0 0.0
  %189 = vmatpush2.msra.mxu0 0.0
  %190 = vmatprep.subr.mxu0 0.0
  %191 = vmatpush2.msra.mxu0 0.0
  %192 = vmatprep.subr.mxu0 0.0
  %193 = vmatpush2.msra.mxu0 0.0
  %194 = vmatprep.subr.mxu0 0.0
  %195 = vmatpush2.msra.mxu0 0.0
  %196 = vmatprep.subr.mxu0 0.0
  %197 = vmatpush2.msra.mxu0 0.0
  %198 = vmatprep.subr.mxu0 0.0
  %199 = vmatpush2.msra.mxu0 0.0
  %200 = vmatprep.subr.mxu0 0.0
  %201 = vmatpush2.msra.mxu0 0.0
  %202 = vmatprep.subr.mxu0 0.0
  %203 = vmatpush2.msra.mxu0 0.0
  %204 = vmatprep.mubr.f32.mxu0 0.0
  %205 = vmatmul.mubr.f32.gmra.mxu0 %v47
  %v206 = vpop.f32.mrf.mxu0
  %v207 = vadd.f32 %v138, %v206
  %v208 = vpop.f32.mrf.mxu0
  %209 = vmatprep.mubr.f32.mxu0 0.0
  %210 = vmatmul.mubr.f32.gmra.mxu0 %v50
  %v211 = vpop.f32.mrf.mxu0
  %v212 = vadd.f32 %v138, %v211
  %v213 = vpop.f32.mrf.mxu0
  %214 = vdwg.mxu0
  %v215 = vld [vmem:[%s5] sm:$0xff]
  %v216 = vld [vmem:[%s5 + $0x8] sm:$0xff]
  %v217 = vld [vmem:[%s5 + $0x10] sm:$0xff]
  %v218 = vld [vmem:[%s5 + $0x18] sm:$0xff]
  %v219 = vld [vmem:[%s6] sm:$0x1]
  %v221 = vlaneseq
  %v222 = vshrl.u32 %v221, 7
  %v223 = vsub.s32 0, %v222
  %v224 = vrot.slane %v219, %v223
  %226 = vmatprep.subr.mxu0 0.0
  %227 = vmatpush1.msra.mxu0 0.0
  %228 = vmatprep.subr.mxu0 0.0
  %229 = vmatpush1.msra.mxu0 0.0
  %230 = vmatprep.subr.mxu0 0.0
  %231 = vmatpush1.msra.mxu0 0.0
  %232 = vmatprep.subr.mxu0 0.0
  %233 = vmatpush1.msra.mxu0 0.0
  %234 = vmatprep.subr.mxu0 0.0
  %235 = vmatpush1.msra.mxu0 0.0
  %236 = vmatprep.subr.mxu0 0.0
  %237 = vmatpush1.msra.mxu0 0.0
  %238 = vmatprep.subr.mxu0 0.0
  %239 = vmatpush1.msra.mxu0 0.0
  %240 = vmatprep.subr.mxu0 0.0
  %241 = vmatpush1.msra.mxu0 0.0
  %242 = vmatprep.subr.mxu0 0.0
  %243 = vmatpush1.msra.mxu0 0.0
  %244 = vmatprep.subr.mxu0 0.0
  %245 = vmatpush1.msra.mxu0 0.0
  %246 = vmatprep.subr.mxu0 0.0
  %247 = vmatpush1.msra.mxu0 0.0
  %248 = vmatprep.subr.mxu0 0.0
  %249 = vmatpush1.msra.mxu0 0.0
  %250 = vmatprep.subr.mxu0 0.0
  %251 = vmatpush1.msra.mxu0 %v218
  %252 = vmatprep.subr.mxu0 0.0
  %253 = vmatpush1.msra.mxu0 %v217
  %254 = vmatprep.subr.mxu0 0.0
  %255 = vmatpush1.msra.mxu0 %v216
  %256 = vmatprep.subr.mxu0 0.0
  %257 = vmatpush1.msra.mxu0 %v215
  %258 = vmatprep.subr.mxu0 0.0
  %259 = vmatpush2.msra.mxu0 0.0
  %260 = vmatprep.subr.mxu0 0.0
  %261 = vmatpush2.msra.mxu0 0.0
  %262 = vmatprep.subr.mxu0 0.0
  %263 = vmatpush2.msra.mxu0 0.0
  %264 = vmatprep.subr.mxu0 0.0
  %265 = vmatpush2.msra.mxu0 0.0
  %266 = vmatprep.subr.mxu0 0.0
  %267 = vmatpush2.msra.mxu0 0.0
  %268 = vmatprep.subr.mxu0 0.0
  %269 = vmatpush2.msra.mxu0 0.0
  %270 = vmatprep.subr.mxu0 0.0
  %271 = vmatpush2.msra.mxu0 0.0
  %272 = vmatprep.subr.mxu0 0.0
  %273 = vmatpush2.msra.mxu0 0.0
  %274 = vmatprep.subr.mxu0 0.0
  %275 = vmatpush2.msra.mxu0 0.0
  %276 = vmatprep.subr.mxu0 0.0
  %277 = vmatpush2.msra.mxu0 0.0
  %278 = vmatprep.subr.mxu0 0.0
  %279 = vmatpush2.msra.mxu0 0.0
  %280 = vmatprep.subr.mxu0 0.0
  %281 = vmatpush2.msra.mxu0 0.0
  %282 = vmatprep.subr.mxu0 0.0
  %283 = vmatpush2.msra.mxu0 0.0
  %284 = vmatprep.subr.mxu0 0.0
  %285 = vmatpush2.msra.mxu0 0.0
  %286 = vmatprep.subr.mxu0 0.0
  %287 = vmatpush2.msra.mxu0 0.0
  %288 = vmatprep.subr.mxu0 0.0
  %289 = vmatpush2.msra.mxu0 0.0
  %290 = vmatprep.mubr.f32.mxu0 0.0
  %291 = vmatmul.mubr.f32.gmra.mxu0 %v47
  %v292 = vpop.f32.mrf.mxu0
  %v293 = vadd.f32 %v224, %v292
  %v294 = vpop.f32.mrf.mxu0
  %295 = vmatprep.mubr.f32.mxu0 0.0
  %296 = vmatmul.mubr.f32.gmra.mxu0 %v50
  %v297 = vpop.f32.mrf.mxu0
  %v298 = vadd.f32 %v224, %v297
  %v299 = vpop.f32.mrf.mxu0
  %300 = vdwg.mxu0
  %v301 = vsel %vm45, %v293, 0.0
  %302 = vadd.xlane.f32.xlu0 %v301
  %v303 = vpop.xlane.xlu0 %302
  %v304 = vsel %vm45, %v298, 0.0
  %305 = vadd.xlane.f32.xlu0 %v304
  %v306 = vpop.xlane.xlu0 %305
  %v307 = vrcp.pop 32.0
  %v308 = vmul.f32 %v303, %v307
  %v309 = vmul.f32 %v306, %v307
  %v310 = vsub.f32 %v293, %v308
  %v311 = vsub.f32 %v298, %v309
  %v312 = vmul.f32 %v310, %v310
  %v313 = vmul.f32 %v311, %v311
  %v314 = vsel %vm45, %v312, 0.0
  %315 = vadd.xlane.f32.xlu0 %v314
  %v316 = vpop.xlane.xlu0 %315
  %v317 = vsel %vm45, %v313, 0.0
  %318 = vadd.xlane.f32.xlu0 %v317
  %v319 = vpop.xlane.xlu0 %318
  %v320 = vmul.f32 %v316, %v307
  %v321 = vmul.f32 %v319, %v307
  %v322 = vadd.f32 %v320, 1e-05
  %v323 = vadd.f32 %v321, 1e-05
  %v324 = vrsqrt.pop %v322
  %v325 = vrsqrt.pop %v323
  %v326 = vmul.f32 %v310, %v324
  %v327 = vmul.f32 %v311, %v325
  %v328 = vxor.u32 %v326, 2147483648
  %v329 = vxor.u32 %v327, 2147483648
  %v330 = vmul.f32 %v328, 1.442695
  %v331 = vpow.pop %v330
  %v332 = vmul.f32 %v329, 1.442695
  %v333 = vpow.pop %v332
  %v334 = vadd.f32 %v331, 1.0
  %v335 = vadd.f32 %v333, 1.0
  %v336 = vrcp.pop %v334
  %v337 = vmul.f32 1.0, %v336
  %v338 = vrcp.pop %v335
  %v339 = vmul.f32 1.0, %v338
  %v340 = vmul.f32 %v326, %v337
  %v341 = vmul.f32 %v327, %v339
  %342 = vst.msk [vmem:[%s10] sm:$0xff] %vm45, %v340
  %343 = vst.msk [vmem:[%s10 + $0x8] sm:$0xff] %vm45, %v341
  %v345 = vsel %vm45, %v127, 0
  %v348 = vsel %vm45, %v128, 0
  %v351 = vsel %vm45, %v207, 0
  %v354 = vsel %vm45, %v212, 0
  %356 = vmatprep.subr.mxu0 0.0
  %357 = vmatpush1.xpose.msra.mxu0 0.0
  %358 = vmatprep.subr.mxu0 0.0
  %359 = vmatpush1.xpose.msra.mxu0 0.0
  %360 = vmatprep.subr.mxu0 0.0
  %361 = vmatpush1.xpose.msra.mxu0 0.0
  %362 = vmatprep.subr.mxu0 0.0
  %363 = vmatpush1.xpose.msra.mxu0 0.0
  %364 = vmatprep.subr.mxu0 0.0
  %365 = vmatpush1.xpose.msra.mxu0 0.0
  %366 = vmatprep.subr.mxu0 0.0
  %367 = vmatpush1.xpose.msra.mxu0 0.0
  %368 = vmatprep.subr.mxu0 0.0
  %369 = vmatpush1.xpose.msra.mxu0 0.0
  %370 = vmatprep.subr.mxu0 0.0
  %371 = vmatpush1.xpose.msra.mxu0 0.0
  %372 = vmatprep.subr.mxu0 0.0
  %373 = vmatpush1.xpose.msra.mxu0 0.0
  %374 = vmatprep.subr.mxu0 0.0
  %375 = vmatpush1.xpose.msra.mxu0 0.0
  %376 = vmatprep.subr.mxu0 0.0
  %377 = vmatpush1.xpose.msra.mxu0 0.0
  %378 = vmatprep.subr.mxu0 0.0
  %379 = vmatpush1.xpose.msra.mxu0 0.0
  %380 = vmatprep.subr.mxu0 0.0
  %381 = vmatpush1.xpose.msra.mxu0 0.0
  %382 = vmatprep.subr.mxu0 0.0
  %383 = vmatpush1.xpose.msra.mxu0 0.0
  %384 = vmatprep.subr.mxu0 0.0
  %385 = vmatpush1.xpose.msra.mxu0 %v354
  %386 = vmatprep.subr.mxu0 0.0
  %387 = vmatpush1.xpose.msra.mxu0 %v351
  %388 = vmatprep.subr.mxu0 0.0
  %389 = vmatpush2.xpose.msra.mxu0 0.0
  %390 = vmatprep.subr.mxu0 0.0
  %391 = vmatpush2.xpose.msra.mxu0 0.0
  %392 = vmatprep.subr.mxu0 0.0
  %393 = vmatpush2.xpose.msra.mxu0 0.0
  %394 = vmatprep.subr.mxu0 0.0
  %395 = vmatpush2.xpose.msra.mxu0 0.0
  %396 = vmatprep.subr.mxu0 0.0
  %397 = vmatpush2.xpose.msra.mxu0 0.0
  %398 = vmatprep.subr.mxu0 0.0
  %399 = vmatpush2.xpose.msra.mxu0 0.0
  %400 = vmatprep.subr.mxu0 0.0
  %401 = vmatpush2.xpose.msra.mxu0 0.0
  %402 = vmatprep.subr.mxu0 0.0
  %403 = vmatpush2.xpose.msra.mxu0 0.0
  %404 = vmatprep.subr.mxu0 0.0
  %405 = vmatpush2.xpose.msra.mxu0 0.0
  %406 = vmatprep.subr.mxu0 0.0
  %407 = vmatpush2.xpose.msra.mxu0 0.0
  %408 = vmatprep.subr.mxu0 0.0
  %409 = vmatpush2.xpose.msra.mxu0 0.0
  %410 = vmatprep.subr.mxu0 0.0
  %411 = vmatpush2.xpose.msra.mxu0 0.0
  %412 = vmatprep.subr.mxu0 0.0
  %413 = vmatpush2.xpose.msra.mxu0 0.0
  %414 = vmatprep.subr.mxu0 0.0
  %415 = vmatpush2.xpose.msra.mxu0 0.0
  %416 = vmatprep.subr.mxu0 0.0
  %417 = vmatpush2.xpose.msra.mxu0 0.0
  %418 = vmatprep.subr.mxu0 0.0
  %419 = vmatpush2.xpose.msra.mxu0 0.0
  %420 = vmatprep.mubr.f32.mxu0 0.0
  %421 = vmatmul.mubr.f32.gmra.mxu0 %v345
  %v422 = vpop.f32.mrf.mxu0
  %v423 = vadd.f32 0.0, %v422
  %v424 = vpop.f32.mrf.mxu0
  %425 = vmatprep.mubr.f32.mxu0 0.0
  %426 = vmatmul.mubr.f32.gmra.mxu0 %v348
  %v427 = vpop.f32.mrf.mxu0
  %v428 = vadd.f32 0.0, %v427
  %v429 = vpop.f32.mrf.mxu0
  %430 = vdwg.mxu0
  %vm431 = vcmask 130048
  %432 = vst.msk [vmem:[%s8] sm:$0xff] %vm431, %v423
  %433 = vst.msk [vmem:[%s8 + $0x8] sm:$0xff] %vm431, %v428
  %v434 = vld [vmem:[%s7] sm:$0xff]
  %v435 = vld [vmem:[%s7 + $0x8] sm:$0xff]
  %v436 = vld [vmem:[%s7 + $0x10] sm:$0xff]
  %v437 = vld [vmem:[%s7 + $0x18] sm:$0xff]
  %v439 = vsel %vm45, %v434, 0
  %v442 = vsel %vm45, %v435, 0
  %v445 = vsel %vm45, %v436, 0
  %v448 = vsel %vm45, %v437, 0
  %450 = vmatprep.subr.mxu0 0.0
  %451 = vmatpush1.xpose.msra.mxu0 0.0
  %452 = vmatprep.subr.mxu0 0.0
  %453 = vmatpush1.xpose.msra.mxu0 0.0
  %454 = vmatprep.subr.mxu0 0.0
  %455 = vmatpush1.xpose.msra.mxu0 0.0
  %456 = vmatprep.subr.mxu0 0.0
  %457 = vmatpush1.xpose.msra.mxu0 0.0
  %458 = vmatprep.subr.mxu0 0.0
  %459 = vmatpush1.xpose.msra.mxu0 0.0
  %460 = vmatprep.subr.mxu0 0.0
  %461 = vmatpush1.xpose.msra.mxu0 0.0
  %462 = vmatprep.subr.mxu0 0.0
  %463 = vmatpush1.xpose.msra.mxu0 0.0
  %464 = vmatprep.subr.mxu0 0.0
  %465 = vmatpush1.xpose.msra.mxu0 0.0
  %466 = vmatprep.subr.mxu0 0.0
  %467 = vmatpush1.xpose.msra.mxu0 0.0
  %468 = vmatprep.subr.mxu0 0.0
  %469 = vmatpush1.xpose.msra.mxu0 0.0
  %470 = vmatprep.subr.mxu0 0.0
  %471 = vmatpush1.xpose.msra.mxu0 0.0
  %472 = vmatprep.subr.mxu0 0.0
  %473 = vmatpush1.xpose.msra.mxu0 0.0
  %474 = vmatprep.subr.mxu0 0.0
  %475 = vmatpush1.xpose.msra.mxu0 %v448
  %476 = vmatprep.subr.mxu0 0.0
  %477 = vmatpush1.xpose.msra.mxu0 %v445
  %478 = vmatprep.subr.mxu0 0.0
  %479 = vmatpush1.xpose.msra.mxu0 %v442
  %480 = vmatprep.subr.mxu0 0.0
  %481 = vmatpush1.xpose.msra.mxu0 %v439
  %482 = vmatprep.subr.mxu0 0.0
  %483 = vmatpush2.xpose.msra.mxu0 0.0
  %484 = vmatprep.subr.mxu0 0.0
  %485 = vmatpush2.xpose.msra.mxu0 0.0
  %486 = vmatprep.subr.mxu0 0.0
  %487 = vmatpush2.xpose.msra.mxu0 0.0
  %488 = vmatprep.subr.mxu0 0.0
  %489 = vmatpush2.xpose.msra.mxu0 0.0
  %490 = vmatprep.subr.mxu0 0.0
  %491 = vmatpush2.xpose.msra.mxu0 0.0
  %492 = vmatprep.subr.mxu0 0.0
  %493 = vmatpush2.xpose.msra.mxu0 0.0
  %494 = vmatprep.subr.mxu0 0.0
  %495 = vmatpush2.xpose.msra.mxu0 0.0
  %496 = vmatprep.subr.mxu0 0.0
  %497 = vmatpush2.xpose.msra.mxu0 0.0
  %498 = vmatprep.subr.mxu0 0.0
  %499 = vmatpush2.xpose.msra.mxu0 0.0
  %500 = vmatprep.subr.mxu0 0.0
  %501 = vmatpush2.xpose.msra.mxu0 0.0
  %502 = vmatprep.subr.mxu0 0.0
  %503 = vmatpush2.xpose.msra.mxu0 0.0
  %504 = vmatprep.subr.mxu0 0.0
  %505 = vmatpush2.xpose.msra.mxu0 0.0
  %506 = vmatprep.subr.mxu0 0.0
  %507 = vmatpush2.xpose.msra.mxu0 0.0
  %508 = vmatprep.subr.mxu0 0.0
  %509 = vmatpush2.xpose.msra.mxu0 0.0
  %510 = vmatprep.subr.mxu0 0.0
  %511 = vmatpush2.xpose.msra.mxu0 0.0
  %512 = vmatprep.subr.mxu0 0.0
  %513 = vmatpush2.xpose.msra.mxu0 0.0
  %514 = vmatprep.mubr.f32.mxu0 0.0
  %515 = vmatmul.mubr.f32.gmra.mxu0 %v345
  %v516 = vpop.f32.mrf.mxu0
  %v517 = vadd.f32 0.0, %v516
  %v518 = vpop.f32.mrf.mxu0
  %519 = vmatprep.mubr.f32.mxu0 0.0
  %520 = vmatmul.mubr.f32.gmra.mxu0 %v348
  %v521 = vpop.f32.mrf.mxu0
  %v522 = vadd.f32 0.0, %v521
  %v523 = vpop.f32.mrf.mxu0
  %524 = vdwg.mxu0
  %525 = vst.msk [vmem:[%s9] sm:$0xff] %vm45, %v517
  %526 = vst.msk [vmem:[%s9 + $0x8] sm:$0xff] %vm45, %v522
  // Predicated region
  $region34: #{clofnet_forward.7} parent=0 // pred_check
    _
  $region35: #{clofnet_forward.7} parent=0 // pred_check_branch
    %528 = sbr.rel (0) target = $region37
  $region36: #{clofnet_forward.7} parent=0 // pred_region
    _
  $region37: #{clofnet_forward.7} parent=0 // pred_fallthru
    _
  // Predicated region
  $region38: #{clofnet_forward.7} parent=0 // pred_check
    _
  $region39: #{clofnet_forward.7} parent=0 // pred_check_branch
    %530 = sbr.rel (0) target = $region41
  $region40: #{clofnet_forward.7} parent=0 // pred_region
    _
  $region41: #{clofnet_forward.7} parent=0 // pred_fallthru
    _
  // Predicated region
  $region42: #{clofnet_forward.7} parent=0 // pred_check
    _
  $region43: #{clofnet_forward.7} parent=0 // pred_check_branch
    %532 = sbr.rel (0) target = $region45
  $region44: #{clofnet_forward.7} parent=0 // pred_region
    _
  $region45: #{clofnet_forward.7} parent=0 // pred_fallthru
    _
  // Predicated region
  $region46: #{clofnet_forward.7} parent=0 // pred_check
    _
  $region47: #{clofnet_forward.7} parent=0 // pred_check_branch
    %534 = sbr.rel (0) target = $region49
  $region48: #{clofnet_forward.7} parent=0 // pred_region
    _
  $region49: #{clofnet_forward.7} parent=0 // pred_fallthru
    _
  // Predicated region
  $region50: #{clofnet_forward.7} parent=0 // pred_check
    _
  $region51: #{clofnet_forward.7} parent=0 // pred_check_branch
    %536 = sbr.rel (0) target = $region53
  $region52: #{clofnet_forward.7} parent=0 // pred_region
    _
  $region53: #{clofnet_forward.7} parent=0 // pred_fallthru
    _
  // Predicated region
  $region54: #{clofnet_forward.7} parent=0 // pred_check
    _
  $region55: #{clofnet_forward.7} parent=0 // pred_check_branch
    %538 = sbr.rel (0) target = $region57
  $region56: #{clofnet_forward.7} parent=0 // pred_region
    _
  $region57: #{clofnet_forward.7} parent=0 // pred_fallthru
    _

// kernel: clofnet_forward.8
$region0: #{clofnet_forward.8}
  #allocation0 [shape = 'u32[]', space=smem, size = 0x4, offset = 0x4, fixed_abs, tag = 'smem constant byte address 0x4 - core index']
  #allocation1 [shape = 'u32[144,128]{1,0:T(1,128)}', space=vmem, size = 0x12000, scoped, tag = 'internal scratch']
  %s0 = inlined_call_operand.vmem [shape: f32[16,16], index: 0, kind: input, shape index: {}]
  %s1 = inlined_call_operand.vmem [shape: f32[16,32], index: 1, kind: input, shape index: {}]
  %s2 = inlined_call_operand.vmem [shape: f32[16,16,32], index: 2, kind: input, shape index: {}]
  %s3 = inlined_call_operand.vmem [shape: f32[16,16,32], index: 3, kind: input, shape index: {}]
  %s4 = inlined_call_operand.vmem [shape: f32[16,3,16], index: 4, kind: input, shape index: {}]
  %s5 = inlined_call_operand.vmem [shape: f32[16,16], index: 5, kind: input, shape index: {}]
  %s6 = inlined_call_operand.vmem [shape: f32[16,32], index: 6, kind: input, shape index: {}]
  %s7 = inlined_call_operand.vmem [shape: f32[3,16,32], index: 7, kind: input, shape index: {}]
  %s8 = inlined_call_operand.vmem [shape: f32[16,32], index: 8, kind: input, shape index: {}]
  %s9 = inlined_call_operand.vmem [shape: f32[1,32], index: 9, kind: input, shape index: {}]
  %s10 = inlined_call_operand.vmem [shape: f32[16,32], index: 10, kind: output, shape index: {0}]
  %s11 = inlined_call_operand.vmem [shape: f32[3,16,32], index: 11, kind: output, shape index: {1}]
  %12 = xla_tuple %s10, %s11
  %s13 = sld [smem:[#allocation0]]
  $region58: #{clofnet_forward.8} parent=0
    _
  %s15 = ssub.s32 1, %s13
  %s16 = scalar_select 0, %s15, %s13
  // Predicated region
  $region2: #{clofnet_forward.8} parent=0 // pred_check
    _
  $region3: #{clofnet_forward.8} parent=0 // pred_check_branch
    %18 = sbr.rel (0) target = $region5
  $region4: #{clofnet_forward.8} parent=0 // pred_region
    _
  $region5: #{clofnet_forward.8} parent=0 // pred_fallthru
    _
  // Predicated region
  $region6: #{clofnet_forward.8} parent=0 // pred_check
    _
  $region7: #{clofnet_forward.8} parent=0 // pred_check_branch
    %20 = sbr.rel (0) target = $region9
  $region8: #{clofnet_forward.8} parent=0 // pred_region
    _
  $region9: #{clofnet_forward.8} parent=0 // pred_fallthru
    _
  // Predicated region
  $region10: #{clofnet_forward.8} parent=0 // pred_check
    _
  $region11: #{clofnet_forward.8} parent=0 // pred_check_branch
    %22 = sbr.rel (0) target = $region13
  $region12: #{clofnet_forward.8} parent=0 // pred_region
    _
  $region13: #{clofnet_forward.8} parent=0 // pred_fallthru
    _
  // Predicated region
  $region14: #{clofnet_forward.8} parent=0 // pred_check
    _
  $region15: #{clofnet_forward.8} parent=0 // pred_check_branch
    %24 = sbr.rel (0) target = $region17
  $region16: #{clofnet_forward.8} parent=0 // pred_region
    _
  $region17: #{clofnet_forward.8} parent=0 // pred_fallthru
    _
  // Predicated region
  $region18: #{clofnet_forward.8} parent=0 // pred_check
    _
  $region19: #{clofnet_forward.8} parent=0 // pred_check_branch
    %26 = sbr.rel (0) target = $region21
  $region20: #{clofnet_forward.8} parent=0 // pred_region
    _
  $region21: #{clofnet_forward.8} parent=0 // pred_fallthru
    _
  // Predicated region
  $region22: #{clofnet_forward.8} parent=0 // pred_check
    _
  $region23: #{clofnet_forward.8} parent=0 // pred_check_branch
    %28 = sbr.rel (0) target = $region25
  $region24: #{clofnet_forward.8} parent=0 // pred_region
    _
  $region25: #{clofnet_forward.8} parent=0 // pred_fallthru
    _
  // Predicated region
  $region26: #{clofnet_forward.8} parent=0 // pred_check
    _
  $region27: #{clofnet_forward.8} parent=0 // pred_check_branch
    %30 = sbr.rel (0) target = $region29
  $region28: #{clofnet_forward.8} parent=0 // pred_region
    _
  $region29: #{clofnet_forward.8} parent=0 // pred_fallthru
    _
  // Predicated region
  $region30: #{clofnet_forward.8} parent=0 // pred_check
    _
  $region31: #{clofnet_forward.8} parent=0 // pred_check_branch
    %32 = sbr.rel (0) target = $region33
  $region32: #{clofnet_forward.8} parent=0 // pred_region
    _
  $region33: #{clofnet_forward.8} parent=0 // pred_fallthru
    _
  // Predicated region
  $region34: #{clofnet_forward.8} parent=0 // pred_check
    _
  $region35: #{clofnet_forward.8} parent=0 // pred_check_branch
    %34 = sbr.rel (0) target = $region37
  $region36: #{clofnet_forward.8} parent=0 // pred_region
    _
  $region37: #{clofnet_forward.8} parent=0 // pred_fallthru
    _
  // Predicated region
  $region38: #{clofnet_forward.8} parent=0 // pred_check
    _
  $region39: #{clofnet_forward.8} parent=0 // pred_check_branch
    %36 = sbr.rel (0) target = $region41
  $region40: #{clofnet_forward.8} parent=0 // pred_region
    _
  $region41: #{clofnet_forward.8} parent=0 // pred_fallthru
    _
  %v37 = vld [vmem:[%s0] sm:$0xff]
  %v38 = vld [vmem:[%s0 + $0x8] sm:$0xff]
  %v39 = vld [vmem:[%s1] sm:$0xff]
  %v40 = vld [vmem:[%s1 + $0x8] sm:$0xff]
  %v41 = vld [vmem:[%s2] sm:$0xff]
  %v42 = vld [vmem:[%s2 + $0x8] sm:$0xff]
  %v43 = vld [vmem:[%s2 + $0x10] sm:$0xff]
  %v44 = vld [vmem:[%s2 + $0x18] sm:$0xff]
  %v45 = vld [vmem:[%s2 + $0x20] sm:$0xff]
  %v46 = vld [vmem:[%s2 + $0x28] sm:$0xff]
  %v47 = vld [vmem:[%s2 + $0x30] sm:$0xff]
  %v48 = vld [vmem:[%s2 + $0x38] sm:$0xff]
  %v49 = vld [vmem:[%s2 + $0x40] sm:$0xff]
  %v50 = vld [vmem:[%s2 + $0x48] sm:$0xff]
  %v51 = vld [vmem:[%s2 + $0x50] sm:$0xff]
  %v52 = vld [vmem:[%s2 + $0x58] sm:$0xff]
  %v53 = vld [vmem:[%s2 + $0x60] sm:$0xff]
  %v54 = vld [vmem:[%s2 + $0x68] sm:$0xff]
  %v55 = vld [vmem:[%s2 + $0x70] sm:$0xff]
  %v56 = vld [vmem:[%s2 + $0x78] sm:$0xff]
  %v57 = vld [vmem:[%s2 + $0x80] sm:$0xff]
  %v58 = vld [vmem:[%s2 + $0x88] sm:$0xff]
  %v59 = vld [vmem:[%s2 + $0x90] sm:$0xff]
  %v60 = vld [vmem:[%s2 + $0x98] sm:$0xff]
  %v61 = vld [vmem:[%s2 + $0xa0] sm:$0xff]
  %v62 = vld [vmem:[%s2 + $0xa8] sm:$0xff]
  %v63 = vld [vmem:[%s2 + $0xb0] sm:$0xff]
  %v64 = vld [vmem:[%s2 + $0xb8] sm:$0xff]
  %v65 = vld [vmem:[%s2 + $0xc0] sm:$0xff]
  %v66 = vld [vmem:[%s2 + $0xc8] sm:$0xff]
  %v67 = vld [vmem:[%s2 + $0xd0] sm:$0xff]
  %v68 = vld [vmem:[%s2 + $0xd8] sm:$0xff]
  %v69 = vld [vmem:[%s2 + $0xe0] sm:$0xff]
  %v70 = vld [vmem:[%s2 + $0xe8] sm:$0xff]
  %v71 = vld [vmem:[%s2 + $0xf0] sm:$0xff]
  %v72 = vld [vmem:[%s2 + $0xf8] sm:$0xff]
  %v73 = vld [vmem:[%s3] sm:$0xff]
  %v74 = vld [vmem:[%s3 + $0x8] sm:$0xff]
  %v75 = vld [vmem:[%s3 + $0x10] sm:$0xff]
  %v76 = vld [vmem:[%s3 + $0x18] sm:$0xff]
  %v77 = vld [vmem:[%s3 + $0x20] sm:$0xff]
  %v78 = vld [vmem:[%s3 + $0x28] sm:$0xff]
  %v79 = vld [vmem:[%s3 + $0x30] sm:$0xff]
  %v80 = vld [vmem:[%s3 + $0x38] sm:$0xff]
  %v81 = vld [vmem:[%s3 + $0x40] sm:$0xff]
  %v82 = vld [vmem:[%s3 + $0x48] sm:$0xff]
  %v83 = vld [vmem:[%s3 + $0x50] sm:$0xff]
  %v84 = vld [vmem:[%s3 + $0x58] sm:$0xff]
  %v85 = vld [vmem:[%s3 + $0x60] sm:$0xff]
  %v86 = vld [vmem:[%s3 + $0x68] sm:$0xff]
  %v87 = vld [vmem:[%s3 + $0x70] sm:$0xff]
  %v88 = vld [vmem:[%s3 + $0x78] sm:$0xff]
  %v89 = vld [vmem:[%s3 + $0x80] sm:$0xff]
  %v90 = vld [vmem:[%s3 + $0x88] sm:$0xff]
  %v91 = vld [vmem:[%s3 + $0x90] sm:$0xff]
  %v92 = vld [vmem:[%s3 + $0x98] sm:$0xff]
  %v93 = vld [vmem:[%s3 + $0xa0] sm:$0xff]
  %v94 = vld [vmem:[%s3 + $0xa8] sm:$0xff]
  %v95 = vld [vmem:[%s3 + $0xb0] sm:$0xff]
  %v96 = vld [vmem:[%s3 + $0xb8] sm:$0xff]
  %v97 = vld [vmem:[%s3 + $0xc0] sm:$0xff]
  %v98 = vld [vmem:[%s3 + $0xc8] sm:$0xff]
  %v99 = vld [vmem:[%s3 + $0xd0] sm:$0xff]
  %v100 = vld [vmem:[%s3 + $0xd8] sm:$0xff]
  %v101 = vld [vmem:[%s3 + $0xe0] sm:$0xff]
  %v102 = vld [vmem:[%s3 + $0xe8] sm:$0xff]
  %v103 = vld [vmem:[%s3 + $0xf0] sm:$0xff]
  %v104 = vld [vmem:[%s3 + $0xf8] sm:$0xff]
  %v105 = vld [vmem:[%s5] sm:$0xff]
  %v106 = vld [vmem:[%s5 + $0x8] sm:$0xff]
  %v107 = vld [vmem:[%s8] sm:$0xff]
  %v108 = vld [vmem:[%s8 + $0x8] sm:$0xff]
  %v111 = vcombine.high %v39, %v39
  %v113 = vunpack.c.l.s4 1966171168
  %v114 = vunpack.c.0.s8 %v113
  %v115 = vlaneseq
  %v116 = vshrl.u32 %v115, 7
  %v117 = vsub.s32 %v114, %v116
  %v118 = vrot.slane %v39, %v117
  %v120 = vunpack.c.l.s4 1966171168
  %v121 = vunpack.c.0.s8 %v120
  %v122 = vlaneseq
  %v123 = vshrl.u32 %v122, 7
  %v124 = vsub.s32 %v121, %v123
  %v125 = vrot.slane %v111, %v124
  %v126 = vcombine.high %v118, %v118
  %v127 = vcombine.high %v125, %v125
  %v129 = vunpack.c.l.s4 1966171168
  %v130 = vunpack.c.0.s8 %v129
  %v131 = vlaneseq
  %v132 = vshrl.u32 %v131, 7
  %v133 = vsub.s32 %v130, %v132
  %v134 = vrot.slane %v118, %v133
  %v136 = vunpack.c.l.s4 1966171168
  %v137 = vunpack.c.0.s8 %v136
  %v138 = vlaneseq
  %v139 = vshrl.u32 %v138, 7
  %v140 = vsub.s32 %v137, %v139
  %v141 = vrot.slane %v125, %v140
  %v143 = vunpack.c.l.s4 1966171168
  %v144 = vunpack.c.0.s8 %v143
  %v145 = vlaneseq
  %v146 = vshrl.u32 %v145, 7
  %v147 = vsub.s32 %v144, %v146
  %v148 = vrot.slane %v126, %v147
  %v150 = vunpack.c.l.s4 1966171168
  %v151 = vunpack.c.0.s8 %v150
  %v152 = vlaneseq
  %v153 = vshrl.u32 %v152, 7
  %v154 = vsub.s32 %v151, %v153
  %v155 = vrot.slane %v127, %v154
  %v156 = vcombine.high %v134, %v134
  %v157 = vcombine.high %v141, %v141
  %v158 = vcombine.high %v148, %v148
  %v159 = vcombine.high %v155, %v155
  %v160 = vcombine.high %v40, %v40
  %v162 = vunpack.c.l.s4 1966171168
  %v163 = vunpack.c.0.s8 %v162
  %v164 = vlaneseq
  %v165 = vshrl.u32 %v164, 7
  %v166 = vsub.s32 %v163, %v165
  %v167 = vrot.slane %v40, %v166
  %v169 = vunpack.c.l.s4 1966171168
  %v170 = vunpack.c.0.s8 %v169
  %v171 = vlaneseq
  %v172 = vshrl.u32 %v171, 7
  %v173 = vsub.s32 %v170, %v172
  %v174 = vrot.slane %v160, %v173
  %v175 = vcombine.high %v167, %v167
  %v176 = vcombine.high %v174, %v174
  %v178 = vunpack.c.l.s4 1966171168
  %v179 = vunpack.c.0.s8 %v178
  %v180 = vlaneseq
  %v181 = vshrl.u32 %v180, 7
  %v182 = vsub.s32 %v179, %v181
  %v183 = vrot.slane %v167, %v182
  %v185 = vunpack.c.l.s4 1966171168
  %v186 = vunpack.c.0.s8 %v185
  %v187 = vlaneseq
  %v188 = vshrl.u32 %v187, 7
  %v189 = vsub.s32 %v186, %v188
  %v190 = vrot.slane %v174, %v189
  %v192 = vunpack.c.l.s4 1966171168
  %v193 = vunpack.c.0.s8 %v192
  %v194 = vlaneseq
  %v195 = vshrl.u32 %v194, 7
  %v196 = vsub.s32 %v193, %v195
  %v197 = vrot.slane %v175, %v196
  %v199 = vunpack.c.l.s4 1966171168
  %v200 = vunpack.c.0.s8 %v199
  %v201 = vlaneseq
  %v202 = vshrl.u32 %v201, 7
  %v203 = vsub.s32 %v200, %v202
  %v204 = vrot.slane %v176, %v203
  %v205 = vcombine.high %v183, %v183
  %v206 = vcombine.high %v190, %v190
  %v207 = vcombine.high %v197, %v197
  %v208 = vcombine.high %v204, %v204
  %v209 = vlaneseq
  %v210 = vshrl.u32 %v209, 7
  %v211 = vsub.s32 0, %v210
  %v212 = vrot.slane %v134, %v211
  %v213 = vlaneseq
  %v214 = vshrl.u32 %v213, 7
  %v215 = vsub.s32 0, %v214
  %v216 = vrot.slane %v148, %v215
  %v217 = vlaneseq
  %v218 = vshrl.u32 %v217, 7
  %v219 = vsub.s32 0, %v218
  %v220 = vrot.slane %v156, %v219
  %v221 = vlaneseq
  %v222 = vshrl.u32 %v221, 7
  %v223 = vsub.s32 0, %v222
  %v224 = vrot.slane %v158, %v223
  %v225 = vlaneseq
  %v226 = vshrl.u32 %v225, 7
  %v227 = vsub.s32 0, %v226
  %v228 = vrot.slane %v141, %v227
  %v229 = vlaneseq
  %v230 = vshrl.u32 %v229, 7
  %v231 = vsub.s32 0, %v230
  %v232 = vrot.slane %v155, %v231
  %v233 = vlaneseq
  %v234 = vshrl.u32 %v233, 7
  %v235 = vsub.s32 0, %v234
  %v236 = vrot.slane %v157, %v235
  %v237 = vlaneseq
  %v238 = vshrl.u32 %v237, 7
  %v239 = vsub.s32 0, %v238
  %v240 = vrot.slane %v159, %v239
  %v241 = vlaneseq
  %v242 = vshrl.u32 %v241, 7
  %v243 = vsub.s32 0, %v242
  %v244 = vrot.slane %v183, %v243
  %v245 = vlaneseq
  %v246 = vshrl.u32 %v245, 7
  %v247 = vsub.s32 0, %v246
  %v248 = vrot.slane %v197, %v247
  %v249 = vlaneseq
  %v250 = vshrl.u32 %v249, 7
  %v251 = vsub.s32 0, %v250
  %v252 = vrot.slane %v205, %v251
  %v253 = vlaneseq
  %v254 = vshrl.u32 %v253, 7
  %v255 = vsub.s32 0, %v254
  %v256 = vrot.slane %v207, %v255
  %v257 = vlaneseq
  %v258 = vshrl.u32 %v257, 7
  %v259 = vsub.s32 0, %v258
  %v260 = vrot.slane %v190, %v259
  %v261 = vlaneseq
  %v262 = vshrl.u32 %v261, 7
  %v263 = vsub.s32 0, %v262
  %v264 = vrot.slane %v204, %v263
  %v265 = vlaneseq
  %v266 = vshrl.u32 %v265, 7
  %v267 = vsub.s32 0, %v266
  %v268 = vrot.slane %v206, %v267
  %v269 = vlaneseq
  %v270 = vshrl.u32 %v269, 7
  %v271 = vsub.s32 0, %v270
  %v272 = vrot.slane %v208, %v271
  %v289 = vmul.f32 %v41, %v212
  %v290 = vmul.f32 %v42, %v212
  %v291 = vmul.f32 %v43, %v216
  %v292 = vmul.f32 %v44, %v216
  %v293 = vmul.f32 %v45, %v220
  %v294 = vmul.f32 %v46, %v220
  %v295 = vmul.f32 %v47, %v224
  %v296 = vmul.f32 %v48, %v224
  %v297 = vmul.f32 %v49, %v228
  %v298 = vmul.f32 %v50, %v228
  %v299 = vmul.f32 %v51, %v232
  %v300 = vmul.f32 %v52, %v232
  %v301 = vmul.f32 %v53, %v236
  %v302 = vmul.f32 %v54, %v236
  %v303 = vmul.f32 %v55, %v240
  %v304 = vmul.f32 %v56, %v240
  %v305 = vmul.f32 %v57, %v244
  %v306 = vmul.f32 %v58, %v244
  %v307 = vmul.f32 %v59, %v248
  %v308 = vmul.f32 %v60, %v248
  %v309 = vmul.f32 %v61, %v252
  %v310 = vmul.f32 %v62, %v252
  %v311 = vmul.f32 %v63, %v256
  %v312 = vmul.f32 %v64, %v256
  %v313 = vmul.f32 %v65, %v260
  %v314 = vmul.f32 %v66, %v260
  %v315 = vmul.f32 %v67, %v264
  %v316 = vmul.f32 %v68, %v264
  %v317 = vmul.f32 %v69, %v268
  %v318 = vmul.f32 %v70, %v268
  %v319 = vmul.f32 %v71, %v272
  %v320 = vmul.f32 %v72, %v272
  %vm321 = vcmask 261120
  %v322 = vsel %vm321, %v289, 0.0
  %323 = vadd.xlane.f32.xlu0 %v322
  %v324 = vpop.xlane.xlu0 %323
  %v325 = vsel %vm321, %v290, 0.0
  %326 = vadd.xlane.f32.xlu0 %v325
  %v327 = vpop.xlane.xlu0 %326
  %v328 = vsel %vm321, %v291, 0.0
  %329 = vadd.xlane.f32.xlu0 %v328
  %v330 = vpop.xlane.xlu0 %329
  %v331 = vsel %vm321, %v292, 0.0
  %332 = vadd.xlane.f32.xlu0 %v331
  %v333 = vpop.xlane.xlu0 %332
  %v334 = vsel %vm321, %v293, 0.0
  %335 = vadd.xlane.f32.xlu0 %v334
  %v336 = vpop.xlane.xlu0 %335
  %v337 = vsel %vm321, %v294, 0.0
  %338 = vadd.xlane.f32.xlu0 %v337
  %v339 = vpop.xlane.xlu0 %338
  %v340 = vsel %vm321, %v295, 0.0
  %341 = vadd.xlane.f32.xlu0 %v340
  %v342 = vpop.xlane.xlu0 %341
  %v343 = vsel %vm321, %v296, 0.0
  %344 = vadd.xlane.f32.xlu0 %v343
  %v345 = vpop.xlane.xlu0 %344
  %v346 = vsel %vm321, %v297, 0.0
  %347 = vadd.xlane.f32.xlu0 %v346
  %v348 = vpop.xlane.xlu0 %347
  %v349 = vsel %vm321, %v298, 0.0
  %350 = vadd.xlane.f32.xlu0 %v349
  %v351 = vpop.xlane.xlu0 %350
  %v352 = vsel %vm321, %v299, 0.0
  %353 = vadd.xlane.f32.xlu0 %v352
  %v354 = vpop.xlane.xlu0 %353
  %v355 = vsel %vm321, %v300, 0.0
  %356 = vadd.xlane.f32.xlu0 %v355
  %v357 = vpop.xlane.xlu0 %356
  %v358 = vsel %vm321, %v301, 0.0
  %359 = vadd.xlane.f32.xlu0 %v358
  %v360 = vpop.xlane.xlu0 %359
  %v361 = vsel %vm321, %v302, 0.0
  %362 = vadd.xlane.f32.xlu0 %v361
  %v363 = vpop.xlane.xlu0 %362
  %v364 = vsel %vm321, %v303, 0.0
  %365 = vadd.xlane.f32.xlu0 %v364
  %v366 = vpop.xlane.xlu0 %365
  %v367 = vsel %vm321, %v304, 0.0
  %368 = vadd.xlane.f32.xlu0 %v367
  %v369 = vpop.xlane.xlu0 %368
  %v370 = vsel %vm321, %v305, 0.0
  %371 = vadd.xlane.f32.xlu0 %v370
  %v372 = vpop.xlane.xlu0 %371
  %v373 = vsel %vm321, %v306, 0.0
  %374 = vadd.xlane.f32.xlu0 %v373
  %v375 = vpop.xlane.xlu0 %374
  %v376 = vsel %vm321, %v307, 0.0
  %377 = vadd.xlane.f32.xlu0 %v376
  %v378 = vpop.xlane.xlu0 %377
  %v379 = vsel %vm321, %v308, 0.0
  %380 = vadd.xlane.f32.xlu0 %v379
  %v381 = vpop.xlane.xlu0 %380
  %v382 = vsel %vm321, %v309, 0.0
  %383 = vadd.xlane.f32.xlu0 %v382
  %v384 = vpop.xlane.xlu0 %383
  %v385 = vsel %vm321, %v310, 0.0
  %386 = vadd.xlane.f32.xlu0 %v385
  %v387 = vpop.xlane.xlu0 %386
  %v388 = vsel %vm321, %v311, 0.0
  %389 = vadd.xlane.f32.xlu0 %v388
  %v390 = vpop.xlane.xlu0 %389
  %v391 = vsel %vm321, %v312, 0.0
  %392 = vadd.xlane.f32.xlu0 %v391
  %v393 = vpop.xlane.xlu0 %392
  %v394 = vsel %vm321, %v313, 0.0
  %395 = vadd.xlane.f32.xlu0 %v394
  %v396 = vpop.xlane.xlu0 %395
  %v397 = vsel %vm321, %v314, 0.0
  %398 = vadd.xlane.f32.xlu0 %v397
  %v399 = vpop.xlane.xlu0 %398
  %v400 = vsel %vm321, %v315, 0.0
  %401 = vadd.xlane.f32.xlu0 %v400
  %v402 = vpop.xlane.xlu0 %401
  %v403 = vsel %vm321, %v316, 0.0
  %404 = vadd.xlane.f32.xlu0 %v403
  %v405 = vpop.xlane.xlu0 %404
  %v406 = vsel %vm321, %v317, 0.0
  %407 = vadd.xlane.f32.xlu0 %v406
  %v408 = vpop.xlane.xlu0 %407
  %v409 = vsel %vm321, %v318, 0.0
  %410 = vadd.xlane.f32.xlu0 %v409
  %v411 = vpop.xlane.xlu0 %410
  %v412 = vsel %vm321, %v319, 0.0
  %413 = vadd.xlane.f32.xlu0 %v412
  %v414 = vpop.xlane.xlu0 %413
  %v415 = vsel %vm321, %v320, 0.0
  %416 = vadd.xlane.f32.xlu0 %v415
  %v417 = vpop.xlane.xlu0 %416
  %vm418 = vcmp.gt.f32.partialorder %v105, 0.0
  %vm419 = vcmp.gt.f32.partialorder %v106, 0.0
  %v452 = vlaneseq
  %v453 = vand.u32 %v452, 127
  %v454 = vlaneseq
  %v455 = vshrl.u32 %v454, 7
  %v456 = vsub.s32 %v453, %v455
  %v457 = vrot.slane %v324, %v456
  %v458 = vadd.s32 %v453, 4294967288
  %v459 = vlaneseq
  %v460 = vshrl.u32 %v459, 7
  %v461 = vsub.s32 %v458, %v460
  %v462 = vrot.slane %v327, %v461
  %vm463 = vcmask 130112
  %v464 = vsel %vm463, %v462, %v457
  %v465 = vlaneseq
  %v466 = vshrl.u32 %v465, 7
  %v467 = vsub.s32 %v453, %v466
  %v468 = vrot.slane %v330, %v467
  %v469 = vlaneseq
  %v470 = vshrl.u32 %v469, 7
  %v471 = vsub.s32 %v458, %v470
  %v472 = vrot.slane %v333, %v471
  %v473 = vsel %vm463, %v472, %v468
  %v474 = vlaneseq
  %v475 = vshrl.u32 %v474, 7
  %v476 = vsub.s32 %v453, %v475
  %v477 = vrot.slane %v336, %v476
  %v478 = vlaneseq
  %v479 = vshrl.u32 %v478, 7
  %v480 = vsub.s32 %v458, %v479
  %v481 = vrot.slane %v339, %v480
  %v482 = vsel %vm463, %v481, %v477
  %v483 = vlaneseq
  %v484 = vshrl.u32 %v483, 7
  %v485 = vsub.s32 %v453, %v484
  %v486 = vrot.slane %v342, %v485
  %v487 = vlaneseq
  %v488 = vshrl.u32 %v487, 7
  %v489 = vsub.s32 %v458, %v488
  %v490 = vrot.slane %v345, %v489
  %v491 = vsel %vm463, %v490, %v486
  %v492 = vlaneseq
  %v493 = vshrl.u32 %v492, 7
  %v494 = vsub.s32 %v453, %v493
  %v495 = vrot.slane %v348, %v494
  %v496 = vlaneseq
  %v497 = vshrl.u32 %v496, 7
  %v498 = vsub.s32 %v458, %v497
  %v499 = vrot.slane %v351, %v498
  %v500 = vsel %vm463, %v499, %v495
  %v501 = vlaneseq
  %v502 = vshrl.u32 %v501, 7
  %v503 = vsub.s32 %v453, %v502
  %v504 = vrot.slane %v354, %v503
  %v505 = vlaneseq
  %v506 = vshrl.u32 %v505, 7
  %v507 = vsub.s32 %v458, %v506
  %v508 = vrot.slane %v357, %v507
  %v509 = vsel %vm463, %v508, %v504
  %v510 = vlaneseq
  %v511 = vshrl.u32 %v510, 7
  %v512 = vsub.s32 %v453, %v511
  %v513 = vrot.slane %v360, %v512
  %v514 = vlaneseq
  %v515 = vshrl.u32 %v514, 7
  %v516 = vsub.s32 %v458, %v515
  %v517 = vrot.slane %v363, %v516
  %v518 = vsel %vm463, %v517, %v513
  %v519 = vlaneseq
  %v520 = vshrl.u32 %v519, 7
  %v521 = vsub.s32 %v453, %v520
  %v522 = vrot.slane %v366, %v521
  %v523 = vlaneseq
  %v524 = vshrl.u32 %v523, 7
  %v525 = vsub.s32 %v458, %v524
  %v526 = vrot.slane %v369, %v525
  %v527 = vsel %vm463, %v526, %v522
  %v528 = vlaneseq
  %v529 = vshrl.u32 %v528, 7
  %v530 = vsub.s32 %v453, %v529
  %v531 = vrot.slane %v372, %v530
  %v532 = vlaneseq
  %v533 = vshrl.u32 %v532, 7
  %v534 = vsub.s32 %v458, %v533
  %v535 = vrot.slane %v375, %v534
  %v536 = vsel %vm463, %v535, %v531
  %v537 = vlaneseq
  %v538 = vshrl.u32 %v537, 7
  %v539 = vsub.s32 %v453, %v538
  %v540 = vrot.slane %v378, %v539
  %v541 = vlaneseq
  %v542 = vshrl.u32 %v541, 7
  %v543 = vsub.s32 %v458, %v542
  %v544 = vrot.slane %v381, %v543
  %v545 = vsel %vm463, %v544, %v540
  %v546 = vlaneseq
  %v547 = vshrl.u32 %v546, 7
  %v548 = vsub.s32 %v453, %v547
  %v549 = vrot.slane %v384, %v548
  %v550 = vlaneseq
  %v551 = vshrl.u32 %v550, 7
  %v552 = vsub.s32 %v458, %v551
  %v553 = vrot.slane %v387, %v552
  %v554 = vsel %vm463, %v553, %v549
  %v555 = vlaneseq
  %v556 = vshrl.u32 %v555, 7
  %v557 = vsub.s32 %v453, %v556
  %v558 = vrot.slane %v390, %v557
  %v559 = vlaneseq
  %v560 = vshrl.u32 %v559, 7
  %v561 = vsub.s32 %v458, %v560
  %v562 = vrot.slane %v393, %v561
  %v563 = vsel %vm463, %v562, %v558
  %v564 = vlaneseq
  %v565 = vshrl.u32 %v564, 7
  %v566 = vsub.s32 %v453, %v565
  %v567 = vrot.slane %v396, %v566
  %v568 = vlaneseq
  %v569 = vshrl.u32 %v568, 7
  %v570 = vsub.s32 %v458, %v569
  %v571 = vrot.slane %v399, %v570
  %v572 = vsel %vm463, %v571, %v567
  %v573 = vlaneseq
  %v574 = vshrl.u32 %v573, 7
  %v575 = vsub.s32 %v453, %v574
  %v576 = vrot.slane %v402, %v575
  %v577 = vlaneseq
  %v578 = vshrl.u32 %v577, 7
  %v579 = vsub.s32 %v458, %v578
  %v580 = vrot.slane %v405, %v579
  %v581 = vsel %vm463, %v580, %v576
  %v582 = vlaneseq
  %v583 = vshrl.u32 %v582, 7
  %v584 = vsub.s32 %v453, %v583
  %v585 = vrot.slane %v408, %v584
  %v586 = vlaneseq
  %v587 = vshrl.u32 %v586, 7
  %v588 = vsub.s32 %v458, %v587
  %v589 = vrot.slane %v411, %v588
  %v590 = vsel %vm463, %v589, %v585
  %v591 = vlaneseq
  %v592 = vshrl.u32 %v591, 7
  %v593 = vsub.s32 %v453, %v592
  %v594 = vrot.slane %v414, %v593
  %v595 = vlaneseq
  %v596 = vshrl.u32 %v595, 7
  %v597 = vsub.s32 %v458, %v596
  %v598 = vrot.slane %v417, %v597
  %v599 = vsel %vm463, %v598, %v594
  %vm600 = vcmask 1041409
  %v601 = vsel %vm600, %v473, %v464
  %vm602 = vcmask 1042434
  %v603 = vsel %vm602, %v482, %v601
  %vm604 = vcmask 1043459
  %v605 = vsel %vm604, %v491, %v603
  %vm606 = vcmask 1044484
  %v607 = vsel %vm606, %v500, %v605
  %vm608 = vcmask 1045509
  %v609 = vsel %vm608, %v509, %v607
  %vm610 = vcmask 1046534
  %v611 = vsel %vm610, %v518, %v609
  %vm612 = vcmask 1047559
  %v613 = vsel %vm612, %v527, %v611
  %v614 = vsel %vm600, %v545, %v536
  %v615 = vsel %vm602, %v554, %v614
  %v616 = vsel %vm604, %v563, %v615
  %v617 = vsel %vm606, %v572, %v616
  %v618 = vsel %vm608, %v581, %v617
  %v619 = vsel %vm610, %v590, %v618
  %v620 = vsel %vm612, %v599, %v619
  %v623 = vadd.f32 %v37, %v613
  %v624 = vadd.f32 %v38, %v620
  %v625 = vsel %vm418, %v623, -1e+30
  %v626 = vsel %vm419, %v624, -1e+30
  %vm627 = vcmask 130048
  %v628 = vsel %vm627, %v625, -inf
  %629 = vmax.xlane.f32.xlu0 %v628
  %v630 = vpop.xlane.xlu0 %629
  %v631 = vsel %vm627, %v626, -inf
  %632 = vmax.xlane.f32.xlu0 %v631
  %v633 = vpop.xlane.xlu0 %632
  %v634 = vsub.f32 %v625, %v630
  %v635 = vsub.f32 %v626, %v633
  %v636 = vmul.f32 %v634, 1.442695
  %v637 = vpow.pop %v636
  %v638 = vmul.f32 %v635, 1.442695
  %v639 = vpow.pop %v638
  %v640 = vmul.f32 %v637, %v105
  %v641 = vmul.f32 %v639, %v106
  %v642 = vsel %vm627, %v640, 0.0
  %643 = vadd.xlane.f32.xlu0 %v642
  %v644 = vpop.xlane.xlu0 %643
  %v645 = vsel %vm627, %v641, 0.0
  %646 = vadd.xlane.f32.xlu0 %v645
  %v647 = vpop.xlane.xlu0 %646
  %vm648 = vcmp.gt.f32.partialorder %v644, 0.0
  %vm649 = vcmp.gt.f32.partialorder %v647, 0.0
  %v650 = vsel %vm648, %v644, 1.0
  %v651 = vsel %vm649, %v647, 1.0
  %v652 = vrcp.pop %v650
  %v653 = vmul.f32 %v640, %v652
  %v654 = vrcp.pop %v651
  %v655 = vmul.f32 %v641, %v654
  %v656 = vlaneseq
  %v657 = vshrl.u32 %v656, 7
  %v658 = vsub.s32 0, %v657
  %v659 = vrot.slane %v653, %v658
  %661 = vbcast.lane.b32.xlu0 %v659, 256
  %v662 = vpop.permute.xlu0 %661
  %s664 = sor.u32 256, 8
  %665 = vbcast.lane.b32.xlu0 %v659, %s664
  %v666 = vpop.permute.xlu0 %665
  %v667 = vlaneseq
  %v668 = vshrl.u32 %v667, 7
  %v669 = vsub.s32 1, %v668
  %v670 = vrot.slane %v653, %v669
  %672 = vbcast.lane.b32.xlu0 %v670, 256
  %v673 = vpop.permute.xlu0 %672
  %s675 = sor.u32 256, 8
  %676 = vbcast.lane.b32.xlu0 %v670, %s675
  %v677 = vpop.permute.xlu0 %676
  %v678 = vlaneseq
  %v679 = vshrl.u32 %v678, 7
  %v680 = vsub.s32 2, %v679
  %v681 = vrot.slane %v653, %v680
  %683 = vbcast.lane.b32.xlu0 %v681, 256
  %v684 = vpop.permute.xlu0 %683
  %s686 = sor.u32 256, 8
  %687 = vbcast.lane.b32.xlu0 %v681, %s686
  %v688 = vpop.permute.xlu0 %687
  %v689 = vlaneseq
  %v690 = vshrl.u32 %v689, 7
  %v691 = vsub.s32 3, %v690
  %v692 = vrot.slane %v653, %v691
  %694 = vbcast.lane.b32.xlu0 %v692, 256
  %v695 = vpop.permute.xlu0 %694
  %s697 = sor.u32 256, 8
  %698 = vbcast.lane.b32.xlu0 %v692, %s697
  %v699 = vpop.permute.xlu0 %698
  %v700 = vlaneseq
  %v701 = vshrl.u32 %v700, 7
  %v702 = vsub.s32 4, %v701
  %v703 = vrot.slane %v653, %v702
  %705 = vbcast.lane.b32.xlu0 %v703, 256
  %v706 = vpop.permute.xlu0 %705
  %s708 = sor.u32 256, 8
  %709 = vbcast.lane.b32.xlu0 %v703, %s708
  %v710 = vpop.permute.xlu0 %709
  %v711 = vlaneseq
  %v712 = vshrl.u32 %v711, 7
  %v713 = vsub.s32 5, %v712
  %v714 = vrot.slane %v653, %v713
  %716 = vbcast.lane.b32.xlu0 %v714, 256
  %v717 = vpop.permute.xlu0 %716
  %s719 = sor.u32 256, 8
  %720 = vbcast.lane.b32.xlu0 %v714, %s719
  %v721 = vpop.permute.xlu0 %720
  %v722 = vlaneseq
  %v723 = vshrl.u32 %v722, 7
  %v724 = vsub.s32 6, %v723
  %v725 = vrot.slane %v653, %v724
  %727 = vbcast.lane.b32.xlu0 %v725, 256
  %v728 = vpop.permute.xlu0 %727
  %s730 = sor.u32 256, 8
  %731 = vbcast.lane.b32.xlu0 %v725, %s730
  %v732 = vpop.permute.xlu0 %731
  %v733 = vlaneseq
  %v734 = vshrl.u32 %v733, 7
  %v735 = vsub.s32 7, %v734
  %v736 = vrot.slane %v653, %v735
  %738 = vbcast.lane.b32.xlu0 %v736, 256
  %v739 = vpop.permute.xlu0 %738
  %s741 = sor.u32 256, 8
  %742 = vbcast.lane.b32.xlu0 %v736, %s741
  %v743 = vpop.permute.xlu0 %742
  %v744 = vlaneseq
  %v745 = vshrl.u32 %v744, 7
  %v746 = vsub.s32 0, %v745
  %v747 = vrot.slane %v655, %v746
  %749 = vbcast.lane.b32.xlu0 %v747, 256
  %v750 = vpop.permute.xlu0 %749
  %s752 = sor.u32 256, 8
  %753 = vbcast.lane.b32.xlu0 %v747, %s752
  %v754 = vpop.permute.xlu0 %753
  %v755 = vlaneseq
  %v756 = vshrl.u32 %v755, 7
  %v757 = vsub.s32 1, %v756
  %v758 = vrot.slane %v655, %v757
  %760 = vbcast.lane.b32.xlu0 %v758, 256
  %v761 = vpop.permute.xlu0 %760
  %s763 = sor.u32 256, 8
  %764 = vbcast.lane.b32.xlu0 %v758, %s763
  %v765 = vpop.permute.xlu0 %764
  %v766 = vlaneseq
  %v767 = vshrl.u32 %v766, 7
  %v768 = vsub.s32 2, %v767
  %v769 = vrot.slane %v655, %v768
  %771 = vbcast.lane.b32.xlu0 %v769, 256
  %v772 = vpop.permute.xlu0 %771
  %s774 = sor.u32 256, 8
  %775 = vbcast.lane.b32.xlu0 %v769, %s774
  %v776 = vpop.permute.xlu0 %775
  %v777 = vlaneseq
  %v778 = vshrl.u32 %v777, 7
  %v779 = vsub.s32 3, %v778
  %v780 = vrot.slane %v655, %v779
  %782 = vbcast.lane.b32.xlu0 %v780, 256
  %v783 = vpop.permute.xlu0 %782
  %s785 = sor.u32 256, 8
  %786 = vbcast.lane.b32.xlu0 %v780, %s785
  %v787 = vpop.permute.xlu0 %786
  %v788 = vlaneseq
  %v789 = vshrl.u32 %v788, 7
  %v790 = vsub.s32 4, %v789
  %v791 = vrot.slane %v655, %v790
  %793 = vbcast.lane.b32.xlu0 %v791, 256
  %v794 = vpop.permute.xlu0 %793
  %s796 = sor.u32 256, 8
  %797 = vbcast.lane.b32.xlu0 %v791, %s796
  %v798 = vpop.permute.xlu0 %797
  %v799 = vlaneseq
  %v800 = vshrl.u32 %v799, 7
  %v801 = vsub.s32 5, %v800
  %v802 = vrot.slane %v655, %v801
  %804 = vbcast.lane.b32.xlu0 %v802, 256
  %v805 = vpop.permute.xlu0 %804
  %s807 = sor.u32 256, 8
  %808 = vbcast.lane.b32.xlu0 %v802, %s807
  %v809 = vpop.permute.xlu0 %808
  %v810 = vlaneseq
  %v811 = vshrl.u32 %v810, 7
  %v812 = vsub.s32 6, %v811
  %v813 = vrot.slane %v655, %v812
  %815 = vbcast.lane.b32.xlu0 %v813, 256
  %v816 = vpop.permute.xlu0 %815
  %s818 = sor.u32 256, 8
  %819 = vbcast.lane.b32.xlu0 %v813, %s818
  %v820 = vpop.permute.xlu0 %819
  %v821 = vlaneseq
  %v822 = vshrl.u32 %v821, 7
  %v823 = vsub.s32 7, %v822
  %v824 = vrot.slane %v655, %v823
  %826 = vbcast.lane.b32.xlu0 %v824, 256
  %v827 = vpop.permute.xlu0 %826
  %s829 = sor.u32 256, 8
  %830 = vbcast.lane.b32.xlu0 %v824, %s829
  %v831 = vpop.permute.xlu0 %830
  %v832 = vmul.f32 %v662, %v73
  %v833 = vmul.f32 %v666, %v74
  %v834 = vmul.f32 %v673, %v75
  %v835 = vmul.f32 %v677, %v76
  %v836 = vmul.f32 %v684, %v77
  %v837 = vmul.f32 %v688, %v78
  %v838 = vmul.f32 %v695, %v79
  %v839 = vmul.f32 %v699, %v80
  %v840 = vmul.f32 %v706, %v81
  %v841 = vmul.f32 %v710, %v82
  %v842 = vmul.f32 %v717, %v83
  %v843 = vmul.f32 %v721, %v84
  %v844 = vmul.f32 %v728, %v85
  %v845 = vmul.f32 %v732, %v86
  %v846 = vmul.f32 %v739, %v87
  %v847 = vmul.f32 %v743, %v88
  %v848 = vmul.f32 %v750, %v89
  %v849 = vmul.f32 %v754, %v90
  %v850 = vmul.f32 %v761, %v91
  %v851 = vmul.f32 %v765, %v92
  %v852 = vmul.f32 %v772, %v93
  %v853 = vmul.f32 %v776, %v94
  %v854 = vmul.f32 %v783, %v95
  %v855 = vmul.f32 %v787, %v96
  %v856 = vmul.f32 %v794, %v97
  %v857 = vmul.f32 %v798, %v98
  %v858 = vmul.f32 %v805, %v99
  %v859 = vmul.f32 %v809, %v100
  %v860 = vmul.f32 %v816, %v101
  %v861 = vmul.f32 %v820, %v102
  %v862 = vmul.f32 %v827, %v103
  %v863 = vmul.f32 %v831, %v104
  %v864 = vmul.f32 %v832, %v107
  %v865 = vmul.f32 %v833, %v108
  %v866 = vmul.f32 %v834, %v107
  %v867 = vmul.f32 %v835, %v108
  %v868 = vmul.f32 %v836, %v107
  %v869 = vmul.f32 %v837, %v108
  %v870 = vmul.f32 %v838, %v107
  %v871 = vmul.f32 %v839, %v108
  %v872 = vmul.f32 %v840, %v107
  %v873 = vmul.f32 %v841, %v108
  %v874 = vmul.f32 %v842, %v107
  %v875 = vmul.f32 %v843, %v108
  %v876 = vmul.f32 %v844, %v107
  %v877 = vmul.f32 %v845, %v108
  %v878 = vmul.f32 %v846, %v107
  %v879 = vmul.f32 %v847, %v108
  %v880 = vmul.f32 %v848, %v107
  %v881 = vmul.f32 %v849, %v108
  %v882 = vmul.f32 %v850, %v107
  %v883 = vmul.f32 %v851, %v108
  %v884 = vmul.f32 %v852, %v107
  %v885 = vmul.f32 %v853, %v108
  %v886 = vmul.f32 %v854, %v107
  %v887 = vmul.f32 %v855, %v108
  %v888 = vmul.f32 %v856, %v107
  %v889 = vmul.f32 %v857, %v108
  %v890 = vmul.f32 %v858, %v107
  %v891 = vmul.f32 %v859, %v108
  %v892 = vmul.f32 %v860, %v107
  %v893 = vmul.f32 %v861, %v108
  %v894 = vmul.f32 %v862, %v107
  %v895 = vmul.f32 %v863, %v108
  %v896 = vsel %vm321, %v864, 0.0
  %v897 = vsel %vm321, %v865, 0.0
  %v898 = vadd.f32 %v896, %v897
  %v899 = vrot.slane %v898, 4
  %v900 = vadd.f32 %v898, %v899
  %v901 = vrot.slane %v900, 2
  %v902 = vadd.f32 %v900, %v901
  %v903 = vrot.slane %v902, 1
  %v904 = vadd.f32 %v902, %v903
  %v905 = vsel %vm321, %v866, 0.0
  %v906 = vsel %vm321, %v867, 0.0
  %v907 = vadd.f32 %v905, %v906
  %v908 = vrot.slane %v907, 4
  %v909 = vadd.f32 %v907, %v908
  %v910 = vrot.slane %v909, 2
  %v911 = vadd.f32 %v909, %v910
  %v912 = vrot.slane %v911, 1
  %v913 = vadd.f32 %v911, %v912
  %v914 = vsel %vm321, %v868, 0.0
  %v915 = vsel %vm321, %v869, 0.0
  %v916 = vadd.f32 %v914, %v915
  %v917 = vrot.slane %v916, 4
  %v918 = vadd.f32 %v916, %v917
  %v919 = vrot.slane %v918, 2
  %v920 = vadd.f32 %v918, %v919
  %v921 = vrot.slane %v920, 1
  %v922 = vadd.f32 %v920, %v921
  %v923 = vsel %vm321, %v870, 0.0
  %v924 = vsel %vm321, %v871, 0.0
  %v925 = vadd.f32 %v923, %v924
  %v926 = vrot.slane %v925, 4
  %v927 = vadd.f32 %v925, %v926
  %v928 = vrot.slane %v927, 2
  %v929 = vadd.f32 %v927, %v928
  %v930 = vrot.slane %v929, 1
  %v931 = vadd.f32 %v929, %v930
  %v932 = vsel %vm321, %v872, 0.0
  %v933 = vsel %vm321, %v873, 0.0
  %v934 = vadd.f32 %v932, %v933
  %v935 = vrot.slane %v934, 4
  %v936 = vadd.f32 %v934, %v935
  %v937 = vrot.slane %v936, 2
  %v938 = vadd.f32 %v936, %v937
  %v939 = vrot.slane %v938, 1
  %v940 = vadd.f32 %v938, %v939
  %v941 = vsel %vm321, %v874, 0.0
  %v942 = vsel %vm321, %v875, 0.0
  %v943 = vadd.f32 %v941, %v942
  %v944 = vrot.slane %v943, 4
  %v945 = vadd.f32 %v943, %v944
  %v946 = vrot.slane %v945, 2
  %v947 = vadd.f32 %v945, %v946
  %v948 = vrot.slane %v947, 1
  %v949 = vadd.f32 %v947, %v948
  %v950 = vsel %vm321, %v876, 0.0
  %v951 = vsel %vm321, %v877, 0.0
  %v952 = vadd.f32 %v950, %v951
  %v953 = vrot.slane %v952, 4
  %v954 = vadd.f32 %v952, %v953
  %v955 = vrot.slane %v954, 2
  %v956 = vadd.f32 %v954, %v955
  %v957 = vrot.slane %v956, 1
  %v958 = vadd.f32 %v956, %v957
  %v959 = vsel %vm321, %v878, 0.0
  %v960 = vsel %vm321, %v879, 0.0
  %v961 = vadd.f32 %v959, %v960
  %v962 = vrot.slane %v961, 4
  %v963 = vadd.f32 %v961, %v962
  %v964 = vrot.slane %v963, 2
  %v965 = vadd.f32 %v963, %v964
  %v966 = vrot.slane %v965, 1
  %v967 = vadd.f32 %v965, %v966
  %v968 = vsel %vm321, %v880, 0.0
  %v969 = vsel %vm321, %v881, 0.0
  %v970 = vadd.f32 %v968, %v969
  %v971 = vrot.slane %v970, 4
  %v972 = vadd.f32 %v970, %v971
  %v973 = vrot.slane %v972, 2
  %v974 = vadd.f32 %v972, %v973
  %v975 = vrot.slane %v974, 1
  %v976 = vadd.f32 %v974, %v975
  %v977 = vsel %vm321, %v882, 0.0
  %v978 = vsel %vm321, %v883, 0.0
  %v979 = vadd.f32 %v977, %v978
  %v980 = vrot.slane %v979, 4
  %v981 = vadd.f32 %v979, %v980
  %v982 = vrot.slane %v981, 2
  %v983 = vadd.f32 %v981, %v982
  %v984 = vrot.slane %v983, 1
  %v985 = vadd.f32 %v983, %v984
  %v986 = vsel %vm321, %v884, 0.0
  %v987 = vsel %vm321, %v885, 0.0
  %v988 = vadd.f32 %v986, %v987
  %v989 = vrot.slane %v988, 4
  %v990 = vadd.f32 %v988, %v989
  %v991 = vrot.slane %v990, 2
  %v992 = vadd.f32 %v990, %v991
  %v993 = vrot.slane %v992, 1
  %v994 = vadd.f32 %v992, %v993
  %v995 = vsel %vm321, %v886, 0.0
  %v996 = vsel %vm321, %v887, 0.0
  %v997 = vadd.f32 %v995, %v996
  %v998 = vrot.slane %v997, 4
  %v999 = vadd.f32 %v997, %v998
  %v1000 = vrot.slane %v999, 2
  %v1001 = vadd.f32 %v999, %v1000
  %v1002 = vrot.slane %v1001, 1
  %v1003 = vadd.f32 %v1001, %v1002
  %v1004 = vsel %vm321, %v888, 0.0
  %v1005 = vsel %vm321, %v889, 0.0
  %v1006 = vadd.f32 %v1004, %v1005
  %v1007 = vrot.slane %v1006, 4
  %v1008 = vadd.f32 %v1006, %v1007
  %v1009 = vrot.slane %v1008, 2
  %v1010 = vadd.f32 %v1008, %v1009
  %v1011 = vrot.slane %v1010, 1
  %v1012 = vadd.f32 %v1010, %v1011
  %v1013 = vsel %vm321, %v890, 0.0
  %v1014 = vsel %vm321, %v891, 0.0
  %v1015 = vadd.f32 %v1013, %v1014
  %v1016 = vrot.slane %v1015, 4
  %v1017 = vadd.f32 %v1015, %v1016
  %v1018 = vrot.slane %v1017, 2
  %v1019 = vadd.f32 %v1017, %v1018
  %v1020 = vrot.slane %v1019, 1
  %v1021 = vadd.f32 %v1019, %v1020
  %v1022 = vsel %vm321, %v892, 0.0
  %v1023 = vsel %vm321, %v893, 0.0
  %v1024 = vadd.f32 %v1022, %v1023
  %v1025 = vrot.slane %v1024, 4
  %v1026 = vadd.f32 %v1024, %v1025
  %v1027 = vrot.slane %v1026, 2
  %v1028 = vadd.f32 %v1026, %v1027
  %v1029 = vrot.slane %v1028, 1
  %v1030 = vadd.f32 %v1028, %v1029
  %v1031 = vsel %vm321, %v894, 0.0
  %v1032 = vsel %vm321, %v895, 0.0
  %v1033 = vadd.f32 %v1031, %v1032
  %v1034 = vrot.slane %v1033, 4
  %v1035 = vadd.f32 %v1033, %v1034
  %v1036 = vrot.slane %v1035, 2
  %v1037 = vadd.f32 %v1035, %v1036
  %v1038 = vrot.slane %v1037, 1
  %v1039 = vadd.f32 %v1037, %v1038
  %v1040 = vld [vmem:[%s6] sm:$0xff]
  %v1041 = vld [vmem:[%s6 + $0x8] sm:$0xff]
  %v1058 = vsel %vm600, %v913, %v904
  %v1059 = vsel %vm602, %v922, %v1058
  %v1060 = vsel %vm604, %v931, %v1059
  %v1061 = vsel %vm606, %v940, %v1060
  %v1062 = vsel %vm608, %v949, %v1061
  %v1063 = vsel %vm610, %v958, %v1062
  %v1064 = vsel %vm612, %v967, %v1063
  %v1065 = vsel %vm600, %v985, %v976
  %v1066 = vsel %vm602, %v994, %v1065
  %v1067 = vsel %vm604, %v1003, %v1066
  %v1068 = vsel %vm606, %v1012, %v1067
  %v1069 = vsel %vm608, %v1021, %v1068
  %v1070 = vsel %vm610, %v1030, %v1069
  %v1071 = vsel %vm612, %v1039, %v1070
  %v1074 = vadd.f32 %v1040, %v1064
  %v1075 = vadd.f32 %v1041, %v1071
  %1076 = vst.msk [vmem:[%s10] sm:$0xff] %vm321, %v1074
  %1077 = vst.msk [vmem:[%s10 + $0x8] sm:$0xff] %vm321, %v1075
  %v1078 = vld [vmem:[%s4] sm:$0x7]
  %v1079 = vld [vmem:[%s4 + $0x4] sm:$0x7]
  %v1080 = vld [vmem:[%s4 + $0x8] sm:$0x7]
  %v1081 = vld [vmem:[%s4 + $0xc] sm:$0x7]
  %v1082 = vld [vmem:[%s4 + $0x10] sm:$0x7]
  %v1083 = vld [vmem:[%s4 + $0x14] sm:$0x7]
  %v1084 = vld [vmem:[%s4 + $0x18] sm:$0x7]
  %v1085 = vld [vmem:[%s4 + $0x1c] sm:$0x7]
  %v1086 = vld [vmem:[%s4 + $0x20] sm:$0x7]
  %v1087 = vld [vmem:[%s4 + $0x24] sm:$0x7]
  %v1088 = vld [vmem:[%s4 + $0x28] sm:$0x7]
  %v1089 = vld [vmem:[%s4 + $0x2c] sm:$0x7]
  %v1090 = vld [vmem:[%s4 + $0x30] sm:$0x7]
  %v1091 = vld [vmem:[%s4 + $0x34] sm:$0x7]
  %v1092 = vld [vmem:[%s4 + $0x38] sm:$0x7]
  %v1093 = vld [vmem:[%s4 + $0x3c] sm:$0x7]
  %v1094 = vld [vmem:[%s7] sm:$0xff]
  %v1095 = vld [vmem:[%s7 + $0x8] sm:$0xff]
  %v1096 = vld [vmem:[%s7 + $0x10] sm:$0xff]
  %v1097 = vld [vmem:[%s7 + $0x18] sm:$0xff]
  %v1098 = vld [vmem:[%s7 + $0x20] sm:$0xff]
  %v1099 = vld [vmem:[%s7 + $0x28] sm:$0xff]
  %v1100 = vld [vmem:[%s9] sm:$0x1]
  %v1101 = vlaneseq
  %v1102 = vshrl.u32 %v1101, 7
  %v1103 = vsub.s32 0, %v1102
  %v1104 = vrot.slane %v1078, %v1103
  %1106 = vbcast.lane.b32.xlu0 %v1104, 256
  %v1107 = vpop.permute.xlu0 %1106
  %s1109 = sor.u32 256, 8
  %1110 = vbcast.lane.b32.xlu0 %v1104, %s1109
  %v1111 = vpop.permute.xlu0 %1110
  %v1112 = vlaneseq
  %v1113 = vshrl.u32 %v1112, 7
  %v1114 = vsub.s32 0, %v1113
  %v1115 = vrot.slane %v1079, %v1114
  %1117 = vbcast.lane.b32.xlu0 %v1115, 256
  %v1118 = vpop.permute.xlu0 %1117
  %s1120 = sor.u32 256, 8
  %1121 = vbcast.lane.b32.xlu0 %v1115, %s1120
  %v1122 = vpop.permute.xlu0 %1121
  %v1123 = vlaneseq
  %v1124 = vshrl.u32 %v1123, 7
  %v1125 = vsub.s32 0, %v1124
  %v1126 = vrot.slane %v1080, %v1125
  %1128 = vbcast.lane.b32.xlu0 %v1126, 256
  %v1129 = vpop.permute.xlu0 %1128
  %s1131 = sor.u32 256, 8
  %1132 = vbcast.lane.b32.xlu0 %v1126, %s1131
  %v1133 = vpop.permute.xlu0 %1132
  %v1134 = vlaneseq
  %v1135 = vshrl.u32 %v1134, 7
  %v1136 = vsub.s32 0, %v1135
  %v1137 = vrot.slane %v1081, %v1136
  %1139 = vbcast.lane.b32.xlu0 %v1137, 256
  %v1140 = vpop.permute.xlu0 %1139
  %s1142 = sor.u32 256, 8
  %1143 = vbcast.lane.b32.xlu0 %v1137, %s1142
  %v1144 = vpop.permute.xlu0 %1143
  %v1145 = vlaneseq
  %v1146 = vshrl.u32 %v1145, 7
  %v1147 = vsub.s32 0, %v1146
  %v1148 = vrot.slane %v1082, %v1147
  %1150 = vbcast.lane.b32.xlu0 %v1148, 256
  %v1151 = vpop.permute.xlu0 %1150
  %s1153 = sor.u32 256, 8
  %1154 = vbcast.lane.b32.xlu0 %v1148, %s1153
  %v1155 = vpop.permute.xlu0 %1154
  %v1156 = vlaneseq
  %v1157 = vshrl.u32 %v1156, 7
  %v1158 = vsub.s32 0, %v1157
  %v1159 = vrot.slane %v1083, %v1158
  %1161 = vbcast.lane.b32.xlu0 %v1159, 256
  %v1162 = vpop.permute.xlu0 %1161
  %s1164 = sor.u32 256, 8
  %1165 = vbcast.lane.b32.xlu0 %v1159, %s1164
  %v1166 = vpop.permute.xlu0 %1165
  %v1167 = vlaneseq
  %v1168 = vshrl.u32 %v1167, 7
  %v1169 = vsub.s32 0, %v1168
  %v1170 = vrot.slane %v1084, %v1169
  %1172 = vbcast.lane.b32.xlu0 %v1170, 256
  %v1173 = vpop.permute.xlu0 %1172
  %s1175 = sor.u32 256, 8
  %1176 = vbcast.lane.b32.xlu0 %v1170, %s1175
  %v1177 = vpop.permute.xlu0 %1176
  %v1178 = vlaneseq
  %v1179 = vshrl.u32 %v1178, 7
  %v1180 = vsub.s32 0, %v1179
  %v1181 = vrot.slane %v1085, %v1180
  %1183 = vbcast.lane.b32.xlu0 %v1181, 256
  %v1184 = vpop.permute.xlu0 %1183
  %s1186 = sor.u32 256, 8
  %1187 = vbcast.lane.b32.xlu0 %v1181, %s1186
  %v1188 = vpop.permute.xlu0 %1187
  %v1189 = vlaneseq
  %v1190 = vshrl.u32 %v1189, 7
  %v1191 = vsub.s32 0, %v1190
  %v1192 = vrot.slane %v1086, %v1191
  %1194 = vbcast.lane.b32.xlu0 %v1192, 256
  %v1195 = vpop.permute.xlu0 %1194
  %s1197 = sor.u32 256, 8
  %1198 = vbcast.lane.b32.xlu0 %v1192, %s1197
  %v1199 = vpop.permute.xlu0 %1198
  %v1200 = vlaneseq
  %v1201 = vshrl.u32 %v1200, 7
  %v1202 = vsub.s32 0, %v1201
  %v1203 = vrot.slane %v1087, %v1202
  %1205 = vbcast.lane.b32.xlu0 %v1203, 256
  %v1206 = vpop.permute.xlu0 %1205
  %s1208 = sor.u32 256, 8
  %1209 = vbcast.lane.b32.xlu0 %v1203, %s1208
  %v1210 = vpop.permute.xlu0 %1209
  %v1211 = vlaneseq
  %v1212 = vshrl.u32 %v1211, 7
  %v1213 = vsub.s32 0, %v1212
  %v1214 = vrot.slane %v1088, %v1213
  %1216 = vbcast.lane.b32.xlu0 %v1214, 256
  %v1217 = vpop.permute.xlu0 %1216
  %s1219 = sor.u32 256, 8
  %1220 = vbcast.lane.b32.xlu0 %v1214, %s1219
  %v1221 = vpop.permute.xlu0 %1220
  %v1222 = vlaneseq
  %v1223 = vshrl.u32 %v1222, 7
  %v1224 = vsub.s32 0, %v1223
  %v1225 = vrot.slane %v1089, %v1224
  %1227 = vbcast.lane.b32.xlu0 %v1225, 256
  %v1228 = vpop.permute.xlu0 %1227
  %s1230 = sor.u32 256, 8
  %1231 = vbcast.lane.b32.xlu0 %v1225, %s1230
  %v1232 = vpop.permute.xlu0 %1231
  %v1233 = vlaneseq
  %v1234 = vshrl.u32 %v1233, 7
  %v1235 = vsub.s32 0, %v1234
  %v1236 = vrot.slane %v1090, %v1235
  %1238 = vbcast.lane.b32.xlu0 %v1236, 256
  %v1239 = vpop.permute.xlu0 %1238
  %s1241 = sor.u32 256, 8
  %1242 = vbcast.lane.b32.xlu0 %v1236, %s1241
  %v1243 = vpop.permute.xlu0 %1242
  %v1244 = vlaneseq
  %v1245 = vshrl.u32 %v1244, 7
  %v1246 = vsub.s32 0, %v1245
  %v1247 = vrot.slane %v1091, %v1246
  %1249 = vbcast.lane.b32.xlu0 %v1247, 256
  %v1250 = vpop.permute.xlu0 %1249
  %s1252 = sor.u32 256, 8
  %1253 = vbcast.lane.b32.xlu0 %v1247, %s1252
  %v1254 = vpop.permute.xlu0 %1253
  %v1255 = vlaneseq
  %v1256 = vshrl.u32 %v1255, 7
  %v1257 = vsub.s32 0, %v1256
  %v1258 = vrot.slane %v1092, %v1257
  %1260 = vbcast.lane.b32.xlu0 %v1258, 256
  %v1261 = vpop.permute.xlu0 %1260
  %s1263 = sor.u32 256, 8
  %1264 = vbcast.lane.b32.xlu0 %v1258, %s1263
  %v1265 = vpop.permute.xlu0 %1264
  %v1266 = vlaneseq
  %v1267 = vshrl.u32 %v1266, 7
  %v1268 = vsub.s32 0, %v1267
  %v1269 = vrot.slane %v1093, %v1268
  %1271 = vbcast.lane.b32.xlu0 %v1269, 256
  %v1272 = vpop.permute.xlu0 %1271
  %s1274 = sor.u32 256, 8
  %1275 = vbcast.lane.b32.xlu0 %v1269, %s1274
  %v1276 = vpop.permute.xlu0 %1275
  %v1277 = vmul.f32 %v1107, %v864
  %v1278 = vmul.f32 %v1111, %v865
  %v1279 = vmul.f32 %v1118, %v866
  %v1280 = vmul.f32 %v1122, %v867
  %v1281 = vmul.f32 %v1129, %v868
  %v1282 = vmul.f32 %v1133, %v869
  %v1283 = vmul.f32 %v1140, %v870
  %v1284 = vmul.f32 %v1144, %v871
  %v1285 = vmul.f32 %v1151, %v872
  %v1286 = vmul.f32 %v1155, %v873
  %v1287 = vmul.f32 %v1162, %v874
  %v1288 = vmul.f32 %v1166, %v875
  %v1289 = vmul.f32 %v1173, %v876
  %v1290 = vmul.f32 %v1177, %v877
  %v1291 = vmul.f32 %v1184, %v878
  %v1292 = vmul.f32 %v1188, %v879
  %v1293 = vmul.f32 %v1195, %v880
  %v1294 = vmul.f32 %v1199, %v881
  %v1295 = vmul.f32 %v1206, %v882
  %v1296 = vmul.f32 %v1210, %v883
  %v1297 = vmul.f32 %v1217, %v884
  %v1298 = vmul.f32 %v1221, %v885
  %v1299 = vmul.f32 %v1228, %v886
  %v1300 = vmul.f32 %v1232, %v887
  %v1301 = vmul.f32 %v1239, %v888
  %v1302 = vmul.f32 %v1243, %v889
  %v1303 = vmul.f32 %v1250, %v890
  %v1304 = vmul.f32 %v1254, %v891
  %v1305 = vmul.f32 %v1261, %v892
  %v1306 = vmul.f32 %v1265, %v893
  %v1307 = vmul.f32 %v1272, %v894
  %v1308 = vmul.f32 %v1276, %v895
  %v1309 = vsel %vm321, %v1277, 0.0
  %v1310 = vsel %vm321, %v1278, 0.0
  %v1311 = vadd.f32 %v1309, %v1310
  %v1312 = vrot.slane %v1311, 4
  %v1313 = vadd.f32 %v1311, %v1312
  %v1314 = vrot.slane %v1313, 2
  %v1315 = vadd.f32 %v1313, %v1314
  %v1316 = vrot.slane %v1315, 1
  %v1317 = vadd.f32 %v1315, %v1316
  %v1318 = vsel %vm321, %v1279, 0.0
  %v1319 = vsel %vm321, %v1280, 0.0
  %v1320 = vadd.f32 %v1318, %v1319
  %v1321 = vrot.slane %v1320, 4
  %v1322 = vadd.f32 %v1320, %v1321
  %v1323 = vrot.slane %v1322, 2
  %v1324 = vadd.f32 %v1322, %v1323
  %v1325 = vrot.slane %v1324, 1
  %v1326 = vadd.f32 %v1324, %v1325
  %v1327 = vsel %vm321, %v1281, 0.0
  %v1328 = vsel %vm321, %v1282, 0.0
  %v1329 = vadd.f32 %v1327, %v1328
  %v1330 = vrot.slane %v1329, 4
  %v1331 = vadd.f32 %v1329, %v1330
  %v1332 = vrot.slane %v1331, 2
  %v1333 = vadd.f32 %v1331, %v1332
  %v1334 = vrot.slane %v1333, 1
  %v1335 = vadd.f32 %v1333, %v1334
  %v1336 = vsel %vm321, %v1283, 0.0
  %v1337 = vsel %vm321, %v1284, 0.0
  %v1338 = vadd.f32 %v1336, %v1337
  %v1339 = vrot.slane %v1338, 4
  %v1340 = vadd.f32 %v1338, %v1339
  %v1341 = vrot.slane %v1340, 2
  %v1342 = vadd.f32 %v1340, %v1341
  %v1343 = vrot.slane %v1342, 1
  %v1344 = vadd.f32 %v1342, %v1343
  %v1345 = vsel %vm321, %v1285, 0.0
  %v1346 = vsel %vm321, %v1286, 0.0
  %v1347 = vadd.f32 %v1345, %v1346
  %v1348 = vrot.slane %v1347, 4
  %v1349 = vadd.f32 %v1347, %v1348
  %v1350 = vrot.slane %v1349, 2
  %v1351 = vadd.f32 %v1349, %v1350
  %v1352 = vrot.slane %v1351, 1
  %v1353 = vadd.f32 %v1351, %v1352
  %v1354 = vsel %vm321, %v1287, 0.0
  %v1355 = vsel %vm321, %v1288, 0.0
  %v1356 = vadd.f32 %v1354, %v1355
  %v1357 = vrot.slane %v1356, 4
  %v1358 = vadd.f32 %v1356, %v1357
  %v1359 = vrot.slane %v1358, 2
  %v1360 = vadd.f32 %v1358, %v1359
  %v1361 = vrot.slane %v1360, 1
  %v1362 = vadd.f32 %v1360, %v1361
  %v1363 = vsel %vm321, %v1289, 0.0
  %v1364 = vsel %vm321, %v1290, 0.0
  %v1365 = vadd.f32 %v1363, %v1364
  %v1366 = vrot.slane %v1365, 4
  %v1367 = vadd.f32 %v1365, %v1366
  %v1368 = vrot.slane %v1367, 2
  %v1369 = vadd.f32 %v1367, %v1368
  %v1370 = vrot.slane %v1369, 1
  %v1371 = vadd.f32 %v1369, %v1370
  %v1372 = vsel %vm321, %v1291, 0.0
  %v1373 = vsel %vm321, %v1292, 0.0
  %v1374 = vadd.f32 %v1372, %v1373
  %v1375 = vrot.slane %v1374, 4
  %v1376 = vadd.f32 %v1374, %v1375
  %v1377 = vrot.slane %v1376, 2
  %v1378 = vadd.f32 %v1376, %v1377
  %v1379 = vrot.slane %v1378, 1
  %v1380 = vadd.f32 %v1378, %v1379
  %v1381 = vsel %vm321, %v1293, 0.0
  %v1382 = vsel %vm321, %v1294, 0.0
  %v1383 = vadd.f32 %v1381, %v1382
  %v1384 = vrot.slane %v1383, 4
  %v1385 = vadd.f32 %v1383, %v1384
  %v1386 = vrot.slane %v1385, 2
  %v1387 = vadd.f32 %v1385, %v1386
  %v1388 = vrot.slane %v1387, 1
  %v1389 = vadd.f32 %v1387, %v1388
  %v1390 = vsel %vm321, %v1295, 0.0
  %v1391 = vsel %vm321, %v1296, 0.0
  %v1392 = vadd.f32 %v1390, %v1391
  %v1393 = vrot.slane %v1392, 4
  %v1394 = vadd.f32 %v1392, %v1393
  %v1395 = vrot.slane %v1394, 2
  %v1396 = vadd.f32 %v1394, %v1395
  %v1397 = vrot.slane %v1396, 1
  %v1398 = vadd.f32 %v1396, %v1397
  %v1399 = vsel %vm321, %v1297, 0.0
  %v1400 = vsel %vm321, %v1298, 0.0
  %v1401 = vadd.f32 %v1399, %v1400
  %v1402 = vrot.slane %v1401, 4
  %v1403 = vadd.f32 %v1401, %v1402
  %v1404 = vrot.slane %v1403, 2
  %v1405 = vadd.f32 %v1403, %v1404
  %v1406 = vrot.slane %v1405, 1
  %v1407 = vadd.f32 %v1405, %v1406
  %v1408 = vsel %vm321, %v1299, 0.0
  %v1409 = vsel %vm321, %v1300, 0.0
  %v1410 = vadd.f32 %v1408, %v1409
  %v1411 = vrot.slane %v1410, 4
  %v1412 = vadd.f32 %v1410, %v1411
  %v1413 = vrot.slane %v1412, 2
  %v1414 = vadd.f32 %v1412, %v1413
  %v1415 = vrot.slane %v1414, 1
  %v1416 = vadd.f32 %v1414, %v1415
  %v1417 = vsel %vm321, %v1301, 0.0
  %v1418 = vsel %vm321, %v1302, 0.0
  %v1419 = vadd.f32 %v1417, %v1418
  %v1420 = vrot.slane %v1419, 4
  %v1421 = vadd.f32 %v1419, %v1420
  %v1422 = vrot.slane %v1421, 2
  %v1423 = vadd.f32 %v1421, %v1422
  %v1424 = vrot.slane %v1423, 1
  %v1425 = vadd.f32 %v1423, %v1424
  %v1426 = vsel %vm321, %v1303, 0.0
  %v1427 = vsel %vm321, %v1304, 0.0
  %v1428 = vadd.f32 %v1426, %v1427
  %v1429 = vrot.slane %v1428, 4
  %v1430 = vadd.f32 %v1428, %v1429
  %v1431 = vrot.slane %v1430, 2
  %v1432 = vadd.f32 %v1430, %v1431
  %v1433 = vrot.slane %v1432, 1
  %v1434 = vadd.f32 %v1432, %v1433
  %v1435 = vsel %vm321, %v1305, 0.0
  %v1436 = vsel %vm321, %v1306, 0.0
  %v1437 = vadd.f32 %v1435, %v1436
  %v1438 = vrot.slane %v1437, 4
  %v1439 = vadd.f32 %v1437, %v1438
  %v1440 = vrot.slane %v1439, 2
  %v1441 = vadd.f32 %v1439, %v1440
  %v1442 = vrot.slane %v1441, 1
  %v1443 = vadd.f32 %v1441, %v1442
  %v1444 = vsel %vm321, %v1307, 0.0
  %v1445 = vsel %vm321, %v1308, 0.0
  %v1446 = vadd.f32 %v1444, %v1445
  %v1447 = vrot.slane %v1446, 4
  %v1448 = vadd.f32 %v1446, %v1447
  %v1449 = vrot.slane %v1448, 2
  %v1450 = vadd.f32 %v1448, %v1449
  %v1451 = vrot.slane %v1450, 1
  %v1452 = vadd.f32 %v1450, %v1451
  %v1469 = vsel %vm600, %v1326, %v1317
  %v1470 = vsel %vm602, %v1335, %v1469
  %v1471 = vsel %vm604, %v1344, %v1470
  %v1472 = vsel %vm606, %v1353, %v1471
  %v1473 = vsel %vm608, %v1362, %v1472
  %v1474 = vsel %vm610, %v1371, %v1473
  %v1475 = vsel %vm612, %v1380, %v1474
  %v1476 = vsel %vm600, %v1398, %v1389
  %v1477 = vsel %vm602, %v1407, %v1476
  %v1478 = vsel %vm604, %v1416, %v1477
  %v1479 = vsel %vm606, %v1425, %v1478
  %v1480 = vsel %vm608, %v1434, %v1479
  %v1481 = vsel %vm610, %v1443, %v1480
  %v1482 = vsel %vm612, %v1452, %v1481
  %v1485 = vadd.f32 %v1094, %v1475
  %v1486 = vadd.f32 %v1095, %v1482
  %v1487 = vlaneseq
  %v1488 = vshrl.u32 %v1487, 7
  %v1489 = vsub.s32 1, %v1488
  %v1490 = vrot.slane %v1078, %v1489
  %1492 = vbcast.lane.b32.xlu0 %v1490, 256
  %v1493 = vpop.permute.xlu0 %1492
  %s1495 = sor.u32 256, 8
  %1496 = vbcast.lane.b32.xlu0 %v1490, %s1495
  %v1497 = vpop.permute.xlu0 %1496
  %v1498 = vlaneseq
  %v1499 = vshrl.u32 %v1498, 7
  %v1500 = vsub.s32 1, %v1499
  %v1501 = vrot.slane %v1079, %v1500
  %1503 = vbcast.lane.b32.xlu0 %v1501, 256
  %v1504 = vpop.permute.xlu0 %1503
  %s1506 = sor.u32 256, 8
  %1507 = vbcast.lane.b32.xlu0 %v1501, %s1506
  %v1508 = vpop.permute.xlu0 %1507
  %v1509 = vlaneseq
  %v1510 = vshrl.u32 %v1509, 7
  %v1511 = vsub.s32 1, %v1510
  %v1512 = vrot.slane %v1080, %v1511
  %1514 = vbcast.lane.b32.xlu0 %v1512, 256
  %v1515 = vpop.permute.xlu0 %1514
  %s1517 = sor.u32 256, 8
  %1518 = vbcast.lane.b32.xlu0 %v1512, %s1517
  %v1519 = vpop.permute.xlu0 %1518
  %v1520 = vlaneseq
  %v1521 = vshrl.u32 %v1520, 7
  %v1522 = vsub.s32 1, %v1521
  %v1523 = vrot.slane %v1081, %v1522
  %1525 = vbcast.lane.b32.xlu0 %v1523, 256
  %v1526 = vpop.permute.xlu0 %1525
  %s1528 = sor.u32 256, 8
  %1529 = vbcast.lane.b32.xlu0 %v1523, %s1528
  %v1530 = vpop.permute.xlu0 %1529
  %v1531 = vlaneseq
  %v1532 = vshrl.u32 %v1531, 7
  %v1533 = vsub.s32 1, %v1532
  %v1534 = vrot.slane %v1082, %v1533
  %1536 = vbcast.lane.b32.xlu0 %v1534, 256
  %v1537 = vpop.permute.xlu0 %1536
  %s1539 = sor.u32 256, 8
  %1540 = vbcast.lane.b32.xlu0 %v1534, %s1539
  %v1541 = vpop.permute.xlu0 %1540
  %v1542 = vlaneseq
  %v1543 = vshrl.u32 %v1542, 7
  %v1544 = vsub.s32 1, %v1543
  %v1545 = vrot.slane %v1083, %v1544
  %1547 = vbcast.lane.b32.xlu0 %v1545, 256
  %v1548 = vpop.permute.xlu0 %1547
  %s1550 = sor.u32 256, 8
  %1551 = vbcast.lane.b32.xlu0 %v1545, %s1550
  %v1552 = vpop.permute.xlu0 %1551
  %v1553 = vlaneseq
  %v1554 = vshrl.u32 %v1553, 7
  %v1555 = vsub.s32 1, %v1554
  %v1556 = vrot.slane %v1084, %v1555
  %1558 = vbcast.lane.b32.xlu0 %v1556, 256
  %v1559 = vpop.permute.xlu0 %1558
  %s1561 = sor.u32 256, 8
  %1562 = vbcast.lane.b32.xlu0 %v1556, %s1561
  %v1563 = vpop.permute.xlu0 %1562
  %v1564 = vlaneseq
  %v1565 = vshrl.u32 %v1564, 7
  %v1566 = vsub.s32 1, %v1565
  %v1567 = vrot.slane %v1085, %v1566
  %1569 = vbcast.lane.b32.xlu0 %v1567, 256
  %v1570 = vpop.permute.xlu0 %1569
  %s1572 = sor.u32 256, 8
  %1573 = vbcast.lane.b32.xlu0 %v1567, %s1572
  %v1574 = vpop.permute.xlu0 %1573
  %v1575 = vlaneseq
  %v1576 = vshrl.u32 %v1575, 7
  %v1577 = vsub.s32 1, %v1576
  %v1578 = vrot.slane %v1086, %v1577
  %1580 = vbcast.lane.b32.xlu0 %v1578, 256
  %v1581 = vpop.permute.xlu0 %1580
  %s1583 = sor.u32 256, 8
  %1584 = vbcast.lane.b32.xlu0 %v1578, %s1583
  %v1585 = vpop.permute.xlu0 %1584
  %v1586 = vlaneseq
  %v1587 = vshrl.u32 %v1586, 7
  %v1588 = vsub.s32 1, %v1587
  %v1589 = vrot.slane %v1087, %v1588
  %1591 = vbcast.lane.b32.xlu0 %v1589, 256
  %v1592 = vpop.permute.xlu0 %1591
  %s1594 = sor.u32 256, 8
  %1595 = vbcast.lane.b32.xlu0 %v1589, %s1594
  %v1596 = vpop.permute.xlu0 %1595
  %v1597 = vlaneseq
  %v1598 = vshrl.u32 %v1597, 7
  %v1599 = vsub.s32 1, %v1598
  %v1600 = vrot.slane %v1088, %v1599
  %1602 = vbcast.lane.b32.xlu0 %v1600, 256
  %v1603 = vpop.permute.xlu0 %1602
  %s1605 = sor.u32 256, 8
  %1606 = vbcast.lane.b32.xlu0 %v1600, %s1605
  %v1607 = vpop.permute.xlu0 %1606
  %v1608 = vlaneseq
  %v1609 = vshrl.u32 %v1608, 7
  %v1610 = vsub.s32 1, %v1609
  %v1611 = vrot.slane %v1089, %v1610
  %1613 = vbcast.lane.b32.xlu0 %v1611, 256
  %v1614 = vpop.permute.xlu0 %1613
  %s1616 = sor.u32 256, 8
  %1617 = vbcast.lane.b32.xlu0 %v1611, %s1616
  %v1618 = vpop.permute.xlu0 %1617
  %v1619 = vlaneseq
  %v1620 = vshrl.u32 %v1619, 7
  %v1621 = vsub.s32 1, %v1620
  %v1622 = vrot.slane %v1090, %v1621
  %1624 = vbcast.lane.b32.xlu0 %v1622, 256
  %v1625 = vpop.permute.xlu0 %1624
  %s1627 = sor.u32 256, 8
  %1628 = vbcast.lane.b32.xlu0 %v1622, %s1627
  %v1629 = vpop.permute.xlu0 %1628
  %v1630 = vlaneseq
  %v1631 = vshrl.u32 %v1630, 7
  %v1632 = vsub.s32 1, %v1631
  %v1633 = vrot.slane %v1091, %v1632
  %1635 = vbcast.lane.b32.xlu0 %v1633, 256
  %v1636 = vpop.permute.xlu0 %1635
  %s1638 = sor.u32 256, 8
  %1639 = vbcast.lane.b32.xlu0 %v1633, %s1638
  %v1640 = vpop.permute.xlu0 %1639
  %v1641 = vlaneseq
  %v1642 = vshrl.u32 %v1641, 7
  %v1643 = vsub.s32 1, %v1642
  %v1644 = vrot.slane %v1092, %v1643
  %1646 = vbcast.lane.b32.xlu0 %v1644, 256
  %v1647 = vpop.permute.xlu0 %1646
  %s1649 = sor.u32 256, 8
  %1650 = vbcast.lane.b32.xlu0 %v1644, %s1649
  %v1651 = vpop.permute.xlu0 %1650
  %v1652 = vlaneseq
  %v1653 = vshrl.u32 %v1652, 7
  %v1654 = vsub.s32 1, %v1653
  %v1655 = vrot.slane %v1093, %v1654
  %1657 = vbcast.lane.b32.xlu0 %v1655, 256
  %v1658 = vpop.permute.xlu0 %1657
  %s1660 = sor.u32 256, 8
  %1661 = vbcast.lane.b32.xlu0 %v1655, %s1660
  %v1662 = vpop.permute.xlu0 %1661
  %v1663 = vmul.f32 %v1493, %v864
  %v1664 = vmul.f32 %v1497, %v865
  %v1665 = vmul.f32 %v1504, %v866
  %v1666 = vmul.f32 %v1508, %v867
  %v1667 = vmul.f32 %v1515, %v868
  %v1668 = vmul.f32 %v1519, %v869
  %v1669 = vmul.f32 %v1526, %v870
  %v1670 = vmul.f32 %v1530, %v871
  %v1671 = vmul.f32 %v1537, %v872
  %v1672 = vmul.f32 %v1541, %v873
  %v1673 = vmul.f32 %v1548, %v874
  %v1674 = vmul.f32 %v1552, %v875
  %v1675 = vmul.f32 %v1559, %v876
  %v1676 = vmul.f32 %v1563, %v877
  %v1677 = vmul.f32 %v1570, %v878
  %v1678 = vmul.f32 %v1574, %v879
  %v1679 = vmul.f32 %v1581, %v880
  %v1680 = vmul.f32 %v1585, %v881
  %v1681 = vmul.f32 %v1592, %v882
  %v1682 = vmul.f32 %v1596, %v883
  %v1683 = vmul.f32 %v1603, %v884
  %v1684 = vmul.f32 %v1607, %v885
  %v1685 = vmul.f32 %v1614, %v886
  %v1686 = vmul.f32 %v1618, %v887
  %v1687 = vmul.f32 %v1625, %v888
  %v1688 = vmul.f32 %v1629, %v889
  %v1689 = vmul.f32 %v1636, %v890
  %v1690 = vmul.f32 %v1640, %v891
  %v1691 = vmul.f32 %v1647, %v892
  %v1692 = vmul.f32 %v1651, %v893
  %v1693 = vmul.f32 %v1658, %v894
  %v1694 = vmul.f32 %v1662, %v895
  %v1695 = vsel %vm321, %v1663, 0.0
  %v1696 = vsel %vm321, %v1664, 0.0
  %v1697 = vadd.f32 %v1695, %v1696
  %v1698 = vrot.slane %v1697, 4
  %v1699 = vadd.f32 %v1697, %v1698
  %v1700 = vrot.slane %v1699, 2
  %v1701 = vadd.f32 %v1699, %v1700
  %v1702 = vrot.slane %v1701, 1
  %v1703 = vadd.f32 %v1701, %v1702
  %v1704 = vsel %vm321, %v1665, 0.0
  %v1705 = vsel %vm321, %v1666, 0.0
  %v1706 = vadd.f32 %v1704, %v1705
  %v1707 = vrot.slane %v1706, 4
  %v1708 = vadd.f32 %v1706, %v1707
  %v1709 = vrot.slane %v1708, 2
  %v1710 = vadd.f32 %v1708, %v1709
  %v1711 = vrot.slane %v1710, 1
  %v1712 = vadd.f32 %v1710, %v1711
  %v1713 = vsel %vm321, %v1667, 0.0
  %v1714 = vsel %vm321, %v1668, 0.0
  %v1715 = vadd.f32 %v1713, %v1714
  %v1716 = vrot.slane %v1715, 4
  %v1717 = vadd.f32 %v1715, %v1716
  %v1718 = vrot.slane %v1717, 2
  %v1719 = vadd.f32 %v1717, %v1718
  %v1720 = vrot.slane %v1719, 1
  %v1721 = vadd.f32 %v1719, %v1720
  %v1722 = vsel %vm321, %v1669, 0.0
  %v1723 = vsel %vm321, %v1670, 0.0
  %v1724 = vadd.f32 %v1722, %v1723
  %v1725 = vrot.slane %v1724, 4
  %v1726 = vadd.f32 %v1724, %v1725
  %v1727 = vrot.slane %v1726, 2
  %v1728 = vadd.f32 %v1726, %v1727
  %v1729 = vrot.slane %v1728, 1
  %v1730 = vadd.f32 %v1728, %v1729
  %v1731 = vsel %vm321, %v1671, 0.0
  %v1732 = vsel %vm321, %v1672, 0.0
  %v1733 = vadd.f32 %v1731, %v1732
  %v1734 = vrot.slane %v1733, 4
  %v1735 = vadd.f32 %v1733, %v1734
  %v1736 = vrot.slane %v1735, 2
  %v1737 = vadd.f32 %v1735, %v1736
  %v1738 = vrot.slane %v1737, 1
  %v1739 = vadd.f32 %v1737, %v1738
  %v1740 = vsel %vm321, %v1673, 0.0
  %v1741 = vsel %vm321, %v1674, 0.0
  %v1742 = vadd.f32 %v1740, %v1741
  %v1743 = vrot.slane %v1742, 4
  %v1744 = vadd.f32 %v1742, %v1743
  %v1745 = vrot.slane %v1744, 2
  %v1746 = vadd.f32 %v1744, %v1745
  %v1747 = vrot.slane %v1746, 1
  %v1748 = vadd.f32 %v1746, %v1747
  %v1749 = vsel %vm321, %v1675, 0.0
  %v1750 = vsel %vm321, %v1676, 0.0
  %v1751 = vadd.f32 %v1749, %v1750
  %v1752 = vrot.slane %v1751, 4
  %v1753 = vadd.f32 %v1751, %v1752
  %v1754 = vrot.slane %v1753, 2
  %v1755 = vadd.f32 %v1753, %v1754
  %v1756 = vrot.slane %v1755, 1
  %v1757 = vadd.f32 %v1755, %v1756
  %v1758 = vsel %vm321, %v1677, 0.0
  %v1759 = vsel %vm321, %v1678, 0.0
  %v1760 = vadd.f32 %v1758, %v1759
  %v1761 = vrot.slane %v1760, 4
  %v1762 = vadd.f32 %v1760, %v1761
  %v1763 = vrot.slane %v1762, 2
  %v1764 = vadd.f32 %v1762, %v1763
  %v1765 = vrot.slane %v1764, 1
  %v1766 = vadd.f32 %v1764, %v1765
  %v1767 = vsel %vm321, %v1679, 0.0
  %v1768 = vsel %vm321, %v1680, 0.0
  %v1769 = vadd.f32 %v1767, %v1768
  %v1770 = vrot.slane %v1769, 4
  %v1771 = vadd.f32 %v1769, %v1770
  %v1772 = vrot.slane %v1771, 2
  %v1773 = vadd.f32 %v1771, %v1772
  %v1774 = vrot.slane %v1773, 1
  %v1775 = vadd.f32 %v1773, %v1774
  %v1776 = vsel %vm321, %v1681, 0.0
  %v1777 = vsel %vm321, %v1682, 0.0
  %v1778 = vadd.f32 %v1776, %v1777
  %v1779 = vrot.slane %v1778, 4
  %v1780 = vadd.f32 %v1778, %v1779
  %v1781 = vrot.slane %v1780, 2
  %v1782 = vadd.f32 %v1780, %v1781
  %v1783 = vrot.slane %v1782, 1
  %v1784 = vadd.f32 %v1782, %v1783
  %v1785 = vsel %vm321, %v1683, 0.0
  %v1786 = vsel %vm321, %v1684, 0.0
  %v1787 = vadd.f32 %v1785, %v1786
  %v1788 = vrot.slane %v1787, 4
  %v1789 = vadd.f32 %v1787, %v1788
  %v1790 = vrot.slane %v1789, 2
  %v1791 = vadd.f32 %v1789, %v1790
  %v1792 = vrot.slane %v1791, 1
  %v1793 = vadd.f32 %v1791, %v1792
  %v1794 = vsel %vm321, %v1685, 0.0
  %v1795 = vsel %vm321, %v1686, 0.0
  %v1796 = vadd.f32 %v1794, %v1795
  %v1797 = vrot.slane %v1796, 4
  %v1798 = vadd.f32 %v1796, %v1797
  %v1799 = vrot.slane %v1798, 2
  %v1800 = vadd.f32 %v1798, %v1799
  %v1801 = vrot.slane %v1800, 1
  %v1802 = vadd.f32 %v1800, %v1801
  %v1803 = vsel %vm321, %v1687, 0.0
  %v1804 = vsel %vm321, %v1688, 0.0
  %v1805 = vadd.f32 %v1803, %v1804
  %v1806 = vrot.slane %v1805, 4
  %v1807 = vadd.f32 %v1805, %v1806
  %v1808 = vrot.slane %v1807, 2
  %v1809 = vadd.f32 %v1807, %v1808
  %v1810 = vrot.slane %v1809, 1
  %v1811 = vadd.f32 %v1809, %v1810
  %v1812 = vsel %vm321, %v1689, 0.0
  %v1813 = vsel %vm321, %v1690, 0.0
  %v1814 = vadd.f32 %v1812, %v1813
  %v1815 = vrot.slane %v1814, 4
  %v1816 = vadd.f32 %v1814, %v1815
  %v1817 = vrot.slane %v1816, 2
  %v1818 = vadd.f32 %v1816, %v1817
  %v1819 = vrot.slane %v1818, 1
  %v1820 = vadd.f32 %v1818, %v1819
  %v1821 = vsel %vm321, %v1691, 0.0
  %v1822 = vsel %vm321, %v1692, 0.0
  %v1823 = vadd.f32 %v1821, %v1822
  %v1824 = vrot.slane %v1823, 4
  %v1825 = vadd.f32 %v1823, %v1824
  %v1826 = vrot.slane %v1825, 2
  %v1827 = vadd.f32 %v1825, %v1826
  %v1828 = vrot.slane %v1827, 1
  %v1829 = vadd.f32 %v1827, %v1828
  %v1830 = vsel %vm321, %v1693, 0.0
  %v1831 = vsel %vm321, %v1694, 0.0
  %v1832 = vadd.f32 %v1830, %v1831
  %v1833 = vrot.slane %v1832, 4
  %v1834 = vadd.f32 %v1832, %v1833
  %v1835 = vrot.slane %v1834, 2
  %v1836 = vadd.f32 %v1834, %v1835
  %v1837 = vrot.slane %v1836, 1
  %v1838 = vadd.f32 %v1836, %v1837
  %v1855 = vsel %vm600, %v1712, %v1703
  %v1856 = vsel %vm602, %v1721, %v1855
  %v1857 = vsel %vm604, %v1730, %v1856
  %v1858 = vsel %vm606, %v1739, %v1857
  %v1859 = vsel %vm608, %v1748, %v1858
  %v1860 = vsel %vm610, %v1757, %v1859
  %v1861 = vsel %vm612, %v1766, %v1860
  %v1862 = vsel %vm600, %v1784, %v1775
  %v1863 = vsel %vm602, %v1793, %v1862
  %v1864 = vsel %vm604, %v1802, %v1863
  %v1865 = vsel %vm606, %v1811, %v1864
  %v1866 = vsel %vm608, %v1820, %v1865
  %v1867 = vsel %vm610, %v1829, %v1866
  %v1868 = vsel %vm612, %v1838, %v1867
  %v1871 = vadd.f32 %v1096, %v1861
  %v1872 = vadd.f32 %v1097, %v1868
  %v1873 = vlaneseq
  %v1874 = vshrl.u32 %v1873, 7
  %v1875 = vsub.s32 2, %v1874
  %v1876 = vrot.slane %v1078, %v1875
  %1878 = vbcast.lane.b32.xlu0 %v1876, 256
  %v1879 = vpop.permute.xlu0 %1878
  %s1881 = sor.u32 256, 8
  %1882 = vbcast.lane.b32.xlu0 %v1876, %s1881
  %v1883 = vpop.permute.xlu0 %1882
  %v1884 = vlaneseq
  %v1885 = vshrl.u32 %v1884, 7
  %v1886 = vsub.s32 2, %v1885
  %v1887 = vrot.slane %v1079, %v1886
  %1889 = vbcast.lane.b32.xlu0 %v1887, 256
  %v1890 = vpop.permute.xlu0 %1889
  %s1892 = sor.u32 256, 8
  %1893 = vbcast.lane.b32.xlu0 %v1887, %s1892
  %v1894 = vpop.permute.xlu0 %1893
  %v1895 = vlaneseq
  %v1896 = vshrl.u32 %v1895, 7
  %v1897 = vsub.s32 2, %v1896
  %v1898 = vrot.slane %v1080, %v1897
  %1900 = vbcast.lane.b32.xlu0 %v1898, 256
  %v1901 = vpop.permute.xlu0 %1900
  %s1903 = sor.u32 256, 8
  %1904 = vbcast.lane.b32.xlu0 %v1898, %s1903
  %v1905 = vpop.permute.xlu0 %1904
  %v1906 = vlaneseq
  %v1907 = vshrl.u32 %v1906, 7
  %v1908 = vsub.s32 2, %v1907
  %v1909 = vrot.slane %v1081, %v1908
  %1911 = vbcast.lane.b32.xlu0 %v1909, 256
  %v1912 = vpop.permute.xlu0 %1911
  %s1914 = sor.u32 256, 8
  %1915 = vbcast.lane.b32.xlu0 %v1909, %s1914
  %v1916 = vpop.permute.xlu0 %1915
  %v1917 = vlaneseq
  %v1918 = vshrl.u32 %v1917, 7
  %v1919 = vsub.s32 2, %v1918
  %v1920 = vrot.slane %v1082, %v1919
  %1922 = vbcast.lane.b32.xlu0 %v1920, 256
  %v1923 = vpop.permute.xlu0 %1922
  %s1925 = sor.u32 256, 8
  %1926 = vbcast.lane.b32.xlu0 %v1920, %s1925
  %v1927 = vpop.permute.xlu0 %1926
  %v1928 = vlaneseq
  %v1929 = vshrl.u32 %v1928, 7
  %v1930 = vsub.s32 2, %v1929
  %v1931 = vrot.slane %v1083, %v1930
  %1933 = vbcast.lane.b32.xlu0 %v1931, 256
  %v1934 = vpop.permute.xlu0 %1933
  %s1936 = sor.u32 256, 8
  %1937 = vbcast.lane.b32.xlu0 %v1931, %s1936
  %v1938 = vpop.permute.xlu0 %1937
  %v1939 = vlaneseq
  %v1940 = vshrl.u32 %v1939, 7
  %v1941 = vsub.s32 2, %v1940
  %v1942 = vrot.slane %v1084, %v1941
  %1944 = vbcast.lane.b32.xlu0 %v1942, 256
  %v1945 = vpop.permute.xlu0 %1944
  %s1947 = sor.u32 256, 8
  %1948 = vbcast.lane.b32.xlu0 %v1942, %s1947
  %v1949 = vpop.permute.xlu0 %1948
  %v1950 = vlaneseq
  %v1951 = vshrl.u32 %v1950, 7
  %v1952 = vsub.s32 2, %v1951
  %v1953 = vrot.slane %v1085, %v1952
  %1955 = vbcast.lane.b32.xlu0 %v1953, 256
  %v1956 = vpop.permute.xlu0 %1955
  %s1958 = sor.u32 256, 8
  %1959 = vbcast.lane.b32.xlu0 %v1953, %s1958
  %v1960 = vpop.permute.xlu0 %1959
  %v1961 = vlaneseq
  %v1962 = vshrl.u32 %v1961, 7
  %v1963 = vsub.s32 2, %v1962
  %v1964 = vrot.slane %v1086, %v1963
  %1966 = vbcast.lane.b32.xlu0 %v1964, 256
  %v1967 = vpop.permute.xlu0 %1966
  %s1969 = sor.u32 256, 8
  %1970 = vbcast.lane.b32.xlu0 %v1964, %s1969
  %v1971 = vpop.permute.xlu0 %1970
  %v1972 = vlaneseq
  %v1973 = vshrl.u32 %v1972, 7
  %v1974 = vsub.s32 2, %v1973
  %v1975 = vrot.slane %v1087, %v1974
  %1977 = vbcast.lane.b32.xlu0 %v1975, 256
  %v1978 = vpop.permute.xlu0 %1977
  %s1980 = sor.u32 256, 8
  %1981 = vbcast.lane.b32.xlu0 %v1975, %s1980
  %v1982 = vpop.permute.xlu0 %1981
  %v1983 = vlaneseq
  %v1984 = vshrl.u32 %v1983, 7
  %v1985 = vsub.s32 2, %v1984
  %v1986 = vrot.slane %v1088, %v1985
  %1988 = vbcast.lane.b32.xlu0 %v1986, 256
  %v1989 = vpop.permute.xlu0 %1988
  %s1991 = sor.u32 256, 8
  %1992 = vbcast.lane.b32.xlu0 %v1986, %s1991
  %v1993 = vpop.permute.xlu0 %1992
  %v1994 = vlaneseq
  %v1995 = vshrl.u32 %v1994, 7
  %v1996 = vsub.s32 2, %v1995
  %v1997 = vrot.slane %v1089, %v1996
  %1999 = vbcast.lane.b32.xlu0 %v1997, 256
  %v2000 = vpop.permute.xlu0 %1999
  %s2002 = sor.u32 256, 8
  %2003 = vbcast.lane.b32.xlu0 %v1997, %s2002
  %v2004 = vpop.permute.xlu0 %2003
  %v2005 = vlaneseq
  %v2006 = vshrl.u32 %v2005, 7
  %v2007 = vsub.s32 2, %v2006
  %v2008 = vrot.slane %v1090, %v2007
  %2010 = vbcast.lane.b32.xlu0 %v2008, 256
  %v2011 = vpop.permute.xlu0 %2010
  %s2013 = sor.u32 256, 8
  %2014 = vbcast.lane.b32.xlu0 %v2008, %s2013
  %v2015 = vpop.permute.xlu0 %2014
  %v2016 = vlaneseq
  %v2017 = vshrl.u32 %v2016, 7
  %v2018 = vsub.s32 2, %v2017
  %v2019 = vrot.slane %v1091, %v2018
  %2021 = vbcast.lane.b32.xlu0 %v2019, 256
  %v2022 = vpop.permute.xlu0 %2021
  %s2024 = sor.u32 256, 8
  %2025 = vbcast.lane.b32.xlu0 %v2019, %s2024
  %v2026 = vpop.permute.xlu0 %2025
  %v2027 = vlaneseq
  %v2028 = vshrl.u32 %v2027, 7
  %v2029 = vsub.s32 2, %v2028
  %v2030 = vrot.slane %v1092, %v2029
  %2032 = vbcast.lane.b32.xlu0 %v2030, 256
  %v2033 = vpop.permute.xlu0 %2032
  %s2035 = sor.u32 256, 8
  %2036 = vbcast.lane.b32.xlu0 %v2030, %s2035
  %v2037 = vpop.permute.xlu0 %2036
  %v2038 = vlaneseq
  %v2039 = vshrl.u32 %v2038, 7
  %v2040 = vsub.s32 2, %v2039
  %v2041 = vrot.slane %v1093, %v2040
  %2043 = vbcast.lane.b32.xlu0 %v2041, 256
  %v2044 = vpop.permute.xlu0 %2043
  %s2046 = sor.u32 256, 8
  %2047 = vbcast.lane.b32.xlu0 %v2041, %s2046
  %v2048 = vpop.permute.xlu0 %2047
  %v2049 = vmul.f32 %v1879, %v864
  %v2050 = vmul.f32 %v1883, %v865
  %v2051 = vmul.f32 %v1890, %v866
  %v2052 = vmul.f32 %v1894, %v867
  %v2053 = vmul.f32 %v1901, %v868
  %v2054 = vmul.f32 %v1905, %v869
  %v2055 = vmul.f32 %v1912, %v870
  %v2056 = vmul.f32 %v1916, %v871
  %v2057 = vmul.f32 %v1923, %v872
  %v2058 = vmul.f32 %v1927, %v873
  %v2059 = vmul.f32 %v1934, %v874
  %v2060 = vmul.f32 %v1938, %v875
  %v2061 = vmul.f32 %v1945, %v876
  %v2062 = vmul.f32 %v1949, %v877
  %v2063 = vmul.f32 %v1956, %v878
  %v2064 = vmul.f32 %v1960, %v879
  %v2065 = vmul.f32 %v1967, %v880
  %v2066 = vmul.f32 %v1971, %v881
  %v2067 = vmul.f32 %v1978, %v882
  %v2068 = vmul.f32 %v1982, %v883
  %v2069 = vmul.f32 %v1989, %v884
  %v2070 = vmul.f32 %v1993, %v885
  %v2071 = vmul.f32 %v2000, %v886
  %v2072 = vmul.f32 %v2004, %v887
  %v2073 = vmul.f32 %v2011, %v888
  %v2074 = vmul.f32 %v2015, %v889
  %v2075 = vmul.f32 %v2022, %v890
  %v2076 = vmul.f32 %v2026, %v891
  %v2077 = vmul.f32 %v2033, %v892
  %v2078 = vmul.f32 %v2037, %v893
  %v2079 = vmul.f32 %v2044, %v894
  %v2080 = vmul.f32 %v2048, %v895
  %v2081 = vsel %vm321, %v2049, 0.0
  %v2082 = vsel %vm321, %v2050, 0.0
  %v2083 = vadd.f32 %v2081, %v2082
  %v2084 = vrot.slane %v2083, 4
  %v2085 = vadd.f32 %v2083, %v2084
  %v2086 = vrot.slane %v2085, 2
  %v2087 = vadd.f32 %v2085, %v2086
  %v2088 = vrot.slane %v2087, 1
  %v2089 = vadd.f32 %v2087, %v2088
  %v2090 = vsel %vm321, %v2051, 0.0
  %v2091 = vsel %vm321, %v2052, 0.0
  %v2092 = vadd.f32 %v2090, %v2091
  %v2093 = vrot.slane %v2092, 4
  %v2094 = vadd.f32 %v2092, %v2093
  %v2095 = vrot.slane %v2094, 2
  %v2096 = vadd.f32 %v2094, %v2095
  %v2097 = vrot.slane %v2096, 1
  %v2098 = vadd.f32 %v2096, %v2097
  %v2099 = vsel %vm321, %v2053, 0.0
  %v2100 = vsel %vm321, %v2054, 0.0
  %v2101 = vadd.f32 %v2099, %v2100
  %v2102 = vrot.slane %v2101, 4
  %v2103 = vadd.f32 %v2101, %v2102
  %v2104 = vrot.slane %v2103, 2
  %v2105 = vadd.f32 %v2103, %v2104
  %v2106 = vrot.slane %v2105, 1
  %v2107 = vadd.f32 %v2105, %v2106
  %v2108 = vsel %vm321, %v2055, 0.0
  %v2109 = vsel %vm321, %v2056, 0.0
  %v2110 = vadd.f32 %v2108, %v2109
  %v2111 = vrot.slane %v2110, 4
  %v2112 = vadd.f32 %v2110, %v2111
  %v2113 = vrot.slane %v2112, 2
  %v2114 = vadd.f32 %v2112, %v2113
  %v2115 = vrot.slane %v2114, 1
  %v2116 = vadd.f32 %v2114, %v2115
  %v2117 = vsel %vm321, %v2057, 0.0
  %v2118 = vsel %vm321, %v2058, 0.0
  %v2119 = vadd.f32 %v2117, %v2118
  %v2120 = vrot.slane %v2119, 4
  %v2121 = vadd.f32 %v2119, %v2120
  %v2122 = vrot.slane %v2121, 2
  %v2123 = vadd.f32 %v2121, %v2122
  %v2124 = vrot.slane %v2123, 1
  %v2125 = vadd.f32 %v2123, %v2124
  %v2126 = vsel %vm321, %v2059, 0.0
  %v2127 = vsel %vm321, %v2060, 0.0
  %v2128 = vadd.f32 %v2126, %v2127
  %v2129 = vrot.slane %v2128, 4
  %v2130 = vadd.f32 %v2128, %v2129
  %v2131 = vrot.slane %v2130, 2
  %v2132 = vadd.f32 %v2130, %v2131
  %v2133 = vrot.slane %v2132, 1
  %v2134 = vadd.f32 %v2132, %v2133
  %v2135 = vsel %vm321, %v2061, 0.0
  %v2136 = vsel %vm321, %v2062, 0.0
  %v2137 = vadd.f32 %v2135, %v2136
  %v2138 = vrot.slane %v2137, 4
  %v2139 = vadd.f32 %v2137, %v2138
  %v2140 = vrot.slane %v2139, 2
  %v2141 = vadd.f32 %v2139, %v2140
  %v2142 = vrot.slane %v2141, 1
  %v2143 = vadd.f32 %v2141, %v2142
  %v2144 = vsel %vm321, %v2063, 0.0
  %v2145 = vsel %vm321, %v2064, 0.0
  %v2146 = vadd.f32 %v2144, %v2145
  %v2147 = vrot.slane %v2146, 4
  %v2148 = vadd.f32 %v2146, %v2147
  %v2149 = vrot.slane %v2148, 2
  %v2150 = vadd.f32 %v2148, %v2149
  %v2151 = vrot.slane %v2150, 1
  %v2152 = vadd.f32 %v2150, %v2151
  %v2153 = vsel %vm321, %v2065, 0.0
  %v2154 = vsel %vm321, %v2066, 0.0
  %v2155 = vadd.f32 %v2153, %v2154
  %v2156 = vrot.slane %v2155, 4
  %v2157 = vadd.f32 %v2155, %v2156
  %v2158 = vrot.slane %v2157, 2
  %v2159 = vadd.f32 %v2157, %v2158
  %v2160 = vrot.slane %v2159, 1
  %v2161 = vadd.f32 %v2159, %v2160
  %v2162 = vsel %vm321, %v2067, 0.0
  %v2163 = vsel %vm321, %v2068, 0.0
  %v2164 = vadd.f32 %v2162, %v2163
  %v2165 = vrot.slane %v2164, 4
  %v2166 = vadd.f32 %v2164, %v2165
  %v2167 = vrot.slane %v2166, 2
  %v2168 = vadd.f32 %v2166, %v2167
  %v2169 = vrot.slane %v2168, 1
  %v2170 = vadd.f32 %v2168, %v2169
  %v2171 = vsel %vm321, %v2069, 0.0
  %v2172 = vsel %vm321, %v2070, 0.0
  %v2173 = vadd.f32 %v2171, %v2172
  %v2174 = vrot.slane %v2173, 4
  %v2175 = vadd.f32 %v2173, %v2174
  %v2176 = vrot.slane %v2175, 2
  %v2177 = vadd.f32 %v2175, %v2176
  %v2178 = vrot.slane %v2177, 1
  %v2179 = vadd.f32 %v2177, %v2178
  %v2180 = vsel %vm321, %v2071, 0.0
  %v2181 = vsel %vm321, %v2072, 0.0
  %v2182 = vadd.f32 %v2180, %v2181
  %v2183 = vrot.slane %v2182, 4
  %v2184 = vadd.f32 %v2182, %v2183
  %v2185 = vrot.slane %v2184, 2
  %v2186 = vadd.f32 %v2184, %v2185
  %v2187 = vrot.slane %v2186, 1
  %v2188 = vadd.f32 %v2186, %v2187
  %v2189 = vsel %vm321, %v2073, 0.0
  %v2190 = vsel %vm321, %v2074, 0.0
  %v2191 = vadd.f32 %v2189, %v2190
  %v2192 = vrot.slane %v2191, 4
  %v2193 = vadd.f32 %v2191, %v2192
  %v2194 = vrot.slane %v2193, 2
  %v2195 = vadd.f32 %v2193, %v2194
  %v2196 = vrot.slane %v2195, 1
  %v2197 = vadd.f32 %v2195, %v2196
  %v2198 = vsel %vm321, %v2075, 0.0
  %v2199 = vsel %vm321, %v2076, 0.0
  %v2200 = vadd.f32 %v2198, %v2199
  %v2201 = vrot.slane %v2200, 4
  %v2202 = vadd.f32 %v2200, %v2201
  %v2203 = vrot.slane %v2202, 2
  %v2204 = vadd.f32 %v2202, %v2203
  %v2205 = vrot.slane %v2204, 1
  %v2206 = vadd.f32 %v2204, %v2205
  %v2207 = vsel %vm321, %v2077, 0.0
  %v2208 = vsel %vm321, %v2078, 0.0
  %v2209 = vadd.f32 %v2207, %v2208
  %v2210 = vrot.slane %v2209, 4
  %v2211 = vadd.f32 %v2209, %v2210
  %v2212 = vrot.slane %v2211, 2
  %v2213 = vadd.f32 %v2211, %v2212
  %v2214 = vrot.slane %v2213, 1
  %v2215 = vadd.f32 %v2213, %v2214
  %v2216 = vsel %vm321, %v2079, 0.0
  %v2217 = vsel %vm321, %v2080, 0.0
  %v2218 = vadd.f32 %v2216, %v2217
  %v2219 = vrot.slane %v2218, 4
  %v2220 = vadd.f32 %v2218, %v2219
  %v2221 = vrot.slane %v2220, 2
  %v2222 = vadd.f32 %v2220, %v2221
  %v2223 = vrot.slane %v2222, 1
  %v2224 = vadd.f32 %v2222, %v2223
  %v2241 = vsel %vm600, %v2098, %v2089
  %v2242 = vsel %vm602, %v2107, %v2241
  %v2243 = vsel %vm604, %v2116, %v2242
  %v2244 = vsel %vm606, %v2125, %v2243
  %v2245 = vsel %vm608, %v2134, %v2244
  %v2246 = vsel %vm610, %v2143, %v2245
  %v2247 = vsel %vm612, %v2152, %v2246
  %v2248 = vsel %vm600, %v2170, %v2161
  %v2249 = vsel %vm602, %v2179, %v2248
  %v2250 = vsel %vm604, %v2188, %v2249
  %v2251 = vsel %vm606, %v2197, %v2250
  %v2252 = vsel %vm608, %v2206, %v2251
  %v2253 = vsel %vm610, %v2215, %v2252
  %v2254 = vsel %vm612, %v2224, %v2253
  %v2257 = vadd.f32 %v1098, %v2247
  %v2258 = vadd.f32 %v1099, %v2254
  %v2259 = vsel %vm321, %v1485, 0.0
  %2260 = vadd.xlane.f32.xlu0 %v2259
  %v2261 = vpop.xlane.xlu0 %2260
  %v2262 = vsel %vm321, %v1486, 0.0
  %2263 = vadd.xlane.f32.xlu0 %v2262
  %v2264 = vpop.xlane.xlu0 %2263
  %v2265 = vrcp.pop 32.0
  %v2266 = vmul.f32 %v2261, %v2265
  %v2267 = vmul.f32 %v2264, %v2265
  %v2268 = vsub.f32 %v1485, %v2266
  %v2269 = vsub.f32 %v1486, %v2267
  %v2270 = vmul.f32 %v2268, %v2268
  %v2271 = vmul.f32 %v2269, %v2269
  %v2272 = vadd.f32 %v2270, 0.0
  %v2273 = vadd.f32 %v2271, 0.0
  %v2274 = vsel %vm321, %v1871, 0.0
  %2275 = vadd.xlane.f32.xlu0 %v2274
  %v2276 = vpop.xlane.xlu0 %2275
  %v2277 = vsel %vm321, %v1872, 0.0
  %2278 = vadd.xlane.f32.xlu0 %v2277
  %v2279 = vpop.xlane.xlu0 %2278
  %v2280 = vmul.f32 %v2276, %v2265
  %v2281 = vmul.f32 %v2279, %v2265
  %v2282 = vsub.f32 %v1871, %v2280
  %v2283 = vsub.f32 %v1872, %v2281
  %v2284 = vmul.f32 %v2282, %v2282
  %v2285 = vmul.f32 %v2283, %v2283
  %v2286 = vadd.f32 %v2272, %v2284
  %v2287 = vadd.f32 %v2273, %v2285
  %v2288 = vsel %vm321, %v2257, 0.0
  %2289 = vadd.xlane.f32.xlu0 %v2288
  %v2290 = vpop.xlane.xlu0 %2289
  %v2291 = vsel %vm321, %v2258, 0.0
  %2292 = vadd.xlane.f32.xlu0 %v2291
  %v2293 = vpop.xlane.xlu0 %2292
  %v2294 = vmul.f32 %v2290, %v2265
  %v2295 = vmul.f32 %v2293, %v2265
  %v2296 = vsub.f32 %v2257, %v2294
  %v2297 = vsub.f32 %v2258, %v2295
  %v2298 = vmul.f32 %v2296, %v2296
  %v2299 = vmul.f32 %v2297, %v2297
  %v2300 = vadd.f32 %v2286, %v2298
  %v2301 = vadd.f32 %v2287, %v2299
  %v2302 = vsel %vm321, %v2300, 0.0
  %2303 = vadd.xlane.f32.xlu0 %v2302
  %v2304 = vpop.xlane.xlu0 %2303
  %v2305 = vsel %vm321, %v2301, 0.0
  %2306 = vadd.xlane.f32.xlu0 %v2305
  %v2307 = vpop.xlane.xlu0 %2306
  %v2308 = vmul.f32 %v2304, %v2265
  %v2309 = vmul.f32 %v2307, %v2265
  %v2310 = vadd.f32 %v2308, 1e-05
  %v2311 = vadd.f32 %v2309, 1e-05
  %v2312 = vrsqrt.pop %v2310
  %v2313 = vrsqrt.pop %v2311
  %v2315 = vlaneseq
  %v2316 = vshrl.u32 %v2315, 7
  %v2317 = vsub.s32 0, %v2316
  %v2318 = vrot.slane %v1100, %v2317
  %v2320 = vmul.f32 %v2312, %v2318
  %v2321 = vmul.f32 %v2313, %v2318
  %v2322 = vmul.f32 %v2268, %v2320
  %v2323 = vmul.f32 %v2269, %v2321
  %2324 = vst.msk [vmem:[%s11] sm:$0xff] %vm321, %v2322
  %2325 = vst.msk [vmem:[%s11 + $0x8] sm:$0xff] %vm321, %v2323
  %v2326 = vmul.f32 %v2282, %v2320
  %v2327 = vmul.f32 %v2283, %v2321
  %s2328 = scalar_lea.vmem %s11, 16
  %2329 = vst.msk [vmem:[%s2328] sm:$0xff] %vm321, %v2326
  %2330 = vst.msk [vmem:[%s2328 + $0x8] sm:$0xff] %vm321, %v2327
  %v2331 = vmul.f32 %v2296, %v2320
  %v2332 = vmul.f32 %v2297, %v2321
  %s2333 = scalar_lea.vmem %s11, 32
  %2334 = vst.msk [vmem:[%s2333] sm:$0xff] %vm321, %v2331
  %2335 = vst.msk [vmem:[%s2333 + $0x8] sm:$0xff] %vm321, %v2332
  // Predicated region
  $region42: #{clofnet_forward.8} parent=0 // pred_check
    _
  $region43: #{clofnet_forward.8} parent=0 // pred_check_branch
    %2337 = sbr.rel (0) target = $region45
  $region44: #{clofnet_forward.8} parent=0 // pred_region
    _
  $region45: #{clofnet_forward.8} parent=0 // pred_fallthru
    _
  // Predicated region
  $region46: #{clofnet_forward.8} parent=0 // pred_check
    _
  $region47: #{clofnet_forward.8} parent=0 // pred_check_branch
    %2339 = sbr.rel (0) target = $region49
  $region48: #{clofnet_forward.8} parent=0 // pred_region
    _
  $region49: #{clofnet_forward.8} parent=0 // pred_fallthru
    _
  // Predicated region
  $region50: #{clofnet_forward.8} parent=0 // pred_check
    _
  $region51: #{clofnet_forward.8} parent=0 // pred_check_branch
    %2341 = sbr.rel (0) target = $region53
  $region52: #{clofnet_forward.8} parent=0 // pred_region
    _
  $region53: #{clofnet_forward.8} parent=0 // pred_fallthru
    _
  // Predicated region
  $region54: #{clofnet_forward.8} parent=0 // pred_check
    _
  $region55: #{clofnet_forward.8} parent=0 // pred_check_branch
    %2343 = sbr.rel (0) target = $region57
  $region56: #{clofnet_forward.8} parent=0 // pred_region
    _
  $region57: #{clofnet_forward.8} parent=0 // pred_fallthru
    _

// kernel: clofnet_forward.11
$region0: #{clofnet_forward.11}
  #allocation0 [shape = 'u32[]', space=smem, size = 0x4, offset = 0x4, fixed_abs, tag = 'smem constant byte address 0x4 - core index']
  #allocation1 [shape = 'u32[144,128]{1,0:T(1,128)}', space=vmem, size = 0x12000, scoped, tag = 'internal scratch']
  %s0 = inlined_call_operand.vmem [shape: f32[3,16,32], index: 0, kind: input, shape index: {}]
  %s1 = inlined_call_operand.vmem [shape: f32[2,16], index: 1, kind: input, shape index: {}]
  %s2 = inlined_call_operand.hbm [shape: f32[2,32], index: 2, kind: output, shape index: {}]
  %s3 = sld [smem:[#allocation0]]
  $region18: #{clofnet_forward.11} parent=0
    _
  %s5 = ssub.s32 1, %s3
  %s6 = scalar_select 0, %s5, %s3
  $region1: #{clofnet_forward.11} parent=0
    #allocation2 [shape = 'u8[1024]{0}', space=vmem, size = 0x400, scoped, tag = 'output window, operand 0, single buffered']
    #allocation3 [shape = 's32[1]{0}', space=sflag, size = 0x4, scoped, tag = 'scoped memory for clofnet_forward.11']
    %7 = vsyncpa [#allocation3], 0
    // Predicated region
    $region2: #{clofnet_forward.11} parent=1 // pred_check
      _
    $region3: #{clofnet_forward.11} parent=1 // pred_check_branch
      %9 = sbr.rel (0) target = $region5
    $region4: #{clofnet_forward.11} parent=1 // pred_region
      _
    $region5: #{clofnet_forward.11} parent=1 // pred_fallthru
      _
    // Predicated region
    $region6: #{clofnet_forward.11} parent=1 // pred_check
      _
    $region7: #{clofnet_forward.11} parent=1 // pred_check_branch
      %11 = sbr.rel (0) target = $region9
    $region8: #{clofnet_forward.11} parent=1 // pred_region
      _
    $region9: #{clofnet_forward.11} parent=1 // pred_fallthru
      _
    %v12 = vld [vmem:[%s0] sm:$0xff]
    %v13 = vld [vmem:[%s0 + $0x8] sm:$0xff]
    %v14 = vmul.f32 %v12, %v12
    %v15 = vmul.f32 %v13, %v13
    %s16 = scalar_lea.vmem %s0, 16
    %v17 = vld [vmem:[%s16] sm:$0xff]
    %v18 = vld [vmem:[%s16 + $0x8] sm:$0xff]
    %v19 = vmul.f32 %v17, %v17
    %v20 = vmul.f32 %v18, %v18
    %v21 = vadd.f32 %v14, %v19
    %v22 = vadd.f32 %v15, %v20
    %s23 = scalar_lea.vmem %s0, 32
    %v24 = vld [vmem:[%s23] sm:$0xff]
    %v25 = vld [vmem:[%s23 + $0x8] sm:$0xff]
    %v26 = vmul.f32 %v24, %v24
    %v27 = vmul.f32 %v25, %v25
    %v28 = vadd.f32 %v21, %v26
    %v29 = vadd.f32 %v22, %v27
    %v30 = vrsqrt.pop %v28
    %v31 = vmul.f32 %v28, %v30
    %vm32 = vcmp.eq.f32.partialorder %v28, inf
    %v33 = vsel %vm32, %v28, %v31
    %vm34 = vcmp.eq.f32.partialorder %v28, 0.0
    %v35 = vand.u32 %v28, 2147483648
    %v36 = vsel %vm34, %v35, %v33
    %v37 = vrsqrt.pop %v29
    %v38 = vmul.f32 %v29, %v37
    %vm39 = vcmp.eq.f32.partialorder %v29, inf
    %v40 = vsel %vm39, %v29, %v38
    %vm41 = vcmp.eq.f32.partialorder %v29, 0.0
    %v42 = vand.u32 %v29, 2147483648
    %v43 = vsel %vm41, %v42, %v40
    %v44 = vld [vmem:[%s1] sm:$0x3]
    %vm45 = vcmask 130048
    %v47 = vsel %vm45, %v44, 0
    %49 = vmatprep.subr.mxu0 0.0
    %50 = vmatpush1.msra.mxu0 0.0
    %51 = vmatprep.subr.mxu0 0.0
    %52 = vmatpush1.msra.mxu0 0.0
    %53 = vmatprep.subr.mxu0 0.0
    %54 = vmatpush1.msra.mxu0 0.0
    %55 = vmatprep.subr.mxu0 0.0
    %56 = vmatpush1.msra.mxu0 0.0
    %57 = vmatprep.subr.mxu0 0.0
    %58 = vmatpush1.msra.mxu0 0.0
    %59 = vmatprep.subr.mxu0 0.0
    %60 = vmatpush1.msra.mxu0 0.0
    %61 = vmatprep.subr.mxu0 0.0
    %62 = vmatpush1.msra.mxu0 0.0
    %63 = vmatprep.subr.mxu0 0.0
    %64 = vmatpush1.msra.mxu0 0.0
    %65 = vmatprep.subr.mxu0 0.0
    %66 = vmatpush1.msra.mxu0 0.0
    %67 = vmatprep.subr.mxu0 0.0
    %68 = vmatpush1.msra.mxu0 0.0
    %69 = vmatprep.subr.mxu0 0.0
    %70 = vmatpush1.msra.mxu0 0.0
    %71 = vmatprep.subr.mxu0 0.0
    %72 = vmatpush1.msra.mxu0 0.0
    %73 = vmatprep.subr.mxu0 0.0
    %74 = vmatpush1.msra.mxu0 0.0
    %75 = vmatprep.subr.mxu0 0.0
    %76 = vmatpush1.msra.mxu0 0.0
    %77 = vmatprep.subr.mxu0 0.0
    %78 = vmatpush1.msra.mxu0 %v43
    %79 = vmatprep.subr.mxu0 0.0
    %80 = vmatpush1.msra.mxu0 %v36
    %81 = vmatprep.subr.mxu0 0.0
    %82 = vmatpush2.msra.mxu0 0.0
    %83 = vmatprep.subr.mxu0 0.0
    %84 = vmatpush2.msra.mxu0 0.0
    %85 = vmatprep.subr.mxu0 0.0
    %86 = vmatpush2.msra.mxu0 0.0
    %87 = vmatprep.subr.mxu0 0.0
    %88 = vmatpush2.msra.mxu0 0.0
    %89 = vmatprep.subr.mxu0 0.0
    %90 = vmatpush2.msra.mxu0 0.0
    %91 = vmatprep.subr.mxu0 0.0
    %92 = vmatpush2.msra.mxu0 0.0
    %93 = vmatprep.subr.mxu0 0.0
    %94 = vmatpush2.msra.mxu0 0.0
    %95 = vmatprep.subr.mxu0 0.0
    %96 = vmatpush2.msra.mxu0 0.0
    %97 = vmatprep.subr.mxu0 0.0
    %98 = vmatpush2.msra.mxu0 0.0
    %99 = vmatprep.subr.mxu0 0.0
    %100 = vmatpush2.msra.mxu0 0.0
    %101 = vmatprep.subr.mxu0 0.0
    %102 = vmatpush2.msra.mxu0 0.0
    %103 = vmatprep.subr.mxu0 0.0
    %104 = vmatpush2.msra.mxu0 0.0
    %105 = vmatprep.subr.mxu0 0.0
    %106 = vmatpush2.msra.mxu0 0.0
    %107 = vmatprep.subr.mxu0 0.0
    %108 = vmatpush2.msra.mxu0 0.0
    %109 = vmatprep.subr.mxu0 0.0
    %110 = vmatpush2.msra.mxu0 0.0
    %111 = vmatprep.subr.mxu0 0.0
    %112 = vmatpush2.msra.mxu0 0.0
    %113 = vmatprep.mubr.f32.mxu0 0.0
    %114 = vmatmul.mubr.f32.gmra.mxu0 %v47
    %v115 = vpop.f32.mrf.mxu0
    %v116 = vadd.f32 0.0, %v115
    %v117 = vpop.f32.mrf.mxu0
    %118 = vdwg.mxu0
    %vm119 = vcmask 254976
    %120 = vst.msk [vmem:[#allocation2] sm:$0x3] %vm119, %v116
    // Predicated region
    $region10: #{clofnet_forward.11} parent=1 // pred_check
      _
    $region11: #{clofnet_forward.11} parent=1 // pred_check_branch
      %122 = sbr.rel (0) target = $region13
    $region12: #{clofnet_forward.11} parent=1 // pred_region
      %s124 = ssub.s32 32, 32
      %125 = vsyncadd [#allocation3], %s124
      %s127 = sshll.u32 [#allocation2], 4
      %s128 = int_to_ptr.vmem [resolvable:$true] %s127
      %130 = dma.vmem_to_hbm [thread:$0]  %s128, 32, %s2, [#allocation3]
    $region13: #{clofnet_forward.11} parent=1 // pred_fallthru
      _
    // Predicated region
    $region14: #{clofnet_forward.11} parent=1 // pred_check
      _
    $region15: #{clofnet_forward.11} parent=1 // pred_check_branch
      %132 = sbr.rel (0) target = $region17
    $region16: #{clofnet_forward.11} parent=1 // pred_region
      %133 = dma.done [#allocation3], 32
    $region17: #{clofnet_forward.11} parent=1 // pred_fallthru
      _
    %134 = vsyncpa [#allocation3], 1

// kernel: clofnet_forward.6
$region0: #{clofnet_forward.6}
  #allocation0 [shape = 'u32[]', space=smem, size = 0x4, offset = 0x4, fixed_abs, tag = 'smem constant byte address 0x4 - core index']
  #allocation1 [shape = 'u32[144,128]{1,0:T(1,128)}', space=vmem, size = 0x12000, scoped, tag = 'internal scratch']
  %s0 = inlined_call_operand.vmem [shape: f32[256,1], index: 0, kind: input, shape index: {}]
  %s1 = inlined_call_operand.vmem [shape: f32[256,8], index: 1, kind: input, shape index: {}]
  %s2 = inlined_call_operand.vmem [shape: f32[1,16], index: 2, kind: input, shape index: {}]
  %s3 = inlined_call_operand.vmem [shape: f32[1,16], index: 3, kind: input, shape index: {}]
  %s4 = inlined_call_operand.vmem [shape: f32[16,32], index: 4, kind: input, shape index: {}]
  %s5 = inlined_call_operand.vmem [shape: f32[1,32], index: 5, kind: input, shape index: {}]
  %s6 = inlined_call_operand.vmem [shape: f32[32,32], index: 6, kind: input, shape index: {}]
  %s7 = inlined_call_operand.vmem [shape: f32[1,32], index: 7, kind: input, shape index: {}]
  %s8 = inlined_call_operand.vmem [shape: f32[8,8], index: 8, kind: input, shape index: {}]
  %s9 = inlined_call_operand.vmem [shape: f32[1,8], index: 9, kind: input, shape index: {}]
  %s10 = inlined_call_operand.vmem [shape: f32[8,32], index: 10, kind: input, shape index: {}]
  %s11 = inlined_call_operand.vmem [shape: f32[1,32], index: 11, kind: input, shape index: {}]
  %s12 = inlined_call_operand.vmem [shape: f32[256,32], index: 12, kind: output, shape index: {0}]
  %s13 = inlined_call_operand.vmem [shape: f32[256,32], index: 13, kind: output, shape index: {1}]
  %14 = xla_tuple %s12, %s13
  %s15 = sld [smem:[#allocation0]]
  $region66: #{clofnet_forward.6} parent=0
    _
  %s17 = ssub.s32 1, %s15
  %s18 = scalar_select 0, %s17, %s15
  // Predicated region
  $region2: #{clofnet_forward.6} parent=0 // pred_check
    _
  $region3: #{clofnet_forward.6} parent=0 // pred_check_branch
    %20 = sbr.rel (0) target = $region5
  $region4: #{clofnet_forward.6} parent=0 // pred_region
    _
  $region5: #{clofnet_forward.6} parent=0 // pred_fallthru
    _
  // Predicated region
  $region6: #{clofnet_forward.6} parent=0 // pred_check
    _
  $region7: #{clofnet_forward.6} parent=0 // pred_check_branch
    %22 = sbr.rel (0) target = $region9
  $region8: #{clofnet_forward.6} parent=0 // pred_region
    _
  $region9: #{clofnet_forward.6} parent=0 // pred_fallthru
    _
  // Predicated region
  $region10: #{clofnet_forward.6} parent=0 // pred_check
    _
  $region11: #{clofnet_forward.6} parent=0 // pred_check_branch
    %24 = sbr.rel (0) target = $region13
  $region12: #{clofnet_forward.6} parent=0 // pred_region
    _
  $region13: #{clofnet_forward.6} parent=0 // pred_fallthru
    _
  // Predicated region
  $region14: #{clofnet_forward.6} parent=0 // pred_check
    _
  $region15: #{clofnet_forward.6} parent=0 // pred_check_branch
    %26 = sbr.rel (0) target = $region17
  $region16: #{clofnet_forward.6} parent=0 // pred_region
    _
  $region17: #{clofnet_forward.6} parent=0 // pred_fallthru
    _
  // Predicated region
  $region18: #{clofnet_forward.6} parent=0 // pred_check
    _
  $region19: #{clofnet_forward.6} parent=0 // pred_check_branch
    %28 = sbr.rel (0) target = $region21
  $region20: #{clofnet_forward.6} parent=0 // pred_region
    _
  $region21: #{clofnet_forward.6} parent=0 // pred_fallthru
    _
  // Predicated region
  $region22: #{clofnet_forward.6} parent=0 // pred_check
    _
  $region23: #{clofnet_forward.6} parent=0 // pred_check_branch
    %30 = sbr.rel (0) target = $region25
  $region24: #{clofnet_forward.6} parent=0 // pred_region
    _
  $region25: #{clofnet_forward.6} parent=0 // pred_fallthru
    _
  // Predicated region
  $region26: #{clofnet_forward.6} parent=0 // pred_check
    _
  $region27: #{clofnet_forward.6} parent=0 // pred_check_branch
    %32 = sbr.rel (0) target = $region29
  $region28: #{clofnet_forward.6} parent=0 // pred_region
    _
  $region29: #{clofnet_forward.6} parent=0 // pred_fallthru
    _
  // Predicated region
  $region30: #{clofnet_forward.6} parent=0 // pred_check
    _
  $region31: #{clofnet_forward.6} parent=0 // pred_check_branch
    %34 = sbr.rel (0) target = $region33
  $region32: #{clofnet_forward.6} parent=0 // pred_region
    _
  $region33: #{clofnet_forward.6} parent=0 // pred_fallthru
    _
  // Predicated region
  $region34: #{clofnet_forward.6} parent=0 // pred_check
    _
  $region35: #{clofnet_forward.6} parent=0 // pred_check_branch
    %36 = sbr.rel (0) target = $region37
  $region36: #{clofnet_forward.6} parent=0 // pred_region
    _
  $region37: #{clofnet_forward.6} parent=0 // pred_fallthru
    _
  // Predicated region
  $region38: #{clofnet_forward.6} parent=0 // pred_check
    _
  $region39: #{clofnet_forward.6} parent=0 // pred_check_branch
    %38 = sbr.rel (0) target = $region41
  $region40: #{clofnet_forward.6} parent=0 // pred_region
    _
  $region41: #{clofnet_forward.6} parent=0 // pred_fallthru
    _
  // Predicated region
  $region42: #{clofnet_forward.6} parent=0 // pred_check
    _
  $region43: #{clofnet_forward.6} parent=0 // pred_check_branch
    %40 = sbr.rel (0) target = $region45
  $region44: #{clofnet_forward.6} parent=0 // pred_region
    _
  $region45: #{clofnet_forward.6} parent=0 // pred_fallthru
    _
  // Predicated region
  $region46: #{clofnet_forward.6} parent=0 // pred_check
    _
  $region47: #{clofnet_forward.6} parent=0 // pred_check_branch
    %42 = sbr.rel (0) target = $region49
  $region48: #{clofnet_forward.6} parent=0 // pred_region
    _
  $region49: #{clofnet_forward.6} parent=0 // pred_fallthru
    _
  %v43 = vld [vmem:[%s0] sm:$0xff]
  %v44 = vld [vmem:[%s0 + $0x8] sm:$0xff]
  %v45 = vld [vmem:[%s0 + $0x10] sm:$0xff]
  %v46 = vld [vmem:[%s0 + $0x18] sm:$0xff]
  %v47 = vld [vmem:[%s0 + $0x20] sm:$0xff]
  %v48 = vld [vmem:[%s0 + $0x28] sm:$0xff]
  %v49 = vld [vmem:[%s0 + $0x30] sm:$0xff]
  %v50 = vld [vmem:[%s0 + $0x38] sm:$0xff]
  %v51 = vld [vmem:[%s0 + $0x40] sm:$0xff]
  %v52 = vld [vmem:[%s0 + $0x48] sm:$0xff]
  %v53 = vld [vmem:[%s0 + $0x50] sm:$0xff]
  %v54 = vld [vmem:[%s0 + $0x58] sm:$0xff]
  %v55 = vld [vmem:[%s0 + $0x60] sm:$0xff]
  %v56 = vld [vmem:[%s0 + $0x68] sm:$0xff]
  %v57 = vld [vmem:[%s0 + $0x70] sm:$0xff]
  %v58 = vld [vmem:[%s0 + $0x78] sm:$0xff]
  %v59 = vld [vmem:[%s0 + $0x80] sm:$0xff]
  %v60 = vld [vmem:[%s0 + $0x88] sm:$0xff]
  %v61 = vld [vmem:[%s0 + $0x90] sm:$0xff]
  %v62 = vld [vmem:[%s0 + $0x98] sm:$0xff]
  %v63 = vld [vmem:[%s0 + $0xa0] sm:$0xff]
  %v64 = vld [vmem:[%s0 + $0xa8] sm:$0xff]
  %v65 = vld [vmem:[%s0 + $0xb0] sm:$0xff]
  %v66 = vld [vmem:[%s0 + $0xb8] sm:$0xff]
  %v67 = vld [vmem:[%s0 + $0xc0] sm:$0xff]
  %v68 = vld [vmem:[%s0 + $0xc8] sm:$0xff]
  %v69 = vld [vmem:[%s0 + $0xd0] sm:$0xff]
  %v70 = vld [vmem:[%s0 + $0xd8] sm:$0xff]
  %v71 = vld [vmem:[%s0 + $0xe0] sm:$0xff]
  %v72 = vld [vmem:[%s0 + $0xe8] sm:$0xff]
  %v73 = vld [vmem:[%s0 + $0xf0] sm:$0xff]
  %v74 = vld [vmem:[%s0 + $0xf8] sm:$0xff]
  %v75 = vmul.f32 %v43, 0.62831855
  %v76 = vmul.f32 %v44, 0.62831855
  %v77 = vmul.f32 %v45, 0.62831855
  %v78 = vmul.f32 %v46, 0.62831855
  %v79 = vmul.f32 %v47, 0.62831855
  %v80 = vmul.f32 %v48, 0.62831855
  %v81 = vmul.f32 %v49, 0.62831855
  %v82 = vmul.f32 %v50, 0.62831855
  %v83 = vmul.f32 %v51, 0.62831855
  %v84 = vmul.f32 %v52, 0.62831855
  %v85 = vmul.f32 %v53, 0.62831855
  %v86 = vmul.f32 %v54, 0.62831855
  %v87 = vmul.f32 %v55, 0.62831855
  %v88 = vmul.f32 %v56, 0.62831855
  %v89 = vmul.f32 %v57, 0.62831855
  %v90 = vmul.f32 %v58, 0.62831855
  %v91 = vmul.f32 %v59, 0.62831855
  %v92 = vmul.f32 %v60, 0.62831855
  %v93 = vmul.f32 %v61, 0.62831855
  %v94 = vmul.f32 %v62, 0.62831855
  %v95 = vmul.f32 %v63, 0.62831855
  %v96 = vmul.f32 %v64, 0.62831855
  %v97 = vmul.f32 %v65, 0.62831855
  %v98 = vmul.f32 %v66, 0.62831855
  %v99 = vmul.f32 %v67, 0.62831855
  %v100 = vmul.f32 %v68, 0.62831855
  %v101 = vmul.f32 %v69, 0.62831855
  %v102 = vmul.f32 %v70, 0.62831855
  %v103 = vmul.f32 %v71, 0.62831855
  %v104 = vmul.f32 %v72, 0.62831855
  %v105 = vmul.f32 %v73, 0.62831855
  %v106 = vmul.f32 %v74, 0.62831855
  %v107 = vand.u32 2147483647, %v75
  %vm108 = vcmp.le.f32.partialorder %v107, 0.7853982
  %vm109 = vcmp.lt.s32.totalorder %v75, 0
  %v110 = vand.u32 %v75, 2139095040
  %v111 = vshrl.u32 %v110, 23
  %v112 = vsub.s32 %v111, 127
  %v113 = vand.u32 2147483647, %v75
  %v114 = vand.u32 %v113, 8388607
  %v115 = vor.u32 %v114, 8388608
  %v116 = vsub.s32 0, %v115
  %v117 = vadd.s32 %v112, 1
  %vm118 = vcmp.gt.s32.totalorder %v117, 0
  %v119 = vsel %vm118, %v117, 0
  %v120 = vshrl.u32 %v119, 5
  %v121 = vand.u32 %v119, 31
  %v122 = vsub.s32 32, %v121
  %v123 = vshrl.u32 683565275, %v122
  %v124 = vshll.u32 683565275, %v121
  %v125 = vshrl.u32 2475754826, %v122
  %v126 = vor.u32 %v124, %v125
  %v127 = vshll.u32 2475754826, %v121
  %v128 = vshrl.u32 2131351028, %v122
  %v129 = vor.u32 %v127, %v128
  %v130 = vshll.u32 2131351028, %v121
  %v131 = vshrl.u32 2102212464, %v122
  %v132 = vor.u32 %v130, %v131
  %v133 = vshll.u32 2102212464, %v121
  %v134 = vshrl.u32 920167782, %v122
  %v135 = vor.u32 %v133, %v134
  %v136 = vshll.u32 920167782, %v121
  %v137 = vshrl.u32 1326507024, %v122
  %v138 = vor.u32 %v136, %v137
  %vm139 = vcmp.lt.s32.totalorder %v120, 1
  %vm140 = vcmp.lt.s32.totalorder %v120, 2
  %vm141 = vcmp.lt.s32.totalorder %v120, 3
  %vm142 = vcmp.lt.s32.totalorder %v120, 4
  %v143 = vsel %vm139, %v123, %v126
  %v144 = vsel %vm142, %v132, 2102212464
  %v145 = vsel %vm141, %v129, %v144
  %v146 = vsel %vm140, %v143, %v145
  %v147 = vsel %vm139, %v126, %v129
  %v148 = vsel %vm142, %v135, 920167782
  %v149 = vsel %vm141, %v132, %v148
  %v150 = vsel %vm140, %v147, %v149
  %v151 = vsel %vm139, %v129, %v132
  %v152 = vsel %vm142, %v138, 1326507024
  %v153 = vsel %vm141, %v135, %v152
  %v154 = vsel %vm140, %v151, %v153
  %v155 = vshll.u32 %v115, 8
  %v156 = vmul.u32.u64.compose %v155, %v154
  %v157 = vextract.low.u32 %v156
  %v158 = vextract.high.u32 %v156
  %v159 = vmul.u32.u64.compose %v155, %v150
  %v160 = vextract.low.u32 %v159
  %v161 = vextract.high.u32 %v159
  %v162 = vmul.u32 %v155, %v146
  %v163 = vadd.s32 %v158, %v160
  %vm164 = vc.u32 %v158, %v160
  %v165 = vadd.s32 %v161, 1
  %v166 = vsel %vm164, %v165, %v161
  %v167 = vadd.s32 %v162, %v166
  %v168 = vadd.s32 %v167, 536870912
  %v169 = vshrl.u32 %v168, 30
  %v170 = vshll.u32 %v169, 30
  %v171 = vsub.s32 %v167, %v170
  %vm172 = vcmp.lt.s32.totalorder %v171, 0
  %v173 = vsub.s32 0, %v171
  %v174 = vsel %vm172, %v173, %v171
  %v175 = vclz %v174
  %v176 = vsub.s32 %v175, 2
  %vm177 = vcmp.gt.s32.totalorder 0, %v176
  %v178 = vsel %vm177, 0, %v176
  %v179 = vsub.s32 32, %v178
  %v180 = vshll.u32 %v171, %v178
  %v181 = vshrl.u32 %v163, %v179
  %v182 = vor.u32 %v180, %v181
  %v183 = vsub.s32 4294967266, %v178
  %v184 = vadd.s32 %v183, 127
  %v185 = vshll.u32 %v184, 23
  %v186 = vor.u32 4788187, %v185
  %v187 = vand.u32 2147483647, %v186
  %v189 = vcvt.s32.f32 %v182
  %v190 = vmul.f32 %v189, %v187
  %v191 = vxor.u32 %v190, 2147483648
  %v192 = vsel %vm109, %v191, %v190
  %v193 = vsub.s32 4, %v169
  %v194 = vsel %vm109, %v193, %v169
  %v195 = vsel %vm108, %v75, %v192
  %v196 = vsel %vm108, 0, %v194
  %v197 = vcosq.f32.pop %v195
  %v198 = vsinq.f32.pop %v195
  %vm199 = vweird.f32 %v75
  %v200 = vand.u32 %v196, 3
  %vm201 = vcmp.lt.s32.totalorder %v200, 2
  %vm202 = vcmp.eq.s32.totalorder %v200, 0
  %v203 = vxor.u32 %v198, 2147483648
  %v204 = vsel %vm202, %v197, %v203
  %vm205 = vcmp.eq.s32.totalorder %v200, 2
  %v206 = vxor.u32 %v197, 2147483648
  %v207 = vsel %vm205, %v206, %v198
  %v208 = vsel %vm201, %v204, %v207
  %v209 = vsel %vm199, nan, %v208
  %v210 = vand.u32 2147483647, %v76
  %vm211 = vcmp.le.f32.partialorder %v210, 0.7853982
  %vm212 = vcmp.lt.s32.totalorder %v76, 0
  %v213 = vand.u32 %v76, 2139095040
  %v214 = vshrl.u32 %v213, 23
  %v215 = vsub.s32 %v214, 127
  %v216 = vand.u32 2147483647, %v76
  %v217 = vand.u32 %v216, 8388607
  %v218 = vor.u32 %v217, 8388608
  %v219 = vsub.s32 0, %v218
  %v220 = vadd.s32 %v215, 1
  %vm221 = vcmp.gt.s32.totalorder %v220, 0
  %v222 = vsel %vm221, %v220, 0
  %v223 = vshrl.u32 %v222, 5
  %v224 = vand.u32 %v222, 31
  %v225 = vsub.s32 32, %v224
  %v226 = vshrl.u32 683565275, %v225
  %v227 = vshll.u32 683565275, %v224
  %v228 = vshrl.u32 2475754826, %v225
  %v229 = vor.u32 %v227, %v228
  %v230 = vshll.u32 2475754826, %v224
  %v231 = vshrl.u32 2131351028, %v225
  %v232 = vor.u32 %v230, %v231
  %v233 = vshll.u32 2131351028, %v224
  %v234 = vshrl.u32 2102212464, %v225
  %v235 = vor.u32 %v233, %v234
  %v236 = vshll.u32 2102212464, %v224
  %v237 = vshrl.u32 920167782, %v225
  %v238 = vor.u32 %v236, %v237
  %v239 = vshll.u32 920167782, %v224
  %v240 = vshrl.u32 1326507024, %v225
  %v241 = vor.u32 %v239, %v240
  %vm242 = vcmp.lt.s32.totalorder %v223, 1
  %vm243 = vcmp.lt.s32.totalorder %v223, 2
  %vm244 = vcmp.lt.s32.totalorder %v223, 3
  %vm245 = vcmp.lt.s32.totalorder %v223, 4
  %v246 = vsel %vm242, %v226, %v229
  %v247 = vsel %vm245, %v235, 2102212464
  %v248 = vsel %vm244, %v232, %v247
  %v249 = vsel %vm243, %v246, %v248
  %v250 = vsel %vm242, %v229, %v232
  %v251 = vsel %vm245, %v238, 920167782
  %v252 = vsel %vm244, %v235, %v251
  %v253 = vsel %vm243, %v250, %v252
  %v254 = vsel %vm242, %v232, %v235
  %v255 = vsel %vm245, %v241, 1326507024
  %v256 = vsel %vm244, %v238, %v255
  %v257 = vsel %vm243, %v254, %v256
  %v258 = vshll.u32 %v218, 8
  %v259 = vmul.u32.u64.compose %v258, %v257
  %v260 = vextract.low.u32 %v259
  %v261 = vextract.high.u32 %v259
  %v262 = vmul.u32.u64.compose %v258, %v253
  %v263 = vextract.low.u32 %v262
  %v264 = vextract.high.u32 %v262
  %v265 = vmul.u32 %v258, %v249
  %v266 = vadd.s32 %v261, %v263
  %vm267 = vc.u32 %v261, %v263
  %v268 = vadd.s32 %v264, 1
  %v269 = vsel %vm267, %v268, %v264
  %v270 = vadd.s32 %v265, %v269
  %v271 = vadd.s32 %v270, 536870912
  %v272 = vshrl.u32 %v271, 30
  %v273 = vshll.u32 %v272, 30
  %v274 = vsub.s32 %v270, %v273
  %vm275 = vcmp.lt.s32.totalorder %v274, 0
  %v276 = vsub.s32 0, %v274
  %v277 = vsel %vm275, %v276, %v274
  %v278 = vclz %v277
  %v279 = vsub.s32 %v278, 2
  %vm280 = vcmp.gt.s32.totalorder 0, %v279
  %v281 = vsel %vm280, 0, %v279
  %v282 = vsub.s32 32, %v281
  %v283 = vshll.u32 %v274, %v281
  %v284 = vshrl.u32 %v266, %v282
  %v285 = vor.u32 %v283, %v284
  %v286 = vsub.s32 4294967266, %v281
  %v287 = vadd.s32 %v286, 127
  %v288 = vshll.u32 %v287, 23
  %v289 = vor.u32 4788187, %v288
  %v290 = vand.u32 2147483647, %v289
  %v292 = vcvt.s32.f32 %v285
  %v293 = vmul.f32 %v292, %v290
  %v294 = vxor.u32 %v293, 2147483648
  %v295 = vsel %vm212, %v294, %v293
  %v296 = vsub.s32 4, %v272
  %v297 = vsel %vm212, %v296, %v272
  %v298 = vsel %vm211, %v76, %v295
  %v299 = vsel %vm211, 0, %v297
  %v300 = vcosq.f32.pop %v298
  %v301 = vsinq.f32.pop %v298
  %vm302 = vweird.f32 %v76
  %v303 = vand.u32 %v299, 3
  %vm304 = vcmp.lt.s32.totalorder %v303, 2
  %vm305 = vcmp.eq.s32.totalorder %v303, 0
  %v306 = vxor.u32 %v301, 2147483648
  %v307 = vsel %vm305, %v300, %v306
  %vm308 = vcmp.eq.s32.totalorder %v303, 2
  %v309 = vxor.u32 %v300, 2147483648
  %v310 = vsel %vm308, %v309, %v301
  %v311 = vsel %vm304, %v307, %v310
  %v312 = vsel %vm302, nan, %v311
  %v313 = vand.u32 2147483647, %v77
  %vm314 = vcmp.le.f32.partialorder %v313, 0.7853982
  %vm315 = vcmp.lt.s32.totalorder %v77, 0
  %v316 = vand.u32 %v77, 2139095040
  %v317 = vshrl.u32 %v316, 23
  %v318 = vsub.s32 %v317, 127
  %v319 = vand.u32 2147483647, %v77
  %v320 = vand.u32 %v319, 8388607
  %v321 = vor.u32 %v320, 8388608
  %v322 = vsub.s32 0, %v321
  %v323 = vadd.s32 %v318, 1
  %vm324 = vcmp.gt.s32.totalorder %v323, 0
  %v325 = vsel %vm324, %v323, 0
  %v326 = vshrl.u32 %v325, 5
  %v327 = vand.u32 %v325, 31
  %v328 = vsub.s32 32, %v327
  %v329 = vshrl.u32 683565275, %v328
  %v330 = vshll.u32 683565275, %v327
  %v331 = vshrl.u32 2475754826, %v328
  %v332 = vor.u32 %v330, %v331
  %v333 = vshll.u32 2475754826, %v327
  %v334 = vshrl.u32 2131351028, %v328
  %v335 = vor.u32 %v333, %v334
  %v336 = vshll.u32 2131351028, %v327
  %v337 = vshrl.u32 2102212464, %v328
  %v338 = vor.u32 %v336, %v337
  %v339 = vshll.u32 2102212464, %v327
  %v340 = vshrl.u32 920167782, %v328
  %v341 = vor.u32 %v339, %v340
  %v342 = vshll.u32 920167782, %v327
  %v343 = vshrl.u32 1326507024, %v328
  %v344 = vor.u32 %v342, %v343
  %vm345 = vcmp.lt.s32.totalorder %v326, 1
  %vm346 = vcmp.lt.s32.totalorder %v326, 2
  %vm347 = vcmp.lt.s32.totalorder %v326, 3
  %vm348 = vcmp.lt.s32.totalorder %v326, 4
  %v349 = vsel %vm345, %v329, %v332
  %v350 = vsel %vm348, %v338, 2102212464
  %v351 = vsel %vm347, %v335, %v350
  %v352 = vsel %vm346, %v349, %v351
  %v353 = vsel %vm345, %v332, %v335
  %v354 = vsel %vm348, %v341, 920167782
  %v355 = vsel %vm347, %v338, %v354
  %v356 = vsel %vm346, %v353, %v355
  %v357 = vsel %vm345, %v335, %v338
  %v358 = vsel %vm348, %v344, 1326507024
  %v359 = vsel %vm347, %v341, %v358
  %v360 = vsel %vm346, %v357, %v359
  %v361 = vshll.u32 %v321, 8
  %v362 = vmul.u32.u64.compose %v361, %v360
  %v363 = vextract.low.u32 %v362
  %v364 = vextract.high.u32 %v362
  %v365 = vmul.u32.u64.compose %v361, %v356
  %v366 = vextract.low.u32 %v365
  %v367 = vextract.high.u32 %v365
  %v368 = vmul.u32 %v361, %v352
  %v369 = vadd.s32 %v364, %v366
  %vm370 = vc.u32 %v364, %v366
  %v371 = vadd.s32 %v367, 1
  %v372 = vsel %vm370, %v371, %v367
  %v373 = vadd.s32 %v368, %v372
  %v374 = vadd.s32 %v373, 536870912
  %v375 = vshrl.u32 %v374, 30
  %v376 = vshll.u32 %v375, 30
  %v377 = vsub.s32 %v373, %v376
  %vm378 = vcmp.lt.s32.totalorder %v377, 0
  %v379 = vsub.s32 0, %v377
  %v380 = vsel %vm378, %v379, %v377
  %v381 = vclz %v380
  %v382 = vsub.s32 %v381, 2
  %vm383 = vcmp.gt.s32.totalorder 0, %v382
  %v384 = vsel %vm383, 0, %v382
  %v385 = vsub.s32 32, %v384
  %v386 = vshll.u32 %v377, %v384
  %v387 = vshrl.u32 %v369, %v385
  %v388 = vor.u32 %v386, %v387
  %v389 = vsub.s32 4294967266, %v384
  %v390 = vadd.s32 %v389, 127
  %v391 = vshll.u32 %v390, 23
  %v392 = vor.u32 4788187, %v391
  %v393 = vand.u32 2147483647, %v392
  %v395 = vcvt.s32.f32 %v388
  %v396 = vmul.f32 %v395, %v393
  %v397 = vxor.u32 %v396, 2147483648
  %v398 = vsel %vm315, %v397, %v396
  %v399 = vsub.s32 4, %v375
  %v400 = vsel %vm315, %v399, %v375
  %v401 = vsel %vm314, %v77, %v398
  %v402 = vsel %vm314, 0, %v400
  %v403 = vcosq.f32.pop %v401
  %v404 = vsinq.f32.pop %v401
  %vm405 = vweird.f32 %v77
  %v406 = vand.u32 %v402, 3
  %vm407 = vcmp.lt.s32.totalorder %v406, 2
  %vm408 = vcmp.eq.s32.totalorder %v406, 0
  %v409 = vxor.u32 %v404, 2147483648
  %v410 = vsel %vm408, %v403, %v409
  %vm411 = vcmp.eq.s32.totalorder %v406, 2
  %v412 = vxor.u32 %v403, 2147483648
  %v413 = vsel %vm411, %v412, %v404
  %v414 = vsel %vm407, %v410, %v413
  %v415 = vsel %vm405, nan, %v414
  %v416 = vand.u32 2147483647, %v78
  %vm417 = vcmp.le.f32.partialorder %v416, 0.7853982
  %vm418 = vcmp.lt.s32.totalorder %v78, 0
  %v419 = vand.u32 %v78, 2139095040
  %v420 = vshrl.u32 %v419, 23
  %v421 = vsub.s32 %v420, 127
  %v422 = vand.u32 2147483647, %v78
  %v423 = vand.u32 %v422, 8388607
  %v424 = vor.u32 %v423, 8388608
  %v425 = vsub.s32 0, %v424
  %v426 = vadd.s32 %v421, 1
  %vm427 = vcmp.gt.s32.totalorder %v426, 0
  %v428 = vsel %vm427, %v426, 0
  %v429 = vshrl.u32 %v428, 5
  %v430 = vand.u32 %v428, 31
  %v431 = vsub.s32 32, %v430
  %v432 = vshrl.u32 683565275, %v431
  %v433 = vshll.u32 683565275, %v430
  %v434 = vshrl.u32 2475754826, %v431
  %v435 = vor.u32 %v433, %v434
  %v436 = vshll.u32 2475754826, %v430
  %v437 = vshrl.u32 2131351028, %v431
  %v438 = vor.u32 %v436, %v437
  %v439 = vshll.u32 2131351028, %v430
  %v440 = vshrl.u32 2102212464, %v431
  %v441 = vor.u32 %v439, %v440
  %v442 = vshll.u32 2102212464, %v430
  %v443 = vshrl.u32 920167782, %v431
  %v444 = vor.u32 %v442, %v443
  %v445 = vshll.u32 920167782, %v430
  %v446 = vshrl.u32 1326507024, %v431
  %v447 = vor.u32 %v445, %v446
  %vm448 = vcmp.lt.s32.totalorder %v429, 1
  %vm449 = vcmp.lt.s32.totalorder %v429, 2
  %vm450 = vcmp.lt.s32.totalorder %v429, 3
  %vm451 = vcmp.lt.s32.totalorder %v429, 4
  %v452 = vsel %vm448, %v432, %v435
  %v453 = vsel %vm451, %v441, 2102212464
  %v454 = vsel %vm450, %v438, %v453
  %v455 = vsel %vm449, %v452, %v454
  %v456 = vsel %vm448, %v435, %v438
  %v457 = vsel %vm451, %v444, 920167782
  %v458 = vsel %vm450, %v441, %v457
  %v459 = vsel %vm449, %v456, %v458
  %v460 = vsel %vm448, %v438, %v441
  %v461 = vsel %vm451, %v447, 1326507024
  %v462 = vsel %vm450, %v444, %v461
  %v463 = vsel %vm449, %v460, %v462
  %v464 = vshll.u32 %v424, 8
  %v465 = vmul.u32.u64.compose %v464, %v463
  %v466 = vextract.low.u32 %v465
  %v467 = vextract.high.u32 %v465
  %v468 = vmul.u32.u64.compose %v464, %v459
  %v469 = vextract.low.u32 %v468
  %v470 = vextract.high.u32 %v468
  %v471 = vmul.u32 %v464, %v455
  %v472 = vadd.s32 %v467, %v469
  %vm473 = vc.u32 %v467, %v469
  %v474 = vadd.s32 %v470, 1
  %v475 = vsel %vm473, %v474, %v470
  %v476 = vadd.s32 %v471, %v475
  %v477 = vadd.s32 %v476, 536870912
  %v478 = vshrl.u32 %v477, 30
  %v479 = vshll.u32 %v478, 30
  %v480 = vsub.s32 %v476, %v479
  %vm481 = vcmp.lt.s32.totalorder %v480, 0
  %v482 = vsub.s32 0, %v480
  %v483 = vsel %vm481, %v482, %v480
  %v484 = vclz %v483
  %v485 = vsub.s32 %v484, 2
  %vm486 = vcmp.gt.s32.totalorder 0, %v485
  %v487 = vsel %vm486, 0, %v485
  %v488 = vsub.s32 32, %v487
  %v489 = vshll.u32 %v480, %v487
  %v490 = vshrl.u32 %v472, %v488
  %v491 = vor.u32 %v489, %v490
  %v492 = vsub.s32 4294967266, %v487
  %v493 = vadd.s32 %v492, 127
  %v494 = vshll.u32 %v493, 23
  %v495 = vor.u32 4788187, %v494
  %v496 = vand.u32 2147483647, %v495
  %v498 = vcvt.s32.f32 %v491
  %v499 = vmul.f32 %v498, %v496
  %v500 = vxor.u32 %v499, 2147483648
  %v501 = vsel %vm418, %v500, %v499
  %v502 = vsub.s32 4, %v478
  %v503 = vsel %vm418, %v502, %v478
  %v504 = vsel %vm417, %v78, %v501
  %v505 = vsel %vm417, 0, %v503
  %v506 = vcosq.f32.pop %v504
  %v507 = vsinq.f32.pop %v504
  %vm508 = vweird.f32 %v78
  %v509 = vand.u32 %v505, 3
  %vm510 = vcmp.lt.s32.totalorder %v509, 2
  %vm511 = vcmp.eq.s32.totalorder %v509, 0
  %v512 = vxor.u32 %v507, 2147483648
  %v513 = vsel %vm511, %v506, %v512
  %vm514 = vcmp.eq.s32.totalorder %v509, 2
  %v515 = vxor.u32 %v506, 2147483648
  %v516 = vsel %vm514, %v515, %v507
  %v517 = vsel %vm510, %v513, %v516
  %v518 = vsel %vm508, nan, %v517
  %v519 = vand.u32 2147483647, %v79
  %vm520 = vcmp.le.f32.partialorder %v519, 0.7853982
  %vm521 = vcmp.lt.s32.totalorder %v79, 0
  %v522 = vand.u32 %v79, 2139095040
  %v523 = vshrl.u32 %v522, 23
  %v524 = vsub.s32 %v523, 127
  %v525 = vand.u32 2147483647, %v79
  %v526 = vand.u32 %v525, 8388607
  %v527 = vor.u32 %v526, 8388608
  %v528 = vsub.s32 0, %v527
  %v529 = vadd.s32 %v524, 1
  %vm530 = vcmp.gt.s32.totalorder %v529, 0
  %v531 = vsel %vm530, %v529, 0
  %v532 = vshrl.u32 %v531, 5
  %v533 = vand.u32 %v531, 31
  %v534 = vsub.s32 32, %v533
  %v535 = vshrl.u32 683565275, %v534
  %v536 = vshll.u32 683565275, %v533
  %v537 = vshrl.u32 2475754826, %v534
  %v538 = vor.u32 %v536, %v537
  %v539 = vshll.u32 2475754826, %v533
  %v540 = vshrl.u32 2131351028, %v534
  %v541 = vor.u32 %v539, %v540
  %v542 = vshll.u32 2131351028, %v533
  %v543 = vshrl.u32 2102212464, %v534
  %v544 = vor.u32 %v542, %v543
  %v545 = vshll.u32 2102212464, %v533
  %v546 = vshrl.u32 920167782, %v534
  %v547 = vor.u32 %v545, %v546
  %v548 = vshll.u32 920167782, %v533
  %v549 = vshrl.u32 1326507024, %v534
  %v550 = vor.u32 %v548, %v549
  %vm551 = vcmp.lt.s32.totalorder %v532, 1
  %vm552 = vcmp.lt.s32.totalorder %v532, 2
  %vm553 = vcmp.lt.s32.totalorder %v532, 3
  %vm554 = vcmp.lt.s32.totalorder %v532, 4
  %v555 = vsel %vm551, %v535, %v538
  %v556 = vsel %vm554, %v544, 2102212464
  %v557 = vsel %vm553, %v541, %v556
  %v558 = vsel %vm552, %v555, %v557
  %v559 = vsel %vm551, %v538, %v541
  %v560 = vsel %vm554, %v547, 920167782
  %v561 = vsel %vm553, %v544, %v560
  %v562 = vsel %vm552, %v559, %v561
  %v563 = vsel %vm551, %v541, %v544
  %v564 = vsel %vm554, %v550, 1326507024
  %v565 = vsel %vm553, %v547, %v564
  %v566 = vsel %vm552, %v563, %v565
  %v567 = vshll.u32 %v527, 8
  %v568 = vmul.u32.u64.compose %v567, %v566
  %v569 = vextract.low.u32 %v568
  %v570 = vextract.high.u32 %v568
  %v571 = vmul.u32.u64.compose %v567, %v562
  %v572 = vextract.low.u32 %v571
  %v573 = vextract.high.u32 %v571
  %v574 = vmul.u32 %v567, %v558
  %v575 = vadd.s32 %v570, %v572
  %vm576 = vc.u32 %v570, %v572
  %v577 = vadd.s32 %v573, 1
  %v578 = vsel %vm576, %v577, %v573
  %v579 = vadd.s32 %v574, %v578
  %v580 = vadd.s32 %v579, 536870912
  %v581 = vshrl.u32 %v580, 30
  %v582 = vshll.u32 %v581, 30
  %v583 = vsub.s32 %v579, %v582
  %vm584 = vcmp.lt.s32.totalorder %v583, 0
  %v585 = vsub.s32 0, %v583
  %v586 = vsel %vm584, %v585, %v583
  %v587 = vclz %v586
  %v588 = vsub.s32 %v587, 2
  %vm589 = vcmp.gt.s32.totalorder 0, %v588
  %v590 = vsel %vm589, 0, %v588
  %v591 = vsub.s32 32, %v590
  %v592 = vshll.u32 %v583, %v590
  %v593 = vshrl.u32 %v575, %v591
  %v594 = vor.u32 %v592, %v593
  %v595 = vsub.s32 4294967266, %v590
  %v596 = vadd.s32 %v595, 127
  %v597 = vshll.u32 %v596, 23
  %v598 = vor.u32 4788187, %v597
  %v599 = vand.u32 2147483647, %v598
  %v601 = vcvt.s32.f32 %v594
  %v602 = vmul.f32 %v601, %v599
  %v603 = vxor.u32 %v602, 2147483648
  %v604 = vsel %vm521, %v603, %v602
  %v605 = vsub.s32 4, %v581
  %v606 = vsel %vm521, %v605, %v581
  %v607 = vsel %vm520, %v79, %v604
  %v608 = vsel %vm520, 0, %v606
  %v609 = vcosq.f32.pop %v607
  %v610 = vsinq.f32.pop %v607
  %vm611 = vweird.f32 %v79
  %v612 = vand.u32 %v608, 3
  %vm613 = vcmp.lt.s32.totalorder %v612, 2
  %vm614 = vcmp.eq.s32.totalorder %v612, 0
  %v615 = vxor.u32 %v610, 2147483648
  %v616 = vsel %vm614, %v609, %v615
  %vm617 = vcmp.eq.s32.totalorder %v612, 2
  %v618 = vxor.u32 %v609, 2147483648
  %v619 = vsel %vm617, %v618, %v610
  %v620 = vsel %vm613, %v616, %v619
  %v621 = vsel %vm611, nan, %v620
  %v622 = vand.u32 2147483647, %v80
  %vm623 = vcmp.le.f32.partialorder %v622, 0.7853982
  %vm624 = vcmp.lt.s32.totalorder %v80, 0
  %v625 = vand.u32 %v80, 2139095040
  %v626 = vshrl.u32 %v625, 23
  %v627 = vsub.s32 %v626, 127
  %v628 = vand.u32 2147483647, %v80
  %v629 = vand.u32 %v628, 8388607
  %v630 = vor.u32 %v629, 8388608
  %v631 = vsub.s32 0, %v630
  %v632 = vadd.s32 %v627, 1
  %vm633 = vcmp.gt.s32.totalorder %v632, 0
  %v634 = vsel %vm633, %v632, 0
  %v635 = vshrl.u32 %v634, 5
  %v636 = vand.u32 %v634, 31
  %v637 = vsub.s32 32, %v636
  %v638 = vshrl.u32 683565275, %v637
  %v639 = vshll.u32 683565275, %v636
  %v640 = vshrl.u32 2475754826, %v637
  %v641 = vor.u32 %v639, %v640
  %v642 = vshll.u32 2475754826, %v636
  %v643 = vshrl.u32 2131351028, %v637
  %v644 = vor.u32 %v642, %v643
  %v645 = vshll.u32 2131351028, %v636
  %v646 = vshrl.u32 2102212464, %v637
  %v647 = vor.u32 %v645, %v646
  %v648 = vshll.u32 2102212464, %v636
  %v649 = vshrl.u32 920167782, %v637
  %v650 = vor.u32 %v648, %v649
  %v651 = vshll.u32 920167782, %v636
  %v652 = vshrl.u32 1326507024, %v637
  %v653 = vor.u32 %v651, %v652
  %vm654 = vcmp.lt.s32.totalorder %v635, 1
  %vm655 = vcmp.lt.s32.totalorder %v635, 2
  %vm656 = vcmp.lt.s32.totalorder %v635, 3
  %vm657 = vcmp.lt.s32.totalorder %v635, 4
  %v658 = vsel %vm654, %v638, %v641
  %v659 = vsel %vm657, %v647, 2102212464
  %v660 = vsel %vm656, %v644, %v659
  %v661 = vsel %vm655, %v658, %v660
  %v662 = vsel %vm654, %v641, %v644
  %v663 = vsel %vm657, %v650, 920167782
  %v664 = vsel %vm656, %v647, %v663
  %v665 = vsel %vm655, %v662, %v664
  %v666 = vsel %vm654, %v644, %v647
  %v667 = vsel %vm657, %v653, 1326507024
  %v668 = vsel %vm656, %v650, %v667
  %v669 = vsel %vm655, %v666, %v668
  %v670 = vshll.u32 %v630, 8
  %v671 = vmul.u32.u64.compose %v670, %v669
  %v672 = vextract.low.u32 %v671
  %v673 = vextract.high.u32 %v671
  %v674 = vmul.u32.u64.compose %v670, %v665
  %v675 = vextract.low.u32 %v674
  %v676 = vextract.high.u32 %v674
  %v677 = vmul.u32 %v670, %v661
  %v678 = vadd.s32 %v673, %v675
  %vm679 = vc.u32 %v673, %v675
  %v680 = vadd.s32 %v676, 1
  %v681 = vsel %vm679, %v680, %v676
  %v682 = vadd.s32 %v677, %v681
  %v683 = vadd.s32 %v682, 536870912
  %v684 = vshrl.u32 %v683, 30
  %v685 = vshll.u32 %v684, 30
  %v686 = vsub.s32 %v682, %v685
  %vm687 = vcmp.lt.s32.totalorder %v686, 0
  %v688 = vsub.s32 0, %v686
  %v689 = vsel %vm687, %v688, %v686
  %v690 = vclz %v689
  %v691 = vsub.s32 %v690, 2
  %vm692 = vcmp.gt.s32.totalorder 0, %v691
  %v693 = vsel %vm692, 0, %v691
  %v694 = vsub.s32 32, %v693
  %v695 = vshll.u32 %v686, %v693
  %v696 = vshrl.u32 %v678, %v694
  %v697 = vor.u32 %v695, %v696
  %v698 = vsub.s32 4294967266, %v693
  %v699 = vadd.s32 %v698, 127
  %v700 = vshll.u32 %v699, 23
  %v701 = vor.u32 4788187, %v700
  %v702 = vand.u32 2147483647, %v701
  %v704 = vcvt.s32.f32 %v697
  %v705 = vmul.f32 %v704, %v702
  %v706 = vxor.u32 %v705, 2147483648
  %v707 = vsel %vm624, %v706, %v705
  %v708 = vsub.s32 4, %v684
  %v709 = vsel %vm624, %v708, %v684
  %v710 = vsel %vm623, %v80, %v707
  %v711 = vsel %vm623, 0, %v709
  %v712 = vcosq.f32.pop %v710
  %v713 = vsinq.f32.pop %v710
  %vm714 = vweird.f32 %v80
  %v715 = vand.u32 %v711, 3
  %vm716 = vcmp.lt.s32.totalorder %v715, 2
  %vm717 = vcmp.eq.s32.totalorder %v715, 0
  %v718 = vxor.u32 %v713, 2147483648
  %v719 = vsel %vm717, %v712, %v718
  %vm720 = vcmp.eq.s32.totalorder %v715, 2
  %v721 = vxor.u32 %v712, 2147483648
  %v722 = vsel %vm720, %v721, %v713
  %v723 = vsel %vm716, %v719, %v722
  %v724 = vsel %vm714, nan, %v723
  %v725 = vand.u32 2147483647, %v81
  %vm726 = vcmp.le.f32.partialorder %v725, 0.7853982
  %vm727 = vcmp.lt.s32.totalorder %v81, 0
  %v728 = vand.u32 %v81, 2139095040
  %v729 = vshrl.u32 %v728, 23
  %v730 = vsub.s32 %v729, 127
  %v731 = vand.u32 2147483647, %v81
  %v732 = vand.u32 %v731, 8388607
  %v733 = vor.u32 %v732, 8388608
  %v734 = vsub.s32 0, %v733
  %v735 = vadd.s32 %v730, 1
  %vm736 = vcmp.gt.s32.totalorder %v735, 0
  %v737 = vsel %vm736, %v735, 0
  %v738 = vshrl.u32 %v737, 5
  %v739 = vand.u32 %v737, 31
  %v740 = vsub.s32 32, %v739
  %v741 = vshrl.u32 683565275, %v740
  %v742 = vshll.u32 683565275, %v739
  %v743 = vshrl.u32 2475754826, %v740
  %v744 = vor.u32 %v742, %v743
  %v745 = vshll.u32 2475754826, %v739
  %v746 = vshrl.u32 2131351028, %v740
  %v747 = vor.u32 %v745, %v746
  %v748 = vshll.u32 2131351028, %v739
  %v749 = vshrl.u32 2102212464, %v740
  %v750 = vor.u32 %v748, %v749
  %v751 = vshll.u32 2102212464, %v739
  %v752 = vshrl.u32 920167782, %v740
  %v753 = vor.u32 %v751, %v752
  %v754 = vshll.u32 920167782, %v739
  %v755 = vshrl.u32 1326507024, %v740
  %v756 = vor.u32 %v754, %v755
  %vm757 = vcmp.lt.s32.totalorder %v738, 1
  %vm758 = vcmp.lt.s32.totalorder %v738, 2
  %vm759 = vcmp.lt.s32.totalorder %v738, 3
  %vm760 = vcmp.lt.s32.totalorder %v738, 4
  %v761 = vsel %vm757, %v741, %v744
  %v762 = vsel %vm760, %v750, 2102212464
  %v763 = vsel %vm759, %v747, %v762
  %v764 = vsel %vm758, %v761, %v763
  %v765 = vsel %vm757, %v744, %v747
  %v766 = vsel %vm760, %v753, 920167782
  %v767 = vsel %vm759, %v750, %v766
  %v768 = vsel %vm758, %v765, %v767
  %v769 = vsel %vm757, %v747, %v750
  %v770 = vsel %vm760, %v756, 1326507024
  %v771 = vsel %vm759, %v753, %v770
  %v772 = vsel %vm758, %v769, %v771
  %v773 = vshll.u32 %v733, 8
  %v774 = vmul.u32.u64.compose %v773, %v772
  %v775 = vextract.low.u32 %v774
  %v776 = vextract.high.u32 %v774
  %v777 = vmul.u32.u64.compose %v773, %v768
  %v778 = vextract.low.u32 %v777
  %v779 = vextract.high.u32 %v777
  %v780 = vmul.u32 %v773, %v764
  %v781 = vadd.s32 %v776, %v778
  %vm782 = vc.u32 %v776, %v778
  %v783 = vadd.s32 %v779, 1
  %v784 = vsel %vm782, %v783, %v779
  %v785 = vadd.s32 %v780, %v784
  %v786 = vadd.s32 %v785, 536870912
  %v787 = vshrl.u32 %v786, 30
  %v788 = vshll.u32 %v787, 30
  %v789 = vsub.s32 %v785, %v788
  %vm790 = vcmp.lt.s32.totalorder %v789, 0
  %v791 = vsub.s32 0, %v789
  %v792 = vsel %vm790, %v791, %v789
  %v793 = vclz %v792
  %v794 = vsub.s32 %v793, 2
  %vm795 = vcmp.gt.s32.totalorder 0, %v794
  %v796 = vsel %vm795, 0, %v794
  %v797 = vsub.s32 32, %v796
  %v798 = vshll.u32 %v789, %v796
  %v799 = vshrl.u32 %v781, %v797
  %v800 = vor.u32 %v798, %v799
  %v801 = vsub.s32 4294967266, %v796
  %v802 = vadd.s32 %v801, 127
  %v803 = vshll.u32 %v802, 23
  %v804 = vor.u32 4788187, %v803
  %v805 = vand.u32 2147483647, %v804
  %v807 = vcvt.s32.f32 %v800
  %v808 = vmul.f32 %v807, %v805
  %v809 = vxor.u32 %v808, 2147483648
  %v810 = vsel %vm727, %v809, %v808
  %v811 = vsub.s32 4, %v787
  %v812 = vsel %vm727, %v811, %v787
  %v813 = vsel %vm726, %v81, %v810
  %v814 = vsel %vm726, 0, %v812
  %v815 = vcosq.f32.pop %v813
  %v816 = vsinq.f32.pop %v813
  %vm817 = vweird.f32 %v81
  %v818 = vand.u32 %v814, 3
  %vm819 = vcmp.lt.s32.totalorder %v818, 2
  %vm820 = vcmp.eq.s32.totalorder %v818, 0
  %v821 = vxor.u32 %v816, 2147483648
  %v822 = vsel %vm820, %v815, %v821
  %vm823 = vcmp.eq.s32.totalorder %v818, 2
  %v824 = vxor.u32 %v815, 2147483648
  %v825 = vsel %vm823, %v824, %v816
  %v826 = vsel %vm819, %v822, %v825
  %v827 = vsel %vm817, nan, %v826
  %v828 = vand.u32 2147483647, %v82
  %vm829 = vcmp.le.f32.partialorder %v828, 0.7853982
  %vm830 = vcmp.lt.s32.totalorder %v82, 0
  %v831 = vand.u32 %v82, 2139095040
  %v832 = vshrl.u32 %v831, 23
  %v833 = vsub.s32 %v832, 127
  %v834 = vand.u32 2147483647, %v82
  %v835 = vand.u32 %v834, 8388607
  %v836 = vor.u32 %v835, 8388608
  %v837 = vsub.s32 0, %v836
  %v838 = vadd.s32 %v833, 1
  %vm839 = vcmp.gt.s32.totalorder %v838, 0
  %v840 = vsel %vm839, %v838, 0
  %v841 = vshrl.u32 %v840, 5
  %v842 = vand.u32 %v840, 31
  %v843 = vsub.s32 32, %v842
  %v844 = vshrl.u32 683565275, %v843
  %v845 = vshll.u32 683565275, %v842
  %v846 = vshrl.u32 2475754826, %v843
  %v847 = vor.u32 %v845, %v846
  %v848 = vshll.u32 2475754826, %v842
  %v849 = vshrl.u32 2131351028, %v843
  %v850 = vor.u32 %v848, %v849
  %v851 = vshll.u32 2131351028, %v842
  %v852 = vshrl.u32 2102212464, %v843
  %v853 = vor.u32 %v851, %v852
  %v854 = vshll.u32 2102212464, %v842
  %v855 = vshrl.u32 920167782, %v843
  %v856 = vor.u32 %v854, %v855
  %v857 = vshll.u32 920167782, %v842
  %v858 = vshrl.u32 1326507024, %v843
  %v859 = vor.u32 %v857, %v858
  %vm860 = vcmp.lt.s32.totalorder %v841, 1
  %vm861 = vcmp.lt.s32.totalorder %v841, 2
  %vm862 = vcmp.lt.s32.totalorder %v841, 3
  %vm863 = vcmp.lt.s32.totalorder %v841, 4
  %v864 = vsel %vm860, %v844, %v847
  %v865 = vsel %vm863, %v853, 2102212464
  %v866 = vsel %vm862, %v850, %v865
  %v867 = vsel %vm861, %v864, %v866
  %v868 = vsel %vm860, %v847, %v850
  %v869 = vsel %vm863, %v856, 920167782
  %v870 = vsel %vm862, %v853, %v869
  %v871 = vsel %vm861, %v868, %v870
  %v872 = vsel %vm860, %v850, %v853
  %v873 = vsel %vm863, %v859, 1326507024
  %v874 = vsel %vm862, %v856, %v873
  %v875 = vsel %vm861, %v872, %v874
  %v876 = vshll.u32 %v836, 8
  %v877 = vmul.u32.u64.compose %v876, %v875
  %v878 = vextract.low.u32 %v877
  %v879 = vextract.high.u32 %v877
  %v880 = vmul.u32.u64.compose %v876, %v871
  %v881 = vextract.low.u32 %v880
  %v882 = vextract.high.u32 %v880
  %v883 = vmul.u32 %v876, %v867
  %v884 = vadd.s32 %v879, %v881
  %vm885 = vc.u32 %v879, %v881
  %v886 = vadd.s32 %v882, 1
  %v887 = vsel %vm885, %v886, %v882
  %v888 = vadd.s32 %v883, %v887
  %v889 = vadd.s32 %v888, 536870912
  %v890 = vshrl.u32 %v889, 30
  %v891 = vshll.u32 %v890, 30
  %v892 = vsub.s32 %v888, %v891
  %vm893 = vcmp.lt.s32.totalorder %v892, 0
  %v894 = vsub.s32 0, %v892
  %v895 = vsel %vm893, %v894, %v892
  %v896 = vclz %v895
  %v897 = vsub.s32 %v896, 2
  %vm898 = vcmp.gt.s32.totalorder 0, %v897
  %v899 = vsel %vm898, 0, %v897
  %v900 = vsub.s32 32, %v899
  %v901 = vshll.u32 %v892, %v899
  %v902 = vshrl.u32 %v884, %v900
  %v903 = vor.u32 %v901, %v902
  %v904 = vsub.s32 4294967266, %v899
  %v905 = vadd.s32 %v904, 127
  %v906 = vshll.u32 %v905, 23
  %v907 = vor.u32 4788187, %v906
  %v908 = vand.u32 2147483647, %v907
  %v910 = vcvt.s32.f32 %v903
  %v911 = vmul.f32 %v910, %v908
  %v912 = vxor.u32 %v911, 2147483648
  %v913 = vsel %vm830, %v912, %v911
  %v914 = vsub.s32 4, %v890
  %v915 = vsel %vm830, %v914, %v890
  %v916 = vsel %vm829, %v82, %v913
  %v917 = vsel %vm829, 0, %v915
  %v918 = vcosq.f32.pop %v916
  %v919 = vsinq.f32.pop %v916
  %vm920 = vweird.f32 %v82
  %v921 = vand.u32 %v917, 3
  %vm922 = vcmp.lt.s32.totalorder %v921, 2
  %vm923 = vcmp.eq.s32.totalorder %v921, 0
  %v924 = vxor.u32 %v919, 2147483648
  %v925 = vsel %vm923, %v918, %v924
  %vm926 = vcmp.eq.s32.totalorder %v921, 2
  %v927 = vxor.u32 %v918, 2147483648
  %v928 = vsel %vm926, %v927, %v919
  %v929 = vsel %vm922, %v925, %v928
  %v930 = vsel %vm920, nan, %v929
  %v931 = vand.u32 2147483647, %v83
  %vm932 = vcmp.le.f32.partialorder %v931, 0.7853982
  %vm933 = vcmp.lt.s32.totalorder %v83, 0
  %v934 = vand.u32 %v83, 2139095040
  %v935 = vshrl.u32 %v934, 23
  %v936 = vsub.s32 %v935, 127
  %v937 = vand.u32 2147483647, %v83
  %v938 = vand.u32 %v937, 8388607
  %v939 = vor.u32 %v938, 8388608
  %v940 = vsub.s32 0, %v939
  %v941 = vadd.s32 %v936, 1
  %vm942 = vcmp.gt.s32.totalorder %v941, 0
  %v943 = vsel %vm942, %v941, 0
  %v944 = vshrl.u32 %v943, 5
  %v945 = vand.u32 %v943, 31
  %v946 = vsub.s32 32, %v945
  %v947 = vshrl.u32 683565275, %v946
  %v948 = vshll.u32 683565275, %v945
  %v949 = vshrl.u32 2475754826, %v946
  %v950 = vor.u32 %v948, %v949
  %v951 = vshll.u32 2475754826, %v945
  %v952 = vshrl.u32 2131351028, %v946
  %v953 = vor.u32 %v951, %v952
  %v954 = vshll.u32 2131351028, %v945
  %v955 = vshrl.u32 2102212464, %v946
  %v956 = vor.u32 %v954, %v955
  %v957 = vshll.u32 2102212464, %v945
  %v958 = vshrl.u32 920167782, %v946
  %v959 = vor.u32 %v957, %v958
  %v960 = vshll.u32 920167782, %v945
  %v961 = vshrl.u32 1326507024, %v946
  %v962 = vor.u32 %v960, %v961
  %vm963 = vcmp.lt.s32.totalorder %v944, 1
  %vm964 = vcmp.lt.s32.totalorder %v944, 2
  %vm965 = vcmp.lt.s32.totalorder %v944, 3
  %vm966 = vcmp.lt.s32.totalorder %v944, 4
  %v967 = vsel %vm963, %v947, %v950
  %v968 = vsel %vm966, %v956, 2102212464
  %v969 = vsel %vm965, %v953, %v968
  %v970 = vsel %vm964, %v967, %v969
  %v971 = vsel %vm963, %v950, %v953
  %v972 = vsel %vm966, %v959, 920167782
  %v973 = vsel %vm965, %v956, %v972
  %v974 = vsel %vm964, %v971, %v973
  %v975 = vsel %vm963, %v953, %v956
  %v976 = vsel %vm966, %v962, 1326507024
  %v977 = vsel %vm965, %v959, %v976
  %v978 = vsel %vm964, %v975, %v977
  %v979 = vshll.u32 %v939, 8
  %v980 = vmul.u32.u64.compose %v979, %v978
  %v981 = vextract.low.u32 %v980
  %v982 = vextract.high.u32 %v980
  %v983 = vmul.u32.u64.compose %v979, %v974
  %v984 = vextract.low.u32 %v983
  %v985 = vextract.high.u32 %v983
  %v986 = vmul.u32 %v979, %v970
  %v987 = vadd.s32 %v982, %v984
  %vm988 = vc.u32 %v982, %v984
  %v989 = vadd.s32 %v985, 1
  %v990 = vsel %vm988, %v989, %v985
  %v991 = vadd.s32 %v986, %v990
  %v992 = vadd.s32 %v991, 536870912
  %v993 = vshrl.u32 %v992, 30
  %v994 = vshll.u32 %v993, 30
  %v995 = vsub.s32 %v991, %v994
  %vm996 = vcmp.lt.s32.totalorder %v995, 0
  %v997 = vsub.s32 0, %v995
  %v998 = vsel %vm996, %v997, %v995
  %v999 = vclz %v998
  %v1000 = vsub.s32 %v999, 2
  %vm1001 = vcmp.gt.s32.totalorder 0, %v1000
  %v1002 = vsel %vm1001, 0, %v1000
  %v1003 = vsub.s32 32, %v1002
  %v1004 = vshll.u32 %v995, %v1002
  %v1005 = vshrl.u32 %v987, %v1003
  %v1006 = vor.u32 %v1004, %v1005
  %v1007 = vsub.s32 4294967266, %v1002
  %v1008 = vadd.s32 %v1007, 127
  %v1009 = vshll.u32 %v1008, 23
  %v1010 = vor.u32 4788187, %v1009
  %v1011 = vand.u32 2147483647, %v1010
  %v1013 = vcvt.s32.f32 %v1006
  %v1014 = vmul.f32 %v1013, %v1011
  %v1015 = vxor.u32 %v1014, 2147483648
  %v1016 = vsel %vm933, %v1015, %v1014
  %v1017 = vsub.s32 4, %v993
  %v1018 = vsel %vm933, %v1017, %v993
  %v1019 = vsel %vm932, %v83, %v1016
  %v1020 = vsel %vm932, 0, %v1018
  %v1021 = vcosq.f32.pop %v1019
  %v1022 = vsinq.f32.pop %v1019
  %vm1023 = vweird.f32 %v83
  %v1024 = vand.u32 %v1020, 3
  %vm1025 = vcmp.lt.s32.totalorder %v1024, 2
  %vm1026 = vcmp.eq.s32.totalorder %v1024, 0
  %v1027 = vxor.u32 %v1022, 2147483648
  %v1028 = vsel %vm1026, %v1021, %v1027
  %vm1029 = vcmp.eq.s32.totalorder %v1024, 2
  %v1030 = vxor.u32 %v1021, 2147483648
  %v1031 = vsel %vm1029, %v1030, %v1022
  %v1032 = vsel %vm1025, %v1028, %v1031
  %v1033 = vsel %vm1023, nan, %v1032
  %v1034 = vand.u32 2147483647, %v84
  %vm1035 = vcmp.le.f32.partialorder %v1034, 0.7853982
  %vm1036 = vcmp.lt.s32.totalorder %v84, 0
  %v1037 = vand.u32 %v84, 2139095040
  %v1038 = vshrl.u32 %v1037, 23
  %v1039 = vsub.s32 %v1038, 127
  %v1040 = vand.u32 2147483647, %v84
  %v1041 = vand.u32 %v1040, 8388607
  %v1042 = vor.u32 %v1041, 8388608
  %v1043 = vsub.s32 0, %v1042
  %v1044 = vadd.s32 %v1039, 1
  %vm1045 = vcmp.gt.s32.totalorder %v1044, 0
  %v1046 = vsel %vm1045, %v1044, 0
  %v1047 = vshrl.u32 %v1046, 5
  %v1048 = vand.u32 %v1046, 31
  %v1049 = vsub.s32 32, %v1048
  %v1050 = vshrl.u32 683565275, %v1049
  %v1051 = vshll.u32 683565275, %v1048
  %v1052 = vshrl.u32 2475754826, %v1049
  %v1053 = vor.u32 %v1051, %v1052
  %v1054 = vshll.u32 2475754826, %v1048
  %v1055 = vshrl.u32 2131351028, %v1049
  %v1056 = vor.u32 %v1054, %v1055
  %v1057 = vshll.u32 2131351028, %v1048
  %v1058 = vshrl.u32 2102212464, %v1049
  %v1059 = vor.u32 %v1057, %v1058
  %v1060 = vshll.u32 2102212464, %v1048
  %v1061 = vshrl.u32 920167782, %v1049
  %v1062 = vor.u32 %v1060, %v1061
  %v1063 = vshll.u32 920167782, %v1048
  %v1064 = vshrl.u32 1326507024, %v1049
  %v1065 = vor.u32 %v1063, %v1064
  %vm1066 = vcmp.lt.s32.totalorder %v1047, 1
  %vm1067 = vcmp.lt.s32.totalorder %v1047, 2
  %vm1068 = vcmp.lt.s32.totalorder %v1047, 3
  %vm1069 = vcmp.lt.s32.totalorder %v1047, 4
  %v1070 = vsel %vm1066, %v1050, %v1053
  %v1071 = vsel %vm1069, %v1059, 2102212464
  %v1072 = vsel %vm1068, %v1056, %v1071
  %v1073 = vsel %vm1067, %v1070, %v1072
  %v1074 = vsel %vm1066, %v1053, %v1056
  %v1075 = vsel %vm1069, %v1062, 920167782
  %v1076 = vsel %vm1068, %v1059, %v1075
  %v1077 = vsel %vm1067, %v1074, %v1076
  %v1078 = vsel %vm1066, %v1056, %v1059
  %v1079 = vsel %vm1069, %v1065, 1326507024
  %v1080 = vsel %vm1068, %v1062, %v1079
  %v1081 = vsel %vm1067, %v1078, %v1080
  %v1082 = vshll.u32 %v1042, 8
  %v1083 = vmul.u32.u64.compose %v1082, %v1081
  %v1084 = vextract.low.u32 %v1083
  %v1085 = vextract.high.u32 %v1083
  %v1086 = vmul.u32.u64.compose %v1082, %v1077
  %v1087 = vextract.low.u32 %v1086
  %v1088 = vextract.high.u32 %v1086
  %v1089 = vmul.u32 %v1082, %v1073
  %v1090 = vadd.s32 %v1085, %v1087
  %vm1091 = vc.u32 %v1085, %v1087
  %v1092 = vadd.s32 %v1088, 1
  %v1093 = vsel %vm1091, %v1092, %v1088
  %v1094 = vadd.s32 %v1089, %v1093
  %v1095 = vadd.s32 %v1094, 536870912
  %v1096 = vshrl.u32 %v1095, 30
  %v1097 = vshll.u32 %v1096, 30
  %v1098 = vsub.s32 %v1094, %v1097
  %vm1099 = vcmp.lt.s32.totalorder %v1098, 0
  %v1100 = vsub.s32 0, %v1098
  %v1101 = vsel %vm1099, %v1100, %v1098
  %v1102 = vclz %v1101
  %v1103 = vsub.s32 %v1102, 2
  %vm1104 = vcmp.gt.s32.totalorder 0, %v1103
  %v1105 = vsel %vm1104, 0, %v1103
  %v1106 = vsub.s32 32, %v1105
  %v1107 = vshll.u32 %v1098, %v1105
  %v1108 = vshrl.u32 %v1090, %v1106
  %v1109 = vor.u32 %v1107, %v1108
  %v1110 = vsub.s32 4294967266, %v1105
  %v1111 = vadd.s32 %v1110, 127
  %v1112 = vshll.u32 %v1111, 23
  %v1113 = vor.u32 4788187, %v1112
  %v1114 = vand.u32 2147483647, %v1113
  %v1116 = vcvt.s32.f32 %v1109
  %v1117 = vmul.f32 %v1116, %v1114
  %v1118 = vxor.u32 %v1117, 2147483648
  %v1119 = vsel %vm1036, %v1118, %v1117
  %v1120 = vsub.s32 4, %v1096
  %v1121 = vsel %vm1036, %v1120, %v1096
  %v1122 = vsel %vm1035, %v84, %v1119
  %v1123 = vsel %vm1035, 0, %v1121
  %v1124 = vcosq.f32.pop %v1122
  %v1125 = vsinq.f32.pop %v1122
  %vm1126 = vweird.f32 %v84
  %v1127 = vand.u32 %v1123, 3
  %vm1128 = vcmp.lt.s32.totalorder %v1127, 2
  %vm1129 = vcmp.eq.s32.totalorder %v1127, 0
  %v1130 = vxor.u32 %v1125, 2147483648
  %v1131 = vsel %vm1129, %v1124, %v1130
  %vm1132 = vcmp.eq.s32.totalorder %v1127, 2
  %v1133 = vxor.u32 %v1124, 2147483648
  %v1134 = vsel %vm1132, %v1133, %v1125
  %v1135 = vsel %vm1128, %v1131, %v1134
  %v1136 = vsel %vm1126, nan, %v1135
  %v1137 = vand.u32 2147483647, %v85
  %vm1138 = vcmp.le.f32.partialorder %v1137, 0.7853982
  %vm1139 = vcmp.lt.s32.totalorder %v85, 0
  %v1140 = vand.u32 %v85, 2139095040
  %v1141 = vshrl.u32 %v1140, 23
  %v1142 = vsub.s32 %v1141, 127
  %v1143 = vand.u32 2147483647, %v85
  %v1144 = vand.u32 %v1143, 8388607
  %v1145 = vor.u32 %v1144, 8388608
  %v1146 = vsub.s32 0, %v1145
  %v1147 = vadd.s32 %v1142, 1
  %vm1148 = vcmp.gt.s32.totalorder %v1147, 0
  %v1149 = vsel %vm1148, %v1147, 0
  %v1150 = vshrl.u32 %v1149, 5
  %v1151 = vand.u32 %v1149, 31
  %v1152 = vsub.s32 32, %v1151
  %v1153 = vshrl.u32 683565275, %v1152
  %v1154 = vshll.u32 683565275, %v1151
  %v1155 = vshrl.u32 2475754826, %v1152
  %v1156 = vor.u32 %v1154, %v1155
  %v1157 = vshll.u32 2475754826, %v1151
  %v1158 = vshrl.u32 2131351028, %v1152
  %v1159 = vor.u32 %v1157, %v1158
  %v1160 = vshll.u32 2131351028, %v1151
  %v1161 = vshrl.u32 2102212464, %v1152
  %v1162 = vor.u32 %v1160, %v1161
  %v1163 = vshll.u32 2102212464, %v1151
  %v1164 = vshrl.u32 920167782, %v1152
  %v1165 = vor.u32 %v1163, %v1164
  %v1166 = vshll.u32 920167782, %v1151
  %v1167 = vshrl.u32 1326507024, %v1152
  %v1168 = vor.u32 %v1166, %v1167
  %vm1169 = vcmp.lt.s32.totalorder %v1150, 1
  %vm1170 = vcmp.lt.s32.totalorder %v1150, 2
  %vm1171 = vcmp.lt.s32.totalorder %v1150, 3
  %vm1172 = vcmp.lt.s32.totalorder %v1150, 4
  %v1173 = vsel %vm1169, %v1153, %v1156
  %v1174 = vsel %vm1172, %v1162, 2102212464
  %v1175 = vsel %vm1171, %v1159, %v1174
  %v1176 = vsel %vm1170, %v1173, %v1175
  %v1177 = vsel %vm1169, %v1156, %v1159
  %v1178 = vsel %vm1172, %v1165, 920167782
  %v1179 = vsel %vm1171, %v1162, %v1178
  %v1180 = vsel %vm1170, %v1177, %v1179
  %v1181 = vsel %vm1169, %v1159, %v1162
  %v1182 = vsel %vm1172, %v1168, 1326507024
  %v1183 = vsel %vm1171, %v1165, %v1182
  %v1184 = vsel %vm1170, %v1181, %v1183
  %v1185 = vshll.u32 %v1145, 8
  %v1186 = vmul.u32.u64.compose %v1185, %v1184
  %v1187 = vextract.low.u32 %v1186
  %v1188 = vextract.high.u32 %v1186
  %v1189 = vmul.u32.u64.compose %v1185, %v1180
  %v1190 = vextract.low.u32 %v1189
  %v1191 = vextract.high.u32 %v1189
  %v1192 = vmul.u32 %v1185, %v1176
  %v1193 = vadd.s32 %v1188, %v1190
  %vm1194 = vc.u32 %v1188, %v1190
  %v1195 = vadd.s32 %v1191, 1
  %v1196 = vsel %vm1194, %v1195, %v1191
  %v1197 = vadd.s32 %v1192, %v1196
  %v1198 = vadd.s32 %v1197, 536870912
  %v1199 = vshrl.u32 %v1198, 30
  %v1200 = vshll.u32 %v1199, 30
  %v1201 = vsub.s32 %v1197, %v1200
  %vm1202 = vcmp.lt.s32.totalorder %v1201, 0
  %v1203 = vsub.s32 0, %v1201
  %v1204 = vsel %vm1202, %v1203, %v1201
  %v1205 = vclz %v1204
  %v1206 = vsub.s32 %v1205, 2
  %vm1207 = vcmp.gt.s32.totalorder 0, %v1206
  %v1208 = vsel %vm1207, 0, %v1206
  %v1209 = vsub.s32 32, %v1208
  %v1210 = vshll.u32 %v1201, %v1208
  %v1211 = vshrl.u32 %v1193, %v1209
  %v1212 = vor.u32 %v1210, %v1211
  %v1213 = vsub.s32 4294967266, %v1208
  %v1214 = vadd.s32 %v1213, 127
  %v1215 = vshll.u32 %v1214, 23
  %v1216 = vor.u32 4788187, %v1215
  %v1217 = vand.u32 2147483647, %v1216
  %v1219 = vcvt.s32.f32 %v1212
  %v1220 = vmul.f32 %v1219, %v1217
  %v1221 = vxor.u32 %v1220, 2147483648
  %v1222 = vsel %vm1139, %v1221, %v1220
  %v1223 = vsub.s32 4, %v1199
  %v1224 = vsel %vm1139, %v1223, %v1199
  %v1225 = vsel %vm1138, %v85, %v1222
  %v1226 = vsel %vm1138, 0, %v1224
  %v1227 = vcosq.f32.pop %v1225
  %v1228 = vsinq.f32.pop %v1225
  %vm1229 = vweird.f32 %v85
  %v1230 = vand.u32 %v1226, 3
  %vm1231 = vcmp.lt.s32.totalorder %v1230, 2
  %vm1232 = vcmp.eq.s32.totalorder %v1230, 0
  %v1233 = vxor.u32 %v1228, 2147483648
  %v1234 = vsel %vm1232, %v1227, %v1233
  %vm1235 = vcmp.eq.s32.totalorder %v1230, 2
  %v1236 = vxor.u32 %v1227, 2147483648
  %v1237 = vsel %vm1235, %v1236, %v1228
  %v1238 = vsel %vm1231, %v1234, %v1237
  %v1239 = vsel %vm1229, nan, %v1238
  %v1240 = vand.u32 2147483647, %v86
  %vm1241 = vcmp.le.f32.partialorder %v1240, 0.7853982
  %vm1242 = vcmp.lt.s32.totalorder %v86, 0
  %v1243 = vand.u32 %v86, 2139095040
  %v1244 = vshrl.u32 %v1243, 23
  %v1245 = vsub.s32 %v1244, 127
  %v1246 = vand.u32 2147483647, %v86
  %v1247 = vand.u32 %v1246, 8388607
  %v1248 = vor.u32 %v1247, 8388608
  %v1249 = vsub.s32 0, %v1248
  %v1250 = vadd.s32 %v1245, 1
  %vm1251 = vcmp.gt.s32.totalorder %v1250, 0
  %v1252 = vsel %vm1251, %v1250, 0
  %v1253 = vshrl.u32 %v1252, 5
  %v1254 = vand.u32 %v1252, 31
  %v1255 = vsub.s32 32, %v1254
  %v1256 = vshrl.u32 683565275, %v1255
  %v1257 = vshll.u32 683565275, %v1254
  %v1258 = vshrl.u32 2475754826, %v1255
  %v1259 = vor.u32 %v1257, %v1258
  %v1260 = vshll.u32 2475754826, %v1254
  %v1261 = vshrl.u32 2131351028, %v1255
  %v1262 = vor.u32 %v1260, %v1261
  %v1263 = vshll.u32 2131351028, %v1254
  %v1264 = vshrl.u32 2102212464, %v1255
  %v1265 = vor.u32 %v1263, %v1264
  %v1266 = vshll.u32 2102212464, %v1254
  %v1267 = vshrl.u32 920167782, %v1255
  %v1268 = vor.u32 %v1266, %v1267
  %v1269 = vshll.u32 920167782, %v1254
  %v1270 = vshrl.u32 1326507024, %v1255
  %v1271 = vor.u32 %v1269, %v1270
  %vm1272 = vcmp.lt.s32.totalorder %v1253, 1
  %vm1273 = vcmp.lt.s32.totalorder %v1253, 2
  %vm1274 = vcmp.lt.s32.totalorder %v1253, 3
  %vm1275 = vcmp.lt.s32.totalorder %v1253, 4
  %v1276 = vsel %vm1272, %v1256, %v1259
  %v1277 = vsel %vm1275, %v1265, 2102212464
  %v1278 = vsel %vm1274, %v1262, %v1277
  %v1279 = vsel %vm1273, %v1276, %v1278
  %v1280 = vsel %vm1272, %v1259, %v1262
  %v1281 = vsel %vm1275, %v1268, 920167782
  %v1282 = vsel %vm1274, %v1265, %v1281
  %v1283 = vsel %vm1273, %v1280, %v1282
  %v1284 = vsel %vm1272, %v1262, %v1265
  %v1285 = vsel %vm1275, %v1271, 1326507024
  %v1286 = vsel %vm1274, %v1268, %v1285
  %v1287 = vsel %vm1273, %v1284, %v1286
  %v1288 = vshll.u32 %v1248, 8
  %v1289 = vmul.u32.u64.compose %v1288, %v1287
  %v1290 = vextract.low.u32 %v1289
  %v1291 = vextract.high.u32 %v1289
  %v1292 = vmul.u32.u64.compose %v1288, %v1283
  %v1293 = vextract.low.u32 %v1292
  %v1294 = vextract.high.u32 %v1292
  %v1295 = vmul.u32 %v1288, %v1279
  %v1296 = vadd.s32 %v1291, %v1293
  %vm1297 = vc.u32 %v1291, %v1293
  %v1298 = vadd.s32 %v1294, 1
  %v1299 = vsel %vm1297, %v1298, %v1294
  %v1300 = vadd.s32 %v1295, %v1299
  %v1301 = vadd.s32 %v1300, 536870912
  %v1302 = vshrl.u32 %v1301, 30
  %v1303 = vshll.u32 %v1302, 30
  %v1304 = vsub.s32 %v1300, %v1303
  %vm1305 = vcmp.lt.s32.totalorder %v1304, 0
  %v1306 = vsub.s32 0, %v1304
  %v1307 = vsel %vm1305, %v1306, %v1304
  %v1308 = vclz %v1307
  %v1309 = vsub.s32 %v1308, 2
  %vm1310 = vcmp.gt.s32.totalorder 0, %v1309
  %v1311 = vsel %vm1310, 0, %v1309
  %v1312 = vsub.s32 32, %v1311
  %v1313 = vshll.u32 %v1304, %v1311
  %v1314 = vshrl.u32 %v1296, %v1312
  %v1315 = vor.u32 %v1313, %v1314
  %v1316 = vsub.s32 4294967266, %v1311
  %v1317 = vadd.s32 %v1316, 127
  %v1318 = vshll.u32 %v1317, 23
  %v1319 = vor.u32 4788187, %v1318
  %v1320 = vand.u32 2147483647, %v1319
  %v1322 = vcvt.s32.f32 %v1315
  %v1323 = vmul.f32 %v1322, %v1320
  %v1324 = vxor.u32 %v1323, 2147483648
  %v1325 = vsel %vm1242, %v1324, %v1323
  %v1326 = vsub.s32 4, %v1302
  %v1327 = vsel %vm1242, %v1326, %v1302
  %v1328 = vsel %vm1241, %v86, %v1325
  %v1329 = vsel %vm1241, 0, %v1327
  %v1330 = vcosq.f32.pop %v1328
  %v1331 = vsinq.f32.pop %v1328
  %vm1332 = vweird.f32 %v86
  %v1333 = vand.u32 %v1329, 3
  %vm1334 = vcmp.lt.s32.totalorder %v1333, 2
  %vm1335 = vcmp.eq.s32.totalorder %v1333, 0
  %v1336 = vxor.u32 %v1331, 2147483648
  %v1337 = vsel %vm1335, %v1330, %v1336
  %vm1338 = vcmp.eq.s32.totalorder %v1333, 2
  %v1339 = vxor.u32 %v1330, 2147483648
  %v1340 = vsel %vm1338, %v1339, %v1331
  %v1341 = vsel %vm1334, %v1337, %v1340
  %v1342 = vsel %vm1332, nan, %v1341
  %v1343 = vand.u32 2147483647, %v87
  %vm1344 = vcmp.le.f32.partialorder %v1343, 0.7853982
  %vm1345 = vcmp.lt.s32.totalorder %v87, 0
  %v1346 = vand.u32 %v87, 2139095040
  %v1347 = vshrl.u32 %v1346, 23
  %v1348 = vsub.s32 %v1347, 127
  %v1349 = vand.u32 2147483647, %v87
  %v1350 = vand.u32 %v1349, 8388607
  %v1351 = vor.u32 %v1350, 8388608
  %v1352 = vsub.s32 0, %v1351
  %v1353 = vadd.s32 %v1348, 1
  %vm1354 = vcmp.gt.s32.totalorder %v1353, 0
  %v1355 = vsel %vm1354, %v1353, 0
  %v1356 = vshrl.u32 %v1355, 5
  %v1357 = vand.u32 %v1355, 31
  %v1358 = vsub.s32 32, %v1357
  %v1359 = vshrl.u32 683565275, %v1358
  %v1360 = vshll.u32 683565275, %v1357
  %v1361 = vshrl.u32 2475754826, %v1358
  %v1362 = vor.u32 %v1360, %v1361
  %v1363 = vshll.u32 2475754826, %v1357
  %v1364 = vshrl.u32 2131351028, %v1358
  %v1365 = vor.u32 %v1363, %v1364
  %v1366 = vshll.u32 2131351028, %v1357
  %v1367 = vshrl.u32 2102212464, %v1358
  %v1368 = vor.u32 %v1366, %v1367
  %v1369 = vshll.u32 2102212464, %v1357
  %v1370 = vshrl.u32 920167782, %v1358
  %v1371 = vor.u32 %v1369, %v1370
  %v1372 = vshll.u32 920167782, %v1357
  %v1373 = vshrl.u32 1326507024, %v1358
  %v1374 = vor.u32 %v1372, %v1373
  %vm1375 = vcmp.lt.s32.totalorder %v1356, 1
  %vm1376 = vcmp.lt.s32.totalorder %v1356, 2
  %vm1377 = vcmp.lt.s32.totalorder %v1356, 3
  %vm1378 = vcmp.lt.s32.totalorder %v1356, 4
  %v1379 = vsel %vm1375, %v1359, %v1362
  %v1380 = vsel %vm1378, %v1368, 2102212464
  %v1381 = vsel %vm1377, %v1365, %v1380
  %v1382 = vsel %vm1376, %v1379, %v1381
  %v1383 = vsel %vm1375, %v1362, %v1365
  %v1384 = vsel %vm1378, %v1371, 920167782
  %v1385 = vsel %vm1377, %v1368, %v1384
  %v1386 = vsel %vm1376, %v1383, %v1385
  %v1387 = vsel %vm1375, %v1365, %v1368
  %v1388 = vsel %vm1378, %v1374, 1326507024
  %v1389 = vsel %vm1377, %v1371, %v1388
  %v1390 = vsel %vm1376, %v1387, %v1389
  %v1391 = vshll.u32 %v1351, 8
  %v1392 = vmul.u32.u64.compose %v1391, %v1390
  %v1393 = vextract.low.u32 %v1392
  %v1394 = vextract.high.u32 %v1392
  %v1395 = vmul.u32.u64.compose %v1391, %v1386
  %v1396 = vextract.low.u32 %v1395
  %v1397 = vextract.high.u32 %v1395
  %v1398 = vmul.u32 %v1391, %v1382
  %v1399 = vadd.s32 %v1394, %v1396
  %vm1400 = vc.u32 %v1394, %v1396
  %v1401 = vadd.s32 %v1397, 1
  %v1402 = vsel %vm1400, %v1401, %v1397
  %v1403 = vadd.s32 %v1398, %v1402
  %v1404 = vadd.s32 %v1403, 536870912
  %v1405 = vshrl.u32 %v1404, 30
  %v1406 = vshll.u32 %v1405, 30
  %v1407 = vsub.s32 %v1403, %v1406
  %vm1408 = vcmp.lt.s32.totalorder %v1407, 0
  %v1409 = vsub.s32 0, %v1407
  %v1410 = vsel %vm1408, %v1409, %v1407
  %v1411 = vclz %v1410
  %v1412 = vsub.s32 %v1411, 2
  %vm1413 = vcmp.gt.s32.totalorder 0, %v1412
  %v1414 = vsel %vm1413, 0, %v1412
  %v1415 = vsub.s32 32, %v1414
  %v1416 = vshll.u32 %v1407, %v1414
  %v1417 = vshrl.u32 %v1399, %v1415
  %v1418 = vor.u32 %v1416, %v1417
  %v1419 = vsub.s32 4294967266, %v1414
  %v1420 = vadd.s32 %v1419, 127
  %v1421 = vshll.u32 %v1420, 23
  %v1422 = vor.u32 4788187, %v1421
  %v1423 = vand.u32 2147483647, %v1422
  %v1425 = vcvt.s32.f32 %v1418
  %v1426 = vmul.f32 %v1425, %v1423
  %v1427 = vxor.u32 %v1426, 2147483648
  %v1428 = vsel %vm1345, %v1427, %v1426
  %v1429 = vsub.s32 4, %v1405
  %v1430 = vsel %vm1345, %v1429, %v1405
  %v1431 = vsel %vm1344, %v87, %v1428
  %v1432 = vsel %vm1344, 0, %v1430
  %v1433 = vcosq.f32.pop %v1431
  %v1434 = vsinq.f32.pop %v1431
  %vm1435 = vweird.f32 %v87
  %v1436 = vand.u32 %v1432, 3
  %vm1437 = vcmp.lt.s32.totalorder %v1436, 2
  %vm1438 = vcmp.eq.s32.totalorder %v1436, 0
  %v1439 = vxor.u32 %v1434, 2147483648
  %v1440 = vsel %vm1438, %v1433, %v1439
  %vm1441 = vcmp.eq.s32.totalorder %v1436, 2
  %v1442 = vxor.u32 %v1433, 2147483648
  %v1443 = vsel %vm1441, %v1442, %v1434
  %v1444 = vsel %vm1437, %v1440, %v1443
  %v1445 = vsel %vm1435, nan, %v1444
  %v1446 = vand.u32 2147483647, %v88
  %vm1447 = vcmp.le.f32.partialorder %v1446, 0.7853982
  %vm1448 = vcmp.lt.s32.totalorder %v88, 0
  %v1449 = vand.u32 %v88, 2139095040
  %v1450 = vshrl.u32 %v1449, 23
  %v1451 = vsub.s32 %v1450, 127
  %v1452 = vand.u32 2147483647, %v88
  %v1453 = vand.u32 %v1452, 8388607
  %v1454 = vor.u32 %v1453, 8388608
  %v1455 = vsub.s32 0, %v1454
  %v1456 = vadd.s32 %v1451, 1
  %vm1457 = vcmp.gt.s32.totalorder %v1456, 0
  %v1458 = vsel %vm1457, %v1456, 0
  %v1459 = vshrl.u32 %v1458, 5
  %v1460 = vand.u32 %v1458, 31
  %v1461 = vsub.s32 32, %v1460
  %v1462 = vshrl.u32 683565275, %v1461
  %v1463 = vshll.u32 683565275, %v1460
  %v1464 = vshrl.u32 2475754826, %v1461
  %v1465 = vor.u32 %v1463, %v1464
  %v1466 = vshll.u32 2475754826, %v1460
  %v1467 = vshrl.u32 2131351028, %v1461
  %v1468 = vor.u32 %v1466, %v1467
  %v1469 = vshll.u32 2131351028, %v1460
  %v1470 = vshrl.u32 2102212464, %v1461
  %v1471 = vor.u32 %v1469, %v1470
  %v1472 = vshll.u32 2102212464, %v1460
  %v1473 = vshrl.u32 920167782, %v1461
  %v1474 = vor.u32 %v1472, %v1473
  %v1475 = vshll.u32 920167782, %v1460
  %v1476 = vshrl.u32 1326507024, %v1461
  %v1477 = vor.u32 %v1475, %v1476
  %vm1478 = vcmp.lt.s32.totalorder %v1459, 1
  %vm1479 = vcmp.lt.s32.totalorder %v1459, 2
  %vm1480 = vcmp.lt.s32.totalorder %v1459, 3
  %vm1481 = vcmp.lt.s32.totalorder %v1459, 4
  %v1482 = vsel %vm1478, %v1462, %v1465
  %v1483 = vsel %vm1481, %v1471, 2102212464
  %v1484 = vsel %vm1480, %v1468, %v1483
  %v1485 = vsel %vm1479, %v1482, %v1484
  %v1486 = vsel %vm1478, %v1465, %v1468
  %v1487 = vsel %vm1481, %v1474, 920167782
  %v1488 = vsel %vm1480, %v1471, %v1487
  %v1489 = vsel %vm1479, %v1486, %v1488
  %v1490 = vsel %vm1478, %v1468, %v1471
  %v1491 = vsel %vm1481, %v1477, 1326507024
  %v1492 = vsel %vm1480, %v1474, %v1491
  %v1493 = vsel %vm1479, %v1490, %v1492
  %v1494 = vshll.u32 %v1454, 8
  %v1495 = vmul.u32.u64.compose %v1494, %v1493
  %v1496 = vextract.low.u32 %v1495
  %v1497 = vextract.high.u32 %v1495
  %v1498 = vmul.u32.u64.compose %v1494, %v1489
  %v1499 = vextract.low.u32 %v1498
  %v1500 = vextract.high.u32 %v1498
  %v1501 = vmul.u32 %v1494, %v1485
  %v1502 = vadd.s32 %v1497, %v1499
  %vm1503 = vc.u32 %v1497, %v1499
  %v1504 = vadd.s32 %v1500, 1
  %v1505 = vsel %vm1503, %v1504, %v1500
  %v1506 = vadd.s32 %v1501, %v1505
  %v1507 = vadd.s32 %v1506, 536870912
  %v1508 = vshrl.u32 %v1507, 30
  %v1509 = vshll.u32 %v1508, 30
  %v1510 = vsub.s32 %v1506, %v1509
  %vm1511 = vcmp.lt.s32.totalorder %v1510, 0
  %v1512 = vsub.s32 0, %v1510
  %v1513 = vsel %vm1511, %v1512, %v1510
  %v1514 = vclz %v1513
  %v1515 = vsub.s32 %v1514, 2
  %vm1516 = vcmp.gt.s32.totalorder 0, %v1515
  %v1517 = vsel %vm1516, 0, %v1515
  %v1518 = vsub.s32 32, %v1517
  %v1519 = vshll.u32 %v1510, %v1517
  %v1520 = vshrl.u32 %v1502, %v1518
  %v1521 = vor.u32 %v1519, %v1520
  %v1522 = vsub.s32 4294967266, %v1517
  %v1523 = vadd.s32 %v1522, 127
  %v1524 = vshll.u32 %v1523, 23
  %v1525 = vor.u32 4788187, %v1524
  %v1526 = vand.u32 2147483647, %v1525
  %v1528 = vcvt.s32.f32 %v1521
  %v1529 = vmul.f32 %v1528, %v1526
  %v1530 = vxor.u32 %v1529, 2147483648
  %v1531 = vsel %vm1448, %v1530, %v1529
  %v1532 = vsub.s32 4, %v1508
  %v1533 = vsel %vm1448, %v1532, %v1508
  %v1534 = vsel %vm1447, %v88, %v1531
  %v1535 = vsel %vm1447, 0, %v1533
  %v1536 = vcosq.f32.pop %v1534
  %v1537 = vsinq.f32.pop %v1534
  %vm1538 = vweird.f32 %v88
  %v1539 = vand.u32 %v1535, 3
  %vm1540 = vcmp.lt.s32.totalorder %v1539, 2
  %vm1541 = vcmp.eq.s32.totalorder %v1539, 0
  %v1542 = vxor.u32 %v1537, 2147483648
  %v1543 = vsel %vm1541, %v1536, %v1542
  %vm1544 = vcmp.eq.s32.totalorder %v1539, 2
  %v1545 = vxor.u32 %v1536, 2147483648
  %v1546 = vsel %vm1544, %v1545, %v1537
  %v1547 = vsel %vm1540, %v1543, %v1546
  %v1548 = vsel %vm1538, nan, %v1547
  %v1549 = vand.u32 2147483647, %v89
  %vm1550 = vcmp.le.f32.partialorder %v1549, 0.7853982
  %vm1551 = vcmp.lt.s32.totalorder %v89, 0
  %v1552 = vand.u32 %v89, 2139095040
  %v1553 = vshrl.u32 %v1552, 23
  %v1554 = vsub.s32 %v1553, 127
  %v1555 = vand.u32 2147483647, %v89
  %v1556 = vand.u32 %v1555, 8388607
  %v1557 = vor.u32 %v1556, 8388608
  %v1558 = vsub.s32 0, %v1557
  %v1559 = vadd.s32 %v1554, 1
  %vm1560 = vcmp.gt.s32.totalorder %v1559, 0
  %v1561 = vsel %vm1560, %v1559, 0
  %v1562 = vshrl.u32 %v1561, 5
  %v1563 = vand.u32 %v1561, 31
  %v1564 = vsub.s32 32, %v1563
  %v1565 = vshrl.u32 683565275, %v1564
  %v1566 = vshll.u32 683565275, %v1563
  %v1567 = vshrl.u32 2475754826, %v1564
  %v1568 = vor.u32 %v1566, %v1567
  %v1569 = vshll.u32 2475754826, %v1563
  %v1570 = vshrl.u32 2131351028, %v1564
  %v1571 = vor.u32 %v1569, %v1570
  %v1572 = vshll.u32 2131351028, %v1563
  %v1573 = vshrl.u32 2102212464, %v1564
  %v1574 = vor.u32 %v1572, %v1573
  %v1575 = vshll.u32 2102212464, %v1563
  %v1576 = vshrl.u32 920167782, %v1564
  %v1577 = vor.u32 %v1575, %v1576
  %v1578 = vshll.u32 920167782, %v1563
  %v1579 = vshrl.u32 1326507024, %v1564
  %v1580 = vor.u32 %v1578, %v1579
  %vm1581 = vcmp.lt.s32.totalorder %v1562, 1
  %vm1582 = vcmp.lt.s32.totalorder %v1562, 2
  %vm1583 = vcmp.lt.s32.totalorder %v1562, 3
  %vm1584 = vcmp.lt.s32.totalorder %v1562, 4
  %v1585 = vsel %vm1581, %v1565, %v1568
  %v1586 = vsel %vm1584, %v1574, 2102212464
  %v1587 = vsel %vm1583, %v1571, %v1586
  %v1588 = vsel %vm1582, %v1585, %v1587
  %v1589 = vsel %vm1581, %v1568, %v1571
  %v1590 = vsel %vm1584, %v1577, 920167782
  %v1591 = vsel %vm1583, %v1574, %v1590
  %v1592 = vsel %vm1582, %v1589, %v1591
  %v1593 = vsel %vm1581, %v1571, %v1574
  %v1594 = vsel %vm1584, %v1580, 1326507024
  %v1595 = vsel %vm1583, %v1577, %v1594
  %v1596 = vsel %vm1582, %v1593, %v1595
  %v1597 = vshll.u32 %v1557, 8
  %v1598 = vmul.u32.u64.compose %v1597, %v1596
  %v1599 = vextract.low.u32 %v1598
  %v1600 = vextract.high.u32 %v1598
  %v1601 = vmul.u32.u64.compose %v1597, %v1592
  %v1602 = vextract.low.u32 %v1601
  %v1603 = vextract.high.u32 %v1601
  %v1604 = vmul.u32 %v1597, %v1588
  %v1605 = vadd.s32 %v1600, %v1602
  %vm1606 = vc.u32 %v1600, %v1602
  %v1607 = vadd.s32 %v1603, 1
  %v1608 = vsel %vm1606, %v1607, %v1603
  %v1609 = vadd.s32 %v1604, %v1608
  %v1610 = vadd.s32 %v1609, 536870912
  %v1611 = vshrl.u32 %v1610, 30
  %v1612 = vshll.u32 %v1611, 30
  %v1613 = vsub.s32 %v1609, %v1612
  %vm1614 = vcmp.lt.s32.totalorder %v1613, 0
  %v1615 = vsub.s32 0, %v1613
  %v1616 = vsel %vm1614, %v1615, %v1613
  %v1617 = vclz %v1616
  %v1618 = vsub.s32 %v1617, 2
  %vm1619 = vcmp.gt.s32.totalorder 0, %v1618
  %v1620 = vsel %vm1619, 0, %v1618
  %v1621 = vsub.s32 32, %v1620
  %v1622 = vshll.u32 %v1613, %v1620
  %v1623 = vshrl.u32 %v1605, %v1621
  %v1624 = vor.u32 %v1622, %v1623
  %v1625 = vsub.s32 4294967266, %v1620
  %v1626 = vadd.s32 %v1625, 127
  %v1627 = vshll.u32 %v1626, 23
  %v1628 = vor.u32 4788187, %v1627
  %v1629 = vand.u32 2147483647, %v1628
  %v1631 = vcvt.s32.f32 %v1624
  %v1632 = vmul.f32 %v1631, %v1629
  %v1633 = vxor.u32 %v1632, 2147483648
  %v1634 = vsel %vm1551, %v1633, %v1632
  %v1635 = vsub.s32 4, %v1611
  %v1636 = vsel %vm1551, %v1635, %v1611
  %v1637 = vsel %vm1550, %v89, %v1634
  %v1638 = vsel %vm1550, 0, %v1636
  %v1639 = vcosq.f32.pop %v1637
  %v1640 = vsinq.f32.pop %v1637
  %vm1641 = vweird.f32 %v89
  %v1642 = vand.u32 %v1638, 3
  %vm1643 = vcmp.lt.s32.totalorder %v1642, 2
  %vm1644 = vcmp.eq.s32.totalorder %v1642, 0
  %v1645 = vxor.u32 %v1640, 2147483648
  %v1646 = vsel %vm1644, %v1639, %v1645
  %vm1647 = vcmp.eq.s32.totalorder %v1642, 2
  %v1648 = vxor.u32 %v1639, 2147483648
  %v1649 = vsel %vm1647, %v1648, %v1640
  %v1650 = vsel %vm1643, %v1646, %v1649
  %v1651 = vsel %vm1641, nan, %v1650
  %v1652 = vand.u32 2147483647, %v90
  %vm1653 = vcmp.le.f32.partialorder %v1652, 0.7853982
  %vm1654 = vcmp.lt.s32.totalorder %v90, 0
  %v1655 = vand.u32 %v90, 2139095040
  %v1656 = vshrl.u32 %v1655, 23
  %v1657 = vsub.s32 %v1656, 127
  %v1658 = vand.u32 2147483647, %v90
  %v1659 = vand.u32 %v1658, 8388607
  %v1660 = vor.u32 %v1659, 8388608
  %v1661 = vsub.s32 0, %v1660
  %v1662 = vadd.s32 %v1657, 1
  %vm1663 = vcmp.gt.s32.totalorder %v1662, 0
  %v1664 = vsel %vm1663, %v1662, 0
  %v1665 = vshrl.u32 %v1664, 5
  %v1666 = vand.u32 %v1664, 31
  %v1667 = vsub.s32 32, %v1666
  %v1668 = vshrl.u32 683565275, %v1667
  %v1669 = vshll.u32 683565275, %v1666
  %v1670 = vshrl.u32 2475754826, %v1667
  %v1671 = vor.u32 %v1669, %v1670
  %v1672 = vshll.u32 2475754826, %v1666
  %v1673 = vshrl.u32 2131351028, %v1667
  %v1674 = vor.u32 %v1672, %v1673
  %v1675 = vshll.u32 2131351028, %v1666
  %v1676 = vshrl.u32 2102212464, %v1667
  %v1677 = vor.u32 %v1675, %v1676
  %v1678 = vshll.u32 2102212464, %v1666
  %v1679 = vshrl.u32 920167782, %v1667
  %v1680 = vor.u32 %v1678, %v1679
  %v1681 = vshll.u32 920167782, %v1666
  %v1682 = vshrl.u32 1326507024, %v1667
  %v1683 = vor.u32 %v1681, %v1682
  %vm1684 = vcmp.lt.s32.totalorder %v1665, 1
  %vm1685 = vcmp.lt.s32.totalorder %v1665, 2
  %vm1686 = vcmp.lt.s32.totalorder %v1665, 3
  %vm1687 = vcmp.lt.s32.totalorder %v1665, 4
  %v1688 = vsel %vm1684, %v1668, %v1671
  %v1689 = vsel %vm1687, %v1677, 2102212464
  %v1690 = vsel %vm1686, %v1674, %v1689
  %v1691 = vsel %vm1685, %v1688, %v1690
  %v1692 = vsel %vm1684, %v1671, %v1674
  %v1693 = vsel %vm1687, %v1680, 920167782
  %v1694 = vsel %vm1686, %v1677, %v1693
  %v1695 = vsel %vm1685, %v1692, %v1694
  %v1696 = vsel %vm1684, %v1674, %v1677
  %v1697 = vsel %vm1687, %v1683, 1326507024
  %v1698 = vsel %vm1686, %v1680, %v1697
  %v1699 = vsel %vm1685, %v1696, %v1698
  %v1700 = vshll.u32 %v1660, 8
  %v1701 = vmul.u32.u64.compose %v1700, %v1699
  %v1702 = vextract.low.u32 %v1701
  %v1703 = vextract.high.u32 %v1701
  %v1704 = vmul.u32.u64.compose %v1700, %v1695
  %v1705 = vextract.low.u32 %v1704
  %v1706 = vextract.high.u32 %v1704
  %v1707 = vmul.u32 %v1700, %v1691
  %v1708 = vadd.s32 %v1703, %v1705
  %vm1709 = vc.u32 %v1703, %v1705
  %v1710 = vadd.s32 %v1706, 1
  %v1711 = vsel %vm1709, %v1710, %v1706
  %v1712 = vadd.s32 %v1707, %v1711
  %v1713 = vadd.s32 %v1712, 536870912
  %v1714 = vshrl.u32 %v1713, 30
  %v1715 = vshll.u32 %v1714, 30
  %v1716 = vsub.s32 %v1712, %v1715
  %vm1717 = vcmp.lt.s32.totalorder %v1716, 0
  %v1718 = vsub.s32 0, %v1716
  %v1719 = vsel %vm1717, %v1718, %v1716
  %v1720 = vclz %v1719
  %v1721 = vsub.s32 %v1720, 2
  %vm1722 = vcmp.gt.s32.totalorder 0, %v1721
  %v1723 = vsel %vm1722, 0, %v1721
  %v1724 = vsub.s32 32, %v1723
  %v1725 = vshll.u32 %v1716, %v1723
  %v1726 = vshrl.u32 %v1708, %v1724
  %v1727 = vor.u32 %v1725, %v1726
  %v1728 = vsub.s32 4294967266, %v1723
  %v1729 = vadd.s32 %v1728, 127
  %v1730 = vshll.u32 %v1729, 23
  %v1731 = vor.u32 4788187, %v1730
  %v1732 = vand.u32 2147483647, %v1731
  %v1734 = vcvt.s32.f32 %v1727
  %v1735 = vmul.f32 %v1734, %v1732
  %v1736 = vxor.u32 %v1735, 2147483648
  %v1737 = vsel %vm1654, %v1736, %v1735
  %v1738 = vsub.s32 4, %v1714
  %v1739 = vsel %vm1654, %v1738, %v1714
  %v1740 = vsel %vm1653, %v90, %v1737
  %v1741 = vsel %vm1653, 0, %v1739
  %v1742 = vcosq.f32.pop %v1740
  %v1743 = vsinq.f32.pop %v1740
  %vm1744 = vweird.f32 %v90
  %v1745 = vand.u32 %v1741, 3
  %vm1746 = vcmp.lt.s32.totalorder %v1745, 2
  %vm1747 = vcmp.eq.s32.totalorder %v1745, 0
  %v1748 = vxor.u32 %v1743, 2147483648
  %v1749 = vsel %vm1747, %v1742, %v1748
  %vm1750 = vcmp.eq.s32.totalorder %v1745, 2
  %v1751 = vxor.u32 %v1742, 2147483648
  %v1752 = vsel %vm1750, %v1751, %v1743
  %v1753 = vsel %vm1746, %v1749, %v1752
  %v1754 = vsel %vm1744, nan, %v1753
  %v1755 = vand.u32 2147483647, %v91
  %vm1756 = vcmp.le.f32.partialorder %v1755, 0.7853982
  %vm1757 = vcmp.lt.s32.totalorder %v91, 0
  %v1758 = vand.u32 %v91, 2139095040
  %v1759 = vshrl.u32 %v1758, 23
  %v1760 = vsub.s32 %v1759, 127
  %v1761 = vand.u32 2147483647, %v91
  %v1762 = vand.u32 %v1761, 8388607
  %v1763 = vor.u32 %v1762, 8388608
  %v1764 = vsub.s32 0, %v1763
  %v1765 = vadd.s32 %v1760, 1
  %vm1766 = vcmp.gt.s32.totalorder %v1765, 0
  %v1767 = vsel %vm1766, %v1765, 0
  %v1768 = vshrl.u32 %v1767, 5
  %v1769 = vand.u32 %v1767, 31
  %v1770 = vsub.s32 32, %v1769
  %v1771 = vshrl.u32 683565275, %v1770
  %v1772 = vshll.u32 683565275, %v1769
  %v1773 = vshrl.u32 2475754826, %v1770
  %v1774 = vor.u32 %v1772, %v1773
  %v1775 = vshll.u32 2475754826, %v1769
  %v1776 = vshrl.u32 2131351028, %v1770
  %v1777 = vor.u32 %v1775, %v1776
  %v1778 = vshll.u32 2131351028, %v1769
  %v1779 = vshrl.u32 2102212464, %v1770
  %v1780 = vor.u32 %v1778, %v1779
  %v1781 = vshll.u32 2102212464, %v1769
  %v1782 = vshrl.u32 920167782, %v1770
  %v1783 = vor.u32 %v1781, %v1782
  %v1784 = vshll.u32 920167782, %v1769
  %v1785 = vshrl.u32 1326507024, %v1770
  %v1786 = vor.u32 %v1784, %v1785
  %vm1787 = vcmp.lt.s32.totalorder %v1768, 1
  %vm1788 = vcmp.lt.s32.totalorder %v1768, 2
  %vm1789 = vcmp.lt.s32.totalorder %v1768, 3
  %vm1790 = vcmp.lt.s32.totalorder %v1768, 4
  %v1791 = vsel %vm1787, %v1771, %v1774
  %v1792 = vsel %vm1790, %v1780, 2102212464
  %v1793 = vsel %vm1789, %v1777, %v1792
  %v1794 = vsel %vm1788, %v1791, %v1793
  %v1795 = vsel %vm1787, %v1774, %v1777
  %v1796 = vsel %vm1790, %v1783, 920167782
  %v1797 = vsel %vm1789, %v1780, %v1796
  %v1798 = vsel %vm1788, %v1795, %v1797
  %v1799 = vsel %vm1787, %v1777, %v1780
  %v1800 = vsel %vm1790, %v1786, 1326507024
  %v1801 = vsel %vm1789, %v1783, %v1800
  %v1802 = vsel %vm1788, %v1799, %v1801
  %v1803 = vshll.u32 %v1763, 8
  %v1804 = vmul.u32.u64.compose %v1803, %v1802
  %v1805 = vextract.low.u32 %v1804
  %v1806 = vextract.high.u32 %v1804
  %v1807 = vmul.u32.u64.compose %v1803, %v1798
  %v1808 = vextract.low.u32 %v1807
  %v1809 = vextract.high.u32 %v1807
  %v1810 = vmul.u32 %v1803, %v1794
  %v1811 = vadd.s32 %v1806, %v1808
  %vm1812 = vc.u32 %v1806, %v1808
  %v1813 = vadd.s32 %v1809, 1
  %v1814 = vsel %vm1812, %v1813, %v1809
  %v1815 = vadd.s32 %v1810, %v1814
  %v1816 = vadd.s32 %v1815, 536870912
  %v1817 = vshrl.u32 %v1816, 30
  %v1818 = vshll.u32 %v1817, 30
  %v1819 = vsub.s32 %v1815, %v1818
  %vm1820 = vcmp.lt.s32.totalorder %v1819, 0
  %v1821 = vsub.s32 0, %v1819
  %v1822 = vsel %vm1820, %v1821, %v1819
  %v1823 = vclz %v1822
  %v1824 = vsub.s32 %v1823, 2
  %vm1825 = vcmp.gt.s32.totalorder 0, %v1824
  %v1826 = vsel %vm1825, 0, %v1824
  %v1827 = vsub.s32 32, %v1826
  %v1828 = vshll.u32 %v1819, %v1826
  %v1829 = vshrl.u32 %v1811, %v1827
  %v1830 = vor.u32 %v1828, %v1829
  %v1831 = vsub.s32 4294967266, %v1826
  %v1832 = vadd.s32 %v1831, 127
  %v1833 = vshll.u32 %v1832, 23
  %v1834 = vor.u32 4788187, %v1833
  %v1835 = vand.u32 2147483647, %v1834
  %v1837 = vcvt.s32.f32 %v1830
  %v1838 = vmul.f32 %v1837, %v1835
  %v1839 = vxor.u32 %v1838, 2147483648
  %v1840 = vsel %vm1757, %v1839, %v1838
  %v1841 = vsub.s32 4, %v1817
  %v1842 = vsel %vm1757, %v1841, %v1817
  %v1843 = vsel %vm1756, %v91, %v1840
  %v1844 = vsel %vm1756, 0, %v1842
  %v1845 = vcosq.f32.pop %v1843
  %v1846 = vsinq.f32.pop %v1843
  %vm1847 = vweird.f32 %v91
  %v1848 = vand.u32 %v1844, 3
  %vm1849 = vcmp.lt.s32.totalorder %v1848, 2
  %vm1850 = vcmp.eq.s32.totalorder %v1848, 0
  %v1851 = vxor.u32 %v1846, 2147483648
  %v1852 = vsel %vm1850, %v1845, %v1851
  %vm1853 = vcmp.eq.s32.totalorder %v1848, 2
  %v1854 = vxor.u32 %v1845, 2147483648
  %v1855 = vsel %vm1853, %v1854, %v1846
  %v1856 = vsel %vm1849, %v1852, %v1855
  %v1857 = vsel %vm1847, nan, %v1856
  %v1858 = vand.u32 2147483647, %v92
  %vm1859 = vcmp.le.f32.partialorder %v1858, 0.7853982
  %vm1860 = vcmp.lt.s32.totalorder %v92, 0
  %v1861 = vand.u32 %v92, 2139095040
  %v1862 = vshrl.u32 %v1861, 23
  %v1863 = vsub.s32 %v1862, 127
  %v1864 = vand.u32 2147483647, %v92
  %v1865 = vand.u32 %v1864, 8388607
  %v1866 = vor.u32 %v1865, 8388608
  %v1867 = vsub.s32 0, %v1866
  %v1868 = vadd.s32 %v1863, 1
  %vm1869 = vcmp.gt.s32.totalorder %v1868, 0
  %v1870 = vsel %vm1869, %v1868, 0
  %v1871 = vshrl.u32 %v1870, 5
  %v1872 = vand.u32 %v1870, 31
  %v1873 = vsub.s32 32, %v1872
  %v1874 = vshrl.u32 683565275, %v1873
  %v1875 = vshll.u32 683565275, %v1872
  %v1876 = vshrl.u32 2475754826, %v1873
  %v1877 = vor.u32 %v1875, %v1876
  %v1878 = vshll.u32 2475754826, %v1872
  %v1879 = vshrl.u32 2131351028, %v1873
  %v1880 = vor.u32 %v1878, %v1879
  %v1881 = vshll.u32 2131351028, %v1872
  %v1882 = vshrl.u32 2102212464, %v1873
  %v1883 = vor.u32 %v1881, %v1882
  %v1884 = vshll.u32 2102212464, %v1872
  %v1885 = vshrl.u32 920167782, %v1873
  %v1886 = vor.u32 %v1884, %v1885
  %v1887 = vshll.u32 920167782, %v1872
  %v1888 = vshrl.u32 1326507024, %v1873
  %v1889 = vor.u32 %v1887, %v1888
  %vm1890 = vcmp.lt.s32.totalorder %v1871, 1
  %vm1891 = vcmp.lt.s32.totalorder %v1871, 2
  %vm1892 = vcmp.lt.s32.totalorder %v1871, 3
  %vm1893 = vcmp.lt.s32.totalorder %v1871, 4
  %v1894 = vsel %vm1890, %v1874, %v1877
  %v1895 = vsel %vm1893, %v1883, 2102212464
  %v1896 = vsel %vm1892, %v1880, %v1895
  %v1897 = vsel %vm1891, %v1894, %v1896
  %v1898 = vsel %vm1890, %v1877, %v1880
  %v1899 = vsel %vm1893, %v1886, 920167782
  %v1900 = vsel %vm1892, %v1883, %v1899
  %v1901 = vsel %vm1891, %v1898, %v1900
  %v1902 = vsel %vm1890, %v1880, %v1883
  %v1903 = vsel %vm1893, %v1889, 1326507024
  %v1904 = vsel %vm1892, %v1886, %v1903
  %v1905 = vsel %vm1891, %v1902, %v1904
  %v1906 = vshll.u32 %v1866, 8
  %v1907 = vmul.u32.u64.compose %v1906, %v1905
  %v1908 = vextract.low.u32 %v1907
  %v1909 = vextract.high.u32 %v1907
  %v1910 = vmul.u32.u64.compose %v1906, %v1901
  %v1911 = vextract.low.u32 %v1910
  %v1912 = vextract.high.u32 %v1910
  %v1913 = vmul.u32 %v1906, %v1897
  %v1914 = vadd.s32 %v1909, %v1911
  %vm1915 = vc.u32 %v1909, %v1911
  %v1916 = vadd.s32 %v1912, 1
  %v1917 = vsel %vm1915, %v1916, %v1912
  %v1918 = vadd.s32 %v1913, %v1917
  %v1919 = vadd.s32 %v1918, 536870912
  %v1920 = vshrl.u32 %v1919, 30
  %v1921 = vshll.u32 %v1920, 30
  %v1922 = vsub.s32 %v1918, %v1921
  %vm1923 = vcmp.lt.s32.totalorder %v1922, 0
  %v1924 = vsub.s32 0, %v1922
  %v1925 = vsel %vm1923, %v1924, %v1922
  %v1926 = vclz %v1925
  %v1927 = vsub.s32 %v1926, 2
  %vm1928 = vcmp.gt.s32.totalorder 0, %v1927
  %v1929 = vsel %vm1928, 0, %v1927
  %v1930 = vsub.s32 32, %v1929
  %v1931 = vshll.u32 %v1922, %v1929
  %v1932 = vshrl.u32 %v1914, %v1930
  %v1933 = vor.u32 %v1931, %v1932
  %v1934 = vsub.s32 4294967266, %v1929
  %v1935 = vadd.s32 %v1934, 127
  %v1936 = vshll.u32 %v1935, 23
  %v1937 = vor.u32 4788187, %v1936
  %v1938 = vand.u32 2147483647, %v1937
  %v1940 = vcvt.s32.f32 %v1933
  %v1941 = vmul.f32 %v1940, %v1938
  %v1942 = vxor.u32 %v1941, 2147483648
  %v1943 = vsel %vm1860, %v1942, %v1941
  %v1944 = vsub.s32 4, %v1920
  %v1945 = vsel %vm1860, %v1944, %v1920
  %v1946 = vsel %vm1859, %v92, %v1943
  %v1947 = vsel %vm1859, 0, %v1945
  %v1948 = vcosq.f32.pop %v1946
  %v1949 = vsinq.f32.pop %v1946
  %vm1950 = vweird.f32 %v92
  %v1951 = vand.u32 %v1947, 3
  %vm1952 = vcmp.lt.s32.totalorder %v1951, 2
  %vm1953 = vcmp.eq.s32.totalorder %v1951, 0
  %v1954 = vxor.u32 %v1949, 2147483648
  %v1955 = vsel %vm1953, %v1948, %v1954
  %vm1956 = vcmp.eq.s32.totalorder %v1951, 2
  %v1957 = vxor.u32 %v1948, 2147483648
  %v1958 = vsel %vm1956, %v1957, %v1949
  %v1959 = vsel %vm1952, %v1955, %v1958
  %v1960 = vsel %vm1950, nan, %v1959
  %v1961 = vand.u32 2147483647, %v93
  %vm1962 = vcmp.le.f32.partialorder %v1961, 0.7853982
  %vm1963 = vcmp.lt.s32.totalorder %v93, 0
  %v1964 = vand.u32 %v93, 2139095040
  %v1965 = vshrl.u32 %v1964, 23
  %v1966 = vsub.s32 %v1965, 127
  %v1967 = vand.u32 2147483647, %v93
  %v1968 = vand.u32 %v1967, 8388607
  %v1969 = vor.u32 %v1968, 8388608
  %v1970 = vsub.s32 0, %v1969
  %v1971 = vadd.s32 %v1966, 1
  %vm1972 = vcmp.gt.s32.totalorder %v1971, 0
  %v1973 = vsel %vm1972, %v1971, 0
  %v1974 = vshrl.u32 %v1973, 5
  %v1975 = vand.u32 %v1973, 31
  %v1976 = vsub.s32 32, %v1975
  %v1977 = vshrl.u32 683565275, %v1976
  %v1978 = vshll.u32 683565275, %v1975
  %v1979 = vshrl.u32 2475754826, %v1976
  %v1980 = vor.u32 %v1978, %v1979
  %v1981 = vshll.u32 2475754826, %v1975
  %v1982 = vshrl.u32 2131351028, %v1976
  %v1983 = vor.u32 %v1981, %v1982
  %v1984 = vshll.u32 2131351028, %v1975
  %v1985 = vshrl.u32 2102212464, %v1976
  %v1986 = vor.u32 %v1984, %v1985
  %v1987 = vshll.u32 2102212464, %v1975
  %v1988 = vshrl.u32 920167782, %v1976
  %v1989 = vor.u32 %v1987, %v1988
  %v1990 = vshll.u32 920167782, %v1975
  %v1991 = vshrl.u32 1326507024, %v1976
  %v1992 = vor.u32 %v1990, %v1991
  %vm1993 = vcmp.lt.s32.totalorder %v1974, 1
  %vm1994 = vcmp.lt.s32.totalorder %v1974, 2
  %vm1995 = vcmp.lt.s32.totalorder %v1974, 3
  %vm1996 = vcmp.lt.s32.totalorder %v1974, 4
  %v1997 = vsel %vm1993, %v1977, %v1980
  %v1998 = vsel %vm1996, %v1986, 2102212464
  %v1999 = vsel %vm1995, %v1983, %v1998
  %v2000 = vsel %vm1994, %v1997, %v1999
  %v2001 = vsel %vm1993, %v1980, %v1983
  %v2002 = vsel %vm1996, %v1989, 920167782
  %v2003 = vsel %vm1995, %v1986, %v2002
  %v2004 = vsel %vm1994, %v2001, %v2003
  %v2005 = vsel %vm1993, %v1983, %v1986
  %v2006 = vsel %vm1996, %v1992, 1326507024
  %v2007 = vsel %vm1995, %v1989, %v2006
  %v2008 = vsel %vm1994, %v2005, %v2007
  %v2009 = vshll.u32 %v1969, 8
  %v2010 = vmul.u32.u64.compose %v2009, %v2008
  %v2011 = vextract.low.u32 %v2010
  %v2012 = vextract.high.u32 %v2010
  %v2013 = vmul.u32.u64.compose %v2009, %v2004
  %v2014 = vextract.low.u32 %v2013
  %v2015 = vextract.high.u32 %v2013
  %v2016 = vmul.u32 %v2009, %v2000
  %v2017 = vadd.s32 %v2012, %v2014
  %vm2018 = vc.u32 %v2012, %v2014
  %v2019 = vadd.s32 %v2015, 1
  %v2020 = vsel %vm2018, %v2019, %v2015
  %v2021 = vadd.s32 %v2016, %v2020
  %v2022 = vadd.s32 %v2021, 536870912
  %v2023 = vshrl.u32 %v2022, 30
  %v2024 = vshll.u32 %v2023, 30
  %v2025 = vsub.s32 %v2021, %v2024
  %vm2026 = vcmp.lt.s32.totalorder %v2025, 0
  %v2027 = vsub.s32 0, %v2025
  %v2028 = vsel %vm2026, %v2027, %v2025
  %v2029 = vclz %v2028
  %v2030 = vsub.s32 %v2029, 2
  %vm2031 = vcmp.gt.s32.totalorder 0, %v2030
  %v2032 = vsel %vm2031, 0, %v2030
  %v2033 = vsub.s32 32, %v2032
  %v2034 = vshll.u32 %v2025, %v2032
  %v2035 = vshrl.u32 %v2017, %v2033
  %v2036 = vor.u32 %v2034, %v2035
  %v2037 = vsub.s32 4294967266, %v2032
  %v2038 = vadd.s32 %v2037, 127
  %v2039 = vshll.u32 %v2038, 23
  %v2040 = vor.u32 4788187, %v2039
  %v2041 = vand.u32 2147483647, %v2040
  %v2043 = vcvt.s32.f32 %v2036
  %v2044 = vmul.f32 %v2043, %v2041
  %v2045 = vxor.u32 %v2044, 2147483648
  %v2046 = vsel %vm1963, %v2045, %v2044
  %v2047 = vsub.s32 4, %v2023
  %v2048 = vsel %vm1963, %v2047, %v2023
  %v2049 = vsel %vm1962, %v93, %v2046
  %v2050 = vsel %vm1962, 0, %v2048
  %v2051 = vcosq.f32.pop %v2049
  %v2052 = vsinq.f32.pop %v2049
  %vm2053 = vweird.f32 %v93
  %v2054 = vand.u32 %v2050, 3
  %vm2055 = vcmp.lt.s32.totalorder %v2054, 2
  %vm2056 = vcmp.eq.s32.totalorder %v2054, 0
  %v2057 = vxor.u32 %v2052, 2147483648
  %v2058 = vsel %vm2056, %v2051, %v2057
  %vm2059 = vcmp.eq.s32.totalorder %v2054, 2
  %v2060 = vxor.u32 %v2051, 2147483648
  %v2061 = vsel %vm2059, %v2060, %v2052
  %v2062 = vsel %vm2055, %v2058, %v2061
  %v2063 = vsel %vm2053, nan, %v2062
  %v2064 = vand.u32 2147483647, %v94
  %vm2065 = vcmp.le.f32.partialorder %v2064, 0.7853982
  %vm2066 = vcmp.lt.s32.totalorder %v94, 0
  %v2067 = vand.u32 %v94, 2139095040
  %v2068 = vshrl.u32 %v2067, 23
  %v2069 = vsub.s32 %v2068, 127
  %v2070 = vand.u32 2147483647, %v94
  %v2071 = vand.u32 %v2070, 8388607
  %v2072 = vor.u32 %v2071, 8388608
  %v2073 = vsub.s32 0, %v2072
  %v2074 = vadd.s32 %v2069, 1
  %vm2075 = vcmp.gt.s32.totalorder %v2074, 0
  %v2076 = vsel %vm2075, %v2074, 0
  %v2077 = vshrl.u32 %v2076, 5
  %v2078 = vand.u32 %v2076, 31
  %v2079 = vsub.s32 32, %v2078
  %v2080 = vshrl.u32 683565275, %v2079
  %v2081 = vshll.u32 683565275, %v2078
  %v2082 = vshrl.u32 2475754826, %v2079
  %v2083 = vor.u32 %v2081, %v2082
  %v2084 = vshll.u32 2475754826, %v2078
  %v2085 = vshrl.u32 2131351028, %v2079
  %v2086 = vor.u32 %v2084, %v2085
  %v2087 = vshll.u32 2131351028, %v2078
  %v2088 = vshrl.u32 2102212464, %v2079
  %v2089 = vor.u32 %v2087, %v2088
  %v2090 = vshll.u32 2102212464, %v2078
  %v2091 = vshrl.u32 920167782, %v2079
  %v2092 = vor.u32 %v2090, %v2091
  %v2093 = vshll.u32 920167782, %v2078
  %v2094 = vshrl.u32 1326507024, %v2079
  %v2095 = vor.u32 %v2093, %v2094
  %vm2096 = vcmp.lt.s32.totalorder %v2077, 1
  %vm2097 = vcmp.lt.s32.totalorder %v2077, 2
  %vm2098 = vcmp.lt.s32.totalorder %v2077, 3
  %vm2099 = vcmp.lt.s32.totalorder %v2077, 4
  %v2100 = vsel %vm2096, %v2080, %v2083
  %v2101 = vsel %vm2099, %v2089, 2102212464
  %v2102 = vsel %vm2098, %v2086, %v2101
  %v2103 = vsel %vm2097, %v2100, %v2102
  %v2104 = vsel %vm2096, %v2083, %v2086
  %v2105 = vsel %vm2099, %v2092, 920167782
  %v2106 = vsel %vm2098, %v2089, %v2105
  %v2107 = vsel %vm2097, %v2104, %v2106
  %v2108 = vsel %vm2096, %v2086, %v2089
  %v2109 = vsel %vm2099, %v2095, 1326507024
  %v2110 = vsel %vm2098, %v2092, %v2109
  %v2111 = vsel %vm2097, %v2108, %v2110
  %v2112 = vshll.u32 %v2072, 8
  %v2113 = vmul.u32.u64.compose %v2112, %v2111
  %v2114 = vextract.low.u32 %v2113
  %v2115 = vextract.high.u32 %v2113
  %v2116 = vmul.u32.u64.compose %v2112, %v2107
  %v2117 = vextract.low.u32 %v2116
  %v2118 = vextract.high.u32 %v2116
  %v2119 = vmul.u32 %v2112, %v2103
  %v2120 = vadd.s32 %v2115, %v2117
  %vm2121 = vc.u32 %v2115, %v2117
  %v2122 = vadd.s32 %v2118, 1
  %v2123 = vsel %vm2121, %v2122, %v2118
  %v2124 = vadd.s32 %v2119, %v2123
  %v2125 = vadd.s32 %v2124, 536870912
  %v2126 = vshrl.u32 %v2125, 30
  %v2127 = vshll.u32 %v2126, 30
  %v2128 = vsub.s32 %v2124, %v2127
  %vm2129 = vcmp.lt.s32.totalorder %v2128, 0
  %v2130 = vsub.s32 0, %v2128
  %v2131 = vsel %vm2129, %v2130, %v2128
  %v2132 = vclz %v2131
  %v2133 = vsub.s32 %v2132, 2
  %vm2134 = vcmp.gt.s32.totalorder 0, %v2133
  %v2135 = vsel %vm2134, 0, %v2133
  %v2136 = vsub.s32 32, %v2135
  %v2137 = vshll.u32 %v2128, %v2135
  %v2138 = vshrl.u32 %v2120, %v2136
  %v2139 = vor.u32 %v2137, %v2138
  %v2140 = vsub.s32 4294967266, %v2135
  %v2141 = vadd.s32 %v2140, 127
  %v2142 = vshll.u32 %v2141, 23
  %v2143 = vor.u32 4788187, %v2142
  %v2144 = vand.u32 2147483647, %v2143
  %v2146 = vcvt.s32.f32 %v2139
  %v2147 = vmul.f32 %v2146, %v2144
  %v2148 = vxor.u32 %v2147, 2147483648
  %v2149 = vsel %vm2066, %v2148, %v2147
  %v2150 = vsub.s32 4, %v2126
  %v2151 = vsel %vm2066, %v2150, %v2126
  %v2152 = vsel %vm2065, %v94, %v2149
  %v2153 = vsel %vm2065, 0, %v2151
  %v2154 = vcosq.f32.pop %v2152
  %v2155 = vsinq.f32.pop %v2152
  %vm2156 = vweird.f32 %v94
  %v2157 = vand.u32 %v2153, 3
  %vm2158 = vcmp.lt.s32.totalorder %v2157, 2
  %vm2159 = vcmp.eq.s32.totalorder %v2157, 0
  %v2160 = vxor.u32 %v2155, 2147483648
  %v2161 = vsel %vm2159, %v2154, %v2160
  %vm2162 = vcmp.eq.s32.totalorder %v2157, 2
  %v2163 = vxor.u32 %v2154, 2147483648
  %v2164 = vsel %vm2162, %v2163, %v2155
  %v2165 = vsel %vm2158, %v2161, %v2164
  %v2166 = vsel %vm2156, nan, %v2165
  %v2167 = vand.u32 2147483647, %v95
  %vm2168 = vcmp.le.f32.partialorder %v2167, 0.7853982
  %vm2169 = vcmp.lt.s32.totalorder %v95, 0
  %v2170 = vand.u32 %v95, 2139095040
  %v2171 = vshrl.u32 %v2170, 23
  %v2172 = vsub.s32 %v2171, 127
  %v2173 = vand.u32 2147483647, %v95
  %v2174 = vand.u32 %v2173, 8388607
  %v2175 = vor.u32 %v2174, 8388608
  %v2176 = vsub.s32 0, %v2175
  %v2177 = vadd.s32 %v2172, 1
  %vm2178 = vcmp.gt.s32.totalorder %v2177, 0
  %v2179 = vsel %vm2178, %v2177, 0
  %v2180 = vshrl.u32 %v2179, 5
  %v2181 = vand.u32 %v2179, 31
  %v2182 = vsub.s32 32, %v2181
  %v2183 = vshrl.u32 683565275, %v2182
  %v2184 = vshll.u32 683565275, %v2181
  %v2185 = vshrl.u32 2475754826, %v2182
  %v2186 = vor.u32 %v2184, %v2185
  %v2187 = vshll.u32 2475754826, %v2181
  %v2188 = vshrl.u32 2131351028, %v2182
  %v2189 = vor.u32 %v2187, %v2188
  %v2190 = vshll.u32 2131351028, %v2181
  %v2191 = vshrl.u32 2102212464, %v2182
  %v2192 = vor.u32 %v2190, %v2191
  %v2193 = vshll.u32 2102212464, %v2181
  %v2194 = vshrl.u32 920167782, %v2182
  %v2195 = vor.u32 %v2193, %v2194
  %v2196 = vshll.u32 920167782, %v2181
  %v2197 = vshrl.u32 1326507024, %v2182
  %v2198 = vor.u32 %v2196, %v2197
  %vm2199 = vcmp.lt.s32.totalorder %v2180, 1
  %vm2200 = vcmp.lt.s32.totalorder %v2180, 2
  %vm2201 = vcmp.lt.s32.totalorder %v2180, 3
  %vm2202 = vcmp.lt.s32.totalorder %v2180, 4
  %v2203 = vsel %vm2199, %v2183, %v2186
  %v2204 = vsel %vm2202, %v2192, 2102212464
  %v2205 = vsel %vm2201, %v2189, %v2204
  %v2206 = vsel %vm2200, %v2203, %v2205
  %v2207 = vsel %vm2199, %v2186, %v2189
  %v2208 = vsel %vm2202, %v2195, 920167782
  %v2209 = vsel %vm2201, %v2192, %v2208
  %v2210 = vsel %vm2200, %v2207, %v2209
  %v2211 = vsel %vm2199, %v2189, %v2192
  %v2212 = vsel %vm2202, %v2198, 1326507024
  %v2213 = vsel %vm2201, %v2195, %v2212
  %v2214 = vsel %vm2200, %v2211, %v2213
  %v2215 = vshll.u32 %v2175, 8
  %v2216 = vmul.u32.u64.compose %v2215, %v2214
  %v2217 = vextract.low.u32 %v2216
  %v2218 = vextract.high.u32 %v2216
  %v2219 = vmul.u32.u64.compose %v2215, %v2210
  %v2220 = vextract.low.u32 %v2219
  %v2221 = vextract.high.u32 %v2219
  %v2222 = vmul.u32 %v2215, %v2206
  %v2223 = vadd.s32 %v2218, %v2220
  %vm2224 = vc.u32 %v2218, %v2220
  %v2225 = vadd.s32 %v2221, 1
  %v2226 = vsel %vm2224, %v2225, %v2221
  %v2227 = vadd.s32 %v2222, %v2226
  %v2228 = vadd.s32 %v2227, 536870912
  %v2229 = vshrl.u32 %v2228, 30
  %v2230 = vshll.u32 %v2229, 30
  %v2231 = vsub.s32 %v2227, %v2230
  %vm2232 = vcmp.lt.s32.totalorder %v2231, 0
  %v2233 = vsub.s32 0, %v2231
  %v2234 = vsel %vm2232, %v2233, %v2231
  %v2235 = vclz %v2234
  %v2236 = vsub.s32 %v2235, 2
  %vm2237 = vcmp.gt.s32.totalorder 0, %v2236
  %v2238 = vsel %vm2237, 0, %v2236
  %v2239 = vsub.s32 32, %v2238
  %v2240 = vshll.u32 %v2231, %v2238
  %v2241 = vshrl.u32 %v2223, %v2239
  %v2242 = vor.u32 %v2240, %v2241
  %v2243 = vsub.s32 4294967266, %v2238
  %v2244 = vadd.s32 %v2243, 127
  %v2245 = vshll.u32 %v2244, 23
  %v2246 = vor.u32 4788187, %v2245
  %v2247 = vand.u32 2147483647, %v2246
  %v2249 = vcvt.s32.f32 %v2242
  %v2250 = vmul.f32 %v2249, %v2247
  %v2251 = vxor.u32 %v2250, 2147483648
  %v2252 = vsel %vm2169, %v2251, %v2250
  %v2253 = vsub.s32 4, %v2229
  %v2254 = vsel %vm2169, %v2253, %v2229
  %v2255 = vsel %vm2168, %v95, %v2252
  %v2256 = vsel %vm2168, 0, %v2254
  %v2257 = vcosq.f32.pop %v2255
  %v2258 = vsinq.f32.pop %v2255
  %vm2259 = vweird.f32 %v95
  %v2260 = vand.u32 %v2256, 3
  %vm2261 = vcmp.lt.s32.totalorder %v2260, 2
  %vm2262 = vcmp.eq.s32.totalorder %v2260, 0
  %v2263 = vxor.u32 %v2258, 2147483648
  %v2264 = vsel %vm2262, %v2257, %v2263
  %vm2265 = vcmp.eq.s32.totalorder %v2260, 2
  %v2266 = vxor.u32 %v2257, 2147483648
  %v2267 = vsel %vm2265, %v2266, %v2258
  %v2268 = vsel %vm2261, %v2264, %v2267
  %v2269 = vsel %vm2259, nan, %v2268
  %v2270 = vand.u32 2147483647, %v96
  %vm2271 = vcmp.le.f32.partialorder %v2270, 0.7853982
  %vm2272 = vcmp.lt.s32.totalorder %v96, 0
  %v2273 = vand.u32 %v96, 2139095040
  %v2274 = vshrl.u32 %v2273, 23
  %v2275 = vsub.s32 %v2274, 127
  %v2276 = vand.u32 2147483647, %v96
  %v2277 = vand.u32 %v2276, 8388607
  %v2278 = vor.u32 %v2277, 8388608
  %v2279 = vsub.s32 0, %v2278
  %v2280 = vadd.s32 %v2275, 1
  %vm2281 = vcmp.gt.s32.totalorder %v2280, 0
  %v2282 = vsel %vm2281, %v2280, 0
  %v2283 = vshrl.u32 %v2282, 5
  %v2284 = vand.u32 %v2282, 31
  %v2285 = vsub.s32 32, %v2284
  %v2286 = vshrl.u32 683565275, %v2285
  %v2287 = vshll.u32 683565275, %v2284
  %v2288 = vshrl.u32 2475754826, %v2285
  %v2289 = vor.u32 %v2287, %v2288
  %v2290 = vshll.u32 2475754826, %v2284
  %v2291 = vshrl.u32 2131351028, %v2285
  %v2292 = vor.u32 %v2290, %v2291
  %v2293 = vshll.u32 2131351028, %v2284
  %v2294 = vshrl.u32 2102212464, %v2285
  %v2295 = vor.u32 %v2293, %v2294
  %v2296 = vshll.u32 2102212464, %v2284
  %v2297 = vshrl.u32 920167782, %v2285
  %v2298 = vor.u32 %v2296, %v2297
  %v2299 = vshll.u32 920167782, %v2284
  %v2300 = vshrl.u32 1326507024, %v2285
  %v2301 = vor.u32 %v2299, %v2300
  %vm2302 = vcmp.lt.s32.totalorder %v2283, 1
  %vm2303 = vcmp.lt.s32.totalorder %v2283, 2
  %vm2304 = vcmp.lt.s32.totalorder %v2283, 3
  %vm2305 = vcmp.lt.s32.totalorder %v2283, 4
  %v2306 = vsel %vm2302, %v2286, %v2289
  %v2307 = vsel %vm2305, %v2295, 2102212464
  %v2308 = vsel %vm2304, %v2292, %v2307
  %v2309 = vsel %vm2303, %v2306, %v2308
  %v2310 = vsel %vm2302, %v2289, %v2292
  %v2311 = vsel %vm2305, %v2298, 920167782
  %v2312 = vsel %vm2304, %v2295, %v2311
  %v2313 = vsel %vm2303, %v2310, %v2312
  %v2314 = vsel %vm2302, %v2292, %v2295
  %v2315 = vsel %vm2305, %v2301, 1326507024
  %v2316 = vsel %vm2304, %v2298, %v2315
  %v2317 = vsel %vm2303, %v2314, %v2316
  %v2318 = vshll.u32 %v2278, 8
  %v2319 = vmul.u32.u64.compose %v2318, %v2317
  %v2320 = vextract.low.u32 %v2319
  %v2321 = vextract.high.u32 %v2319
  %v2322 = vmul.u32.u64.compose %v2318, %v2313
  %v2323 = vextract.low.u32 %v2322
  %v2324 = vextract.high.u32 %v2322
  %v2325 = vmul.u32 %v2318, %v2309
  %v2326 = vadd.s32 %v2321, %v2323
  %vm2327 = vc.u32 %v2321, %v2323
  %v2328 = vadd.s32 %v2324, 1
  %v2329 = vsel %vm2327, %v2328, %v2324
  %v2330 = vadd.s32 %v2325, %v2329
  %v2331 = vadd.s32 %v2330, 536870912
  %v2332 = vshrl.u32 %v2331, 30
  %v2333 = vshll.u32 %v2332, 30
  %v2334 = vsub.s32 %v2330, %v2333
  %vm2335 = vcmp.lt.s32.totalorder %v2334, 0
  %v2336 = vsub.s32 0, %v2334
  %v2337 = vsel %vm2335, %v2336, %v2334
  %v2338 = vclz %v2337
  %v2339 = vsub.s32 %v2338, 2
  %vm2340 = vcmp.gt.s32.totalorder 0, %v2339
  %v2341 = vsel %vm2340, 0, %v2339
  %v2342 = vsub.s32 32, %v2341
  %v2343 = vshll.u32 %v2334, %v2341
  %v2344 = vshrl.u32 %v2326, %v2342
  %v2345 = vor.u32 %v2343, %v2344
  %v2346 = vsub.s32 4294967266, %v2341
  %v2347 = vadd.s32 %v2346, 127
  %v2348 = vshll.u32 %v2347, 23
  %v2349 = vor.u32 4788187, %v2348
  %v2350 = vand.u32 2147483647, %v2349
  %v2352 = vcvt.s32.f32 %v2345
  %v2353 = vmul.f32 %v2352, %v2350
  %v2354 = vxor.u32 %v2353, 2147483648
  %v2355 = vsel %vm2272, %v2354, %v2353
  %v2356 = vsub.s32 4, %v2332
  %v2357 = vsel %vm2272, %v2356, %v2332
  %v2358 = vsel %vm2271, %v96, %v2355
  %v2359 = vsel %vm2271, 0, %v2357
  %v2360 = vcosq.f32.pop %v2358
  %v2361 = vsinq.f32.pop %v2358
  %vm2362 = vweird.f32 %v96
  %v2363 = vand.u32 %v2359, 3
  %vm2364 = vcmp.lt.s32.totalorder %v2363, 2
  %vm2365 = vcmp.eq.s32.totalorder %v2363, 0
  %v2366 = vxor.u32 %v2361, 2147483648
  %v2367 = vsel %vm2365, %v2360, %v2366
  %vm2368 = vcmp.eq.s32.totalorder %v2363, 2
  %v2369 = vxor.u32 %v2360, 2147483648
  %v2370 = vsel %vm2368, %v2369, %v2361
  %v2371 = vsel %vm2364, %v2367, %v2370
  %v2372 = vsel %vm2362, nan, %v2371
  %v2373 = vand.u32 2147483647, %v97
  %vm2374 = vcmp.le.f32.partialorder %v2373, 0.7853982
  %vm2375 = vcmp.lt.s32.totalorder %v97, 0
  %v2376 = vand.u32 %v97, 2139095040
  %v2377 = vshrl.u32 %v2376, 23
  %v2378 = vsub.s32 %v2377, 127
  %v2379 = vand.u32 2147483647, %v97
  %v2380 = vand.u32 %v2379, 8388607
  %v2381 = vor.u32 %v2380, 8388608
  %v2382 = vsub.s32 0, %v2381
  %v2383 = vadd.s32 %v2378, 1
  %vm2384 = vcmp.gt.s32.totalorder %v2383, 0
  %v2385 = vsel %vm2384, %v2383, 0
  %v2386 = vshrl.u32 %v2385, 5
  %v2387 = vand.u32 %v2385, 31
  %v2388 = vsub.s32 32, %v2387
  %v2389 = vshrl.u32 683565275, %v2388
  %v2390 = vshll.u32 683565275, %v2387
  %v2391 = vshrl.u32 2475754826, %v2388
  %v2392 = vor.u32 %v2390, %v2391
  %v2393 = vshll.u32 2475754826, %v2387
  %v2394 = vshrl.u32 2131351028, %v2388
  %v2395 = vor.u32 %v2393, %v2394
  %v2396 = vshll.u32 2131351028, %v2387
  %v2397 = vshrl.u32 2102212464, %v2388
  %v2398 = vor.u32 %v2396, %v2397
  %v2399 = vshll.u32 2102212464, %v2387
  %v2400 = vshrl.u32 920167782, %v2388
  %v2401 = vor.u32 %v2399, %v2400
  %v2402 = vshll.u32 920167782, %v2387
  %v2403 = vshrl.u32 1326507024, %v2388
  %v2404 = vor.u32 %v2402, %v2403
  %vm2405 = vcmp.lt.s32.totalorder %v2386, 1
  %vm2406 = vcmp.lt.s32.totalorder %v2386, 2
  %vm2407 = vcmp.lt.s32.totalorder %v2386, 3
  %vm2408 = vcmp.lt.s32.totalorder %v2386, 4
  %v2409 = vsel %vm2405, %v2389, %v2392
  %v2410 = vsel %vm2408, %v2398, 2102212464
  %v2411 = vsel %vm2407, %v2395, %v2410
  %v2412 = vsel %vm2406, %v2409, %v2411
  %v2413 = vsel %vm2405, %v2392, %v2395
  %v2414 = vsel %vm2408, %v2401, 920167782
  %v2415 = vsel %vm2407, %v2398, %v2414
  %v2416 = vsel %vm2406, %v2413, %v2415
  %v2417 = vsel %vm2405, %v2395, %v2398
  %v2418 = vsel %vm2408, %v2404, 1326507024
  %v2419 = vsel %vm2407, %v2401, %v2418
  %v2420 = vsel %vm2406, %v2417, %v2419
  %v2421 = vshll.u32 %v2381, 8
  %v2422 = vmul.u32.u64.compose %v2421, %v2420
  %v2423 = vextract.low.u32 %v2422
  %v2424 = vextract.high.u32 %v2422
  %v2425 = vmul.u32.u64.compose %v2421, %v2416
  %v2426 = vextract.low.u32 %v2425
  %v2427 = vextract.high.u32 %v2425
  %v2428 = vmul.u32 %v2421, %v2412
  %v2429 = vadd.s32 %v2424, %v2426
  %vm2430 = vc.u32 %v2424, %v2426
  %v2431 = vadd.s32 %v2427, 1
  %v2432 = vsel %vm2430, %v2431, %v2427
  %v2433 = vadd.s32 %v2428, %v2432
  %v2434 = vadd.s32 %v2433, 536870912
  %v2435 = vshrl.u32 %v2434, 30
  %v2436 = vshll.u32 %v2435, 30
  %v2437 = vsub.s32 %v2433, %v2436
  %vm2438 = vcmp.lt.s32.totalorder %v2437, 0
  %v2439 = vsub.s32 0, %v2437
  %v2440 = vsel %vm2438, %v2439, %v2437
  %v2441 = vclz %v2440
  %v2442 = vsub.s32 %v2441, 2
  %vm2443 = vcmp.gt.s32.totalorder 0, %v2442
  %v2444 = vsel %vm2443, 0, %v2442
  %v2445 = vsub.s32 32, %v2444
  %v2446 = vshll.u32 %v2437, %v2444
  %v2447 = vshrl.u32 %v2429, %v2445
  %v2448 = vor.u32 %v2446, %v2447
  %v2449 = vsub.s32 4294967266, %v2444
  %v2450 = vadd.s32 %v2449, 127
  %v2451 = vshll.u32 %v2450, 23
  %v2452 = vor.u32 4788187, %v2451
  %v2453 = vand.u32 2147483647, %v2452
  %v2455 = vcvt.s32.f32 %v2448
  %v2456 = vmul.f32 %v2455, %v2453
  %v2457 = vxor.u32 %v2456, 2147483648
  %v2458 = vsel %vm2375, %v2457, %v2456
  %v2459 = vsub.s32 4, %v2435
  %v2460 = vsel %vm2375, %v2459, %v2435
  %v2461 = vsel %vm2374, %v97, %v2458
  %v2462 = vsel %vm2374, 0, %v2460
  %v2463 = vcosq.f32.pop %v2461
  %v2464 = vsinq.f32.pop %v2461
  %vm2465 = vweird.f32 %v97
  %v2466 = vand.u32 %v2462, 3
  %vm2467 = vcmp.lt.s32.totalorder %v2466, 2
  %vm2468 = vcmp.eq.s32.totalorder %v2466, 0
  %v2469 = vxor.u32 %v2464, 2147483648
  %v2470 = vsel %vm2468, %v2463, %v2469
  %vm2471 = vcmp.eq.s32.totalorder %v2466, 2
  %v2472 = vxor.u32 %v2463, 2147483648
  %v2473 = vsel %vm2471, %v2472, %v2464
  %v2474 = vsel %vm2467, %v2470, %v2473
  %v2475 = vsel %vm2465, nan, %v2474
  %v2476 = vand.u32 2147483647, %v98
  %vm2477 = vcmp.le.f32.partialorder %v2476, 0.7853982
  %vm2478 = vcmp.lt.s32.totalorder %v98, 0
  %v2479 = vand.u32 %v98, 2139095040
  %v2480 = vshrl.u32 %v2479, 23
  %v2481 = vsub.s32 %v2480, 127
  %v2482 = vand.u32 2147483647, %v98
  %v2483 = vand.u32 %v2482, 8388607
  %v2484 = vor.u32 %v2483, 8388608
  %v2485 = vsub.s32 0, %v2484
  %v2486 = vadd.s32 %v2481, 1
  %vm2487 = vcmp.gt.s32.totalorder %v2486, 0
  %v2488 = vsel %vm2487, %v2486, 0
  %v2489 = vshrl.u32 %v2488, 5
  %v2490 = vand.u32 %v2488, 31
  %v2491 = vsub.s32 32, %v2490
  %v2492 = vshrl.u32 683565275, %v2491
  %v2493 = vshll.u32 683565275, %v2490
  %v2494 = vshrl.u32 2475754826, %v2491
  %v2495 = vor.u32 %v2493, %v2494
  %v2496 = vshll.u32 2475754826, %v2490
  %v2497 = vshrl.u32 2131351028, %v2491
  %v2498 = vor.u32 %v2496, %v2497
  %v2499 = vshll.u32 2131351028, %v2490
  %v2500 = vshrl.u32 2102212464, %v2491
  %v2501 = vor.u32 %v2499, %v2500
  %v2502 = vshll.u32 2102212464, %v2490
  %v2503 = vshrl.u32 920167782, %v2491
  %v2504 = vor.u32 %v2502, %v2503
  %v2505 = vshll.u32 920167782, %v2490
  %v2506 = vshrl.u32 1326507024, %v2491
  %v2507 = vor.u32 %v2505, %v2506
  %vm2508 = vcmp.lt.s32.totalorder %v2489, 1
  %vm2509 = vcmp.lt.s32.totalorder %v2489, 2
  %vm2510 = vcmp.lt.s32.totalorder %v2489, 3
  %vm2511 = vcmp.lt.s32.totalorder %v2489, 4
  %v2512 = vsel %vm2508, %v2492, %v2495
  %v2513 = vsel %vm2511, %v2501, 2102212464
  %v2514 = vsel %vm2510, %v2498, %v2513
  %v2515 = vsel %vm2509, %v2512, %v2514
  %v2516 = vsel %vm2508, %v2495, %v2498
  %v2517 = vsel %vm2511, %v2504, 920167782
  %v2518 = vsel %vm2510, %v2501, %v2517
  %v2519 = vsel %vm2509, %v2516, %v2518
  %v2520 = vsel %vm2508, %v2498, %v2501
  %v2521 = vsel %vm2511, %v2507, 1326507024
  %v2522 = vsel %vm2510, %v2504, %v2521
  %v2523 = vsel %vm2509, %v2520, %v2522
  %v2524 = vshll.u32 %v2484, 8
  %v2525 = vmul.u32.u64.compose %v2524, %v2523
  %v2526 = vextract.low.u32 %v2525
  %v2527 = vextract.high.u32 %v2525
  %v2528 = vmul.u32.u64.compose %v2524, %v2519
  %v2529 = vextract.low.u32 %v2528
  %v2530 = vextract.high.u32 %v2528
  %v2531 = vmul.u32 %v2524, %v2515
  %v2532 = vadd.s32 %v2527, %v2529
  %vm2533 = vc.u32 %v2527, %v2529
  %v2534 = vadd.s32 %v2530, 1
  %v2535 = vsel %vm2533, %v2534, %v2530
  %v2536 = vadd.s32 %v2531, %v2535
  %v2537 = vadd.s32 %v2536, 536870912
  %v2538 = vshrl.u32 %v2537, 30
  %v2539 = vshll.u32 %v2538, 30
  %v2540 = vsub.s32 %v2536, %v2539
  %vm2541 = vcmp.lt.s32.totalorder %v2540, 0
  %v2542 = vsub.s32 0, %v2540
  %v2543 = vsel %vm2541, %v2542, %v2540
  %v2544 = vclz %v2543
  %v2545 = vsub.s32 %v2544, 2
  %vm2546 = vcmp.gt.s32.totalorder 0, %v2545
  %v2547 = vsel %vm2546, 0, %v2545
  %v2548 = vsub.s32 32, %v2547
  %v2549 = vshll.u32 %v2540, %v2547
  %v2550 = vshrl.u32 %v2532, %v2548
  %v2551 = vor.u32 %v2549, %v2550
  %v2552 = vsub.s32 4294967266, %v2547
  %v2553 = vadd.s32 %v2552, 127
  %v2554 = vshll.u32 %v2553, 23
  %v2555 = vor.u32 4788187, %v2554
  %v2556 = vand.u32 2147483647, %v2555
  %v2558 = vcvt.s32.f32 %v2551
  %v2559 = vmul.f32 %v2558, %v2556
  %v2560 = vxor.u32 %v2559, 2147483648
  %v2561 = vsel %vm2478, %v2560, %v2559
  %v2562 = vsub.s32 4, %v2538
  %v2563 = vsel %vm2478, %v2562, %v2538
  %v2564 = vsel %vm2477, %v98, %v2561
  %v2565 = vsel %vm2477, 0, %v2563
  %v2566 = vcosq.f32.pop %v2564
  %v2567 = vsinq.f32.pop %v2564
  %vm2568 = vweird.f32 %v98
  %v2569 = vand.u32 %v2565, 3
  %vm2570 = vcmp.lt.s32.totalorder %v2569, 2
  %vm2571 = vcmp.eq.s32.totalorder %v2569, 0
  %v2572 = vxor.u32 %v2567, 2147483648
  %v2573 = vsel %vm2571, %v2566, %v2572
  %vm2574 = vcmp.eq.s32.totalorder %v2569, 2
  %v2575 = vxor.u32 %v2566, 2147483648
  %v2576 = vsel %vm2574, %v2575, %v2567
  %v2577 = vsel %vm2570, %v2573, %v2576
  %v2578 = vsel %vm2568, nan, %v2577
  %v2579 = vand.u32 2147483647, %v99
  %vm2580 = vcmp.le.f32.partialorder %v2579, 0.7853982
  %vm2581 = vcmp.lt.s32.totalorder %v99, 0
  %v2582 = vand.u32 %v99, 2139095040
  %v2583 = vshrl.u32 %v2582, 23
  %v2584 = vsub.s32 %v2583, 127
  %v2585 = vand.u32 2147483647, %v99
  %v2586 = vand.u32 %v2585, 8388607
  %v2587 = vor.u32 %v2586, 8388608
  %v2588 = vsub.s32 0, %v2587
  %v2589 = vadd.s32 %v2584, 1
  %vm2590 = vcmp.gt.s32.totalorder %v2589, 0
  %v2591 = vsel %vm2590, %v2589, 0
  %v2592 = vshrl.u32 %v2591, 5
  %v2593 = vand.u32 %v2591, 31
  %v2594 = vsub.s32 32, %v2593
  %v2595 = vshrl.u32 683565275, %v2594
  %v2596 = vshll.u32 683565275, %v2593
  %v2597 = vshrl.u32 2475754826, %v2594
  %v2598 = vor.u32 %v2596, %v2597
  %v2599 = vshll.u32 2475754826, %v2593
  %v2600 = vshrl.u32 2131351028, %v2594
  %v2601 = vor.u32 %v2599, %v2600
  %v2602 = vshll.u32 2131351028, %v2593
  %v2603 = vshrl.u32 2102212464, %v2594
  %v2604 = vor.u32 %v2602, %v2603
  %v2605 = vshll.u32 2102212464, %v2593
  %v2606 = vshrl.u32 920167782, %v2594
  %v2607 = vor.u32 %v2605, %v2606
  %v2608 = vshll.u32 920167782, %v2593
  %v2609 = vshrl.u32 1326507024, %v2594
  %v2610 = vor.u32 %v2608, %v2609
  %vm2611 = vcmp.lt.s32.totalorder %v2592, 1
  %vm2612 = vcmp.lt.s32.totalorder %v2592, 2
  %vm2613 = vcmp.lt.s32.totalorder %v2592, 3
  %vm2614 = vcmp.lt.s32.totalorder %v2592, 4
  %v2615 = vsel %vm2611, %v2595, %v2598
  %v2616 = vsel %vm2614, %v2604, 2102212464
  %v2617 = vsel %vm2613, %v2601, %v2616
  %v2618 = vsel %vm2612, %v2615, %v2617
  %v2619 = vsel %vm2611, %v2598, %v2601
  %v2620 = vsel %vm2614, %v2607, 920167782
  %v2621 = vsel %vm2613, %v2604, %v2620
  %v2622 = vsel %vm2612, %v2619, %v2621
  %v2623 = vsel %vm2611, %v2601, %v2604
  %v2624 = vsel %vm2614, %v2610, 1326507024
  %v2625 = vsel %vm2613, %v2607, %v2624
  %v2626 = vsel %vm2612, %v2623, %v2625
  %v2627 = vshll.u32 %v2587, 8
  %v2628 = vmul.u32.u64.compose %v2627, %v2626
  %v2629 = vextract.low.u32 %v2628
  %v2630 = vextract.high.u32 %v2628
  %v2631 = vmul.u32.u64.compose %v2627, %v2622
  %v2632 = vextract.low.u32 %v2631
  %v2633 = vextract.high.u32 %v2631
  %v2634 = vmul.u32 %v2627, %v2618
  %v2635 = vadd.s32 %v2630, %v2632
  %vm2636 = vc.u32 %v2630, %v2632
  %v2637 = vadd.s32 %v2633, 1
  %v2638 = vsel %vm2636, %v2637, %v2633
  %v2639 = vadd.s32 %v2634, %v2638
  %v2640 = vadd.s32 %v2639, 536870912
  %v2641 = vshrl.u32 %v2640, 30
  %v2642 = vshll.u32 %v2641, 30
  %v2643 = vsub.s32 %v2639, %v2642
  %vm2644 = vcmp.lt.s32.totalorder %v2643, 0
  %v2645 = vsub.s32 0, %v2643
  %v2646 = vsel %vm2644, %v2645, %v2643
  %v2647 = vclz %v2646
  %v2648 = vsub.s32 %v2647, 2
  %vm2649 = vcmp.gt.s32.totalorder 0, %v2648
  %v2650 = vsel %vm2649, 0, %v2648
  %v2651 = vsub.s32 32, %v2650
  %v2652 = vshll.u32 %v2643, %v2650
  %v2653 = vshrl.u32 %v2635, %v2651
  %v2654 = vor.u32 %v2652, %v2653
  %v2655 = vsub.s32 4294967266, %v2650
  %v2656 = vadd.s32 %v2655, 127
  %v2657 = vshll.u32 %v2656, 23
  %v2658 = vor.u32 4788187, %v2657
  %v2659 = vand.u32 2147483647, %v2658
  %v2661 = vcvt.s32.f32 %v2654
  %v2662 = vmul.f32 %v2661, %v2659
  %v2663 = vxor.u32 %v2662, 2147483648
  %v2664 = vsel %vm2581, %v2663, %v2662
  %v2665 = vsub.s32 4, %v2641
  %v2666 = vsel %vm2581, %v2665, %v2641
  %v2667 = vsel %vm2580, %v99, %v2664
  %v2668 = vsel %vm2580, 0, %v2666
  %v2669 = vcosq.f32.pop %v2667
  %v2670 = vsinq.f32.pop %v2667
  %vm2671 = vweird.f32 %v99
  %v2672 = vand.u32 %v2668, 3
  %vm2673 = vcmp.lt.s32.totalorder %v2672, 2
  %vm2674 = vcmp.eq.s32.totalorder %v2672, 0
  %v2675 = vxor.u32 %v2670, 2147483648
  %v2676 = vsel %vm2674, %v2669, %v2675
  %vm2677 = vcmp.eq.s32.totalorder %v2672, 2
  %v2678 = vxor.u32 %v2669, 2147483648
  %v2679 = vsel %vm2677, %v2678, %v2670
  %v2680 = vsel %vm2673, %v2676, %v2679
  %v2681 = vsel %vm2671, nan, %v2680
  %v2682 = vand.u32 2147483647, %v100
  %vm2683 = vcmp.le.f32.partialorder %v2682, 0.7853982
  %vm2684 = vcmp.lt.s32.totalorder %v100, 0
  %v2685 = vand.u32 %v100, 2139095040
  %v2686 = vshrl.u32 %v2685, 23
  %v2687 = vsub.s32 %v2686, 127
  %v2688 = vand.u32 2147483647, %v100
  %v2689 = vand.u32 %v2688, 8388607
  %v2690 = vor.u32 %v2689, 8388608
  %v2691 = vsub.s32 0, %v2690
  %v2692 = vadd.s32 %v2687, 1
  %vm2693 = vcmp.gt.s32.totalorder %v2692, 0
  %v2694 = vsel %vm2693, %v2692, 0
  %v2695 = vshrl.u32 %v2694, 5
  %v2696 = vand.u32 %v2694, 31
  %v2697 = vsub.s32 32, %v2696
  %v2698 = vshrl.u32 683565275, %v2697
  %v2699 = vshll.u32 683565275, %v2696
  %v2700 = vshrl.u32 2475754826, %v2697
  %v2701 = vor.u32 %v2699, %v2700
  %v2702 = vshll.u32 2475754826, %v2696
  %v2703 = vshrl.u32 2131351028, %v2697
  %v2704 = vor.u32 %v2702, %v2703
  %v2705 = vshll.u32 2131351028, %v2696
  %v2706 = vshrl.u32 2102212464, %v2697
  %v2707 = vor.u32 %v2705, %v2706
  %v2708 = vshll.u32 2102212464, %v2696
  %v2709 = vshrl.u32 920167782, %v2697
  %v2710 = vor.u32 %v2708, %v2709
  %v2711 = vshll.u32 920167782, %v2696
  %v2712 = vshrl.u32 1326507024, %v2697
  %v2713 = vor.u32 %v2711, %v2712
  %vm2714 = vcmp.lt.s32.totalorder %v2695, 1
  %vm2715 = vcmp.lt.s32.totalorder %v2695, 2
  %vm2716 = vcmp.lt.s32.totalorder %v2695, 3
  %vm2717 = vcmp.lt.s32.totalorder %v2695, 4
  %v2718 = vsel %vm2714, %v2698, %v2701
  %v2719 = vsel %vm2717, %v2707, 2102212464
  %v2720 = vsel %vm2716, %v2704, %v2719
  %v2721 = vsel %vm2715, %v2718, %v2720
  %v2722 = vsel %vm2714, %v2701, %v2704
  %v2723 = vsel %vm2717, %v2710, 920167782
  %v2724 = vsel %vm2716, %v2707, %v2723
  %v2725 = vsel %vm2715, %v2722, %v2724
  %v2726 = vsel %vm2714, %v2704, %v2707
  %v2727 = vsel %vm2717, %v2713, 1326507024
  %v2728 = vsel %vm2716, %v2710, %v2727
  %v2729 = vsel %vm2715, %v2726, %v2728
  %v2730 = vshll.u32 %v2690, 8
  %v2731 = vmul.u32.u64.compose %v2730, %v2729
  %v2732 = vextract.low.u32 %v2731
  %v2733 = vextract.high.u32 %v2731
  %v2734 = vmul.u32.u64.compose %v2730, %v2725
  %v2735 = vextract.low.u32 %v2734
  %v2736 = vextract.high.u32 %v2734
  %v2737 = vmul.u32 %v2730, %v2721
  %v2738 = vadd.s32 %v2733, %v2735
  %vm2739 = vc.u32 %v2733, %v2735
  %v2740 = vadd.s32 %v2736, 1
  %v2741 = vsel %vm2739, %v2740, %v2736
  %v2742 = vadd.s32 %v2737, %v2741
  %v2743 = vadd.s32 %v2742, 536870912
  %v2744 = vshrl.u32 %v2743, 30
  %v2745 = vshll.u32 %v2744, 30
  %v2746 = vsub.s32 %v2742, %v2745
  %vm2747 = vcmp.lt.s32.totalorder %v2746, 0
  %v2748 = vsub.s32 0, %v2746
  %v2749 = vsel %vm2747, %v2748, %v2746
  %v2750 = vclz %v2749
  %v2751 = vsub.s32 %v2750, 2
  %vm2752 = vcmp.gt.s32.totalorder 0, %v2751
  %v2753 = vsel %vm2752, 0, %v2751
  %v2754 = vsub.s32 32, %v2753
  %v2755 = vshll.u32 %v2746, %v2753
  %v2756 = vshrl.u32 %v2738, %v2754
  %v2757 = vor.u32 %v2755, %v2756
  %v2758 = vsub.s32 4294967266, %v2753
  %v2759 = vadd.s32 %v2758, 127
  %v2760 = vshll.u32 %v2759, 23
  %v2761 = vor.u32 4788187, %v2760
  %v2762 = vand.u32 2147483647, %v2761
  %v2764 = vcvt.s32.f32 %v2757
  %v2765 = vmul.f32 %v2764, %v2762
  %v2766 = vxor.u32 %v2765, 2147483648
  %v2767 = vsel %vm2684, %v2766, %v2765
  %v2768 = vsub.s32 4, %v2744
  %v2769 = vsel %vm2684, %v2768, %v2744
  %v2770 = vsel %vm2683, %v100, %v2767
  %v2771 = vsel %vm2683, 0, %v2769
  %v2772 = vcosq.f32.pop %v2770
  %v2773 = vsinq.f32.pop %v2770
  %vm2774 = vweird.f32 %v100
  %v2775 = vand.u32 %v2771, 3
  %vm2776 = vcmp.lt.s32.totalorder %v2775, 2
  %vm2777 = vcmp.eq.s32.totalorder %v2775, 0
  %v2778 = vxor.u32 %v2773, 2147483648
  %v2779 = vsel %vm2777, %v2772, %v2778
  %vm2780 = vcmp.eq.s32.totalorder %v2775, 2
  %v2781 = vxor.u32 %v2772, 2147483648
  %v2782 = vsel %vm2780, %v2781, %v2773
  %v2783 = vsel %vm2776, %v2779, %v2782
  %v2784 = vsel %vm2774, nan, %v2783
  %v2785 = vand.u32 2147483647, %v101
  %vm2786 = vcmp.le.f32.partialorder %v2785, 0.7853982
  %vm2787 = vcmp.lt.s32.totalorder %v101, 0
  %v2788 = vand.u32 %v101, 2139095040
  %v2789 = vshrl.u32 %v2788, 23
  %v2790 = vsub.s32 %v2789, 127
  %v2791 = vand.u32 2147483647, %v101
  %v2792 = vand.u32 %v2791, 8388607
  %v2793 = vor.u32 %v2792, 8388608
  %v2794 = vsub.s32 0, %v2793
  %v2795 = vadd.s32 %v2790, 1
  %vm2796 = vcmp.gt.s32.totalorder %v2795, 0
  %v2797 = vsel %vm2796, %v2795, 0
  %v2798 = vshrl.u32 %v2797, 5
  %v2799 = vand.u32 %v2797, 31
  %v2800 = vsub.s32 32, %v2799
  %v2801 = vshrl.u32 683565275, %v2800
  %v2802 = vshll.u32 683565275, %v2799
  %v2803 = vshrl.u32 2475754826, %v2800
  %v2804 = vor.u32 %v2802, %v2803
  %v2805 = vshll.u32 2475754826, %v2799
  %v2806 = vshrl.u32 2131351028, %v2800
  %v2807 = vor.u32 %v2805, %v2806
  %v2808 = vshll.u32 2131351028, %v2799
  %v2809 = vshrl.u32 2102212464, %v2800
  %v2810 = vor.u32 %v2808, %v2809
  %v2811 = vshll.u32 2102212464, %v2799
  %v2812 = vshrl.u32 920167782, %v2800
  %v2813 = vor.u32 %v2811, %v2812
  %v2814 = vshll.u32 920167782, %v2799
  %v2815 = vshrl.u32 1326507024, %v2800
  %v2816 = vor.u32 %v2814, %v2815
  %vm2817 = vcmp.lt.s32.totalorder %v2798, 1
  %vm2818 = vcmp.lt.s32.totalorder %v2798, 2
  %vm2819 = vcmp.lt.s32.totalorder %v2798, 3
  %vm2820 = vcmp.lt.s32.totalorder %v2798, 4
  %v2821 = vsel %vm2817, %v2801, %v2804
  %v2822 = vsel %vm2820, %v2810, 2102212464
  %v2823 = vsel %vm2819, %v2807, %v2822
  %v2824 = vsel %vm2818, %v2821, %v2823
  %v2825 = vsel %vm2817, %v2804, %v2807
  %v2826 = vsel %vm2820, %v2813, 920167782
  %v2827 = vsel %vm2819, %v2810, %v2826
  %v2828 = vsel %vm2818, %v2825, %v2827
  %v2829 = vsel %vm2817, %v2807, %v2810
  %v2830 = vsel %vm2820, %v2816, 1326507024
  %v2831 = vsel %vm2819, %v2813, %v2830
  %v2832 = vsel %vm2818, %v2829, %v2831
  %v2833 = vshll.u32 %v2793, 8
  %v2834 = vmul.u32.u64.compose %v2833, %v2832
  %v2835 = vextract.low.u32 %v2834
  %v2836 = vextract.high.u32 %v2834
  %v2837 = vmul.u32.u64.compose %v2833, %v2828
  %v2838 = vextract.low.u32 %v2837
  %v2839 = vextract.high.u32 %v2837
  %v2840 = vmul.u32 %v2833, %v2824
  %v2841 = vadd.s32 %v2836, %v2838
  %vm2842 = vc.u32 %v2836, %v2838
  %v2843 = vadd.s32 %v2839, 1
  %v2844 = vsel %vm2842, %v2843, %v2839
  %v2845 = vadd.s32 %v2840, %v2844
  %v2846 = vadd.s32 %v2845, 536870912
  %v2847 = vshrl.u32 %v2846, 30
  %v2848 = vshll.u32 %v2847, 30
  %v2849 = vsub.s32 %v2845, %v2848
  %vm2850 = vcmp.lt.s32.totalorder %v2849, 0
  %v2851 = vsub.s32 0, %v2849
  %v2852 = vsel %vm2850, %v2851, %v2849
  %v2853 = vclz %v2852
  %v2854 = vsub.s32 %v2853, 2
  %vm2855 = vcmp.gt.s32.totalorder 0, %v2854
  %v2856 = vsel %vm2855, 0, %v2854
  %v2857 = vsub.s32 32, %v2856
  %v2858 = vshll.u32 %v2849, %v2856
  %v2859 = vshrl.u32 %v2841, %v2857
  %v2860 = vor.u32 %v2858, %v2859
  %v2861 = vsub.s32 4294967266, %v2856
  %v2862 = vadd.s32 %v2861, 127
  %v2863 = vshll.u32 %v2862, 23
  %v2864 = vor.u32 4788187, %v2863
  %v2865 = vand.u32 2147483647, %v2864
  %v2867 = vcvt.s32.f32 %v2860
  %v2868 = vmul.f32 %v2867, %v2865
  %v2869 = vxor.u32 %v2868, 2147483648
  %v2870 = vsel %vm2787, %v2869, %v2868
  %v2871 = vsub.s32 4, %v2847
  %v2872 = vsel %vm2787, %v2871, %v2847
  %v2873 = vsel %vm2786, %v101, %v2870
  %v2874 = vsel %vm2786, 0, %v2872
  %v2875 = vcosq.f32.pop %v2873
  %v2876 = vsinq.f32.pop %v2873
  %vm2877 = vweird.f32 %v101
  %v2878 = vand.u32 %v2874, 3
  %vm2879 = vcmp.lt.s32.totalorder %v2878, 2
  %vm2880 = vcmp.eq.s32.totalorder %v2878, 0
  %v2881 = vxor.u32 %v2876, 2147483648
  %v2882 = vsel %vm2880, %v2875, %v2881
  %vm2883 = vcmp.eq.s32.totalorder %v2878, 2
  %v2884 = vxor.u32 %v2875, 2147483648
  %v2885 = vsel %vm2883, %v2884, %v2876
  %v2886 = vsel %vm2879, %v2882, %v2885
  %v2887 = vsel %vm2877, nan, %v2886
  %v2888 = vand.u32 2147483647, %v102
  %vm2889 = vcmp.le.f32.partialorder %v2888, 0.7853982
  %vm2890 = vcmp.lt.s32.totalorder %v102, 0
  %v2891 = vand.u32 %v102, 2139095040
  %v2892 = vshrl.u32 %v2891, 23
  %v2893 = vsub.s32 %v2892, 127
  %v2894 = vand.u32 2147483647, %v102
  %v2895 = vand.u32 %v2894, 8388607
  %v2896 = vor.u32 %v2895, 8388608
  %v2897 = vsub.s32 0, %v2896
  %v2898 = vadd.s32 %v2893, 1
  %vm2899 = vcmp.gt.s32.totalorder %v2898, 0
  %v2900 = vsel %vm2899, %v2898, 0
  %v2901 = vshrl.u32 %v2900, 5
  %v2902 = vand.u32 %v2900, 31
  %v2903 = vsub.s32 32, %v2902
  %v2904 = vshrl.u32 683565275, %v2903
  %v2905 = vshll.u32 683565275, %v2902
  %v2906 = vshrl.u32 2475754826, %v2903
  %v2907 = vor.u32 %v2905, %v2906
  %v2908 = vshll.u32 2475754826, %v2902
  %v2909 = vshrl.u32 2131351028, %v2903
  %v2910 = vor.u32 %v2908, %v2909
  %v2911 = vshll.u32 2131351028, %v2902
  %v2912 = vshrl.u32 2102212464, %v2903
  %v2913 = vor.u32 %v2911, %v2912
  %v2914 = vshll.u32 2102212464, %v2902
  %v2915 = vshrl.u32 920167782, %v2903
  %v2916 = vor.u32 %v2914, %v2915
  %v2917 = vshll.u32 920167782, %v2902
  %v2918 = vshrl.u32 1326507024, %v2903
  %v2919 = vor.u32 %v2917, %v2918
  %vm2920 = vcmp.lt.s32.totalorder %v2901, 1
  %vm2921 = vcmp.lt.s32.totalorder %v2901, 2
  %vm2922 = vcmp.lt.s32.totalorder %v2901, 3
  %vm2923 = vcmp.lt.s32.totalorder %v2901, 4
  %v2924 = vsel %vm2920, %v2904, %v2907
  %v2925 = vsel %vm2923, %v2913, 2102212464
  %v2926 = vsel %vm2922, %v2910, %v2925
  %v2927 = vsel %vm2921, %v2924, %v2926
  %v2928 = vsel %vm2920, %v2907, %v2910
  %v2929 = vsel %vm2923, %v2916, 920167782
  %v2930 = vsel %vm2922, %v2913, %v2929
  %v2931 = vsel %vm2921, %v2928, %v2930
  %v2932 = vsel %vm2920, %v2910, %v2913
  %v2933 = vsel %vm2923, %v2919, 1326507024
  %v2934 = vsel %vm2922, %v2916, %v2933
  %v2935 = vsel %vm2921, %v2932, %v2934
  %v2936 = vshll.u32 %v2896, 8
  %v2937 = vmul.u32.u64.compose %v2936, %v2935
  %v2938 = vextract.low.u32 %v2937
  %v2939 = vextract.high.u32 %v2937
  %v2940 = vmul.u32.u64.compose %v2936, %v2931
  %v2941 = vextract.low.u32 %v2940
  %v2942 = vextract.high.u32 %v2940
  %v2943 = vmul.u32 %v2936, %v2927
  %v2944 = vadd.s32 %v2939, %v2941
  %vm2945 = vc.u32 %v2939, %v2941
  %v2946 = vadd.s32 %v2942, 1
  %v2947 = vsel %vm2945, %v2946, %v2942
  %v2948 = vadd.s32 %v2943, %v2947
  %v2949 = vadd.s32 %v2948, 536870912
  %v2950 = vshrl.u32 %v2949, 30
  %v2951 = vshll.u32 %v2950, 30
  %v2952 = vsub.s32 %v2948, %v2951
  %vm2953 = vcmp.lt.s32.totalorder %v2952, 0
  %v2954 = vsub.s32 0, %v2952
  %v2955 = vsel %vm2953, %v2954, %v2952
  %v2956 = vclz %v2955
  %v2957 = vsub.s32 %v2956, 2
  %vm2958 = vcmp.gt.s32.totalorder 0, %v2957
  %v2959 = vsel %vm2958, 0, %v2957
  %v2960 = vsub.s32 32, %v2959
  %v2961 = vshll.u32 %v2952, %v2959
  %v2962 = vshrl.u32 %v2944, %v2960
  %v2963 = vor.u32 %v2961, %v2962
  %v2964 = vsub.s32 4294967266, %v2959
  %v2965 = vadd.s32 %v2964, 127
  %v2966 = vshll.u32 %v2965, 23
  %v2967 = vor.u32 4788187, %v2966
  %v2968 = vand.u32 2147483647, %v2967
  %v2970 = vcvt.s32.f32 %v2963
  %v2971 = vmul.f32 %v2970, %v2968
  %v2972 = vxor.u32 %v2971, 2147483648
  %v2973 = vsel %vm2890, %v2972, %v2971
  %v2974 = vsub.s32 4, %v2950
  %v2975 = vsel %vm2890, %v2974, %v2950
  %v2976 = vsel %vm2889, %v102, %v2973
  %v2977 = vsel %vm2889, 0, %v2975
  %v2978 = vcosq.f32.pop %v2976
  %v2979 = vsinq.f32.pop %v2976
  %vm2980 = vweird.f32 %v102
  %v2981 = vand.u32 %v2977, 3
  %vm2982 = vcmp.lt.s32.totalorder %v2981, 2
  %vm2983 = vcmp.eq.s32.totalorder %v2981, 0
  %v2984 = vxor.u32 %v2979, 2147483648
  %v2985 = vsel %vm2983, %v2978, %v2984
  %vm2986 = vcmp.eq.s32.totalorder %v2981, 2
  %v2987 = vxor.u32 %v2978, 2147483648
  %v2988 = vsel %vm2986, %v2987, %v2979
  %v2989 = vsel %vm2982, %v2985, %v2988
  %v2990 = vsel %vm2980, nan, %v2989
  %v2991 = vand.u32 2147483647, %v103
  %vm2992 = vcmp.le.f32.partialorder %v2991, 0.7853982
  %vm2993 = vcmp.lt.s32.totalorder %v103, 0
  %v2994 = vand.u32 %v103, 2139095040
  %v2995 = vshrl.u32 %v2994, 23
  %v2996 = vsub.s32 %v2995, 127
  %v2997 = vand.u32 2147483647, %v103
  %v2998 = vand.u32 %v2997, 8388607
  %v2999 = vor.u32 %v2998, 8388608
  %v3000 = vsub.s32 0, %v2999
  %v3001 = vadd.s32 %v2996, 1
  %vm3002 = vcmp.gt.s32.totalorder %v3001, 0
  %v3003 = vsel %vm3002, %v3001, 0
  %v3004 = vshrl.u32 %v3003, 5
  %v3005 = vand.u32 %v3003, 31
  %v3006 = vsub.s32 32, %v3005
  %v3007 = vshrl.u32 683565275, %v3006
  %v3008 = vshll.u32 683565275, %v3005
  %v3009 = vshrl.u32 2475754826, %v3006
  %v3010 = vor.u32 %v3008, %v3009
  %v3011 = vshll.u32 2475754826, %v3005
  %v3012 = vshrl.u32 2131351028, %v3006
  %v3013 = vor.u32 %v3011, %v3012
  %v3014 = vshll.u32 2131351028, %v3005
  %v3015 = vshrl.u32 2102212464, %v3006
  %v3016 = vor.u32 %v3014, %v3015
  %v3017 = vshll.u32 2102212464, %v3005
  %v3018 = vshrl.u32 920167782, %v3006
  %v3019 = vor.u32 %v3017, %v3018
  %v3020 = vshll.u32 920167782, %v3005
  %v3021 = vshrl.u32 1326507024, %v3006
  %v3022 = vor.u32 %v3020, %v3021
  %vm3023 = vcmp.lt.s32.totalorder %v3004, 1
  %vm3024 = vcmp.lt.s32.totalorder %v3004, 2
  %vm3025 = vcmp.lt.s32.totalorder %v3004, 3
  %vm3026 = vcmp.lt.s32.totalorder %v3004, 4
  %v3027 = vsel %vm3023, %v3007, %v3010
  %v3028 = vsel %vm3026, %v3016, 2102212464
  %v3029 = vsel %vm3025, %v3013, %v3028
  %v3030 = vsel %vm3024, %v3027, %v3029
  %v3031 = vsel %vm3023, %v3010, %v3013
  %v3032 = vsel %vm3026, %v3019, 920167782
  %v3033 = vsel %vm3025, %v3016, %v3032
  %v3034 = vsel %vm3024, %v3031, %v3033
  %v3035 = vsel %vm3023, %v3013, %v3016
  %v3036 = vsel %vm3026, %v3022, 1326507024
  %v3037 = vsel %vm3025, %v3019, %v3036
  %v3038 = vsel %vm3024, %v3035, %v3037
  %v3039 = vshll.u32 %v2999, 8
  %v3040 = vmul.u32.u64.compose %v3039, %v3038
  %v3041 = vextract.low.u32 %v3040
  %v3042 = vextract.high.u32 %v3040
  %v3043 = vmul.u32.u64.compose %v3039, %v3034
  %v3044 = vextract.low.u32 %v3043
  %v3045 = vextract.high.u32 %v3043
  %v3046 = vmul.u32 %v3039, %v3030
  %v3047 = vadd.s32 %v3042, %v3044
  %vm3048 = vc.u32 %v3042, %v3044
  %v3049 = vadd.s32 %v3045, 1
  %v3050 = vsel %vm3048, %v3049, %v3045
  %v3051 = vadd.s32 %v3046, %v3050
  %v3052 = vadd.s32 %v3051, 536870912
  %v3053 = vshrl.u32 %v3052, 30
  %v3054 = vshll.u32 %v3053, 30
  %v3055 = vsub.s32 %v3051, %v3054
  %vm3056 = vcmp.lt.s32.totalorder %v3055, 0
  %v3057 = vsub.s32 0, %v3055
  %v3058 = vsel %vm3056, %v3057, %v3055
  %v3059 = vclz %v3058
  %v3060 = vsub.s32 %v3059, 2
  %vm3061 = vcmp.gt.s32.totalorder 0, %v3060
  %v3062 = vsel %vm3061, 0, %v3060
  %v3063 = vsub.s32 32, %v3062
  %v3064 = vshll.u32 %v3055, %v3062
  %v3065 = vshrl.u32 %v3047, %v3063
  %v3066 = vor.u32 %v3064, %v3065
  %v3067 = vsub.s32 4294967266, %v3062
  %v3068 = vadd.s32 %v3067, 127
  %v3069 = vshll.u32 %v3068, 23
  %v3070 = vor.u32 4788187, %v3069
  %v3071 = vand.u32 2147483647, %v3070
  %v3073 = vcvt.s32.f32 %v3066
  %v3074 = vmul.f32 %v3073, %v3071
  %v3075 = vxor.u32 %v3074, 2147483648
  %v3076 = vsel %vm2993, %v3075, %v3074
  %v3077 = vsub.s32 4, %v3053
  %v3078 = vsel %vm2993, %v3077, %v3053
  %v3079 = vsel %vm2992, %v103, %v3076
  %v3080 = vsel %vm2992, 0, %v3078
  %v3081 = vcosq.f32.pop %v3079
  %v3082 = vsinq.f32.pop %v3079
  %vm3083 = vweird.f32 %v103
  %v3084 = vand.u32 %v3080, 3
  %vm3085 = vcmp.lt.s32.totalorder %v3084, 2
  %vm3086 = vcmp.eq.s32.totalorder %v3084, 0
  %v3087 = vxor.u32 %v3082, 2147483648
  %v3088 = vsel %vm3086, %v3081, %v3087
  %vm3089 = vcmp.eq.s32.totalorder %v3084, 2
  %v3090 = vxor.u32 %v3081, 2147483648
  %v3091 = vsel %vm3089, %v3090, %v3082
  %v3092 = vsel %vm3085, %v3088, %v3091
  %v3093 = vsel %vm3083, nan, %v3092
  %v3094 = vand.u32 2147483647, %v104
  %vm3095 = vcmp.le.f32.partialorder %v3094, 0.7853982
  %vm3096 = vcmp.lt.s32.totalorder %v104, 0
  %v3097 = vand.u32 %v104, 2139095040
  %v3098 = vshrl.u32 %v3097, 23
  %v3099 = vsub.s32 %v3098, 127
  %v3100 = vand.u32 2147483647, %v104
  %v3101 = vand.u32 %v3100, 8388607
  %v3102 = vor.u32 %v3101, 8388608
  %v3103 = vsub.s32 0, %v3102
  %v3104 = vadd.s32 %v3099, 1
  %vm3105 = vcmp.gt.s32.totalorder %v3104, 0
  %v3106 = vsel %vm3105, %v3104, 0
  %v3107 = vshrl.u32 %v3106, 5
  %v3108 = vand.u32 %v3106, 31
  %v3109 = vsub.s32 32, %v3108
  %v3110 = vshrl.u32 683565275, %v3109
  %v3111 = vshll.u32 683565275, %v3108
  %v3112 = vshrl.u32 2475754826, %v3109
  %v3113 = vor.u32 %v3111, %v3112
  %v3114 = vshll.u32 2475754826, %v3108
  %v3115 = vshrl.u32 2131351028, %v3109
  %v3116 = vor.u32 %v3114, %v3115
  %v3117 = vshll.u32 2131351028, %v3108
  %v3118 = vshrl.u32 2102212464, %v3109
  %v3119 = vor.u32 %v3117, %v3118
  %v3120 = vshll.u32 2102212464, %v3108
  %v3121 = vshrl.u32 920167782, %v3109
  %v3122 = vor.u32 %v3120, %v3121
  %v3123 = vshll.u32 920167782, %v3108
  %v3124 = vshrl.u32 1326507024, %v3109
  %v3125 = vor.u32 %v3123, %v3124
  %vm3126 = vcmp.lt.s32.totalorder %v3107, 1
  %vm3127 = vcmp.lt.s32.totalorder %v3107, 2
  %vm3128 = vcmp.lt.s32.totalorder %v3107, 3
  %vm3129 = vcmp.lt.s32.totalorder %v3107, 4
  %v3130 = vsel %vm3126, %v3110, %v3113
  %v3131 = vsel %vm3129, %v3119, 2102212464
  %v3132 = vsel %vm3128, %v3116, %v3131
  %v3133 = vsel %vm3127, %v3130, %v3132
  %v3134 = vsel %vm3126, %v3113, %v3116
  %v3135 = vsel %vm3129, %v3122, 920167782
  %v3136 = vsel %vm3128, %v3119, %v3135
  %v3137 = vsel %vm3127, %v3134, %v3136
  %v3138 = vsel %vm3126, %v3116, %v3119
  %v3139 = vsel %vm3129, %v3125, 1326507024
  %v3140 = vsel %vm3128, %v3122, %v3139
  %v3141 = vsel %vm3127, %v3138, %v3140
  %v3142 = vshll.u32 %v3102, 8
  %v3143 = vmul.u32.u64.compose %v3142, %v3141
  %v3144 = vextract.low.u32 %v3143
  %v3145 = vextract.high.u32 %v3143
  %v3146 = vmul.u32.u64.compose %v3142, %v3137
  %v3147 = vextract.low.u32 %v3146
  %v3148 = vextract.high.u32 %v3146
  %v3149 = vmul.u32 %v3142, %v3133
  %v3150 = vadd.s32 %v3145, %v3147
  %vm3151 = vc.u32 %v3145, %v3147
  %v3152 = vadd.s32 %v3148, 1
  %v3153 = vsel %vm3151, %v3152, %v3148
  %v3154 = vadd.s32 %v3149, %v3153
  %v3155 = vadd.s32 %v3154, 536870912
  %v3156 = vshrl.u32 %v3155, 30
  %v3157 = vshll.u32 %v3156, 30
  %v3158 = vsub.s32 %v3154, %v3157
  %vm3159 = vcmp.lt.s32.totalorder %v3158, 0
  %v3160 = vsub.s32 0, %v3158
  %v3161 = vsel %vm3159, %v3160, %v3158
  %v3162 = vclz %v3161
  %v3163 = vsub.s32 %v3162, 2
  %vm3164 = vcmp.gt.s32.totalorder 0, %v3163
  %v3165 = vsel %vm3164, 0, %v3163
  %v3166 = vsub.s32 32, %v3165
  %v3167 = vshll.u32 %v3158, %v3165
  %v3168 = vshrl.u32 %v3150, %v3166
  %v3169 = vor.u32 %v3167, %v3168
  %v3170 = vsub.s32 4294967266, %v3165
  %v3171 = vadd.s32 %v3170, 127
  %v3172 = vshll.u32 %v3171, 23
  %v3173 = vor.u32 4788187, %v3172
  %v3174 = vand.u32 2147483647, %v3173
  %v3176 = vcvt.s32.f32 %v3169
  %v3177 = vmul.f32 %v3176, %v3174
  %v3178 = vxor.u32 %v3177, 2147483648
  %v3179 = vsel %vm3096, %v3178, %v3177
  %v3180 = vsub.s32 4, %v3156
  %v3181 = vsel %vm3096, %v3180, %v3156
  %v3182 = vsel %vm3095, %v104, %v3179
  %v3183 = vsel %vm3095, 0, %v3181
  %v3184 = vcosq.f32.pop %v3182
  %v3185 = vsinq.f32.pop %v3182
  %vm3186 = vweird.f32 %v104
  %v3187 = vand.u32 %v3183, 3
  %vm3188 = vcmp.lt.s32.totalorder %v3187, 2
  %vm3189 = vcmp.eq.s32.totalorder %v3187, 0
  %v3190 = vxor.u32 %v3185, 2147483648
  %v3191 = vsel %vm3189, %v3184, %v3190
  %vm3192 = vcmp.eq.s32.totalorder %v3187, 2
  %v3193 = vxor.u32 %v3184, 2147483648
  %v3194 = vsel %vm3192, %v3193, %v3185
  %v3195 = vsel %vm3188, %v3191, %v3194
  %v3196 = vsel %vm3186, nan, %v3195
  %v3197 = vand.u32 2147483647, %v105
  %vm3198 = vcmp.le.f32.partialorder %v3197, 0.7853982
  %vm3199 = vcmp.lt.s32.totalorder %v105, 0
  %v3200 = vand.u32 %v105, 2139095040
  %v3201 = vshrl.u32 %v3200, 23
  %v3202 = vsub.s32 %v3201, 127
  %v3203 = vand.u32 2147483647, %v105
  %v3204 = vand.u32 %v3203, 8388607
  %v3205 = vor.u32 %v3204, 8388608
  %v3206 = vsub.s32 0, %v3205
  %v3207 = vadd.s32 %v3202, 1
  %vm3208 = vcmp.gt.s32.totalorder %v3207, 0
  %v3209 = vsel %vm3208, %v3207, 0
  %v3210 = vshrl.u32 %v3209, 5
  %v3211 = vand.u32 %v3209, 31
  %v3212 = vsub.s32 32, %v3211
  %v3213 = vshrl.u32 683565275, %v3212
  %v3214 = vshll.u32 683565275, %v3211
  %v3215 = vshrl.u32 2475754826, %v3212
  %v3216 = vor.u32 %v3214, %v3215
  %v3217 = vshll.u32 2475754826, %v3211
  %v3218 = vshrl.u32 2131351028, %v3212
  %v3219 = vor.u32 %v3217, %v3218
  %v3220 = vshll.u32 2131351028, %v3211
  %v3221 = vshrl.u32 2102212464, %v3212
  %v3222 = vor.u32 %v3220, %v3221
  %v3223 = vshll.u32 2102212464, %v3211
  %v3224 = vshrl.u32 920167782, %v3212
  %v3225 = vor.u32 %v3223, %v3224
  %v3226 = vshll.u32 920167782, %v3211
  %v3227 = vshrl.u32 1326507024, %v3212
  %v3228 = vor.u32 %v3226, %v3227
  %vm3229 = vcmp.lt.s32.totalorder %v3210, 1
  %vm3230 = vcmp.lt.s32.totalorder %v3210, 2
  %vm3231 = vcmp.lt.s32.totalorder %v3210, 3
  %vm3232 = vcmp.lt.s32.totalorder %v3210, 4
  %v3233 = vsel %vm3229, %v3213, %v3216
  %v3234 = vsel %vm3232, %v3222, 2102212464
  %v3235 = vsel %vm3231, %v3219, %v3234
  %v3236 = vsel %vm3230, %v3233, %v3235
  %v3237 = vsel %vm3229, %v3216, %v3219
  %v3238 = vsel %vm3232, %v3225, 920167782
  %v3239 = vsel %vm3231, %v3222, %v3238
  %v3240 = vsel %vm3230, %v3237, %v3239
  %v3241 = vsel %vm3229, %v3219, %v3222
  %v3242 = vsel %vm3232, %v3228, 1326507024
  %v3243 = vsel %vm3231, %v3225, %v3242
  %v3244 = vsel %vm3230, %v3241, %v3243
  %v3245 = vshll.u32 %v3205, 8
  %v3246 = vmul.u32.u64.compose %v3245, %v3244
  %v3247 = vextract.low.u32 %v3246
  %v3248 = vextract.high.u32 %v3246
  %v3249 = vmul.u32.u64.compose %v3245, %v3240
  %v3250 = vextract.low.u32 %v3249
  %v3251 = vextract.high.u32 %v3249
  %v3252 = vmul.u32 %v3245, %v3236
  %v3253 = vadd.s32 %v3248, %v3250
  %vm3254 = vc.u32 %v3248, %v3250
  %v3255 = vadd.s32 %v3251, 1
  %v3256 = vsel %vm3254, %v3255, %v3251
  %v3257 = vadd.s32 %v3252, %v3256
  %v3258 = vadd.s32 %v3257, 536870912
  %v3259 = vshrl.u32 %v3258, 30
  %v3260 = vshll.u32 %v3259, 30
  %v3261 = vsub.s32 %v3257, %v3260
  %vm3262 = vcmp.lt.s32.totalorder %v3261, 0
  %v3263 = vsub.s32 0, %v3261
  %v3264 = vsel %vm3262, %v3263, %v3261
  %v3265 = vclz %v3264
  %v3266 = vsub.s32 %v3265, 2
  %vm3267 = vcmp.gt.s32.totalorder 0, %v3266
  %v3268 = vsel %vm3267, 0, %v3266
  %v3269 = vsub.s32 32, %v3268
  %v3270 = vshll.u32 %v3261, %v3268
  %v3271 = vshrl.u32 %v3253, %v3269
  %v3272 = vor.u32 %v3270, %v3271
  %v3273 = vsub.s32 4294967266, %v3268
  %v3274 = vadd.s32 %v3273, 127
  %v3275 = vshll.u32 %v3274, 23
  %v3276 = vor.u32 4788187, %v3275
  %v3277 = vand.u32 2147483647, %v3276
  %v3279 = vcvt.s32.f32 %v3272
  %v3280 = vmul.f32 %v3279, %v3277
  %v3281 = vxor.u32 %v3280, 2147483648
  %v3282 = vsel %vm3199, %v3281, %v3280
  %v3283 = vsub.s32 4, %v3259
  %v3284 = vsel %vm3199, %v3283, %v3259
  %v3285 = vsel %vm3198, %v105, %v3282
  %v3286 = vsel %vm3198, 0, %v3284
  %v3287 = vcosq.f32.pop %v3285
  %v3288 = vsinq.f32.pop %v3285
  %vm3289 = vweird.f32 %v105
  %v3290 = vand.u32 %v3286, 3
  %vm3291 = vcmp.lt.s32.totalorder %v3290, 2
  %vm3292 = vcmp.eq.s32.totalorder %v3290, 0
  %v3293 = vxor.u32 %v3288, 2147483648
  %v3294 = vsel %vm3292, %v3287, %v3293
  %vm3295 = vcmp.eq.s32.totalorder %v3290, 2
  %v3296 = vxor.u32 %v3287, 2147483648
  %v3297 = vsel %vm3295, %v3296, %v3288
  %v3298 = vsel %vm3291, %v3294, %v3297
  %v3299 = vsel %vm3289, nan, %v3298
  %v3300 = vand.u32 2147483647, %v106
  %vm3301 = vcmp.le.f32.partialorder %v3300, 0.7853982
  %vm3302 = vcmp.lt.s32.totalorder %v106, 0
  %v3303 = vand.u32 %v106, 2139095040
  %v3304 = vshrl.u32 %v3303, 23
  %v3305 = vsub.s32 %v3304, 127
  %v3306 = vand.u32 2147483647, %v106
  %v3307 = vand.u32 %v3306, 8388607
  %v3308 = vor.u32 %v3307, 8388608
  %v3309 = vsub.s32 0, %v3308
  %v3310 = vadd.s32 %v3305, 1
  %vm3311 = vcmp.gt.s32.totalorder %v3310, 0
  %v3312 = vsel %vm3311, %v3310, 0
  %v3313 = vshrl.u32 %v3312, 5
  %v3314 = vand.u32 %v3312, 31
  %v3315 = vsub.s32 32, %v3314
  %v3316 = vshrl.u32 683565275, %v3315
  %v3317 = vshll.u32 683565275, %v3314
  %v3318 = vshrl.u32 2475754826, %v3315
  %v3319 = vor.u32 %v3317, %v3318
  %v3320 = vshll.u32 2475754826, %v3314
  %v3321 = vshrl.u32 2131351028, %v3315
  %v3322 = vor.u32 %v3320, %v3321
  %v3323 = vshll.u32 2131351028, %v3314
  %v3324 = vshrl.u32 2102212464, %v3315
  %v3325 = vor.u32 %v3323, %v3324
  %v3326 = vshll.u32 2102212464, %v3314
  %v3327 = vshrl.u32 920167782, %v3315
  %v3328 = vor.u32 %v3326, %v3327
  %v3329 = vshll.u32 920167782, %v3314
  %v3330 = vshrl.u32 1326507024, %v3315
  %v3331 = vor.u32 %v3329, %v3330
  %vm3332 = vcmp.lt.s32.totalorder %v3313, 1
  %vm3333 = vcmp.lt.s32.totalorder %v3313, 2
  %vm3334 = vcmp.lt.s32.totalorder %v3313, 3
  %vm3335 = vcmp.lt.s32.totalorder %v3313, 4
  %v3336 = vsel %vm3332, %v3316, %v3319
  %v3337 = vsel %vm3335, %v3325, 2102212464
  %v3338 = vsel %vm3334, %v3322, %v3337
  %v3339 = vsel %vm3333, %v3336, %v3338
  %v3340 = vsel %vm3332, %v3319, %v3322
  %v3341 = vsel %vm3335, %v3328, 920167782
  %v3342 = vsel %vm3334, %v3325, %v3341
  %v3343 = vsel %vm3333, %v3340, %v3342
  %v3344 = vsel %vm3332, %v3322, %v3325
  %v3345 = vsel %vm3335, %v3331, 1326507024
  %v3346 = vsel %vm3334, %v3328, %v3345
  %v3347 = vsel %vm3333, %v3344, %v3346
  %v3348 = vshll.u32 %v3308, 8
  %v3349 = vmul.u32.u64.compose %v3348, %v3347
  %v3350 = vextract.low.u32 %v3349
  %v3351 = vextract.high.u32 %v3349
  %v3352 = vmul.u32.u64.compose %v3348, %v3343
  %v3353 = vextract.low.u32 %v3352
  %v3354 = vextract.high.u32 %v3352
  %v3355 = vmul.u32 %v3348, %v3339
  %v3356 = vadd.s32 %v3351, %v3353
  %vm3357 = vc.u32 %v3351, %v3353
  %v3358 = vadd.s32 %v3354, 1
  %v3359 = vsel %vm3357, %v3358, %v3354
  %v3360 = vadd.s32 %v3355, %v3359
  %v3361 = vadd.s32 %v3360, 536870912
  %v3362 = vshrl.u32 %v3361, 30
  %v3363 = vshll.u32 %v3362, 30
  %v3364 = vsub.s32 %v3360, %v3363
  %vm3365 = vcmp.lt.s32.totalorder %v3364, 0
  %v3366 = vsub.s32 0, %v3364
  %v3367 = vsel %vm3365, %v3366, %v3364
  %v3368 = vclz %v3367
  %v3369 = vsub.s32 %v3368, 2
  %vm3370 = vcmp.gt.s32.totalorder 0, %v3369
  %v3371 = vsel %vm3370, 0, %v3369
  %v3372 = vsub.s32 32, %v3371
  %v3373 = vshll.u32 %v3364, %v3371
  %v3374 = vshrl.u32 %v3356, %v3372
  %v3375 = vor.u32 %v3373, %v3374
  %v3376 = vsub.s32 4294967266, %v3371
  %v3377 = vadd.s32 %v3376, 127
  %v3378 = vshll.u32 %v3377, 23
  %v3379 = vor.u32 4788187, %v3378
  %v3380 = vand.u32 2147483647, %v3379
  %v3382 = vcvt.s32.f32 %v3375
  %v3383 = vmul.f32 %v3382, %v3380
  %v3384 = vxor.u32 %v3383, 2147483648
  %v3385 = vsel %vm3302, %v3384, %v3383
  %v3386 = vsub.s32 4, %v3362
  %v3387 = vsel %vm3302, %v3386, %v3362
  %v3388 = vsel %vm3301, %v106, %v3385
  %v3389 = vsel %vm3301, 0, %v3387
  %v3390 = vcosq.f32.pop %v3388
  %v3391 = vsinq.f32.pop %v3388
  %vm3392 = vweird.f32 %v106
  %v3393 = vand.u32 %v3389, 3
  %vm3394 = vcmp.lt.s32.totalorder %v3393, 2
  %vm3395 = vcmp.eq.s32.totalorder %v3393, 0
  %v3396 = vxor.u32 %v3391, 2147483648
  %v3397 = vsel %vm3395, %v3390, %v3396
  %vm3398 = vcmp.eq.s32.totalorder %v3393, 2
  %v3399 = vxor.u32 %v3390, 2147483648
  %v3400 = vsel %vm3398, %v3399, %v3391
  %v3401 = vsel %vm3394, %v3397, %v3400
  %v3402 = vsel %vm3392, nan, %v3401
  %v3403 = vadd.f32 %v209, 1.0
  %v3404 = vadd.f32 %v312, 1.0
  %v3405 = vadd.f32 %v415, 1.0
  %v3406 = vadd.f32 %v518, 1.0
  %v3407 = vadd.f32 %v621, 1.0
  %v3408 = vadd.f32 %v724, 1.0
  %v3409 = vadd.f32 %v827, 1.0
  %v3410 = vadd.f32 %v930, 1.0
  %v3411 = vadd.f32 %v1033, 1.0
  %v3412 = vadd.f32 %v1136, 1.0
  %v3413 = vadd.f32 %v1239, 1.0
  %v3414 = vadd.f32 %v1342, 1.0
  %v3415 = vadd.f32 %v1445, 1.0
  %v3416 = vadd.f32 %v1548, 1.0
  %v3417 = vadd.f32 %v1651, 1.0
  %v3418 = vadd.f32 %v1754, 1.0
  %v3419 = vadd.f32 %v1857, 1.0
  %v3420 = vadd.f32 %v1960, 1.0
  %v3421 = vadd.f32 %v2063, 1.0
  %v3422 = vadd.f32 %v2166, 1.0
  %v3423 = vadd.f32 %v2269, 1.0
  %v3424 = vadd.f32 %v2372, 1.0
  %v3425 = vadd.f32 %v2475, 1.0
  %v3426 = vadd.f32 %v2578, 1.0
  %v3427 = vadd.f32 %v2681, 1.0
  %v3428 = vadd.f32 %v2784, 1.0
  %v3429 = vadd.f32 %v2887, 1.0
  %v3430 = vadd.f32 %v2990, 1.0
  %v3431 = vadd.f32 %v3093, 1.0
  %v3432 = vadd.f32 %v3196, 1.0
  %v3433 = vadd.f32 %v3299, 1.0
  %v3434 = vadd.f32 %v3402, 1.0
  %v3435 = vmul.f32 %v3403, 0.5
  %v3436 = vmul.f32 %v3404, 0.5
  %v3437 = vmul.f32 %v3405, 0.5
  %v3438 = vmul.f32 %v3406, 0.5
  %v3439 = vmul.f32 %v3407, 0.5
  %v3440 = vmul.f32 %v3408, 0.5
  %v3441 = vmul.f32 %v3409, 0.5
  %v3442 = vmul.f32 %v3410, 0.5
  %v3443 = vmul.f32 %v3411, 0.5
  %v3444 = vmul.f32 %v3412, 0.5
  %v3445 = vmul.f32 %v3413, 0.5
  %v3446 = vmul.f32 %v3414, 0.5
  %v3447 = vmul.f32 %v3415, 0.5
  %v3448 = vmul.f32 %v3416, 0.5
  %v3449 = vmul.f32 %v3417, 0.5
  %v3450 = vmul.f32 %v3418, 0.5
  %v3451 = vmul.f32 %v3419, 0.5
  %v3452 = vmul.f32 %v3420, 0.5
  %v3453 = vmul.f32 %v3421, 0.5
  %v3454 = vmul.f32 %v3422, 0.5
  %v3455 = vmul.f32 %v3423, 0.5
  %v3456 = vmul.f32 %v3424, 0.5
  %v3457 = vmul.f32 %v3425, 0.5
  %v3458 = vmul.f32 %v3426, 0.5
  %v3459 = vmul.f32 %v3427, 0.5
  %v3460 = vmul.f32 %v3428, 0.5
  %v3461 = vmul.f32 %v3429, 0.5
  %v3462 = vmul.f32 %v3430, 0.5
  %v3463 = vmul.f32 %v3431, 0.5
  %v3464 = vmul.f32 %v3432, 0.5
  %v3465 = vmul.f32 %v3433, 0.5
  %v3466 = vmul.f32 %v3434, 0.5
  %vm3467 = vcmp.lt.f32.partialorder %v43, 5.0
  %vm3468 = vcmp.lt.f32.partialorder %v44, 5.0
  %vm3469 = vcmp.lt.f32.partialorder %v45, 5.0
  %vm3470 = vcmp.lt.f32.partialorder %v46, 5.0
  %vm3471 = vcmp.lt.f32.partialorder %v47, 5.0
  %vm3472 = vcmp.lt.f32.partialorder %v48, 5.0
  %vm3473 = vcmp.lt.f32.partialorder %v49, 5.0
  %vm3474 = vcmp.lt.f32.partialorder %v50, 5.0
  %vm3475 = vcmp.lt.f32.partialorder %v51, 5.0
  %vm3476 = vcmp.lt.f32.partialorder %v52, 5.0
  %vm3477 = vcmp.lt.f32.partialorder %v53, 5.0
  %vm3478 = vcmp.lt.f32.partialorder %v54, 5.0
  %vm3479 = vcmp.lt.f32.partialorder %v55, 5.0
  %vm3480 = vcmp.lt.f32.partialorder %v56, 5.0
  %vm3481 = vcmp.lt.f32.partialorder %v57, 5.0
  %vm3482 = vcmp.lt.f32.partialorder %v58, 5.0
  %vm3483 = vcmp.lt.f32.partialorder %v59, 5.0
  %vm3484 = vcmp.lt.f32.partialorder %v60, 5.0
  %vm3485 = vcmp.lt.f32.partialorder %v61, 5.0
  %vm3486 = vcmp.lt.f32.partialorder %v62, 5.0
  %vm3487 = vcmp.lt.f32.partialorder %v63, 5.0
  %vm3488 = vcmp.lt.f32.partialorder %v64, 5.0
  %vm3489 = vcmp.lt.f32.partialorder %v65, 5.0
  %vm3490 = vcmp.lt.f32.partialorder %v66, 5.0
  %vm3491 = vcmp.lt.f32.partialorder %v67, 5.0
  %vm3492 = vcmp.lt.f32.partialorder %v68, 5.0
  %vm3493 = vcmp.lt.f32.partialorder %v69, 5.0
  %vm3494 = vcmp.lt.f32.partialorder %v70, 5.0
  %vm3495 = vcmp.lt.f32.partialorder %v71, 5.0
  %vm3496 = vcmp.lt.f32.partialorder %v72, 5.0
  %vm3497 = vcmp.lt.f32.partialorder %v73, 5.0
  %vm3498 = vcmp.lt.f32.partialorder %v74, 5.0
  %v3499 = vsel %vm3467, 1, 0
  %v3500 = vsel %vm3468, 1, 0
  %v3501 = vsel %vm3469, 1, 0
  %v3502 = vsel %vm3470, 1, 0
  %v3503 = vsel %vm3471, 1, 0
  %v3504 = vsel %vm3472, 1, 0
  %v3505 = vsel %vm3473, 1, 0
  %v3506 = vsel %vm3474, 1, 0
  %v3507 = vsel %vm3475, 1, 0
  %v3508 = vsel %vm3476, 1, 0
  %v3509 = vsel %vm3477, 1, 0
  %v3510 = vsel %vm3478, 1, 0
  %v3511 = vsel %vm3479, 1, 0
  %v3512 = vsel %vm3480, 1, 0
  %v3513 = vsel %vm3481, 1, 0
  %v3514 = vsel %vm3482, 1, 0
  %v3515 = vsel %vm3483, 1, 0
  %v3516 = vsel %vm3484, 1, 0
  %v3517 = vsel %vm3485, 1, 0
  %v3518 = vsel %vm3486, 1, 0
  %v3519 = vsel %vm3487, 1, 0
  %v3520 = vsel %vm3488, 1, 0
  %v3521 = vsel %vm3489, 1, 0
  %v3522 = vsel %vm3490, 1, 0
  %v3523 = vsel %vm3491, 1, 0
  %v3524 = vsel %vm3492, 1, 0
  %v3525 = vsel %vm3493, 1, 0
  %v3526 = vsel %vm3494, 1, 0
  %v3527 = vsel %vm3495, 1, 0
  %v3528 = vsel %vm3496, 1, 0
  %v3529 = vsel %vm3497, 1, 0
  %v3530 = vsel %vm3498, 1, 0
  %v3531 = vcvt.s32.f32 %v3499
  %v3532 = vcvt.s32.f32 %v3500
  %v3533 = vcvt.s32.f32 %v3501
  %v3534 = vcvt.s32.f32 %v3502
  %v3535 = vcvt.s32.f32 %v3503
  %v3536 = vcvt.s32.f32 %v3504
  %v3537 = vcvt.s32.f32 %v3505
  %v3538 = vcvt.s32.f32 %v3506
  %v3539 = vcvt.s32.f32 %v3507
  %v3540 = vcvt.s32.f32 %v3508
  %v3541 = vcvt.s32.f32 %v3509
  %v3542 = vcvt.s32.f32 %v3510
  %v3543 = vcvt.s32.f32 %v3511
  %v3544 = vcvt.s32.f32 %v3512
  %v3545 = vcvt.s32.f32 %v3513
  %v3546 = vcvt.s32.f32 %v3514
  %v3547 = vcvt.s32.f32 %v3515
  %v3548 = vcvt.s32.f32 %v3516
  %v3549 = vcvt.s32.f32 %v3517
  %v3550 = vcvt.s32.f32 %v3518
  %v3551 = vcvt.s32.f32 %v3519
  %v3552 = vcvt.s32.f32 %v3520
  %v3553 = vcvt.s32.f32 %v3521
  %v3554 = vcvt.s32.f32 %v3522
  %v3555 = vcvt.s32.f32 %v3523
  %v3556 = vcvt.s32.f32 %v3524
  %v3557 = vcvt.s32.f32 %v3525
  %v3558 = vcvt.s32.f32 %v3526
  %v3559 = vcvt.s32.f32 %v3527
  %v3560 = vcvt.s32.f32 %v3528
  %v3561 = vcvt.s32.f32 %v3529
  %v3562 = vcvt.s32.f32 %v3530
  %v3563 = vmul.f32 %v3435, %v3531
  %v3564 = vmul.f32 %v3436, %v3532
  %v3565 = vmul.f32 %v3437, %v3533
  %v3566 = vmul.f32 %v3438, %v3534
  %v3567 = vmul.f32 %v3439, %v3535
  %v3568 = vmul.f32 %v3440, %v3536
  %v3569 = vmul.f32 %v3441, %v3537
  %v3570 = vmul.f32 %v3442, %v3538
  %v3571 = vmul.f32 %v3443, %v3539
  %v3572 = vmul.f32 %v3444, %v3540
  %v3573 = vmul.f32 %v3445, %v3541
  %v3574 = vmul.f32 %v3446, %v3542
  %v3575 = vmul.f32 %v3447, %v3543
  %v3576 = vmul.f32 %v3448, %v3544
  %v3577 = vmul.f32 %v3449, %v3545
  %v3578 = vmul.f32 %v3450, %v3546
  %v3579 = vmul.f32 %v3451, %v3547
  %v3580 = vmul.f32 %v3452, %v3548
  %v3581 = vmul.f32 %v3453, %v3549
  %v3582 = vmul.f32 %v3454, %v3550
  %v3583 = vmul.f32 %v3455, %v3551
  %v3584 = vmul.f32 %v3456, %v3552
  %v3585 = vmul.f32 %v3457, %v3553
  %v3586 = vmul.f32 %v3458, %v3554
  %v3587 = vmul.f32 %v3459, %v3555
  %v3588 = vmul.f32 %v3460, %v3556
  %v3589 = vmul.f32 %v3461, %v3557
  %v3590 = vmul.f32 %v3462, %v3558
  %v3591 = vmul.f32 %v3463, %v3559
  %v3592 = vmul.f32 %v3464, %v3560
  %v3593 = vmul.f32 %v3465, %v3561
  %v3594 = vmul.f32 %v3466, %v3562
  %v3595 = vld [vmem:[%s3] sm:$0x1]
  %v3596 = vsub.f32 0.0, %v3595
  %v3597 = vsub.f32 0.0, %v43
  %v3598 = vsub.f32 0.0, %v44
  %v3599 = vsub.f32 0.0, %v45
  %v3600 = vsub.f32 0.0, %v46
  %v3601 = vsub.f32 0.0, %v47
  %v3602 = vsub.f32 0.0, %v48
  %v3603 = vsub.f32 0.0, %v49
  %v3604 = vsub.f32 0.0, %v50
  %v3605 = vsub.f32 0.0, %v51
  %v3606 = vsub.f32 0.0, %v52
  %v3607 = vsub.f32 0.0, %v53
  %v3608 = vsub.f32 0.0, %v54
  %v3609 = vsub.f32 0.0, %v55
  %v3610 = vsub.f32 0.0, %v56
  %v3611 = vsub.f32 0.0, %v57
  %v3612 = vsub.f32 0.0, %v58
  %v3613 = vsub.f32 0.0, %v59
  %v3614 = vsub.f32 0.0, %v60
  %v3615 = vsub.f32 0.0, %v61
  %v3616 = vsub.f32 0.0, %v62
  %v3617 = vsub.f32 0.0, %v63
  %v3618 = vsub.f32 0.0, %v64
  %v3619 = vsub.f32 0.0, %v65
  %v3620 = vsub.f32 0.0, %v66
  %v3621 = vsub.f32 0.0, %v67
  %v3622 = vsub.f32 0.0, %v68
  %v3623 = vsub.f32 0.0, %v69
  %v3624 = vsub.f32 0.0, %v70
  %v3625 = vsub.f32 0.0, %v71
  %v3626 = vsub.f32 0.0, %v72
  %v3627 = vsub.f32 0.0, %v73
  %v3628 = vsub.f32 0.0, %v74
  %v3629 = vmul.f32 %v3597, 1.442695
  %v3630 = vpow.pop %v3629
  %v3631 = vmul.f32 %v3598, 1.442695
  %v3632 = vpow.pop %v3631
  %v3633 = vmul.f32 %v3599, 1.442695
  %v3634 = vpow.pop %v3633
  %v3635 = vmul.f32 %v3600, 1.442695
  %v3636 = vpow.pop %v3635
  %v3637 = vmul.f32 %v3601, 1.442695
  %v3638 = vpow.pop %v3637
  %v3639 = vmul.f32 %v3602, 1.442695
  %v3640 = vpow.pop %v3639
  %v3641 = vmul.f32 %v3603, 1.442695
  %v3642 = vpow.pop %v3641
  %v3643 = vmul.f32 %v3604, 1.442695
  %v3644 = vpow.pop %v3643
  %v3645 = vmul.f32 %v3605, 1.442695
  %v3646 = vpow.pop %v3645
  %v3647 = vmul.f32 %v3606, 1.442695
  %v3648 = vpow.pop %v3647
  %v3649 = vmul.f32 %v3607, 1.442695
  %v3650 = vpow.pop %v3649
  %v3651 = vmul.f32 %v3608, 1.442695
  %v3652 = vpow.pop %v3651
  %v3653 = vmul.f32 %v3609, 1.442695
  %v3654 = vpow.pop %v3653
  %v3655 = vmul.f32 %v3610, 1.442695
  %v3656 = vpow.pop %v3655
  %v3657 = vmul.f32 %v3611, 1.442695
  %v3658 = vpow.pop %v3657
  %v3659 = vmul.f32 %v3612, 1.442695
  %v3660 = vpow.pop %v3659
  %v3661 = vmul.f32 %v3613, 1.442695
  %v3662 = vpow.pop %v3661
  %v3663 = vmul.f32 %v3614, 1.442695
  %v3664 = vpow.pop %v3663
  %v3665 = vmul.f32 %v3615, 1.442695
  %v3666 = vpow.pop %v3665
  %v3667 = vmul.f32 %v3616, 1.442695
  %v3668 = vpow.pop %v3667
  %v3669 = vmul.f32 %v3617, 1.442695
  %v3670 = vpow.pop %v3669
  %v3671 = vmul.f32 %v3618, 1.442695
  %v3672 = vpow.pop %v3671
  %v3673 = vmul.f32 %v3619, 1.442695
  %v3674 = vpow.pop %v3673
  %v3675 = vmul.f32 %v3620, 1.442695
  %v3676 = vpow.pop %v3675
  %v3677 = vmul.f32 %v3621, 1.442695
  %v3678 = vpow.pop %v3677
  %v3679 = vmul.f32 %v3622, 1.442695
  %v3680 = vpow.pop %v3679
  %v3681 = vmul.f32 %v3623, 1.442695
  %v3682 = vpow.pop %v3681
  %v3683 = vmul.f32 %v3624, 1.442695
  %v3684 = vpow.pop %v3683
  %v3685 = vmul.f32 %v3625, 1.442695
  %v3686 = vpow.pop %v3685
  %v3687 = vmul.f32 %v3626, 1.442695
  %v3688 = vpow.pop %v3687
  %v3689 = vmul.f32 %v3627, 1.442695
  %v3690 = vpow.pop %v3689
  %v3691 = vmul.f32 %v3628, 1.442695
  %v3692 = vpow.pop %v3691
  %v3693 = vld [vmem:[%s2] sm:$0x1]
  %3695 = vset.pattern.permute.xlu0 0
  %3696 = vperm.xlu0 %3695, %v3630
  %v3697 = vpop.permute.xlu0 %3696
  %3700 = vset.pattern.permute.xlu0 0
  %3701 = vperm.xlu0 %3700, %v3632
  %v3702 = vpop.permute.xlu0 %3701
  %3705 = vset.pattern.permute.xlu0 0
  %3706 = vperm.xlu0 %3705, %v3634
  %v3707 = vpop.permute.xlu0 %3706
  %3710 = vset.pattern.permute.xlu0 0
  %3711 = vperm.xlu0 %3710, %v3636
  %v3712 = vpop.permute.xlu0 %3711
  %3715 = vset.pattern.permute.xlu0 0
  %3716 = vperm.xlu0 %3715, %v3638
  %v3717 = vpop.permute.xlu0 %3716
  %3720 = vset.pattern.permute.xlu0 0
  %3721 = vperm.xlu0 %3720, %v3640
  %v3722 = vpop.permute.xlu0 %3721
  %3725 = vset.pattern.permute.xlu0 0
  %3726 = vperm.xlu0 %3725, %v3642
  %v3727 = vpop.permute.xlu0 %3726
  %3730 = vset.pattern.permute.xlu0 0
  %3731 = vperm.xlu0 %3730, %v3644
  %v3732 = vpop.permute.xlu0 %3731
  %3735 = vset.pattern.permute.xlu0 0
  %3736 = vperm.xlu0 %3735, %v3646
  %v3737 = vpop.permute.xlu0 %3736
  %3740 = vset.pattern.permute.xlu0 0
  %3741 = vperm.xlu0 %3740, %v3648
  %v3742 = vpop.permute.xlu0 %3741
  %3745 = vset.pattern.permute.xlu0 0
  %3746 = vperm.xlu0 %3745, %v3650
  %v3747 = vpop.permute.xlu0 %3746
  %3750 = vset.pattern.permute.xlu0 0
  %3751 = vperm.xlu0 %3750, %v3652
  %v3752 = vpop.permute.xlu0 %3751
  %3755 = vset.pattern.permute.xlu0 0
  %3756 = vperm.xlu0 %3755, %v3654
  %v3757 = vpop.permute.xlu0 %3756
  %3760 = vset.pattern.permute.xlu0 0
  %3761 = vperm.xlu0 %3760, %v3656
  %v3762 = vpop.permute.xlu0 %3761
  %3765 = vset.pattern.permute.xlu0 0
  %3766 = vperm.xlu0 %3765, %v3658
  %v3767 = vpop.permute.xlu0 %3766
  %3770 = vset.pattern.permute.xlu0 0
  %3771 = vperm.xlu0 %3770, %v3660
  %v3772 = vpop.permute.xlu0 %3771
  %3775 = vset.pattern.permute.xlu0 0
  %3776 = vperm.xlu0 %3775, %v3662
  %v3777 = vpop.permute.xlu0 %3776
  %3780 = vset.pattern.permute.xlu0 0
  %3781 = vperm.xlu0 %3780, %v3664
  %v3782 = vpop.permute.xlu0 %3781
  %3785 = vset.pattern.permute.xlu0 0
  %3786 = vperm.xlu0 %3785, %v3666
  %v3787 = vpop.permute.xlu0 %3786
  %3790 = vset.pattern.permute.xlu0 0
  %3791 = vperm.xlu0 %3790, %v3668
  %v3792 = vpop.permute.xlu0 %3791
  %3795 = vset.pattern.permute.xlu0 0
  %3796 = vperm.xlu0 %3795, %v3670
  %v3797 = vpop.permute.xlu0 %3796
  %3800 = vset.pattern.permute.xlu0 0
  %3801 = vperm.xlu0 %3800, %v3672
  %v3802 = vpop.permute.xlu0 %3801
  %3805 = vset.pattern.permute.xlu0 0
  %3806 = vperm.xlu0 %3805, %v3674
  %v3807 = vpop.permute.xlu0 %3806
  %3810 = vset.pattern.permute.xlu0 0
  %3811 = vperm.xlu0 %3810, %v3676
  %v3812 = vpop.permute.xlu0 %3811
  %3815 = vset.pattern.permute.xlu0 0
  %3816 = vperm.xlu0 %3815, %v3678
  %v3817 = vpop.permute.xlu0 %3816
  %3820 = vset.pattern.permute.xlu0 0
  %3821 = vperm.xlu0 %3820, %v3680
  %v3822 = vpop.permute.xlu0 %3821
  %3825 = vset.pattern.permute.xlu0 0
  %3826 = vperm.xlu0 %3825, %v3682
  %v3827 = vpop.permute.xlu0 %3826
  %3830 = vset.pattern.permute.xlu0 0
  %3831 = vperm.xlu0 %3830, %v3684
  %v3832 = vpop.permute.xlu0 %3831
  %3835 = vset.pattern.permute.xlu0 0
  %3836 = vperm.xlu0 %3835, %v3686
  %v3837 = vpop.permute.xlu0 %3836
  %3840 = vset.pattern.permute.xlu0 0
  %3841 = vperm.xlu0 %3840, %v3688
  %v3842 = vpop.permute.xlu0 %3841
  %3845 = vset.pattern.permute.xlu0 0
  %3846 = vperm.xlu0 %3845, %v3690
  %v3847 = vpop.permute.xlu0 %3846
  %3850 = vset.pattern.permute.xlu0 0
  %3851 = vperm.xlu0 %3850, %v3692
  %v3852 = vpop.permute.xlu0 %3851
  %v3855 = vlaneseq
  %v3856 = vshrl.u32 %v3855, 7
  %v3857 = vsub.s32 0, %v3856
  %v3858 = vrot.slane %v3693, %v3857
  %v3860 = vsub.f32 %v3697, %v3858
  %v3861 = vsub.f32 %v3702, %v3858
  %v3862 = vsub.f32 %v3707, %v3858
  %v3863 = vsub.f32 %v3712, %v3858
  %v3864 = vsub.f32 %v3717, %v3858
  %v3865 = vsub.f32 %v3722, %v3858
  %v3866 = vsub.f32 %v3727, %v3858
  %v3867 = vsub.f32 %v3732, %v3858
  %v3868 = vsub.f32 %v3737, %v3858
  %v3869 = vsub.f32 %v3742, %v3858
  %v3870 = vsub.f32 %v3747, %v3858
  %v3871 = vsub.f32 %v3752, %v3858
  %v3872 = vsub.f32 %v3757, %v3858
  %v3873 = vsub.f32 %v3762, %v3858
  %v3874 = vsub.f32 %v3767, %v3858
  %v3875 = vsub.f32 %v3772, %v3858
  %v3876 = vsub.f32 %v3777, %v3858
  %v3877 = vsub.f32 %v3782, %v3858
  %v3878 = vsub.f32 %v3787, %v3858
  %v3879 = vsub.f32 %v3792, %v3858
  %v3880 = vsub.f32 %v3797, %v3858
  %v3881 = vsub.f32 %v3802, %v3858
  %v3882 = vsub.f32 %v3807, %v3858
  %v3883 = vsub.f32 %v3812, %v3858
  %v3884 = vsub.f32 %v3817, %v3858
  %v3885 = vsub.f32 %v3822, %v3858
  %v3886 = vsub.f32 %v3827, %v3858
  %v3887 = vsub.f32 %v3832, %v3858
  %v3888 = vsub.f32 %v3837, %v3858
  %v3889 = vsub.f32 %v3842, %v3858
  %v3890 = vsub.f32 %v3847, %v3858
  %v3891 = vsub.f32 %v3852, %v3858
  %v3892 = vmul.f32 %v3860, %v3860
  %v3893 = vmul.f32 %v3861, %v3861
  %v3894 = vmul.f32 %v3862, %v3862
  %v3895 = vmul.f32 %v3863, %v3863
  %v3896 = vmul.f32 %v3864, %v3864
  %v3897 = vmul.f32 %v3865, %v3865
  %v3898 = vmul.f32 %v3866, %v3866
  %v3899 = vmul.f32 %v3867, %v3867
  %v3900 = vmul.f32 %v3868, %v3868
  %v3901 = vmul.f32 %v3869, %v3869
  %v3902 = vmul.f32 %v3870, %v3870
  %v3903 = vmul.f32 %v3871, %v3871
  %v3904 = vmul.f32 %v3872, %v3872
  %v3905 = vmul.f32 %v3873, %v3873
  %v3906 = vmul.f32 %v3874, %v3874
  %v3907 = vmul.f32 %v3875, %v3875
  %v3908 = vmul.f32 %v3876, %v3876
  %v3909 = vmul.f32 %v3877, %v3877
  %v3910 = vmul.f32 %v3878, %v3878
  %v3911 = vmul.f32 %v3879, %v3879
  %v3912 = vmul.f32 %v3880, %v3880
  %v3913 = vmul.f32 %v3881, %v3881
  %v3914 = vmul.f32 %v3882, %v3882
  %v3915 = vmul.f32 %v3883, %v3883
  %v3916 = vmul.f32 %v3884, %v3884
  %v3917 = vmul.f32 %v3885, %v3885
  %v3918 = vmul.f32 %v3886, %v3886
  %v3919 = vmul.f32 %v3887, %v3887
  %v3920 = vmul.f32 %v3888, %v3888
  %v3921 = vmul.f32 %v3889, %v3889
  %v3922 = vmul.f32 %v3890, %v3890
  %v3923 = vmul.f32 %v3891, %v3891
  %v3925 = vlaneseq
  %v3926 = vshrl.u32 %v3925, 7
  %v3927 = vsub.s32 0, %v3926
  %v3928 = vrot.slane %v3596, %v3927
  %v3930 = vmul.f32 %v3928, %v3892
  %v3931 = vmul.f32 %v3928, %v3893
  %v3932 = vmul.f32 %v3928, %v3894
  %v3933 = vmul.f32 %v3928, %v3895
  %v3934 = vmul.f32 %v3928, %v3896
  %v3935 = vmul.f32 %v3928, %v3897
  %v3936 = vmul.f32 %v3928, %v3898
  %v3937 = vmul.f32 %v3928, %v3899
  %v3938 = vmul.f32 %v3928, %v3900
  %v3939 = vmul.f32 %v3928, %v3901
  %v3940 = vmul.f32 %v3928, %v3902
  %v3941 = vmul.f32 %v3928, %v3903
  %v3942 = vmul.f32 %v3928, %v3904
  %v3943 = vmul.f32 %v3928, %v3905
  %v3944 = vmul.f32 %v3928, %v3906
  %v3945 = vmul.f32 %v3928, %v3907
  %v3946 = vmul.f32 %v3928, %v3908
  %v3947 = vmul.f32 %v3928, %v3909
  %v3948 = vmul.f32 %v3928, %v3910
  %v3949 = vmul.f32 %v3928, %v3911
  %v3950 = vmul.f32 %v3928, %v3912
  %v3951 = vmul.f32 %v3928, %v3913
  %v3952 = vmul.f32 %v3928, %v3914
  %v3953 = vmul.f32 %v3928, %v3915
  %v3954 = vmul.f32 %v3928, %v3916
  %v3955 = vmul.f32 %v3928, %v3917
  %v3956 = vmul.f32 %v3928, %v3918
  %v3957 = vmul.f32 %v3928, %v3919
  %v3958 = vmul.f32 %v3928, %v3920
  %v3959 = vmul.f32 %v3928, %v3921
  %v3960 = vmul.f32 %v3928, %v3922
  %v3961 = vmul.f32 %v3928, %v3923
  %v3962 = vmul.f32 %v3930, 1.442695
  %v3963 = vpow.pop %v3962
  %v3964 = vmul.f32 %v3931, 1.442695
  %v3965 = vpow.pop %v3964
  %v3966 = vmul.f32 %v3932, 1.442695
  %v3967 = vpow.pop %v3966
  %v3968 = vmul.f32 %v3933, 1.442695
  %v3969 = vpow.pop %v3968
  %v3970 = vmul.f32 %v3934, 1.442695
  %v3971 = vpow.pop %v3970
  %v3972 = vmul.f32 %v3935, 1.442695
  %v3973 = vpow.pop %v3972
  %v3974 = vmul.f32 %v3936, 1.442695
  %v3975 = vpow.pop %v3974
  %v3976 = vmul.f32 %v3937, 1.442695
  %v3977 = vpow.pop %v3976
  %v3978 = vmul.f32 %v3938, 1.442695
  %v3979 = vpow.pop %v3978
  %v3980 = vmul.f32 %v3939, 1.442695
  %v3981 = vpow.pop %v3980
  %v3982 = vmul.f32 %v3940, 1.442695
  %v3983 = vpow.pop %v3982
  %v3984 = vmul.f32 %v3941, 1.442695
  %v3985 = vpow.pop %v3984
  %v3986 = vmul.f32 %v3942, 1.442695
  %v3987 = vpow.pop %v3986
  %v3988 = vmul.f32 %v3943, 1.442695
  %v3989 = vpow.pop %v3988
  %v3990 = vmul.f32 %v3944, 1.442695
  %v3991 = vpow.pop %v3990
  %v3992 = vmul.f32 %v3945, 1.442695
  %v3993 = vpow.pop %v3992
  %v3994 = vmul.f32 %v3946, 1.442695
  %v3995 = vpow.pop %v3994
  %v3996 = vmul.f32 %v3947, 1.442695
  %v3997 = vpow.pop %v3996
  %v3998 = vmul.f32 %v3948, 1.442695
  %v3999 = vpow.pop %v3998
  %v4000 = vmul.f32 %v3949, 1.442695
  %v4001 = vpow.pop %v4000
  %v4002 = vmul.f32 %v3950, 1.442695
  %v4003 = vpow.pop %v4002
  %v4004 = vmul.f32 %v3951, 1.442695
  %v4005 = vpow.pop %v4004
  %v4006 = vmul.f32 %v3952, 1.442695
  %v4007 = vpow.pop %v4006
  %v4008 = vmul.f32 %v3953, 1.442695
  %v4009 = vpow.pop %v4008
  %v4010 = vmul.f32 %v3954, 1.442695
  %v4011 = vpow.pop %v4010
  %v4012 = vmul.f32 %v3955, 1.442695
  %v4013 = vpow.pop %v4012
  %v4014 = vmul.f32 %v3956, 1.442695
  %v4015 = vpow.pop %v4014
  %v4016 = vmul.f32 %v3957, 1.442695
  %v4017 = vpow.pop %v4016
  %v4018 = vmul.f32 %v3958, 1.442695
  %v4019 = vpow.pop %v4018
  %v4020 = vmul.f32 %v3959, 1.442695
  %v4021 = vpow.pop %v4020
  %v4022 = vmul.f32 %v3960, 1.442695
  %v4023 = vpow.pop %v4022
  %v4024 = vmul.f32 %v3961, 1.442695
  %v4025 = vpow.pop %v4024
  %4027 = vset.pattern.permute.xlu0 0
  %4028 = vperm.xlu0 %4027, %v3563
  %v4029 = vpop.permute.xlu0 %4028
  %4032 = vset.pattern.permute.xlu0 0
  %4033 = vperm.xlu0 %4032, %v3564
  %v4034 = vpop.permute.xlu0 %4033
  %4037 = vset.pattern.permute.xlu0 0
  %4038 = vperm.xlu0 %4037, %v3565
  %v4039 = vpop.permute.xlu0 %4038
  %4042 = vset.pattern.permute.xlu0 0
  %4043 = vperm.xlu0 %4042, %v3566
  %v4044 = vpop.permute.xlu0 %4043
  %4047 = vset.pattern.permute.xlu0 0
  %4048 = vperm.xlu0 %4047, %v3567
  %v4049 = vpop.permute.xlu0 %4048
  %4052 = vset.pattern.permute.xlu0 0
  %4053 = vperm.xlu0 %4052, %v3568
  %v4054 = vpop.permute.xlu0 %4053
  %4057 = vset.pattern.permute.xlu0 0
  %4058 = vperm.xlu0 %4057, %v3569
  %v4059 = vpop.permute.xlu0 %4058
  %4062 = vset.pattern.permute.xlu0 0
  %4063 = vperm.xlu0 %4062, %v3570
  %v4064 = vpop.permute.xlu0 %4063
  %4067 = vset.pattern.permute.xlu0 0
  %4068 = vperm.xlu0 %4067, %v3571
  %v4069 = vpop.permute.xlu0 %4068
  %4072 = vset.pattern.permute.xlu0 0
  %4073 = vperm.xlu0 %4072, %v3572
  %v4074 = vpop.permute.xlu0 %4073
  %4077 = vset.pattern.permute.xlu0 0
  %4078 = vperm.xlu0 %4077, %v3573
  %v4079 = vpop.permute.xlu0 %4078
  %4082 = vset.pattern.permute.xlu0 0
  %4083 = vperm.xlu0 %4082, %v3574
  %v4084 = vpop.permute.xlu0 %4083
  %4087 = vset.pattern.permute.xlu0 0
  %4088 = vperm.xlu0 %4087, %v3575
  %v4089 = vpop.permute.xlu0 %4088
  %4092 = vset.pattern.permute.xlu0 0
  %4093 = vperm.xlu0 %4092, %v3576
  %v4094 = vpop.permute.xlu0 %4093
  %4097 = vset.pattern.permute.xlu0 0
  %4098 = vperm.xlu0 %4097, %v3577
  %v4099 = vpop.permute.xlu0 %4098
  %4102 = vset.pattern.permute.xlu0 0
  %4103 = vperm.xlu0 %4102, %v3578
  %v4104 = vpop.permute.xlu0 %4103
  %4107 = vset.pattern.permute.xlu0 0
  %4108 = vperm.xlu0 %4107, %v3579
  %v4109 = vpop.permute.xlu0 %4108
  %4112 = vset.pattern.permute.xlu0 0
  %4113 = vperm.xlu0 %4112, %v3580
  %v4114 = vpop.permute.xlu0 %4113
  %4117 = vset.pattern.permute.xlu0 0
  %4118 = vperm.xlu0 %4117, %v3581
  %v4119 = vpop.permute.xlu0 %4118
  %4122 = vset.pattern.permute.xlu0 0
  %4123 = vperm.xlu0 %4122, %v3582
  %v4124 = vpop.permute.xlu0 %4123
  %4127 = vset.pattern.permute.xlu0 0
  %4128 = vperm.xlu0 %4127, %v3583
  %v4129 = vpop.permute.xlu0 %4128
  %4132 = vset.pattern.permute.xlu0 0
  %4133 = vperm.xlu0 %4132, %v3584
  %v4134 = vpop.permute.xlu0 %4133
  %4137 = vset.pattern.permute.xlu0 0
  %4138 = vperm.xlu0 %4137, %v3585
  %v4139 = vpop.permute.xlu0 %4138
  %4142 = vset.pattern.permute.xlu0 0
  %4143 = vperm.xlu0 %4142, %v3586
  %v4144 = vpop.permute.xlu0 %4143
  %4147 = vset.pattern.permute.xlu0 0
  %4148 = vperm.xlu0 %4147, %v3587
  %v4149 = vpop.permute.xlu0 %4148
  %4152 = vset.pattern.permute.xlu0 0
  %4153 = vperm.xlu0 %4152, %v3588
  %v4154 = vpop.permute.xlu0 %4153
  %4157 = vset.pattern.permute.xlu0 0
  %4158 = vperm.xlu0 %4157, %v3589
  %v4159 = vpop.permute.xlu0 %4158
  %4162 = vset.pattern.permute.xlu0 0
  %4163 = vperm.xlu0 %4162, %v3590
  %v4164 = vpop.permute.xlu0 %4163
  %4167 = vset.pattern.permute.xlu0 0
  %4168 = vperm.xlu0 %4167, %v3591
  %v4169 = vpop.permute.xlu0 %4168
  %4172 = vset.pattern.permute.xlu0 0
  %4173 = vperm.xlu0 %4172, %v3592
  %v4174 = vpop.permute.xlu0 %4173
  %4177 = vset.pattern.permute.xlu0 0
  %4178 = vperm.xlu0 %4177, %v3593
  %v4179 = vpop.permute.xlu0 %4178
  %4182 = vset.pattern.permute.xlu0 0
  %4183 = vperm.xlu0 %4182, %v3594
  %v4184 = vpop.permute.xlu0 %4183
  %v4186 = vmul.f32 %v4029, %v3963
  %v4187 = vmul.f32 %v4034, %v3965
  %v4188 = vmul.f32 %v4039, %v3967
  %v4189 = vmul.f32 %v4044, %v3969
  %v4190 = vmul.f32 %v4049, %v3971
  %v4191 = vmul.f32 %v4054, %v3973
  %v4192 = vmul.f32 %v4059, %v3975
  %v4193 = vmul.f32 %v4064, %v3977
  %v4194 = vmul.f32 %v4069, %v3979
  %v4195 = vmul.f32 %v4074, %v3981
  %v4196 = vmul.f32 %v4079, %v3983
  %v4197 = vmul.f32 %v4084, %v3985
  %v4198 = vmul.f32 %v4089, %v3987
  %v4199 = vmul.f32 %v4094, %v3989
  %v4200 = vmul.f32 %v4099, %v3991
  %v4201 = vmul.f32 %v4104, %v3993
  %v4202 = vmul.f32 %v4109, %v3995
  %v4203 = vmul.f32 %v4114, %v3997
  %v4204 = vmul.f32 %v4119, %v3999
  %v4205 = vmul.f32 %v4124, %v4001
  %v4206 = vmul.f32 %v4129, %v4003
  %v4207 = vmul.f32 %v4134, %v4005
  %v4208 = vmul.f32 %v4139, %v4007
  %v4209 = vmul.f32 %v4144, %v4009
  %v4210 = vmul.f32 %v4149, %v4011
  %v4211 = vmul.f32 %v4154, %v4013
  %v4212 = vmul.f32 %v4159, %v4015
  %v4213 = vmul.f32 %v4164, %v4017
  %v4214 = vmul.f32 %v4169, %v4019
  %v4215 = vmul.f32 %v4174, %v4021
  %v4216 = vmul.f32 %v4179, %v4023
  %v4217 = vmul.f32 %v4184, %v4025
  %v4218 = vld [vmem:[%s4] sm:$0xff]
  %v4219 = vld [vmem:[%s4 + $0x8] sm:$0xff]
  %v4220 = vld [vmem:[%s5] sm:$0x1]
  %v4222 = vlaneseq
  %v4223 = vshrl.u32 %v4222, 7
  %v4224 = vsub.s32 0, %v4223
  %v4225 = vrot.slane %v4220, %v4224
  %vm4227 = vcmask 130048
  %v4229 = vsel %vm4227, %v4186, 0
  %v4232 = vsel %vm4227, %v4187, 0
  %v4235 = vsel %vm4227, %v4188, 0
  %v4238 = vsel %vm4227, %v4189, 0
  %v4241 = vsel %vm4227, %v4190, 0
  %v4244 = vsel %vm4227, %v4191, 0
  %v4247 = vsel %vm4227, %v4192, 0
  %v4250 = vsel %vm4227, %v4193, 0
  %v4253 = vsel %vm4227, %v4194, 0
  %v4256 = vsel %vm4227, %v4195, 0
  %v4259 = vsel %vm4227, %v4196, 0
  %v4262 = vsel %vm4227, %v4197, 0
  %v4265 = vsel %vm4227, %v4198, 0
  %v4268 = vsel %vm4227, %v4199, 0
  %v4271 = vsel %vm4227, %v4200, 0
  %v4274 = vsel %vm4227, %v4201, 0
  %v4277 = vsel %vm4227, %v4202, 0
  %v4280 = vsel %vm4227, %v4203, 0
  %v4283 = vsel %vm4227, %v4204, 0
  %v4286 = vsel %vm4227, %v4205, 0
  %v4289 = vsel %vm4227, %v4206, 0
  %v4292 = vsel %vm4227, %v4207, 0
  %v4295 = vsel %vm4227, %v4208, 0
  %v4298 = vsel %vm4227, %v4209, 0
  %v4301 = vsel %vm4227, %v4210, 0
  %v4304 = vsel %vm4227, %v4211, 0
  %v4307 = vsel %vm4227, %v4212, 0
  %v4310 = vsel %vm4227, %v4213, 0
  %v4313 = vsel %vm4227, %v4214, 0
  %v4316 = vsel %vm4227, %v4215, 0
  %v4319 = vsel %vm4227, %v4216, 0
  %v4322 = vsel %vm4227, %v4217, 0
  %4324 = vmatprep.subr.mxu0 0.0
  %4325 = vmatpush1.msra.mxu0 0.0
  %4326 = vmatprep.subr.mxu0 0.0
  %4327 = vmatpush1.msra.mxu0 0.0
  %4328 = vmatprep.subr.mxu0 0.0
  %4329 = vmatpush1.msra.mxu0 0.0
  %4330 = vmatprep.subr.mxu0 0.0
  %4331 = vmatpush1.msra.mxu0 0.0
  %4332 = vmatprep.subr.mxu0 0.0
  %4333 = vmatpush1.msra.mxu0 0.0
  %4334 = vmatprep.subr.mxu0 0.0
  %4335 = vmatpush1.msra.mxu0 0.0
  %4336 = vmatprep.subr.mxu0 0.0
  %4337 = vmatpush1.msra.mxu0 0.0
  %4338 = vmatprep.subr.mxu0 0.0
  %4339 = vmatpush1.msra.mxu0 0.0
  %4340 = vmatprep.subr.mxu0 0.0
  %4341 = vmatpush1.msra.mxu0 0.0
  %4342 = vmatprep.subr.mxu0 0.0
  %4343 = vmatpush1.msra.mxu0 0.0
  %4344 = vmatprep.subr.mxu0 0.0
  %4345 = vmatpush1.msra.mxu0 0.0
  %4346 = vmatprep.subr.mxu0 0.0
  %4347 = vmatpush1.msra.mxu0 0.0
  %4348 = vmatprep.subr.mxu0 0.0
  %4349 = vmatpush1.msra.mxu0 0.0
  %4350 = vmatprep.subr.mxu0 0.0
  %4351 = vmatpush1.msra.mxu0 0.0
  %4352 = vmatprep.subr.mxu0 0.0
  %4353 = vmatpush1.msra.mxu0 %v4219
  %4354 = vmatprep.subr.mxu0 0.0
  %4355 = vmatpush1.msra.mxu0 %v4218
  %4356 = vmatprep.subr.mxu0 0.0
  %4357 = vmatpush2.msra.mxu0 0.0
  %4358 = vmatprep.subr.mxu0 0.0
  %4359 = vmatpush2.msra.mxu0 0.0
  %4360 = vmatprep.subr.mxu0 0.0
  %4361 = vmatpush2.msra.mxu0 0.0
  %4362 = vmatprep.subr.mxu0 0.0
  %4363 = vmatpush2.msra.mxu0 0.0
  %4364 = vmatprep.subr.mxu0 0.0
  %4365 = vmatpush2.msra.mxu0 0.0
  %4366 = vmatprep.subr.mxu0 0.0
  %4367 = vmatpush2.msra.mxu0 0.0
  %4368 = vmatprep.subr.mxu0 0.0
  %4369 = vmatpush2.msra.mxu0 0.0
  %4370 = vmatprep.subr.mxu0 0.0
  %4371 = vmatpush2.msra.mxu0 0.0
  %4372 = vmatprep.subr.mxu0 0.0
  %4373 = vmatpush2.msra.mxu0 0.0
  %4374 = vmatprep.subr.mxu0 0.0
  %4375 = vmatpush2.msra.mxu0 0.0
  %4376 = vmatprep.subr.mxu0 0.0
  %4377 = vmatpush2.msra.mxu0 0.0
  %4378 = vmatprep.subr.mxu0 0.0
  %4379 = vmatpush2.msra.mxu0 0.0
  %4380 = vmatprep.subr.mxu0 0.0
  %4381 = vmatpush2.msra.mxu0 0.0
  %4382 = vmatprep.subr.mxu0 0.0
  %4383 = vmatpush2.msra.mxu0 0.0
  %4384 = vmatprep.subr.mxu0 0.0
  %4385 = vmatpush2.msra.mxu0 0.0
  %4386 = vmatprep.subr.mxu0 0.0
  %4387 = vmatpush2.msra.mxu0 0.0
  %4388 = vmatprep.mubr.f32.mxu0 0.0
  %4389 = vmatmul.mubr.f32.gmra.mxu0 %v4229
  %v4390 = vpop.f32.mrf.mxu0
  %v4391 = vadd.f32 %v4225, %v4390
  %v4392 = vpop.f32.mrf.mxu0
  %4393 = vmatprep.mubr.f32.mxu0 0.0
  %4394 = vmatmul.mubr.f32.gmra.mxu0 %v4232
  %v4395 = vpop.f32.mrf.mxu0
  %v4396 = vadd.f32 %v4225, %v4395
  %v4397 = vpop.f32.mrf.mxu0
  %4398 = vmatprep.mubr.f32.mxu0 0.0
  %4399 = vmatmul.mubr.f32.gmra.mxu0 %v4235
  %v4400 = vpop.f32.mrf.mxu0
  %v4401 = vadd.f32 %v4225, %v4400
  %v4402 = vpop.f32.mrf.mxu0
  %4403 = vmatprep.mubr.f32.mxu0 0.0
  %4404 = vmatmul.mubr.f32.gmra.mxu0 %v4238
  %v4405 = vpop.f32.mrf.mxu0
  %v4406 = vadd.f32 %v4225, %v4405
  %v4407 = vpop.f32.mrf.mxu0
  %4408 = vmatprep.mubr.f32.mxu0 0.0
  %4409 = vmatmul.mubr.f32.gmra.mxu0 %v4241
  %v4410 = vpop.f32.mrf.mxu0
  %v4411 = vadd.f32 %v4225, %v4410
  %v4412 = vpop.f32.mrf.mxu0
  %4413 = vmatprep.mubr.f32.mxu0 0.0
  %4414 = vmatmul.mubr.f32.gmra.mxu0 %v4244
  %v4415 = vpop.f32.mrf.mxu0
  %v4416 = vadd.f32 %v4225, %v4415
  %v4417 = vpop.f32.mrf.mxu0
  %4418 = vmatprep.mubr.f32.mxu0 0.0
  %4419 = vmatmul.mubr.f32.gmra.mxu0 %v4247
  %v4420 = vpop.f32.mrf.mxu0
  %v4421 = vadd.f32 %v4225, %v4420
  %v4422 = vpop.f32.mrf.mxu0
  %4423 = vmatprep.mubr.f32.mxu0 0.0
  %4424 = vmatmul.mubr.f32.gmra.mxu0 %v4250
  %v4425 = vpop.f32.mrf.mxu0
  %v4426 = vadd.f32 %v4225, %v4425
  %v4427 = vpop.f32.mrf.mxu0
  %4428 = vmatprep.mubr.f32.mxu0 0.0
  %4429 = vmatmul.mubr.f32.gmra.mxu0 %v4253
  %v4430 = vpop.f32.mrf.mxu0
  %v4431 = vadd.f32 %v4225, %v4430
  %v4432 = vpop.f32.mrf.mxu0
  %4433 = vmatprep.mubr.f32.mxu0 0.0
  %4434 = vmatmul.mubr.f32.gmra.mxu0 %v4256
  %v4435 = vpop.f32.mrf.mxu0
  %v4436 = vadd.f32 %v4225, %v4435
  %v4437 = vpop.f32.mrf.mxu0
  %4438 = vmatprep.mubr.f32.mxu0 0.0
  %4439 = vmatmul.mubr.f32.gmra.mxu0 %v4259
  %v4440 = vpop.f32.mrf.mxu0
  %v4441 = vadd.f32 %v4225, %v4440
  %v4442 = vpop.f32.mrf.mxu0
  %4443 = vmatprep.mubr.f32.mxu0 0.0
  %4444 = vmatmul.mubr.f32.gmra.mxu0 %v4262
  %v4445 = vpop.f32.mrf.mxu0
  %v4446 = vadd.f32 %v4225, %v4445
  %v4447 = vpop.f32.mrf.mxu0
  %4448 = vmatprep.mubr.f32.mxu0 0.0
  %4449 = vmatmul.mubr.f32.gmra.mxu0 %v4265
  %v4450 = vpop.f32.mrf.mxu0
  %v4451 = vadd.f32 %v4225, %v4450
  %v4452 = vpop.f32.mrf.mxu0
  %4453 = vmatprep.mubr.f32.mxu0 0.0
  %4454 = vmatmul.mubr.f32.gmra.mxu0 %v4268
  %v4455 = vpop.f32.mrf.mxu0
  %v4456 = vadd.f32 %v4225, %v4455
  %v4457 = vpop.f32.mrf.mxu0
  %4458 = vmatprep.mubr.f32.mxu0 0.0
  %4459 = vmatmul.mubr.f32.gmra.mxu0 %v4271
  %v4460 = vpop.f32.mrf.mxu0
  %v4461 = vadd.f32 %v4225, %v4460
  %v4462 = vpop.f32.mrf.mxu0
  %4463 = vmatprep.mubr.f32.mxu0 0.0
  %4464 = vmatmul.mubr.f32.gmra.mxu0 %v4274
  %v4465 = vpop.f32.mrf.mxu0
  %v4466 = vadd.f32 %v4225, %v4465
  %v4467 = vpop.f32.mrf.mxu0
  %4468 = vmatprep.mubr.f32.mxu0 0.0
  %4469 = vmatmul.mubr.f32.gmra.mxu0 %v4277
  %v4470 = vpop.f32.mrf.mxu0
  %v4471 = vadd.f32 %v4225, %v4470
  %v4472 = vpop.f32.mrf.mxu0
  %4473 = vmatprep.mubr.f32.mxu0 0.0
  %4474 = vmatmul.mubr.f32.gmra.mxu0 %v4280
  %v4475 = vpop.f32.mrf.mxu0
  %v4476 = vadd.f32 %v4225, %v4475
  %v4477 = vpop.f32.mrf.mxu0
  %4478 = vmatprep.mubr.f32.mxu0 0.0
  %4479 = vmatmul.mubr.f32.gmra.mxu0 %v4283
  %v4480 = vpop.f32.mrf.mxu0
  %v4481 = vadd.f32 %v4225, %v4480
  %v4482 = vpop.f32.mrf.mxu0
  %4483 = vmatprep.mubr.f32.mxu0 0.0
  %4484 = vmatmul.mubr.f32.gmra.mxu0 %v4286
  %v4485 = vpop.f32.mrf.mxu0
  %v4486 = vadd.f32 %v4225, %v4485
  %v4487 = vpop.f32.mrf.mxu0
  %4488 = vmatprep.mubr.f32.mxu0 0.0
  %4489 = vmatmul.mubr.f32.gmra.mxu0 %v4289
  %v4490 = vpop.f32.mrf.mxu0
  %v4491 = vadd.f32 %v4225, %v4490
  %v4492 = vpop.f32.mrf.mxu0
  %4493 = vmatprep.mubr.f32.mxu0 0.0
  %4494 = vmatmul.mubr.f32.gmra.mxu0 %v4292
  %v4495 = vpop.f32.mrf.mxu0
  %v4496 = vadd.f32 %v4225, %v4495
  %v4497 = vpop.f32.mrf.mxu0
  %4498 = vmatprep.mubr.f32.mxu0 0.0
  %4499 = vmatmul.mubr.f32.gmra.mxu0 %v4295
  %v4500 = vpop.f32.mrf.mxu0
  %v4501 = vadd.f32 %v4225, %v4500
  %v4502 = vpop.f32.mrf.mxu0
  %4503 = vmatprep.mubr.f32.mxu0 0.0
  %4504 = vmatmul.mubr.f32.gmra.mxu0 %v4298
  %v4505 = vpop.f32.mrf.mxu0
  %v4506 = vadd.f32 %v4225, %v4505
  %v4507 = vpop.f32.mrf.mxu0
  %4508 = vmatprep.mubr.f32.mxu0 0.0
  %4509 = vmatmul.mubr.f32.gmra.mxu0 %v4301
  %v4510 = vpop.f32.mrf.mxu0
  %v4511 = vadd.f32 %v4225, %v4510
  %v4512 = vpop.f32.mrf.mxu0
  %4513 = vmatprep.mubr.f32.mxu0 0.0
  %4514 = vmatmul.mubr.f32.gmra.mxu0 %v4304
  %v4515 = vpop.f32.mrf.mxu0
  %v4516 = vadd.f32 %v4225, %v4515
  %v4517 = vpop.f32.mrf.mxu0
  %4518 = vmatprep.mubr.f32.mxu0 0.0
  %4519 = vmatmul.mubr.f32.gmra.mxu0 %v4307
  %v4520 = vpop.f32.mrf.mxu0
  %v4521 = vadd.f32 %v4225, %v4520
  %v4522 = vpop.f32.mrf.mxu0
  %4523 = vmatprep.mubr.f32.mxu0 0.0
  %4524 = vmatmul.mubr.f32.gmra.mxu0 %v4310
  %v4525 = vpop.f32.mrf.mxu0
  %v4526 = vadd.f32 %v4225, %v4525
  %v4527 = vpop.f32.mrf.mxu0
  %4528 = vmatprep.mubr.f32.mxu0 0.0
  %4529 = vmatmul.mubr.f32.gmra.mxu0 %v4313
  %v4530 = vpop.f32.mrf.mxu0
  %v4531 = vadd.f32 %v4225, %v4530
  %v4532 = vpop.f32.mrf.mxu0
  %4533 = vmatprep.mubr.f32.mxu0 0.0
  %4534 = vmatmul.mubr.f32.gmra.mxu0 %v4316
  %v4535 = vpop.f32.mrf.mxu0
  %v4536 = vadd.f32 %v4225, %v4535
  %v4537 = vpop.f32.mrf.mxu0
  %4538 = vmatprep.mubr.f32.mxu0 0.0
  %4539 = vmatmul.mubr.f32.gmra.mxu0 %v4319
  %v4540 = vpop.f32.mrf.mxu0
  %v4541 = vadd.f32 %v4225, %v4540
  %v4542 = vpop.f32.mrf.mxu0
  %4543 = vmatprep.mubr.f32.mxu0 0.0
  %4544 = vmatmul.mubr.f32.gmra.mxu0 %v4322
  %v4545 = vpop.f32.mrf.mxu0
  %v4546 = vadd.f32 %v4225, %v4545
  %v4547 = vpop.f32.mrf.mxu0
  %4548 = vdwg.mxu0
  %v4549 = vxor.u32 %v4391, 2147483648
  %v4550 = vxor.u32 %v4396, 2147483648
  %v4551 = vxor.u32 %v4401, 2147483648
  %v4552 = vxor.u32 %v4406, 2147483648
  %v4553 = vxor.u32 %v4411, 2147483648
  %v4554 = vxor.u32 %v4416, 2147483648
  %v4555 = vxor.u32 %v4421, 2147483648
  %v4556 = vxor.u32 %v4426, 2147483648
  %v4557 = vxor.u32 %v4431, 2147483648
  %v4558 = vxor.u32 %v4436, 2147483648
  %v4559 = vxor.u32 %v4441, 2147483648
  %v4560 = vxor.u32 %v4446, 2147483648
  %v4561 = vxor.u32 %v4451, 2147483648
  %v4562 = vxor.u32 %v4456, 2147483648
  %v4563 = vxor.u32 %v4461, 2147483648
  %v4564 = vxor.u32 %v4466, 2147483648
  %v4565 = vxor.u32 %v4471, 2147483648
  %v4566 = vxor.u32 %v4476, 2147483648
  %v4567 = vxor.u32 %v4481, 2147483648
  %v4568 = vxor.u32 %v4486, 2147483648
  %v4569 = vxor.u32 %v4491, 2147483648
  %v4570 = vxor.u32 %v4496, 2147483648
  %v4571 = vxor.u32 %v4501, 2147483648
  %v4572 = vxor.u32 %v4506, 2147483648
  %v4573 = vxor.u32 %v4511, 2147483648
  %v4574 = vxor.u32 %v4516, 2147483648
  %v4575 = vxor.u32 %v4521, 2147483648
  %v4576 = vxor.u32 %v4526, 2147483648
  %v4577 = vxor.u32 %v4531, 2147483648
  %v4578 = vxor.u32 %v4536, 2147483648
  %v4579 = vxor.u32 %v4541, 2147483648
  %v4580 = vxor.u32 %v4546, 2147483648
  %v4581 = vmul.f32 %v4549, 1.442695
  %v4582 = vpow.pop %v4581
  %v4583 = vmul.f32 %v4550, 1.442695
  %v4584 = vpow.pop %v4583
  %v4585 = vmul.f32 %v4551, 1.442695
  %v4586 = vpow.pop %v4585
  %v4587 = vmul.f32 %v4552, 1.442695
  %v4588 = vpow.pop %v4587
  %v4589 = vmul.f32 %v4553, 1.442695
  %v4590 = vpow.pop %v4589
  %v4591 = vmul.f32 %v4554, 1.442695
  %v4592 = vpow.pop %v4591
  %v4593 = vmul.f32 %v4555, 1.442695
  %v4594 = vpow.pop %v4593
  %v4595 = vmul.f32 %v4556, 1.442695
  %v4596 = vpow.pop %v4595
  %v4597 = vmul.f32 %v4557, 1.442695
  %v4598 = vpow.pop %v4597
  %v4599 = vmul.f32 %v4558, 1.442695
  %v4600 = vpow.pop %v4599
  %v4601 = vmul.f32 %v4559, 1.442695
  %v4602 = vpow.pop %v4601
  %v4603 = vmul.f32 %v4560, 1.442695
  %v4604 = vpow.pop %v4603
  %v4605 = vmul.f32 %v4561, 1.442695
  %v4606 = vpow.pop %v4605
  %v4607 = vmul.f32 %v4562, 1.442695
  %v4608 = vpow.pop %v4607
  %v4609 = vmul.f32 %v4563, 1.442695
  %v4610 = vpow.pop %v4609
  %v4611 = vmul.f32 %v4564, 1.442695
  %v4612 = vpow.pop %v4611
  %v4613 = vmul.f32 %v4565, 1.442695
  %v4614 = vpow.pop %v4613
  %v4615 = vmul.f32 %v4566, 1.442695
  %v4616 = vpow.pop %v4615
  %v4617 = vmul.f32 %v4567, 1.442695
  %v4618 = vpow.pop %v4617
  %v4619 = vmul.f32 %v4568, 1.442695
  %v4620 = vpow.pop %v4619
  %v4621 = vmul.f32 %v4569, 1.442695
  %v4622 = vpow.pop %v4621
  %v4623 = vmul.f32 %v4570, 1.442695
  %v4624 = vpow.pop %v4623
  %v4625 = vmul.f32 %v4571, 1.442695
  %v4626 = vpow.pop %v4625
  %v4627 = vmul.f32 %v4572, 1.442695
  %v4628 = vpow.pop %v4627
  %v4629 = vmul.f32 %v4573, 1.442695
  %v4630 = vpow.pop %v4629
  %v4631 = vmul.f32 %v4574, 1.442695
  %v4632 = vpow.pop %v4631
  %v4633 = vmul.f32 %v4575, 1.442695
  %v4634 = vpow.pop %v4633
  %v4635 = vmul.f32 %v4576, 1.442695
  %v4636 = vpow.pop %v4635
  %v4637 = vmul.f32 %v4577, 1.442695
  %v4638 = vpow.pop %v4637
  %v4639 = vmul.f32 %v4578, 1.442695
  %v4640 = vpow.pop %v4639
  %v4641 = vmul.f32 %v4579, 1.442695
  %v4642 = vpow.pop %v4641
  %v4643 = vmul.f32 %v4580, 1.442695
  %v4644 = vpow.pop %v4643
  %v4645 = vadd.f32 %v4582, 1.0
  %v4646 = vadd.f32 %v4584, 1.0
  %v4647 = vadd.f32 %v4586, 1.0
  %v4648 = vadd.f32 %v4588, 1.0
  %v4649 = vadd.f32 %v4590, 1.0
  %v4650 = vadd.f32 %v4592, 1.0
  %v4651 = vadd.f32 %v4594, 1.0
  %v4652 = vadd.f32 %v4596, 1.0
  %v4653 = vadd.f32 %v4598, 1.0
  %v4654 = vadd.f32 %v4600, 1.0
  %v4655 = vadd.f32 %v4602, 1.0
  %v4656 = vadd.f32 %v4604, 1.0
  %v4657 = vadd.f32 %v4606, 1.0
  %v4658 = vadd.f32 %v4608, 1.0
  %v4659 = vadd.f32 %v4610, 1.0
  %v4660 = vadd.f32 %v4612, 1.0
  %v4661 = vadd.f32 %v4614, 1.0
  %v4662 = vadd.f32 %v4616, 1.0
  %v4663 = vadd.f32 %v4618, 1.0
  %v4664 = vadd.f32 %v4620, 1.0
  %v4665 = vadd.f32 %v4622, 1.0
  %v4666 = vadd.f32 %v4624, 1.0
  %v4667 = vadd.f32 %v4626, 1.0
  %v4668 = vadd.f32 %v4628, 1.0
  %v4669 = vadd.f32 %v4630, 1.0
  %v4670 = vadd.f32 %v4632, 1.0
  %v4671 = vadd.f32 %v4634, 1.0
  %v4672 = vadd.f32 %v4636, 1.0
  %v4673 = vadd.f32 %v4638, 1.0
  %v4674 = vadd.f32 %v4640, 1.0
  %v4675 = vadd.f32 %v4642, 1.0
  %v4676 = vadd.f32 %v4644, 1.0
  %v4677 = vrcp.pop %v4645
  %v4678 = vmul.f32 1.0, %v4677
  %v4679 = vrcp.pop %v4646
  %v4680 = vmul.f32 1.0, %v4679
  %v4681 = vrcp.pop %v4647
  %v4682 = vmul.f32 1.0, %v4681
  %v4683 = vrcp.pop %v4648
  %v4684 = vmul.f32 1.0, %v4683
  %v4685 = vrcp.pop %v4649
  %v4686 = vmul.f32 1.0, %v4685
  %v4687 = vrcp.pop %v4650
  %v4688 = vmul.f32 1.0, %v4687
  %v4689 = vrcp.pop %v4651
  %v4690 = vmul.f32 1.0, %v4689
  %v4691 = vrcp.pop %v4652
  %v4692 = vmul.f32 1.0, %v4691
  %v4693 = vrcp.pop %v4653
  %v4694 = vmul.f32 1.0, %v4693
  %v4695 = vrcp.pop %v4654
  %v4696 = vmul.f32 1.0, %v4695
  %v4697 = vrcp.pop %v4655
  %v4698 = vmul.f32 1.0, %v4697
  %v4699 = vrcp.pop %v4656
  %v4700 = vmul.f32 1.0, %v4699
  %v4701 = vrcp.pop %v4657
  %v4702 = vmul.f32 1.0, %v4701
  %v4703 = vrcp.pop %v4658
  %v4704 = vmul.f32 1.0, %v4703
  %v4705 = vrcp.pop %v4659
  %v4706 = vmul.f32 1.0, %v4705
  %v4707 = vrcp.pop %v4660
  %v4708 = vmul.f32 1.0, %v4707
  %v4709 = vrcp.pop %v4661
  %v4710 = vmul.f32 1.0, %v4709
  %v4711 = vrcp.pop %v4662
  %v4712 = vmul.f32 1.0, %v4711
  %v4713 = vrcp.pop %v4663
  %v4714 = vmul.f32 1.0, %v4713
  %v4715 = vrcp.pop %v4664
  %v4716 = vmul.f32 1.0, %v4715
  %v4717 = vrcp.pop %v4665
  %v4718 = vmul.f32 1.0, %v4717
  %v4719 = vrcp.pop %v4666
  %v4720 = vmul.f32 1.0, %v4719
  %v4721 = vrcp.pop %v4667
  %v4722 = vmul.f32 1.0, %v4721
  %v4723 = vrcp.pop %v4668
  %v4724 = vmul.f32 1.0, %v4723
  %v4725 = vrcp.pop %v4669
  %v4726 = vmul.f32 1.0, %v4725
  %v4727 = vrcp.pop %v4670
  %v4728 = vmul.f32 1.0, %v4727
  %v4729 = vrcp.pop %v4671
  %v4730 = vmul.f32 1.0, %v4729
  %v4731 = vrcp.pop %v4672
  %v4732 = vmul.f32 1.0, %v4731
  %v4733 = vrcp.pop %v4673
  %v4734 = vmul.f32 1.0, %v4733
  %v4735 = vrcp.pop %v4674
  %v4736 = vmul.f32 1.0, %v4735
  %v4737 = vrcp.pop %v4675
  %v4738 = vmul.f32 1.0, %v4737
  %v4739 = vrcp.pop %v4676
  %v4740 = vmul.f32 1.0, %v4739
  %v4741 = vmul.f32 %v4391, %v4678
  %v4742 = vmul.f32 %v4396, %v4680
  %v4743 = vmul.f32 %v4401, %v4682
  %v4744 = vmul.f32 %v4406, %v4684
  %v4745 = vmul.f32 %v4411, %v4686
  %v4746 = vmul.f32 %v4416, %v4688
  %v4747 = vmul.f32 %v4421, %v4690
  %v4748 = vmul.f32 %v4426, %v4692
  %v4749 = vmul.f32 %v4431, %v4694
  %v4750 = vmul.f32 %v4436, %v4696
  %v4751 = vmul.f32 %v4441, %v4698
  %v4752 = vmul.f32 %v4446, %v4700
  %v4753 = vmul.f32 %v4451, %v4702
  %v4754 = vmul.f32 %v4456, %v4704
  %v4755 = vmul.f32 %v4461, %v4706
  %v4756 = vmul.f32 %v4466, %v4708
  %v4757 = vmul.f32 %v4471, %v4710
  %v4758 = vmul.f32 %v4476, %v4712
  %v4759 = vmul.f32 %v4481, %v4714
  %v4760 = vmul.f32 %v4486, %v4716
  %v4761 = vmul.f32 %v4491, %v4718
  %v4762 = vmul.f32 %v4496, %v4720
  %v4763 = vmul.f32 %v4501, %v4722
  %v4764 = vmul.f32 %v4506, %v4724
  %v4765 = vmul.f32 %v4511, %v4726
  %v4766 = vmul.f32 %v4516, %v4728
  %v4767 = vmul.f32 %v4521, %v4730
  %v4768 = vmul.f32 %v4526, %v4732
  %v4769 = vmul.f32 %v4531, %v4734
  %v4770 = vmul.f32 %v4536, %v4736
  %v4771 = vmul.f32 %v4541, %v4738
  %v4772 = vmul.f32 %v4546, %v4740
  %v4773 = vld [vmem:[%s6] sm:$0xff]
  %v4774 = vld [vmem:[%s6 + $0x8] sm:$0xff]
  %v4775 = vld [vmem:[%s6 + $0x10] sm:$0xff]
  %v4776 = vld [vmem:[%s6 + $0x18] sm:$0xff]
  %v4777 = vld [vmem:[%s7] sm:$0x1]
  %v4779 = vlaneseq
  %v4780 = vshrl.u32 %v4779, 7
  %v4781 = vsub.s32 0, %v4780
  %v4782 = vrot.slane %v4777, %v4781
  %vm4784 = vcmask 261120
  %v4786 = vsel %vm4784, %v4741, 0
  %v4789 = vsel %vm4784, %v4742, 0
  %v4792 = vsel %vm4784, %v4743, 0
  %v4795 = vsel %vm4784, %v4744, 0
  %v4798 = vsel %vm4784, %v4745, 0
  %v4801 = vsel %vm4784, %v4746, 0
  %v4804 = vsel %vm4784, %v4747, 0
  %v4807 = vsel %vm4784, %v4748, 0
  %v4810 = vsel %vm4784, %v4749, 0
  %v4813 = vsel %vm4784, %v4750, 0
  %v4816 = vsel %vm4784, %v4751, 0
  %v4819 = vsel %vm4784, %v4752, 0
  %v4822 = vsel %vm4784, %v4753, 0
  %v4825 = vsel %vm4784, %v4754, 0
  %v4828 = vsel %vm4784, %v4755, 0
  %v4831 = vsel %vm4784, %v4756, 0
  %v4834 = vsel %vm4784, %v4757, 0
  %v4837 = vsel %vm4784, %v4758, 0
  %v4840 = vsel %vm4784, %v4759, 0
  %v4843 = vsel %vm4784, %v4760, 0
  %v4846 = vsel %vm4784, %v4761, 0
  %v4849 = vsel %vm4784, %v4762, 0
  %v4852 = vsel %vm4784, %v4763, 0
  %v4855 = vsel %vm4784, %v4764, 0
  %v4858 = vsel %vm4784, %v4765, 0
  %v4861 = vsel %vm4784, %v4766, 0
  %v4864 = vsel %vm4784, %v4767, 0
  %v4867 = vsel %vm4784, %v4768, 0
  %v4870 = vsel %vm4784, %v4769, 0
  %v4873 = vsel %vm4784, %v4770, 0
  %v4876 = vsel %vm4784, %v4771, 0
  %v4879 = vsel %vm4784, %v4772, 0
  %4881 = vmatprep.subr.mxu0 0.0
  %4882 = vmatpush1.msra.mxu0 0.0
  %4883 = vmatprep.subr.mxu0 0.0
  %4884 = vmatpush1.msra.mxu0 0.0
  %4885 = vmatprep.subr.mxu0 0.0
  %4886 = vmatpush1.msra.mxu0 0.0
  %4887 = vmatprep.subr.mxu0 0.0
  %4888 = vmatpush1.msra.mxu0 0.0
  %4889 = vmatprep.subr.mxu0 0.0
  %4890 = vmatpush1.msra.mxu0 0.0
  %4891 = vmatprep.subr.mxu0 0.0
  %4892 = vmatpush1.msra.mxu0 0.0
  %4893 = vmatprep.subr.mxu0 0.0
  %4894 = vmatpush1.msra.mxu0 0.0
  %4895 = vmatprep.subr.mxu0 0.0
  %4896 = vmatpush1.msra.mxu0 0.0
  %4897 = vmatprep.subr.mxu0 0.0
  %4898 = vmatpush1.msra.mxu0 0.0
  %4899 = vmatprep.subr.mxu0 0.0
  %4900 = vmatpush1.msra.mxu0 0.0
  %4901 = vmatprep.subr.mxu0 0.0
  %4902 = vmatpush1.msra.mxu0 0.0
  %4903 = vmatprep.subr.mxu0 0.0
  %4904 = vmatpush1.msra.mxu0 0.0
  %4905 = vmatprep.subr.mxu0 0.0
  %4906 = vmatpush1.msra.mxu0 %v4776
  %4907 = vmatprep.subr.mxu0 0.0
  %4908 = vmatpush1.msra.mxu0 %v4775
  %4909 = vmatprep.subr.mxu0 0.0
  %4910 = vmatpush1.msra.mxu0 %v4774
  %4911 = vmatprep.subr.mxu0 0.0
  %4912 = vmatpush1.msra.mxu0 %v4773
  %4913 = vmatprep.subr.mxu0 0.0
  %4914 = vmatpush2.msra.mxu0 0.0
  %4915 = vmatprep.subr.mxu0 0.0
  %4916 = vmatpush2.msra.mxu0 0.0
  %4917 = vmatprep.subr.mxu0 0.0
  %4918 = vmatpush2.msra.mxu0 0.0
  %4919 = vmatprep.subr.mxu0 0.0
  %4920 = vmatpush2.msra.mxu0 0.0
  %4921 = vmatprep.subr.mxu0 0.0
  %4922 = vmatpush2.msra.mxu0 0.0
  %4923 = vmatprep.subr.mxu0 0.0
  %4924 = vmatpush2.msra.mxu0 0.0
  %4925 = vmatprep.subr.mxu0 0.0
  %4926 = vmatpush2.msra.mxu0 0.0
  %4927 = vmatprep.subr.mxu0 0.0
  %4928 = vmatpush2.msra.mxu0 0.0
  %4929 = vmatprep.subr.mxu0 0.0
  %4930 = vmatpush2.msra.mxu0 0.0
  %4931 = vmatprep.subr.mxu0 0.0
  %4932 = vmatpush2.msra.mxu0 0.0
  %4933 = vmatprep.subr.mxu0 0.0
  %4934 = vmatpush2.msra.mxu0 0.0
  %4935 = vmatprep.subr.mxu0 0.0
  %4936 = vmatpush2.msra.mxu0 0.0
  %4937 = vmatprep.subr.mxu0 0.0
  %4938 = vmatpush2.msra.mxu0 0.0
  %4939 = vmatprep.subr.mxu0 0.0
  %4940 = vmatpush2.msra.mxu0 0.0
  %4941 = vmatprep.subr.mxu0 0.0
  %4942 = vmatpush2.msra.mxu0 0.0
  %4943 = vmatprep.subr.mxu0 0.0
  %4944 = vmatpush2.msra.mxu0 0.0
  %4945 = vmatprep.mubr.f32.mxu0 0.0
  %4946 = vmatmul.mubr.f32.gmra.mxu0 %v4786
  %v4947 = vpop.f32.mrf.mxu0
  %v4948 = vadd.f32 %v4782, %v4947
  %v4949 = vpop.f32.mrf.mxu0
  %4950 = vmatprep.mubr.f32.mxu0 0.0
  %4951 = vmatmul.mubr.f32.gmra.mxu0 %v4789
  %v4952 = vpop.f32.mrf.mxu0
  %v4953 = vadd.f32 %v4782, %v4952
  %v4954 = vpop.f32.mrf.mxu0
  %4955 = vmatprep.mubr.f32.mxu0 0.0
  %4956 = vmatmul.mubr.f32.gmra.mxu0 %v4792
  %v4957 = vpop.f32.mrf.mxu0
  %v4958 = vadd.f32 %v4782, %v4957
  %v4959 = vpop.f32.mrf.mxu0
  %4960 = vmatprep.mubr.f32.mxu0 0.0
  %4961 = vmatmul.mubr.f32.gmra.mxu0 %v4795
  %v4962 = vpop.f32.mrf.mxu0
  %v4963 = vadd.f32 %v4782, %v4962
  %v4964 = vpop.f32.mrf.mxu0
  %4965 = vmatprep.mubr.f32.mxu0 0.0
  %4966 = vmatmul.mubr.f32.gmra.mxu0 %v4798
  %v4967 = vpop.f32.mrf.mxu0
  %v4968 = vadd.f32 %v4782, %v4967
  %v4969 = vpop.f32.mrf.mxu0
  %4970 = vmatprep.mubr.f32.mxu0 0.0
  %4971 = vmatmul.mubr.f32.gmra.mxu0 %v4801
  %v4972 = vpop.f32.mrf.mxu0
  %v4973 = vadd.f32 %v4782, %v4972
  %v4974 = vpop.f32.mrf.mxu0
  %4975 = vmatprep.mubr.f32.mxu0 0.0
  %4976 = vmatmul.mubr.f32.gmra.mxu0 %v4804
  %v4977 = vpop.f32.mrf.mxu0
  %v4978 = vadd.f32 %v4782, %v4977
  %v4979 = vpop.f32.mrf.mxu0
  %4980 = vmatprep.mubr.f32.mxu0 0.0
  %4981 = vmatmul.mubr.f32.gmra.mxu0 %v4807
  %v4982 = vpop.f32.mrf.mxu0
  %v4983 = vadd.f32 %v4782, %v4982
  %v4984 = vpop.f32.mrf.mxu0
  %4985 = vmatprep.mubr.f32.mxu0 0.0
  %4986 = vmatmul.mubr.f32.gmra.mxu0 %v4810
  %v4987 = vpop.f32.mrf.mxu0
  %v4988 = vadd.f32 %v4782, %v4987
  %v4989 = vpop.f32.mrf.mxu0
  %4990 = vmatprep.mubr.f32.mxu0 0.0
  %4991 = vmatmul.mubr.f32.gmra.mxu0 %v4813
  %v4992 = vpop.f32.mrf.mxu0
  %v4993 = vadd.f32 %v4782, %v4992
  %v4994 = vpop.f32.mrf.mxu0
  %4995 = vmatprep.mubr.f32.mxu0 0.0
  %4996 = vmatmul.mubr.f32.gmra.mxu0 %v4816
  %v4997 = vpop.f32.mrf.mxu0
  %v4998 = vadd.f32 %v4782, %v4997
  %v4999 = vpop.f32.mrf.mxu0
  %5000 = vmatprep.mubr.f32.mxu0 0.0
  %5001 = vmatmul.mubr.f32.gmra.mxu0 %v4819
  %v5002 = vpop.f32.mrf.mxu0
  %v5003 = vadd.f32 %v4782, %v5002
  %v5004 = vpop.f32.mrf.mxu0
  %5005 = vmatprep.mubr.f32.mxu0 0.0
  %5006 = vmatmul.mubr.f32.gmra.mxu0 %v4822
  %v5007 = vpop.f32.mrf.mxu0
  %v5008 = vadd.f32 %v4782, %v5007
  %v5009 = vpop.f32.mrf.mxu0
  %5010 = vmatprep.mubr.f32.mxu0 0.0
  %5011 = vmatmul.mubr.f32.gmra.mxu0 %v4825
  %v5012 = vpop.f32.mrf.mxu0
  %v5013 = vadd.f32 %v4782, %v5012
  %v5014 = vpop.f32.mrf.mxu0
  %5015 = vmatprep.mubr.f32.mxu0 0.0
  %5016 = vmatmul.mubr.f32.gmra.mxu0 %v4828
  %v5017 = vpop.f32.mrf.mxu0
  %v5018 = vadd.f32 %v4782, %v5017
  %v5019 = vpop.f32.mrf.mxu0
  %5020 = vmatprep.mubr.f32.mxu0 0.0
  %5021 = vmatmul.mubr.f32.gmra.mxu0 %v4831
  %v5022 = vpop.f32.mrf.mxu0
  %v5023 = vadd.f32 %v4782, %v5022
  %v5024 = vpop.f32.mrf.mxu0
  %5025 = vmatprep.mubr.f32.mxu0 0.0
  %5026 = vmatmul.mubr.f32.gmra.mxu0 %v4834
  %v5027 = vpop.f32.mrf.mxu0
  %v5028 = vadd.f32 %v4782, %v5027
  %v5029 = vpop.f32.mrf.mxu0
  %5030 = vmatprep.mubr.f32.mxu0 0.0
  %5031 = vmatmul.mubr.f32.gmra.mxu0 %v4837
  %v5032 = vpop.f32.mrf.mxu0
  %v5033 = vadd.f32 %v4782, %v5032
  %v5034 = vpop.f32.mrf.mxu0
  %5035 = vmatprep.mubr.f32.mxu0 0.0
  %5036 = vmatmul.mubr.f32.gmra.mxu0 %v4840
  %v5037 = vpop.f32.mrf.mxu0
  %v5038 = vadd.f32 %v4782, %v5037
  %v5039 = vpop.f32.mrf.mxu0
  %5040 = vmatprep.mubr.f32.mxu0 0.0
  %5041 = vmatmul.mubr.f32.gmra.mxu0 %v4843
  %v5042 = vpop.f32.mrf.mxu0
  %v5043 = vadd.f32 %v4782, %v5042
  %v5044 = vpop.f32.mrf.mxu0
  %5045 = vmatprep.mubr.f32.mxu0 0.0
  %5046 = vmatmul.mubr.f32.gmra.mxu0 %v4846
  %v5047 = vpop.f32.mrf.mxu0
  %v5048 = vadd.f32 %v4782, %v5047
  %v5049 = vpop.f32.mrf.mxu0
  %5050 = vmatprep.mubr.f32.mxu0 0.0
  %5051 = vmatmul.mubr.f32.gmra.mxu0 %v4849
  %v5052 = vpop.f32.mrf.mxu0
  %v5053 = vadd.f32 %v4782, %v5052
  %v5054 = vpop.f32.mrf.mxu0
  %5055 = vmatprep.mubr.f32.mxu0 0.0
  %5056 = vmatmul.mubr.f32.gmra.mxu0 %v4852
  %v5057 = vpop.f32.mrf.mxu0
  %v5058 = vadd.f32 %v4782, %v5057
  %v5059 = vpop.f32.mrf.mxu0
  %5060 = vmatprep.mubr.f32.mxu0 0.0
  %5061 = vmatmul.mubr.f32.gmra.mxu0 %v4855
  %v5062 = vpop.f32.mrf.mxu0
  %v5063 = vadd.f32 %v4782, %v5062
  %v5064 = vpop.f32.mrf.mxu0
  %5065 = vmatprep.mubr.f32.mxu0 0.0
  %5066 = vmatmul.mubr.f32.gmra.mxu0 %v4858
  %v5067 = vpop.f32.mrf.mxu0
  %v5068 = vadd.f32 %v4782, %v5067
  %v5069 = vpop.f32.mrf.mxu0
  %5070 = vmatprep.mubr.f32.mxu0 0.0
  %5071 = vmatmul.mubr.f32.gmra.mxu0 %v4861
  %v5072 = vpop.f32.mrf.mxu0
  %v5073 = vadd.f32 %v4782, %v5072
  %v5074 = vpop.f32.mrf.mxu0
  %5075 = vmatprep.mubr.f32.mxu0 0.0
  %5076 = vmatmul.mubr.f32.gmra.mxu0 %v4864
  %v5077 = vpop.f32.mrf.mxu0
  %v5078 = vadd.f32 %v4782, %v5077
  %v5079 = vpop.f32.mrf.mxu0
  %5080 = vmatprep.mubr.f32.mxu0 0.0
  %5081 = vmatmul.mubr.f32.gmra.mxu0 %v4867
  %v5082 = vpop.f32.mrf.mxu0
  %v5083 = vadd.f32 %v4782, %v5082
  %v5084 = vpop.f32.mrf.mxu0
  %5085 = vmatprep.mubr.f32.mxu0 0.0
  %5086 = vmatmul.mubr.f32.gmra.mxu0 %v4870
  %v5087 = vpop.f32.mrf.mxu0
  %v5088 = vadd.f32 %v4782, %v5087
  %v5089 = vpop.f32.mrf.mxu0
  %5090 = vmatprep.mubr.f32.mxu0 0.0
  %5091 = vmatmul.mubr.f32.gmra.mxu0 %v4873
  %v5092 = vpop.f32.mrf.mxu0
  %v5093 = vadd.f32 %v4782, %v5092
  %v5094 = vpop.f32.mrf.mxu0
  %5095 = vmatprep.mubr.f32.mxu0 0.0
  %5096 = vmatmul.mubr.f32.gmra.mxu0 %v4876
  %v5097 = vpop.f32.mrf.mxu0
  %v5098 = vadd.f32 %v4782, %v5097
  %v5099 = vpop.f32.mrf.mxu0
  %5100 = vmatprep.mubr.f32.mxu0 0.0
  %5101 = vmatmul.mubr.f32.gmra.mxu0 %v4879
  %v5102 = vpop.f32.mrf.mxu0
  %v5103 = vadd.f32 %v4782, %v5102
  %v5104 = vpop.f32.mrf.mxu0
  %5105 = vdwg.mxu0
  %5107 = vset.pattern.permute.xlu0 0
  %5108 = vperm.xlu0 %5107, %v3435
  %v5109 = vpop.permute.xlu0 %5108
  %5112 = vset.pattern.permute.xlu0 0
  %5113 = vperm.xlu0 %5112, %v3436
  %v5114 = vpop.permute.xlu0 %5113
  %5117 = vset.pattern.permute.xlu0 0
  %5118 = vperm.xlu0 %5117, %v3437
  %v5119 = vpop.permute.xlu0 %5118
  %5122 = vset.pattern.permute.xlu0 0
  %5123 = vperm.xlu0 %5122, %v3438
  %v5124 = vpop.permute.xlu0 %5123
  %5127 = vset.pattern.permute.xlu0 0
  %5128 = vperm.xlu0 %5127, %v3439
  %v5129 = vpop.permute.xlu0 %5128
  %5132 = vset.pattern.permute.xlu0 0
  %5133 = vperm.xlu0 %5132, %v3440
  %v5134 = vpop.permute.xlu0 %5133
  %5137 = vset.pattern.permute.xlu0 0
  %5138 = vperm.xlu0 %5137, %v3441
  %v5139 = vpop.permute.xlu0 %5138
  %5142 = vset.pattern.permute.xlu0 0
  %5143 = vperm.xlu0 %5142, %v3442
  %v5144 = vpop.permute.xlu0 %5143
  %5147 = vset.pattern.permute.xlu0 0
  %5148 = vperm.xlu0 %5147, %v3443
  %v5149 = vpop.permute.xlu0 %5148
  %5152 = vset.pattern.permute.xlu0 0
  %5153 = vperm.xlu0 %5152, %v3444
  %v5154 = vpop.permute.xlu0 %5153
  %5157 = vset.pattern.permute.xlu0 0
  %5158 = vperm.xlu0 %5157, %v3445
  %v5159 = vpop.permute.xlu0 %5158
  %5162 = vset.pattern.permute.xlu0 0
  %5163 = vperm.xlu0 %5162, %v3446
  %v5164 = vpop.permute.xlu0 %5163
  %5167 = vset.pattern.permute.xlu0 0
  %5168 = vperm.xlu0 %5167, %v3447
  %v5169 = vpop.permute.xlu0 %5168
  %5172 = vset.pattern.permute.xlu0 0
  %5173 = vperm.xlu0 %5172, %v3448
  %v5174 = vpop.permute.xlu0 %5173
  %5177 = vset.pattern.permute.xlu0 0
  %5178 = vperm.xlu0 %5177, %v3449
  %v5179 = vpop.permute.xlu0 %5178
  %5182 = vset.pattern.permute.xlu0 0
  %5183 = vperm.xlu0 %5182, %v3450
  %v5184 = vpop.permute.xlu0 %5183
  %5187 = vset.pattern.permute.xlu0 0
  %5188 = vperm.xlu0 %5187, %v3451
  %v5189 = vpop.permute.xlu0 %5188
  %5192 = vset.pattern.permute.xlu0 0
  %5193 = vperm.xlu0 %5192, %v3452
  %v5194 = vpop.permute.xlu0 %5193
  %5197 = vset.pattern.permute.xlu0 0
  %5198 = vperm.xlu0 %5197, %v3453
  %v5199 = vpop.permute.xlu0 %5198
  %5202 = vset.pattern.permute.xlu0 0
  %5203 = vperm.xlu0 %5202, %v3454
  %v5204 = vpop.permute.xlu0 %5203
  %5207 = vset.pattern.permute.xlu0 0
  %5208 = vperm.xlu0 %5207, %v3455
  %v5209 = vpop.permute.xlu0 %5208
  %5212 = vset.pattern.permute.xlu0 0
  %5213 = vperm.xlu0 %5212, %v3456
  %v5214 = vpop.permute.xlu0 %5213
  %5217 = vset.pattern.permute.xlu0 0
  %5218 = vperm.xlu0 %5217, %v3457
  %v5219 = vpop.permute.xlu0 %5218
  %5222 = vset.pattern.permute.xlu0 0
  %5223 = vperm.xlu0 %5222, %v3458
  %v5224 = vpop.permute.xlu0 %5223
  %5227 = vset.pattern.permute.xlu0 0
  %5228 = vperm.xlu0 %5227, %v3459
  %v5229 = vpop.permute.xlu0 %5228
  %5232 = vset.pattern.permute.xlu0 0
  %5233 = vperm.xlu0 %5232, %v3460
  %v5234 = vpop.permute.xlu0 %5233
  %5237 = vset.pattern.permute.xlu0 0
  %5238 = vperm.xlu0 %5237, %v3461
  %v5239 = vpop.permute.xlu0 %5238
  %5242 = vset.pattern.permute.xlu0 0
  %5243 = vperm.xlu0 %5242, %v3462
  %v5244 = vpop.permute.xlu0 %5243
  %5247 = vset.pattern.permute.xlu0 0
  %5248 = vperm.xlu0 %5247, %v3463
  %v5249 = vpop.permute.xlu0 %5248
  %5252 = vset.pattern.permute.xlu0 0
  %5253 = vperm.xlu0 %5252, %v3464
  %v5254 = vpop.permute.xlu0 %5253
  %5257 = vset.pattern.permute.xlu0 0
  %5258 = vperm.xlu0 %5257, %v3465
  %v5259 = vpop.permute.xlu0 %5258
  %5262 = vset.pattern.permute.xlu0 0
  %5263 = vperm.xlu0 %5262, %v3466
  %v5264 = vpop.permute.xlu0 %5263
  %v5266 = vmul.f32 %v5109, %v4948
  %v5267 = vmul.f32 %v5114, %v4953
  %v5268 = vmul.f32 %v5119, %v4958
  %v5269 = vmul.f32 %v5124, %v4963
  %v5270 = vmul.f32 %v5129, %v4968
  %v5271 = vmul.f32 %v5134, %v4973
  %v5272 = vmul.f32 %v5139, %v4978
  %v5273 = vmul.f32 %v5144, %v4983
  %v5274 = vmul.f32 %v5149, %v4988
  %v5275 = vmul.f32 %v5154, %v4993
  %v5276 = vmul.f32 %v5159, %v4998
  %v5277 = vmul.f32 %v5164, %v5003
  %v5278 = vmul.f32 %v5169, %v5008
  %v5279 = vmul.f32 %v5174, %v5013
  %v5280 = vmul.f32 %v5179, %v5018
  %v5281 = vmul.f32 %v5184, %v5023
  %v5282 = vmul.f32 %v5189, %v5028
  %v5283 = vmul.f32 %v5194, %v5033
  %v5284 = vmul.f32 %v5199, %v5038
  %v5285 = vmul.f32 %v5204, %v5043
  %v5286 = vmul.f32 %v5209, %v5048
  %v5287 = vmul.f32 %v5214, %v5053
  %v5288 = vmul.f32 %v5219, %v5058
  %v5289 = vmul.f32 %v5224, %v5063
  %v5290 = vmul.f32 %v5229, %v5068
  %v5291 = vmul.f32 %v5234, %v5073
  %v5292 = vmul.f32 %v5239, %v5078
  %v5293 = vmul.f32 %v5244, %v5083
  %v5294 = vmul.f32 %v5249, %v5088
  %v5295 = vmul.f32 %v5254, %v5093
  %v5296 = vmul.f32 %v5259, %v5098
  %v5297 = vmul.f32 %v5264, %v5103
  %5298 = vst.msk [vmem:[%s12] sm:$0xff] %vm4784, %v5266
  %5299 = vst.msk [vmem:[%s12 + $0x8] sm:$0xff] %vm4784, %v5267
  %5300 = vst.msk [vmem:[%s12 + $0x10] sm:$0xff] %vm4784, %v5268
  %5301 = vst.msk [vmem:[%s12 + $0x18] sm:$0xff] %vm4784, %v5269
  %5302 = vst.msk [vmem:[%s12 + $0x20] sm:$0xff] %vm4784, %v5270
  %5303 = vst.msk [vmem:[%s12 + $0x28] sm:$0xff] %vm4784, %v5271
  %5304 = vst.msk [vmem:[%s12 + $0x30] sm:$0xff] %vm4784, %v5272
  %5305 = vst.msk [vmem:[%s12 + $0x38] sm:$0xff] %vm4784, %v5273
  %5306 = vst.msk [vmem:[%s12 + $0x40] sm:$0xff] %vm4784, %v5274
  %5307 = vst.msk [vmem:[%s12 + $0x48] sm:$0xff] %vm4784, %v5275
  %5308 = vst.msk [vmem:[%s12 + $0x50] sm:$0xff] %vm4784, %v5276
  %5309 = vst.msk [vmem:[%s12 + $0x58] sm:$0xff] %vm4784, %v5277
  %5310 = vst.msk [vmem:[%s12 + $0x60] sm:$0xff] %vm4784, %v5278
  %5311 = vst.msk [vmem:[%s12 + $0x68] sm:$0xff] %vm4784, %v5279
  %5312 = vst.msk [vmem:[%s12 + $0x70] sm:$0xff] %vm4784, %v5280
  %5313 = vst.msk [vmem:[%s12 + $0x78] sm:$0xff] %vm4784, %v5281
  %5314 = vst.msk [vmem:[%s12 + $0x80] sm:$0xff] %vm4784, %v5282
  %5315 = vst.msk [vmem:[%s12 + $0x88] sm:$0xff] %vm4784, %v5283
  %5316 = vst.msk [vmem:[%s12 + $0x90] sm:$0xff] %vm4784, %v5284
  %5317 = vst.msk [vmem:[%s12 + $0x98] sm:$0xff] %vm4784, %v5285
  %5318 = vst.msk [vmem:[%s12 + $0xa0] sm:$0xff] %vm4784, %v5286
  %5319 = vst.msk [vmem:[%s12 + $0xa8] sm:$0xff] %vm4784, %v5287
  %5320 = vst.msk [vmem:[%s12 + $0xb0] sm:$0xff] %vm4784, %v5288
  %5321 = vst.msk [vmem:[%s12 + $0xb8] sm:$0xff] %vm4784, %v5289
  %5322 = vst.msk [vmem:[%s12 + $0xc0] sm:$0xff] %vm4784, %v5290
  %5323 = vst.msk [vmem:[%s12 + $0xc8] sm:$0xff] %vm4784, %v5291
  %5324 = vst.msk [vmem:[%s12 + $0xd0] sm:$0xff] %vm4784, %v5292
  %5325 = vst.msk [vmem:[%s12 + $0xd8] sm:$0xff] %vm4784, %v5293
  %5326 = vst.msk [vmem:[%s12 + $0xe0] sm:$0xff] %vm4784, %v5294
  %5327 = vst.msk [vmem:[%s12 + $0xe8] sm:$0xff] %vm4784, %v5295
  %5328 = vst.msk [vmem:[%s12 + $0xf0] sm:$0xff] %vm4784, %v5296
  %5329 = vst.msk [vmem:[%s12 + $0xf8] sm:$0xff] %vm4784, %v5297
  %v5330 = vld [vmem:[%s1] sm:$0xff]
  %v5331 = vld [vmem:[%s1 + $0x8] sm:$0xff]
  %v5332 = vld [vmem:[%s1 + $0x10] sm:$0xff]
  %v5333 = vld [vmem:[%s1 + $0x18] sm:$0xff]
  %v5334 = vld [vmem:[%s1 + $0x20] sm:$0xff]
  %v5335 = vld [vmem:[%s1 + $0x28] sm:$0xff]
  %v5336 = vld [vmem:[%s1 + $0x30] sm:$0xff]
  %v5337 = vld [vmem:[%s1 + $0x38] sm:$0xff]
  %v5338 = vld [vmem:[%s1 + $0x40] sm:$0xff]
  %v5339 = vld [vmem:[%s1 + $0x48] sm:$0xff]
  %v5340 = vld [vmem:[%s1 + $0x50] sm:$0xff]
  %v5341 = vld [vmem:[%s1 + $0x58] sm:$0xff]
  %v5342 = vld [vmem:[%s1 + $0x60] sm:$0xff]
  %v5343 = vld [vmem:[%s1 + $0x68] sm:$0xff]
  %v5344 = vld [vmem:[%s1 + $0x70] sm:$0xff]
  %v5345 = vld [vmem:[%s1 + $0x78] sm:$0xff]
  %v5346 = vld [vmem:[%s1 + $0x80] sm:$0xff]
  %v5347 = vld [vmem:[%s1 + $0x88] sm:$0xff]
  %v5348 = vld [vmem:[%s1 + $0x90] sm:$0xff]
  %v5349 = vld [vmem:[%s1 + $0x98] sm:$0xff]
  %v5350 = vld [vmem:[%s1 + $0xa0] sm:$0xff]
  %v5351 = vld [vmem:[%s1 + $0xa8] sm:$0xff]
  %v5352 = vld [vmem:[%s1 + $0xb0] sm:$0xff]
  %v5353 = vld [vmem:[%s1 + $0xb8] sm:$0xff]
  %v5354 = vld [vmem:[%s1 + $0xc0] sm:$0xff]
  %v5355 = vld [vmem:[%s1 + $0xc8] sm:$0xff]
  %v5356 = vld [vmem:[%s1 + $0xd0] sm:$0xff]
  %v5357 = vld [vmem:[%s1 + $0xd8] sm:$0xff]
  %v5358 = vld [vmem:[%s1 + $0xe0] sm:$0xff]
  %v5359 = vld [vmem:[%s1 + $0xe8] sm:$0xff]
  %v5360 = vld [vmem:[%s1 + $0xf0] sm:$0xff]
  %v5361 = vld [vmem:[%s1 + $0xf8] sm:$0xff]
  %v5362 = vld [vmem:[%s8] sm:$0xff]
  %v5363 = vld [vmem:[%s9] sm:$0x1]
  %v5365 = vlaneseq
  %v5366 = vshrl.u32 %v5365, 7
  %v5367 = vsub.s32 0, %v5366
  %v5368 = vrot.slane %v5363, %v5367
  %vm5370 = vcmask 64512
  %v5372 = vsel %vm5370, %v5330, 0
  %v5375 = vsel %vm5370, %v5331, 0
  %v5378 = vsel %vm5370, %v5332, 0
  %v5381 = vsel %vm5370, %v5333, 0
  %v5384 = vsel %vm5370, %v5334, 0
  %v5387 = vsel %vm5370, %v5335, 0
  %v5390 = vsel %vm5370, %v5336, 0
  %v5393 = vsel %vm5370, %v5337, 0
  %v5396 = vsel %vm5370, %v5338, 0
  %v5399 = vsel %vm5370, %v5339, 0
  %v5402 = vsel %vm5370, %v5340, 0
  %v5405 = vsel %vm5370, %v5341, 0
  %v5408 = vsel %vm5370, %v5342, 0
  %v5411 = vsel %vm5370, %v5343, 0
  %v5414 = vsel %vm5370, %v5344, 0
  %v5417 = vsel %vm5370, %v5345, 0
  %v5420 = vsel %vm5370, %v5346, 0
  %v5423 = vsel %vm5370, %v5347, 0
  %v5426 = vsel %vm5370, %v5348, 0
  %v5429 = vsel %vm5370, %v5349, 0
  %v5432 = vsel %vm5370, %v5350, 0
  %v5435 = vsel %vm5370, %v5351, 0
  %v5438 = vsel %vm5370, %v5352, 0
  %v5441 = vsel %vm5370, %v5353, 0
  %v5444 = vsel %vm5370, %v5354, 0
  %v5447 = vsel %vm5370, %v5355, 0
  %v5450 = vsel %vm5370, %v5356, 0
  %v5453 = vsel %vm5370, %v5357, 0
  %v5456 = vsel %vm5370, %v5358, 0
  %v5459 = vsel %vm5370, %v5359, 0
  %v5462 = vsel %vm5370, %v5360, 0
  %v5465 = vsel %vm5370, %v5361, 0
  %5467 = vmatprep.subr.mxu0 0.0
  %5468 = vmatpush1.msra.mxu0 0.0
  %5469 = vmatprep.subr.mxu0 0.0
  %5470 = vmatpush1.msra.mxu0 0.0
  %5471 = vmatprep.subr.mxu0 0.0
  %5472 = vmatpush1.msra.mxu0 0.0
  %5473 = vmatprep.subr.mxu0 0.0
  %5474 = vmatpush1.msra.mxu0 0.0
  %5475 = vmatprep.subr.mxu0 0.0
  %5476 = vmatpush1.msra.mxu0 0.0
  %5477 = vmatprep.subr.mxu0 0.0
  %5478 = vmatpush1.msra.mxu0 0.0
  %5479 = vmatprep.subr.mxu0 0.0
  %5480 = vmatpush1.msra.mxu0 0.0
  %5481 = vmatprep.subr.mxu0 0.0
  %5482 = vmatpush1.msra.mxu0 0.0
  %5483 = vmatprep.subr.mxu0 0.0
  %5484 = vmatpush1.msra.mxu0 0.0
  %5485 = vmatprep.subr.mxu0 0.0
  %5486 = vmatpush1.msra.mxu0 0.0
  %5487 = vmatprep.subr.mxu0 0.0
  %5488 = vmatpush1.msra.mxu0 0.0
  %5489 = vmatprep.subr.mxu0 0.0
  %5490 = vmatpush1.msra.mxu0 0.0
  %5491 = vmatprep.subr.mxu0 0.0
  %5492 = vmatpush1.msra.mxu0 0.0
  %5493 = vmatprep.subr.mxu0 0.0
  %5494 = vmatpush1.msra.mxu0 0.0
  %5495 = vmatprep.subr.mxu0 0.0
  %5496 = vmatpush1.msra.mxu0 0.0
  %5497 = vmatprep.subr.mxu0 0.0
  %5498 = vmatpush1.msra.mxu0 %v5362
  %5499 = vmatprep.subr.mxu0 0.0
  %5500 = vmatpush2.msra.mxu0 0.0
  %5501 = vmatprep.subr.mxu0 0.0
  %5502 = vmatpush2.msra.mxu0 0.0
  %5503 = vmatprep.subr.mxu0 0.0
  %5504 = vmatpush2.msra.mxu0 0.0
  %5505 = vmatprep.subr.mxu0 0.0
  %5506 = vmatpush2.msra.mxu0 0.0
  %5507 = vmatprep.subr.mxu0 0.0
  %5508 = vmatpush2.msra.mxu0 0.0
  %5509 = vmatprep.subr.mxu0 0.0
  %5510 = vmatpush2.msra.mxu0 0.0
  %5511 = vmatprep.subr.mxu0 0.0
  %5512 = vmatpush2.msra.mxu0 0.0
  %5513 = vmatprep.subr.mxu0 0.0
  %5514 = vmatpush2.msra.mxu0 0.0
  %5515 = vmatprep.subr.mxu0 0.0
  %5516 = vmatpush2.msra.mxu0 0.0
  %5517 = vmatprep.subr.mxu0 0.0
  %5518 = vmatpush2.msra.mxu0 0.0
  %5519 = vmatprep.subr.mxu0 0.0
  %5520 = vmatpush2.msra.mxu0 0.0
  %5521 = vmatprep.subr.mxu0 0.0
  %5522 = vmatpush2.msra.mxu0 0.0
  %5523 = vmatprep.subr.mxu0 0.0
  %5524 = vmatpush2.msra.mxu0 0.0
  %5525 = vmatprep.subr.mxu0 0.0
  %5526 = vmatpush2.msra.mxu0 0.0
  %5527 = vmatprep.subr.mxu0 0.0
  %5528 = vmatpush2.msra.mxu0 0.0
  %5529 = vmatprep.subr.mxu0 0.0
  %5530 = vmatpush2.msra.mxu0 0.0
  %5531 = vmatprep.mubr.f32.mxu0 0.0
  %5532 = vmatmul.mubr.f32.gmra.mxu0 %v5372
  %v5533 = vpop.f32.mrf.mxu0
  %v5534 = vadd.f32 %v5368, %v5533
  %v5535 = vpop.f32.mrf.mxu0
  %5536 = vmatprep.mubr.f32.mxu0 0.0
  %5537 = vmatmul.mubr.f32.gmra.mxu0 %v5375
  %v5538 = vpop.f32.mrf.mxu0
  %v5539 = vadd.f32 %v5368, %v5538
  %v5540 = vpop.f32.mrf.mxu0
  %5541 = vmatprep.mubr.f32.mxu0 0.0
  %5542 = vmatmul.mubr.f32.gmra.mxu0 %v5378
  %v5543 = vpop.f32.mrf.mxu0
  %v5544 = vadd.f32 %v5368, %v5543
  %v5545 = vpop.f32.mrf.mxu0
  %5546 = vmatprep.mubr.f32.mxu0 0.0
  %5547 = vmatmul.mubr.f32.gmra.mxu0 %v5381
  %v5548 = vpop.f32.mrf.mxu0
  %v5549 = vadd.f32 %v5368, %v5548
  %v5550 = vpop.f32.mrf.mxu0
  %5551 = vmatprep.mubr.f32.mxu0 0.0
  %5552 = vmatmul.mubr.f32.gmra.mxu0 %v5384
  %v5553 = vpop.f32.mrf.mxu0
  %v5554 = vadd.f32 %v5368, %v5553
  %v5555 = vpop.f32.mrf.mxu0
  %5556 = vmatprep.mubr.f32.mxu0 0.0
  %5557 = vmatmul.mubr.f32.gmra.mxu0 %v5387
  %v5558 = vpop.f32.mrf.mxu0
  %v5559 = vadd.f32 %v5368, %v5558
  %v5560 = vpop.f32.mrf.mxu0
  %5561 = vmatprep.mubr.f32.mxu0 0.0
  %5562 = vmatmul.mubr.f32.gmra.mxu0 %v5390
  %v5563 = vpop.f32.mrf.mxu0
  %v5564 = vadd.f32 %v5368, %v5563
  %v5565 = vpop.f32.mrf.mxu0
  %5566 = vmatprep.mubr.f32.mxu0 0.0
  %5567 = vmatmul.mubr.f32.gmra.mxu0 %v5393
  %v5568 = vpop.f32.mrf.mxu0
  %v5569 = vadd.f32 %v5368, %v5568
  %v5570 = vpop.f32.mrf.mxu0
  %5571 = vmatprep.mubr.f32.mxu0 0.0
  %5572 = vmatmul.mubr.f32.gmra.mxu0 %v5396
  %v5573 = vpop.f32.mrf.mxu0
  %v5574 = vadd.f32 %v5368, %v5573
  %v5575 = vpop.f32.mrf.mxu0
  %5576 = vmatprep.mubr.f32.mxu0 0.0
  %5577 = vmatmul.mubr.f32.gmra.mxu0 %v5399
  %v5578 = vpop.f32.mrf.mxu0
  %v5579 = vadd.f32 %v5368, %v5578
  %v5580 = vpop.f32.mrf.mxu0
  %5581 = vmatprep.mubr.f32.mxu0 0.0
  %5582 = vmatmul.mubr.f32.gmra.mxu0 %v5402
  %v5583 = vpop.f32.mrf.mxu0
  %v5584 = vadd.f32 %v5368, %v5583
  %v5585 = vpop.f32.mrf.mxu0
  %5586 = vmatprep.mubr.f32.mxu0 0.0
  %5587 = vmatmul.mubr.f32.gmra.mxu0 %v5405
  %v5588 = vpop.f32.mrf.mxu0
  %v5589 = vadd.f32 %v5368, %v5588
  %v5590 = vpop.f32.mrf.mxu0
  %5591 = vmatprep.mubr.f32.mxu0 0.0
  %5592 = vmatmul.mubr.f32.gmra.mxu0 %v5408
  %v5593 = vpop.f32.mrf.mxu0
  %v5594 = vadd.f32 %v5368, %v5593
  %v5595 = vpop.f32.mrf.mxu0
  %5596 = vmatprep.mubr.f32.mxu0 0.0
  %5597 = vmatmul.mubr.f32.gmra.mxu0 %v5411
  %v5598 = vpop.f32.mrf.mxu0
  %v5599 = vadd.f32 %v5368, %v5598
  %v5600 = vpop.f32.mrf.mxu0
  %5601 = vmatprep.mubr.f32.mxu0 0.0
  %5602 = vmatmul.mubr.f32.gmra.mxu0 %v5414
  %v5603 = vpop.f32.mrf.mxu0
  %v5604 = vadd.f32 %v5368, %v5603
  %v5605 = vpop.f32.mrf.mxu0
  %5606 = vmatprep.mubr.f32.mxu0 0.0
  %5607 = vmatmul.mubr.f32.gmra.mxu0 %v5417
  %v5608 = vpop.f32.mrf.mxu0
  %v5609 = vadd.f32 %v5368, %v5608
  %v5610 = vpop.f32.mrf.mxu0
  %5611 = vmatprep.mubr.f32.mxu0 0.0
  %5612 = vmatmul.mubr.f32.gmra.mxu0 %v5420
  %v5613 = vpop.f32.mrf.mxu0
  %v5614 = vadd.f32 %v5368, %v5613
  %v5615 = vpop.f32.mrf.mxu0
  %5616 = vmatprep.mubr.f32.mxu0 0.0
  %5617 = vmatmul.mubr.f32.gmra.mxu0 %v5423
  %v5618 = vpop.f32.mrf.mxu0
  %v5619 = vadd.f32 %v5368, %v5618
  %v5620 = vpop.f32.mrf.mxu0
  %5621 = vmatprep.mubr.f32.mxu0 0.0
  %5622 = vmatmul.mubr.f32.gmra.mxu0 %v5426
  %v5623 = vpop.f32.mrf.mxu0
  %v5624 = vadd.f32 %v5368, %v5623
  %v5625 = vpop.f32.mrf.mxu0
  %5626 = vmatprep.mubr.f32.mxu0 0.0
  %5627 = vmatmul.mubr.f32.gmra.mxu0 %v5429
  %v5628 = vpop.f32.mrf.mxu0
  %v5629 = vadd.f32 %v5368, %v5628
  %v5630 = vpop.f32.mrf.mxu0
  %5631 = vmatprep.mubr.f32.mxu0 0.0
  %5632 = vmatmul.mubr.f32.gmra.mxu0 %v5432
  %v5633 = vpop.f32.mrf.mxu0
  %v5634 = vadd.f32 %v5368, %v5633
  %v5635 = vpop.f32.mrf.mxu0
  %5636 = vmatprep.mubr.f32.mxu0 0.0
  %5637 = vmatmul.mubr.f32.gmra.mxu0 %v5435
  %v5638 = vpop.f32.mrf.mxu0
  %v5639 = vadd.f32 %v5368, %v5638
  %v5640 = vpop.f32.mrf.mxu0
  %5641 = vmatprep.mubr.f32.mxu0 0.0
  %5642 = vmatmul.mubr.f32.gmra.mxu0 %v5438
  %v5643 = vpop.f32.mrf.mxu0
  %v5644 = vadd.f32 %v5368, %v5643
  %v5645 = vpop.f32.mrf.mxu0
  %5646 = vmatprep.mubr.f32.mxu0 0.0
  %5647 = vmatmul.mubr.f32.gmra.mxu0 %v5441
  %v5648 = vpop.f32.mrf.mxu0
  %v5649 = vadd.f32 %v5368, %v5648
  %v5650 = vpop.f32.mrf.mxu0
  %5651 = vmatprep.mubr.f32.mxu0 0.0
  %5652 = vmatmul.mubr.f32.gmra.mxu0 %v5444
  %v5653 = vpop.f32.mrf.mxu0
  %v5654 = vadd.f32 %v5368, %v5653
  %v5655 = vpop.f32.mrf.mxu0
  %5656 = vmatprep.mubr.f32.mxu0 0.0
  %5657 = vmatmul.mubr.f32.gmra.mxu0 %v5447
  %v5658 = vpop.f32.mrf.mxu0
  %v5659 = vadd.f32 %v5368, %v5658
  %v5660 = vpop.f32.mrf.mxu0
  %5661 = vmatprep.mubr.f32.mxu0 0.0
  %5662 = vmatmul.mubr.f32.gmra.mxu0 %v5450
  %v5663 = vpop.f32.mrf.mxu0
  %v5664 = vadd.f32 %v5368, %v5663
  %v5665 = vpop.f32.mrf.mxu0
  %5666 = vmatprep.mubr.f32.mxu0 0.0
  %5667 = vmatmul.mubr.f32.gmra.mxu0 %v5453
  %v5668 = vpop.f32.mrf.mxu0
  %v5669 = vadd.f32 %v5368, %v5668
  %v5670 = vpop.f32.mrf.mxu0
  %5671 = vmatprep.mubr.f32.mxu0 0.0
  %5672 = vmatmul.mubr.f32.gmra.mxu0 %v5456
  %v5673 = vpop.f32.mrf.mxu0
  %v5674 = vadd.f32 %v5368, %v5673
  %v5675 = vpop.f32.mrf.mxu0
  %5676 = vmatprep.mubr.f32.mxu0 0.0
  %5677 = vmatmul.mubr.f32.gmra.mxu0 %v5459
  %v5678 = vpop.f32.mrf.mxu0
  %v5679 = vadd.f32 %v5368, %v5678
  %v5680 = vpop.f32.mrf.mxu0
  %5681 = vmatprep.mubr.f32.mxu0 0.0
  %5682 = vmatmul.mubr.f32.gmra.mxu0 %v5462
  %v5683 = vpop.f32.mrf.mxu0
  %v5684 = vadd.f32 %v5368, %v5683
  %v5685 = vpop.f32.mrf.mxu0
  %5686 = vmatprep.mubr.f32.mxu0 0.0
  %5687 = vmatmul.mubr.f32.gmra.mxu0 %v5465
  %v5688 = vpop.f32.mrf.mxu0
  %v5689 = vadd.f32 %v5368, %v5688
  %v5690 = vpop.f32.mrf.mxu0
  %5691 = vdwg.mxu0
  %v5692 = vxor.u32 %v5534, 2147483648
  %v5693 = vxor.u32 %v5539, 2147483648
  %v5694 = vxor.u32 %v5544, 2147483648
  %v5695 = vxor.u32 %v5549, 2147483648
  %v5696 = vxor.u32 %v5554, 2147483648
  %v5697 = vxor.u32 %v5559, 2147483648
  %v5698 = vxor.u32 %v5564, 2147483648
  %v5699 = vxor.u32 %v5569, 2147483648
  %v5700 = vxor.u32 %v5574, 2147483648
  %v5701 = vxor.u32 %v5579, 2147483648
  %v5702 = vxor.u32 %v5584, 2147483648
  %v5703 = vxor.u32 %v5589, 2147483648
  %v5704 = vxor.u32 %v5594, 2147483648
  %v5705 = vxor.u32 %v5599, 2147483648
  %v5706 = vxor.u32 %v5604, 2147483648
  %v5707 = vxor.u32 %v5609, 2147483648
  %v5708 = vxor.u32 %v5614, 2147483648
  %v5709 = vxor.u32 %v5619, 2147483648
  %v5710 = vxor.u32 %v5624, 2147483648
  %v5711 = vxor.u32 %v5629, 2147483648
  %v5712 = vxor.u32 %v5634, 2147483648
  %v5713 = vxor.u32 %v5639, 2147483648
  %v5714 = vxor.u32 %v5644, 2147483648
  %v5715 = vxor.u32 %v5649, 2147483648
  %v5716 = vxor.u32 %v5654, 2147483648
  %v5717 = vxor.u32 %v5659, 2147483648
  %v5718 = vxor.u32 %v5664, 2147483648
  %v5719 = vxor.u32 %v5669, 2147483648
  %v5720 = vxor.u32 %v5674, 2147483648
  %v5721 = vxor.u32 %v5679, 2147483648
  %v5722 = vxor.u32 %v5684, 2147483648
  %v5723 = vxor.u32 %v5689, 2147483648
  %v5724 = vmul.f32 %v5692, 1.442695
  %v5725 = vpow.pop %v5724
  %v5726 = vmul.f32 %v5693, 1.442695
  %v5727 = vpow.pop %v5726
  %v5728 = vmul.f32 %v5694, 1.442695
  %v5729 = vpow.pop %v5728
  %v5730 = vmul.f32 %v5695, 1.442695
  %v5731 = vpow.pop %v5730
  %v5732 = vmul.f32 %v5696, 1.442695
  %v5733 = vpow.pop %v5732
  %v5734 = vmul.f32 %v5697, 1.442695
  %v5735 = vpow.pop %v5734
  %v5736 = vmul.f32 %v5698, 1.442695
  %v5737 = vpow.pop %v5736
  %v5738 = vmul.f32 %v5699, 1.442695
  %v5739 = vpow.pop %v5738
  %v5740 = vmul.f32 %v5700, 1.442695
  %v5741 = vpow.pop %v5740
  %v5742 = vmul.f32 %v5701, 1.442695
  %v5743 = vpow.pop %v5742
  %v5744 = vmul.f32 %v5702, 1.442695
  %v5745 = vpow.pop %v5744
  %v5746 = vmul.f32 %v5703, 1.442695
  %v5747 = vpow.pop %v5746
  %v5748 = vmul.f32 %v5704, 1.442695
  %v5749 = vpow.pop %v5748
  %v5750 = vmul.f32 %v5705, 1.442695
  %v5751 = vpow.pop %v5750
  %v5752 = vmul.f32 %v5706, 1.442695
  %v5753 = vpow.pop %v5752
  %v5754 = vmul.f32 %v5707, 1.442695
  %v5755 = vpow.pop %v5754
  %v5756 = vmul.f32 %v5708, 1.442695
  %v5757 = vpow.pop %v5756
  %v5758 = vmul.f32 %v5709, 1.442695
  %v5759 = vpow.pop %v5758
  %v5760 = vmul.f32 %v5710, 1.442695
  %v5761 = vpow.pop %v5760
  %v5762 = vmul.f32 %v5711, 1.442695
  %v5763 = vpow.pop %v5762
  %v5764 = vmul.f32 %v5712, 1.442695
  %v5765 = vpow.pop %v5764
  %v5766 = vmul.f32 %v5713, 1.442695
  %v5767 = vpow.pop %v5766
  %v5768 = vmul.f32 %v5714, 1.442695
  %v5769 = vpow.pop %v5768
  %v5770 = vmul.f32 %v5715, 1.442695
  %v5771 = vpow.pop %v5770
  %v5772 = vmul.f32 %v5716, 1.442695
  %v5773 = vpow.pop %v5772
  %v5774 = vmul.f32 %v5717, 1.442695
  %v5775 = vpow.pop %v5774
  %v5776 = vmul.f32 %v5718, 1.442695
  %v5777 = vpow.pop %v5776
  %v5778 = vmul.f32 %v5719, 1.442695
  %v5779 = vpow.pop %v5778
  %v5780 = vmul.f32 %v5720, 1.442695
  %v5781 = vpow.pop %v5780
  %v5782 = vmul.f32 %v5721, 1.442695
  %v5783 = vpow.pop %v5782
  %v5784 = vmul.f32 %v5722, 1.442695
  %v5785 = vpow.pop %v5784
  %v5786 = vmul.f32 %v5723, 1.442695
  %v5787 = vpow.pop %v5786
  %v5788 = vadd.f32 %v5725, 1.0
  %v5789 = vadd.f32 %v5727, 1.0
  %v5790 = vadd.f32 %v5729, 1.0
  %v5791 = vadd.f32 %v5731, 1.0
  %v5792 = vadd.f32 %v5733, 1.0
  %v5793 = vadd.f32 %v5735, 1.0
  %v5794 = vadd.f32 %v5737, 1.0
  %v5795 = vadd.f32 %v5739, 1.0
  %v5796 = vadd.f32 %v5741, 1.0
  %v5797 = vadd.f32 %v5743, 1.0
  %v5798 = vadd.f32 %v5745, 1.0
  %v5799 = vadd.f32 %v5747, 1.0
  %v5800 = vadd.f32 %v5749, 1.0
  %v5801 = vadd.f32 %v5751, 1.0
  %v5802 = vadd.f32 %v5753, 1.0
  %v5803 = vadd.f32 %v5755, 1.0
  %v5804 = vadd.f32 %v5757, 1.0
  %v5805 = vadd.f32 %v5759, 1.0
  %v5806 = vadd.f32 %v5761, 1.0
  %v5807 = vadd.f32 %v5763, 1.0
  %v5808 = vadd.f32 %v5765, 1.0
  %v5809 = vadd.f32 %v5767, 1.0
  %v5810 = vadd.f32 %v5769, 1.0
  %v5811 = vadd.f32 %v5771, 1.0
  %v5812 = vadd.f32 %v5773, 1.0
  %v5813 = vadd.f32 %v5775, 1.0
  %v5814 = vadd.f32 %v5777, 1.0
  %v5815 = vadd.f32 %v5779, 1.0
  %v5816 = vadd.f32 %v5781, 1.0
  %v5817 = vadd.f32 %v5783, 1.0
  %v5818 = vadd.f32 %v5785, 1.0
  %v5819 = vadd.f32 %v5787, 1.0
  %v5820 = vrcp.pop %v5788
  %v5821 = vmul.f32 1.0, %v5820
  %v5822 = vrcp.pop %v5789
  %v5823 = vmul.f32 1.0, %v5822
  %v5824 = vrcp.pop %v5790
  %v5825 = vmul.f32 1.0, %v5824
  %v5826 = vrcp.pop %v5791
  %v5827 = vmul.f32 1.0, %v5826
  %v5828 = vrcp.pop %v5792
  %v5829 = vmul.f32 1.0, %v5828
  %v5830 = vrcp.pop %v5793
  %v5831 = vmul.f32 1.0, %v5830
  %v5832 = vrcp.pop %v5794
  %v5833 = vmul.f32 1.0, %v5832
  %v5834 = vrcp.pop %v5795
  %v5835 = vmul.f32 1.0, %v5834
  %v5836 = vrcp.pop %v5796
  %v5837 = vmul.f32 1.0, %v5836
  %v5838 = vrcp.pop %v5797
  %v5839 = vmul.f32 1.0, %v5838
  %v5840 = vrcp.pop %v5798
  %v5841 = vmul.f32 1.0, %v5840
  %v5842 = vrcp.pop %v5799
  %v5843 = vmul.f32 1.0, %v5842
  %v5844 = vrcp.pop %v5800
  %v5845 = vmul.f32 1.0, %v5844
  %v5846 = vrcp.pop %v5801
  %v5847 = vmul.f32 1.0, %v5846
  %v5848 = vrcp.pop %v5802
  %v5849 = vmul.f32 1.0, %v5848
  %v5850 = vrcp.pop %v5803
  %v5851 = vmul.f32 1.0, %v5850
  %v5852 = vrcp.pop %v5804
  %v5853 = vmul.f32 1.0, %v5852
  %v5854 = vrcp.pop %v5805
  %v5855 = vmul.f32 1.0, %v5854
  %v5856 = vrcp.pop %v5806
  %v5857 = vmul.f32 1.0, %v5856
  %v5858 = vrcp.pop %v5807
  %v5859 = vmul.f32 1.0, %v5858
  %v5860 = vrcp.pop %v5808
  %v5861 = vmul.f32 1.0, %v5860
  %v5862 = vrcp.pop %v5809
  %v5863 = vmul.f32 1.0, %v5862
  %v5864 = vrcp.pop %v5810
  %v5865 = vmul.f32 1.0, %v5864
  %v5866 = vrcp.pop %v5811
  %v5867 = vmul.f32 1.0, %v5866
  %v5868 = vrcp.pop %v5812
  %v5869 = vmul.f32 1.0, %v5868
  %v5870 = vrcp.pop %v5813
  %v5871 = vmul.f32 1.0, %v5870
  %v5872 = vrcp.pop %v5814
  %v5873 = vmul.f32 1.0, %v5872
  %v5874 = vrcp.pop %v5815
  %v5875 = vmul.f32 1.0, %v5874
  %v5876 = vrcp.pop %v5816
  %v5877 = vmul.f32 1.0, %v5876
  %v5878 = vrcp.pop %v5817
  %v5879 = vmul.f32 1.0, %v5878
  %v5880 = vrcp.pop %v5818
  %v5881 = vmul.f32 1.0, %v5880
  %v5882 = vrcp.pop %v5819
  %v5883 = vmul.f32 1.0, %v5882
  %v5884 = vmul.f32 %v5534, %v5821
  %v5885 = vmul.f32 %v5539, %v5823
  %v5886 = vmul.f32 %v5544, %v5825
  %v5887 = vmul.f32 %v5549, %v5827
  %v5888 = vmul.f32 %v5554, %v5829
  %v5889 = vmul.f32 %v5559, %v5831
  %v5890 = vmul.f32 %v5564, %v5833
  %v5891 = vmul.f32 %v5569, %v5835
  %v5892 = vmul.f32 %v5574, %v5837
  %v5893 = vmul.f32 %v5579, %v5839
  %v5894 = vmul.f32 %v5584, %v5841
  %v5895 = vmul.f32 %v5589, %v5843
  %v5896 = vmul.f32 %v5594, %v5845
  %v5897 = vmul.f32 %v5599, %v5847
  %v5898 = vmul.f32 %v5604, %v5849
  %v5899 = vmul.f32 %v5609, %v5851
  %v5900 = vmul.f32 %v5614, %v5853
  %v5901 = vmul.f32 %v5619, %v5855
  %v5902 = vmul.f32 %v5624, %v5857
  %v5903 = vmul.f32 %v5629, %v5859
  %v5904 = vmul.f32 %v5634, %v5861
  %v5905 = vmul.f32 %v5639, %v5863
  %v5906 = vmul.f32 %v5644, %v5865
  %v5907 = vmul.f32 %v5649, %v5867
  %v5908 = vmul.f32 %v5654, %v5869
  %v5909 = vmul.f32 %v5659, %v5871
  %v5910 = vmul.f32 %v5664, %v5873
  %v5911 = vmul.f32 %v5669, %v5875
  %v5912 = vmul.f32 %v5674, %v5877
  %v5913 = vmul.f32 %v5679, %v5879
  %v5914 = vmul.f32 %v5684, %v5881
  %v5915 = vmul.f32 %v5689, %v5883
  %v5916 = vld [vmem:[%s10] sm:$0xff]
  %v5917 = vld [vmem:[%s11] sm:$0x1]
  %v5919 = vlaneseq
  %v5920 = vshrl.u32 %v5919, 7
  %v5921 = vsub.s32 0, %v5920
  %v5922 = vrot.slane %v5917, %v5921
  %v5925 = vsel %vm5370, %v5884, 0
  %v5928 = vsel %vm5370, %v5885, 0
  %v5931 = vsel %vm5370, %v5886, 0
  %v5934 = vsel %vm5370, %v5887, 0
  %v5937 = vsel %vm5370, %v5888, 0
  %v5940 = vsel %vm5370, %v5889, 0
  %v5943 = vsel %vm5370, %v5890, 0
  %v5946 = vsel %vm5370, %v5891, 0
  %v5949 = vsel %vm5370, %v5892, 0
  %v5952 = vsel %vm5370, %v5893, 0
  %v5955 = vsel %vm5370, %v5894, 0
  %v5958 = vsel %vm5370, %v5895, 0
  %v5961 = vsel %vm5370, %v5896, 0
  %v5964 = vsel %vm5370, %v5897, 0
  %v5967 = vsel %vm5370, %v5898, 0
  %v5970 = vsel %vm5370, %v5899, 0
  %v5973 = vsel %vm5370, %v5900, 0
  %v5976 = vsel %vm5370, %v5901, 0
  %v5979 = vsel %vm5370, %v5902, 0
  %v5982 = vsel %vm5370, %v5903, 0
  %v5985 = vsel %vm5370, %v5904, 0
  %v5988 = vsel %vm5370, %v5905, 0
  %v5991 = vsel %vm5370, %v5906, 0
  %v5994 = vsel %vm5370, %v5907, 0
  %v5997 = vsel %vm5370, %v5908, 0
  %v6000 = vsel %vm5370, %v5909, 0
  %v6003 = vsel %vm5370, %v5910, 0
  %v6006 = vsel %vm5370, %v5911, 0
  %v6009 = vsel %vm5370, %v5912, 0
  %v6012 = vsel %vm5370, %v5913, 0
  %v6015 = vsel %vm5370, %v5914, 0
  %v6018 = vsel %vm5370, %v5915, 0
  %6020 = vmatprep.subr.mxu0 0.0
  %6021 = vmatpush1.msra.mxu0 0.0
  %6022 = vmatprep.subr.mxu0 0.0
  %6023 = vmatpush1.msra.mxu0 0.0
  %6024 = vmatprep.subr.mxu0 0.0
  %6025 = vmatpush1.msra.mxu0 0.0
  %6026 = vmatprep.subr.mxu0 0.0
  %6027 = vmatpush1.msra.mxu0 0.0
  %6028 = vmatprep.subr.mxu0 0.0
  %6029 = vmatpush1.msra.mxu0 0.0
  %6030 = vmatprep.subr.mxu0 0.0
  %6031 = vmatpush1.msra.mxu0 0.0
  %6032 = vmatprep.subr.mxu0 0.0
  %6033 = vmatpush1.msra.mxu0 0.0
  %6034 = vmatprep.subr.mxu0 0.0
  %6035 = vmatpush1.msra.mxu0 0.0
  %6036 = vmatprep.subr.mxu0 0.0
  %6037 = vmatpush1.msra.mxu0 0.0
  %6038 = vmatprep.subr.mxu0 0.0
  %6039 = vmatpush1.msra.mxu0 0.0
  %6040 = vmatprep.subr.mxu0 0.0
  %6041 = vmatpush1.msra.mxu0 0.0
  %6042 = vmatprep.subr.mxu0 0.0
  %6043 = vmatpush1.msra.mxu0 0.0
  %6044 = vmatprep.subr.mxu0 0.0
  %6045 = vmatpush1.msra.mxu0 0.0
  %6046 = vmatprep.subr.mxu0 0.0
  %6047 = vmatpush1.msra.mxu0 0.0
  %6048 = vmatprep.subr.mxu0 0.0
  %6049 = vmatpush1.msra.mxu0 0.0
  %6050 = vmatprep.subr.mxu0 0.0
  %6051 = vmatpush1.msra.mxu0 %v5916
  %6052 = vmatprep.subr.mxu0 0.0
  %6053 = vmatpush2.msra.mxu0 0.0
  %6054 = vmatprep.subr.mxu0 0.0
  %6055 = vmatpush2.msra.mxu0 0.0
  %6056 = vmatprep.subr.mxu0 0.0
  %6057 = vmatpush2.msra.mxu0 0.0
  %6058 = vmatprep.subr.mxu0 0.0
  %6059 = vmatpush2.msra.mxu0 0.0
  %6060 = vmatprep.subr.mxu0 0.0
  %6061 = vmatpush2.msra.mxu0 0.0
  %6062 = vmatprep.subr.mxu0 0.0
  %6063 = vmatpush2.msra.mxu0 0.0
  %6064 = vmatprep.subr.mxu0 0.0
  %6065 = vmatpush2.msra.mxu0 0.0
  %6066 = vmatprep.subr.mxu0 0.0
  %6067 = vmatpush2.msra.mxu0 0.0
  %6068 = vmatprep.subr.mxu0 0.0
  %6069 = vmatpush2.msra.mxu0 0.0
  %6070 = vmatprep.subr.mxu0 0.0
  %6071 = vmatpush2.msra.mxu0 0.0
  %6072 = vmatprep.subr.mxu0 0.0
  %6073 = vmatpush2.msra.mxu0 0.0
  %6074 = vmatprep.subr.mxu0 0.0
  %6075 = vmatpush2.msra.mxu0 0.0
  %6076 = vmatprep.subr.mxu0 0.0
  %6077 = vmatpush2.msra.mxu0 0.0
  %6078 = vmatprep.subr.mxu0 0.0
  %6079 = vmatpush2.msra.mxu0 0.0
  %6080 = vmatprep.subr.mxu0 0.0
  %6081 = vmatpush2.msra.mxu0 0.0
  %6082 = vmatprep.subr.mxu0 0.0
  %6083 = vmatpush2.msra.mxu0 0.0
  %6084 = vmatprep.mubr.f32.mxu0 0.0
  %6085 = vmatmul.mubr.f32.gmra.mxu0 %v5925
  %v6086 = vpop.f32.mrf.mxu0
  %v6087 = vadd.f32 %v5922, %v6086
  %v6088 = vpop.f32.mrf.mxu0
  %6089 = vmatprep.mubr.f32.mxu0 0.0
  %6090 = vmatmul.mubr.f32.gmra.mxu0 %v5928
  %v6091 = vpop.f32.mrf.mxu0
  %v6092 = vadd.f32 %v5922, %v6091
  %v6093 = vpop.f32.mrf.mxu0
  %6094 = vmatprep.mubr.f32.mxu0 0.0
  %6095 = vmatmul.mubr.f32.gmra.mxu0 %v5931
  %v6096 = vpop.f32.mrf.mxu0
  %v6097 = vadd.f32 %v5922, %v6096
  %v6098 = vpop.f32.mrf.mxu0
  %6099 = vmatprep.mubr.f32.mxu0 0.0
  %6100 = vmatmul.mubr.f32.gmra.mxu0 %v5934
  %v6101 = vpop.f32.mrf.mxu0
  %v6102 = vadd.f32 %v5922, %v6101
  %v6103 = vpop.f32.mrf.mxu0
  %6104 = vmatprep.mubr.f32.mxu0 0.0
  %6105 = vmatmul.mubr.f32.gmra.mxu0 %v5937
  %v6106 = vpop.f32.mrf.mxu0
  %v6107 = vadd.f32 %v5922, %v6106
  %v6108 = vpop.f32.mrf.mxu0
  %6109 = vmatprep.mubr.f32.mxu0 0.0
  %6110 = vmatmul.mubr.f32.gmra.mxu0 %v5940
  %v6111 = vpop.f32.mrf.mxu0
  %v6112 = vadd.f32 %v5922, %v6111
  %v6113 = vpop.f32.mrf.mxu0
  %6114 = vmatprep.mubr.f32.mxu0 0.0
  %6115 = vmatmul.mubr.f32.gmra.mxu0 %v5943
  %v6116 = vpop.f32.mrf.mxu0
  %v6117 = vadd.f32 %v5922, %v6116
  %v6118 = vpop.f32.mrf.mxu0
  %6119 = vmatprep.mubr.f32.mxu0 0.0
  %6120 = vmatmul.mubr.f32.gmra.mxu0 %v5946
  %v6121 = vpop.f32.mrf.mxu0
  %v6122 = vadd.f32 %v5922, %v6121
  %v6123 = vpop.f32.mrf.mxu0
  %6124 = vmatprep.mubr.f32.mxu0 0.0
  %6125 = vmatmul.mubr.f32.gmra.mxu0 %v5949
  %v6126 = vpop.f32.mrf.mxu0
  %v6127 = vadd.f32 %v5922, %v6126
  %v6128 = vpop.f32.mrf.mxu0
  %6129 = vmatprep.mubr.f32.mxu0 0.0
  %6130 = vmatmul.mubr.f32.gmra.mxu0 %v5952
  %v6131 = vpop.f32.mrf.mxu0
  %v6132 = vadd.f32 %v5922, %v6131
  %v6133 = vpop.f32.mrf.mxu0
  %6134 = vmatprep.mubr.f32.mxu0 0.0
  %6135 = vmatmul.mubr.f32.gmra.mxu0 %v5955
  %v6136 = vpop.f32.mrf.mxu0
  %v6137 = vadd.f32 %v5922, %v6136
  %v6138 = vpop.f32.mrf.mxu0
  %6139 = vmatprep.mubr.f32.mxu0 0.0
  %6140 = vmatmul.mubr.f32.gmra.mxu0 %v5958
  %v6141 = vpop.f32.mrf.mxu0
  %v6142 = vadd.f32 %v5922, %v6141
  %v6143 = vpop.f32.mrf.mxu0
  %6144 = vmatprep.mubr.f32.mxu0 0.0
  %6145 = vmatmul.mubr.f32.gmra.mxu0 %v5961
  %v6146 = vpop.f32.mrf.mxu0
  %v6147 = vadd.f32 %v5922, %v6146
  %v6148 = vpop.f32.mrf.mxu0
  %6149 = vmatprep.mubr.f32.mxu0 0.0
  %6150 = vmatmul.mubr.f32.gmra.mxu0 %v5964
  %v6151 = vpop.f32.mrf.mxu0
  %v6152 = vadd.f32 %v5922, %v6151
  %v6153 = vpop.f32.mrf.mxu0
  %6154 = vmatprep.mubr.f32.mxu0 0.0
  %6155 = vmatmul.mubr.f32.gmra.mxu0 %v5967
  %v6156 = vpop.f32.mrf.mxu0
  %v6157 = vadd.f32 %v5922, %v6156
  %v6158 = vpop.f32.mrf.mxu0
  %6159 = vmatprep.mubr.f32.mxu0 0.0
  %6160 = vmatmul.mubr.f32.gmra.mxu0 %v5970
  %v6161 = vpop.f32.mrf.mxu0
  %v6162 = vadd.f32 %v5922, %v6161
  %v6163 = vpop.f32.mrf.mxu0
  %6164 = vmatprep.mubr.f32.mxu0 0.0
  %6165 = vmatmul.mubr.f32.gmra.mxu0 %v5973
  %v6166 = vpop.f32.mrf.mxu0
  %v6167 = vadd.f32 %v5922, %v6166
  %v6168 = vpop.f32.mrf.mxu0
  %6169 = vmatprep.mubr.f32.mxu0 0.0
  %6170 = vmatmul.mubr.f32.gmra.mxu0 %v5976
  %v6171 = vpop.f32.mrf.mxu0
  %v6172 = vadd.f32 %v5922, %v6171
  %v6173 = vpop.f32.mrf.mxu0
  %6174 = vmatprep.mubr.f32.mxu0 0.0
  %6175 = vmatmul.mubr.f32.gmra.mxu0 %v5979
  %v6176 = vpop.f32.mrf.mxu0
  %v6177 = vadd.f32 %v5922, %v6176
  %v6178 = vpop.f32.mrf.mxu0
  %6179 = vmatprep.mubr.f32.mxu0 0.0
  %6180 = vmatmul.mubr.f32.gmra.mxu0 %v5982
  %v6181 = vpop.f32.mrf.mxu0
  %v6182 = vadd.f32 %v5922, %v6181
  %v6183 = vpop.f32.mrf.mxu0
  %6184 = vmatprep.mubr.f32.mxu0 0.0
  %6185 = vmatmul.mubr.f32.gmra.mxu0 %v5985
  %v6186 = vpop.f32.mrf.mxu0
  %v6187 = vadd.f32 %v5922, %v6186
  %v6188 = vpop.f32.mrf.mxu0
  %6189 = vmatprep.mubr.f32.mxu0 0.0
  %6190 = vmatmul.mubr.f32.gmra.mxu0 %v5988
  %v6191 = vpop.f32.mrf.mxu0
  %v6192 = vadd.f32 %v5922, %v6191
  %v6193 = vpop.f32.mrf.mxu0
  %6194 = vmatprep.mubr.f32.mxu0 0.0
  %6195 = vmatmul.mubr.f32.gmra.mxu0 %v5991
  %v6196 = vpop.f32.mrf.mxu0
  %v6197 = vadd.f32 %v5922, %v6196
  %v6198 = vpop.f32.mrf.mxu0
  %6199 = vmatprep.mubr.f32.mxu0 0.0
  %6200 = vmatmul.mubr.f32.gmra.mxu0 %v5994
  %v6201 = vpop.f32.mrf.mxu0
  %v6202 = vadd.f32 %v5922, %v6201
  %v6203 = vpop.f32.mrf.mxu0
  %6204 = vmatprep.mubr.f32.mxu0 0.0
  %6205 = vmatmul.mubr.f32.gmra.mxu0 %v5997
  %v6206 = vpop.f32.mrf.mxu0
  %v6207 = vadd.f32 %v5922, %v6206
  %v6208 = vpop.f32.mrf.mxu0
  %6209 = vmatprep.mubr.f32.mxu0 0.0
  %6210 = vmatmul.mubr.f32.gmra.mxu0 %v6000
  %v6211 = vpop.f32.mrf.mxu0
  %v6212 = vadd.f32 %v5922, %v6211
  %v6213 = vpop.f32.mrf.mxu0
  %6214 = vmatprep.mubr.f32.mxu0 0.0
  %6215 = vmatmul.mubr.f32.gmra.mxu0 %v6003
  %v6216 = vpop.f32.mrf.mxu0
  %v6217 = vadd.f32 %v5922, %v6216
  %v6218 = vpop.f32.mrf.mxu0
  %6219 = vmatprep.mubr.f32.mxu0 0.0
  %6220 = vmatmul.mubr.f32.gmra.mxu0 %v6006
  %v6221 = vpop.f32.mrf.mxu0
  %v6222 = vadd.f32 %v5922, %v6221
  %v6223 = vpop.f32.mrf.mxu0
  %6224 = vmatprep.mubr.f32.mxu0 0.0
  %6225 = vmatmul.mubr.f32.gmra.mxu0 %v6009
  %v6226 = vpop.f32.mrf.mxu0
  %v6227 = vadd.f32 %v5922, %v6226
  %v6228 = vpop.f32.mrf.mxu0
  %6229 = vmatprep.mubr.f32.mxu0 0.0
  %6230 = vmatmul.mubr.f32.gmra.mxu0 %v6012
  %v6231 = vpop.f32.mrf.mxu0
  %v6232 = vadd.f32 %v5922, %v6231
  %v6233 = vpop.f32.mrf.mxu0
  %6234 = vmatprep.mubr.f32.mxu0 0.0
  %6235 = vmatmul.mubr.f32.gmra.mxu0 %v6015
  %v6236 = vpop.f32.mrf.mxu0
  %v6237 = vadd.f32 %v5922, %v6236
  %v6238 = vpop.f32.mrf.mxu0
  %6239 = vmatprep.mubr.f32.mxu0 0.0
  %6240 = vmatmul.mubr.f32.gmra.mxu0 %v6018
  %v6241 = vpop.f32.mrf.mxu0
  %v6242 = vadd.f32 %v5922, %v6241
  %v6243 = vpop.f32.mrf.mxu0
  %6244 = vdwg.mxu0
  %6245 = vst.msk [vmem:[%s13] sm:$0xff] %vm4784, %v6087
  %6246 = vst.msk [vmem:[%s13 + $0x8] sm:$0xff] %vm4784, %v6092
  %6247 = vst.msk [vmem:[%s13 + $0x10] sm:$0xff] %vm4784, %v6097
  %6248 = vst.msk [vmem:[%s13 + $0x18] sm:$0xff] %vm4784, %v6102
  %6249 = vst.msk [vmem:[%s13 + $0x20] sm:$0xff] %vm4784, %v6107
  %6250 = vst.msk [vmem:[%s13 + $0x28] sm:$0xff] %vm4784, %v6112
  %6251 = vst.msk [vmem:[%s13 + $0x30] sm:$0xff] %vm4784, %v6117
  %6252 = vst.msk [vmem:[%s13 + $0x38] sm:$0xff] %vm4784, %v6122
  %6253 = vst.msk [vmem:[%s13 + $0x40] sm:$0xff] %vm4784, %v6127
  %6254 = vst.msk [vmem:[%s13 + $0x48] sm:$0xff] %vm4784, %v6132
  %6255 = vst.msk [vmem:[%s13 + $0x50] sm:$0xff] %vm4784, %v6137
  %6256 = vst.msk [vmem:[%s13 + $0x58] sm:$0xff] %vm4784, %v6142
  %6257 = vst.msk [vmem:[%s13 + $0x60] sm:$0xff] %vm4784, %v6147
  %6258 = vst.msk [vmem:[%s13 + $0x68] sm:$0xff] %vm4784, %v6152
  %6259 = vst.msk [vmem:[%s13 + $0x70] sm:$0xff] %vm4784, %v6157
  %6260 = vst.msk [vmem:[%s13 + $0x78] sm:$0xff] %vm4784, %v6162
  %6261 = vst.msk [vmem:[%s13 + $0x80] sm:$0xff] %vm4784, %v6167
  %6262 = vst.msk [vmem:[%s13 + $0x88] sm:$0xff] %vm4784, %v6172
  %6263 = vst.msk [vmem:[%s13 + $0x90] sm:$0xff] %vm4784, %v6177
  %6264 = vst.msk [vmem:[%s13 + $0x98] sm:$0xff] %vm4784, %v6182
  %6265 = vst.msk [vmem:[%s13 + $0xa0] sm:$0xff] %vm4784, %v6187
  %6266 = vst.msk [vmem:[%s13 + $0xa8] sm:$0xff] %vm4784, %v6192
  %6267 = vst.msk [vmem:[%s13 + $0xb0] sm:$0xff] %vm4784, %v6197
  %6268 = vst.msk [vmem:[%s13 + $0xb8] sm:$0xff] %vm4784, %v6202
  %6269 = vst.msk [vmem:[%s13 + $0xc0] sm:$0xff] %vm4784, %v6207
  %6270 = vst.msk [vmem:[%s13 + $0xc8] sm:$0xff] %vm4784, %v6212
  %6271 = vst.msk [vmem:[%s13 + $0xd0] sm:$0xff] %vm4784, %v6217
  %6272 = vst.msk [vmem:[%s13 + $0xd8] sm:$0xff] %vm4784, %v6222
  %6273 = vst.msk [vmem:[%s13 + $0xe0] sm:$0xff] %vm4784, %v6227
  %6274 = vst.msk [vmem:[%s13 + $0xe8] sm:$0xff] %vm4784, %v6232
  %6275 = vst.msk [vmem:[%s13 + $0xf0] sm:$0xff] %vm4784, %v6237
  %6276 = vst.msk [vmem:[%s13 + $0xf8] sm:$0xff] %vm4784, %v6242
  // Predicated region
  $region50: #{clofnet_forward.6} parent=0 // pred_check
    _
  $region51: #{clofnet_forward.6} parent=0 // pred_check_branch
    %6278 = sbr.rel (0) target = $region53
  $region52: #{clofnet_forward.6} parent=0 // pred_region
    _
  $region53: #{clofnet_forward.6} parent=0 // pred_fallthru
    _
  // Predicated region
  $region54: #{clofnet_forward.6} parent=0 // pred_check
    _
  $region55: #{clofnet_forward.6} parent=0 // pred_check_branch
    %6280 = sbr.rel (0) target = $region57
  $region56: #{clofnet_forward.6} parent=0 // pred_region
    _
  $region57: #{clofnet_forward.6} parent=0 // pred_fallthru
    _
  // Predicated region
  $region58: #{clofnet_forward.6} parent=0 // pred_check
    _
  $region59: #{clofnet_forward.6} parent=0 // pred_check_branch
    %6282 = sbr.rel (0) target = $region61
  $region60: #{clofnet_forward.6} parent=0 // pred_region
    _
  $region61: #{clofnet_forward.6} parent=0 // pred_fallthru
    _
  // Predicated region
  $region62: #{clofnet_forward.6} parent=0 // pred_check
    _
  $region63: #{clofnet_forward.6} parent=0 // pred_check_branch
    %6284 = sbr.rel (0) target = $region65
  $region64: #{clofnet_forward.6} parent=0 // pred_region
    _
  $region65: #{clofnet_forward.6} parent=0 // pred_fallthru
    _

// kernel: clofnet_forward.10
$region0: #{clofnet_forward.10}
  #allocation0 [shape = 'u32[]', space=smem, size = 0x4, offset = 0x4, fixed_abs, tag = 'smem constant byte address 0x4 - core index']
  #allocation1 [shape = 'u32[144,128]{1,0:T(1,128)}', space=vmem, size = 0x12000, scoped, tag = 'internal scratch']
  %s0 = inlined_call_operand.vmem [shape: f32[16,16], index: 0, kind: input, shape index: {}]
  %s1 = inlined_call_operand.vmem [shape: f32[16,32], index: 1, kind: input, shape index: {}]
  %s2 = inlined_call_operand.vmem [shape: f32[16,16,32], index: 2, kind: input, shape index: {}]
  %s3 = inlined_call_operand.vmem [shape: f32[16,16,32], index: 3, kind: input, shape index: {}]
  %s4 = inlined_call_operand.vmem [shape: f32[16,3,16], index: 4, kind: input, shape index: {}]
  %s5 = inlined_call_operand.vmem [shape: f32[16,16], index: 5, kind: input, shape index: {}]
  %s6 = inlined_call_operand.vmem [shape: f32[16,32], index: 6, kind: input, shape index: {}]
  %s7 = inlined_call_operand.vmem [shape: f32[3,16,32], index: 7, kind: input, shape index: {}]
  %s8 = inlined_call_operand.vmem [shape: f32[16,32], index: 8, kind: input, shape index: {}]
  %s9 = inlined_call_operand.vmem [shape: f32[1,32], index: 9, kind: input, shape index: {}]
  %s10 = inlined_call_operand.hbm [shape: f32[16,32], index: 10, kind: output, shape index: {0}]
  %s11 = inlined_call_operand.vmem [shape: f32[3,16,32], index: 11, kind: output, shape index: {1}]
  %12 = xla_tuple %s10, %s11
  %s13 = sld [smem:[#allocation0]]
  $region58: #{clofnet_forward.10} parent=0
    _
  %s15 = ssub.s32 1, %s13
  %s16 = scalar_select 0, %s15, %s13
  $region1: #{clofnet_forward.10} parent=0
    #allocation2 [shape = 'u8[8192]{0}', space=vmem, size = 0x2000, scoped, tag = 'output window, operand 0, single buffered']
    #allocation3 [shape = 's32[1]{0}', space=sflag, size = 0x4, scoped, tag = 'scoped memory for clofnet_forward.10']
    %17 = vsyncpa [#allocation3], 0
    // Predicated region
    $region2: #{clofnet_forward.10} parent=1 // pred_check
      _
    $region3: #{clofnet_forward.10} parent=1 // pred_check_branch
      %19 = sbr.rel (0) target = $region5
    $region4: #{clofnet_forward.10} parent=1 // pred_region
      _
    $region5: #{clofnet_forward.10} parent=1 // pred_fallthru
      _
    // Predicated region
    $region6: #{clofnet_forward.10} parent=1 // pred_check
      _
    $region7: #{clofnet_forward.10} parent=1 // pred_check_branch
      %21 = sbr.rel (0) target = $region9
    $region8: #{clofnet_forward.10} parent=1 // pred_region
      _
    $region9: #{clofnet_forward.10} parent=1 // pred_fallthru
      _
    // Predicated region
    $region10: #{clofnet_forward.10} parent=1 // pred_check
      _
    $region11: #{clofnet_forward.10} parent=1 // pred_check_branch
      %23 = sbr.rel (0) target = $region13
    $region12: #{clofnet_forward.10} parent=1 // pred_region
      _
    $region13: #{clofnet_forward.10} parent=1 // pred_fallthru
      _
    // Predicated region
    $region14: #{clofnet_forward.10} parent=1 // pred_check
      _
    $region15: #{clofnet_forward.10} parent=1 // pred_check_branch
      %25 = sbr.rel (0) target = $region17
    $region16: #{clofnet_forward.10} parent=1 // pred_region
      _
    $region17: #{clofnet_forward.10} parent=1 // pred_fallthru
      _
    // Predicated region
    $region18: #{clofnet_forward.10} parent=1 // pred_check
      _
    $region19: #{clofnet_forward.10} parent=1 // pred_check_branch
      %27 = sbr.rel (0) target = $region21
    $region20: #{clofnet_forward.10} parent=1 // pred_region
      _
    $region21: #{clofnet_forward.10} parent=1 // pred_fallthru
      _
    // Predicated region
    $region22: #{clofnet_forward.10} parent=1 // pred_check
      _
    $region23: #{clofnet_forward.10} parent=1 // pred_check_branch
      %29 = sbr.rel (0) target = $region25
    $region24: #{clofnet_forward.10} parent=1 // pred_region
      _
    $region25: #{clofnet_forward.10} parent=1 // pred_fallthru
      _
    // Predicated region
    $region26: #{clofnet_forward.10} parent=1 // pred_check
      _
    $region27: #{clofnet_forward.10} parent=1 // pred_check_branch
      %31 = sbr.rel (0) target = $region29
    $region28: #{clofnet_forward.10} parent=1 // pred_region
      _
    $region29: #{clofnet_forward.10} parent=1 // pred_fallthru
      _
    // Predicated region
    $region30: #{clofnet_forward.10} parent=1 // pred_check
      _
    $region31: #{clofnet_forward.10} parent=1 // pred_check_branch
      %33 = sbr.rel (0) target = $region33
    $region32: #{clofnet_forward.10} parent=1 // pred_region
      _
    $region33: #{clofnet_forward.10} parent=1 // pred_fallthru
      _
    // Predicated region
    $region34: #{clofnet_forward.10} parent=1 // pred_check
      _
    $region35: #{clofnet_forward.10} parent=1 // pred_check_branch
      %35 = sbr.rel (0) target = $region37
    $region36: #{clofnet_forward.10} parent=1 // pred_region
      _
    $region37: #{clofnet_forward.10} parent=1 // pred_fallthru
      _
    // Predicated region
    $region38: #{clofnet_forward.10} parent=1 // pred_check
      _
    $region39: #{clofnet_forward.10} parent=1 // pred_check_branch
      %37 = sbr.rel (0) target = $region41
    $region40: #{clofnet_forward.10} parent=1 // pred_region
      _
    $region41: #{clofnet_forward.10} parent=1 // pred_fallthru
      _
    %v38 = vld [vmem:[%s0] sm:$0xff]
    %v39 = vld [vmem:[%s0 + $0x8] sm:$0xff]
    %v40 = vld [vmem:[%s1] sm:$0xff]
    %v41 = vld [vmem:[%s1 + $0x8] sm:$0xff]
    %v42 = vld [vmem:[%s2] sm:$0xff]
    %v43 = vld [vmem:[%s2 + $0x8] sm:$0xff]
    %v44 = vld [vmem:[%s2 + $0x10] sm:$0xff]
    %v45 = vld [vmem:[%s2 + $0x18] sm:$0xff]
    %v46 = vld [vmem:[%s2 + $0x20] sm:$0xff]
    %v47 = vld [vmem:[%s2 + $0x28] sm:$0xff]
    %v48 = vld [vmem:[%s2 + $0x30] sm:$0xff]
    %v49 = vld [vmem:[%s2 + $0x38] sm:$0xff]
    %v50 = vld [vmem:[%s2 + $0x40] sm:$0xff]
    %v51 = vld [vmem:[%s2 + $0x48] sm:$0xff]
    %v52 = vld [vmem:[%s2 + $0x50] sm:$0xff]
    %v53 = vld [vmem:[%s2 + $0x58] sm:$0xff]
    %v54 = vld [vmem:[%s2 + $0x60] sm:$0xff]
    %v55 = vld [vmem:[%s2 + $0x68] sm:$0xff]
    %v56 = vld [vmem:[%s2 + $0x70] sm:$0xff]
    %v57 = vld [vmem:[%s2 + $0x78] sm:$0xff]
    %v58 = vld [vmem:[%s2 + $0x80] sm:$0xff]
    %v59 = vld [vmem:[%s2 + $0x88] sm:$0xff]
    %v60 = vld [vmem:[%s2 + $0x90] sm:$0xff]
    %v61 = vld [vmem:[%s2 + $0x98] sm:$0xff]
    %v62 = vld [vmem:[%s2 + $0xa0] sm:$0xff]
    %v63 = vld [vmem:[%s2 + $0xa8] sm:$0xff]
    %v64 = vld [vmem:[%s2 + $0xb0] sm:$0xff]
    %v65 = vld [vmem:[%s2 + $0xb8] sm:$0xff]
    %v66 = vld [vmem:[%s2 + $0xc0] sm:$0xff]
    %v67 = vld [vmem:[%s2 + $0xc8] sm:$0xff]
    %v68 = vld [vmem:[%s2 + $0xd0] sm:$0xff]
    %v69 = vld [vmem:[%s2 + $0xd8] sm:$0xff]
    %v70 = vld [vmem:[%s2 + $0xe0] sm:$0xff]
    %v71 = vld [vmem:[%s2 + $0xe8] sm:$0xff]
    %v72 = vld [vmem:[%s2 + $0xf0] sm:$0xff]
    %v73 = vld [vmem:[%s2 + $0xf8] sm:$0xff]
    %v74 = vld [vmem:[%s3] sm:$0xff]
    %v75 = vld [vmem:[%s3 + $0x8] sm:$0xff]
    %v76 = vld [vmem:[%s3 + $0x10] sm:$0xff]
    %v77 = vld [vmem:[%s3 + $0x18] sm:$0xff]
    %v78 = vld [vmem:[%s3 + $0x20] sm:$0xff]
    %v79 = vld [vmem:[%s3 + $0x28] sm:$0xff]
    %v80 = vld [vmem:[%s3 + $0x30] sm:$0xff]
    %v81 = vld [vmem:[%s3 + $0x38] sm:$0xff]
    %v82 = vld [vmem:[%s3 + $0x40] sm:$0xff]
    %v83 = vld [vmem:[%s3 + $0x48] sm:$0xff]
    %v84 = vld [vmem:[%s3 + $0x50] sm:$0xff]
    %v85 = vld [vmem:[%s3 + $0x58] sm:$0xff]
    %v86 = vld [vmem:[%s3 + $0x60] sm:$0xff]
    %v87 = vld [vmem:[%s3 + $0x68] sm:$0xff]
    %v88 = vld [vmem:[%s3 + $0x70] sm:$0xff]
    %v89 = vld [vmem:[%s3 + $0x78] sm:$0xff]
    %v90 = vld [vmem:[%s3 + $0x80] sm:$0xff]
    %v91 = vld [vmem:[%s3 + $0x88] sm:$0xff]
    %v92 = vld [vmem:[%s3 + $0x90] sm:$0xff]
    %v93 = vld [vmem:[%s3 + $0x98] sm:$0xff]
    %v94 = vld [vmem:[%s3 + $0xa0] sm:$0xff]
    %v95 = vld [vmem:[%s3 + $0xa8] sm:$0xff]
    %v96 = vld [vmem:[%s3 + $0xb0] sm:$0xff]
    %v97 = vld [vmem:[%s3 + $0xb8] sm:$0xff]
    %v98 = vld [vmem:[%s3 + $0xc0] sm:$0xff]
    %v99 = vld [vmem:[%s3 + $0xc8] sm:$0xff]
    %v100 = vld [vmem:[%s3 + $0xd0] sm:$0xff]
    %v101 = vld [vmem:[%s3 + $0xd8] sm:$0xff]
    %v102 = vld [vmem:[%s3 + $0xe0] sm:$0xff]
    %v103 = vld [vmem:[%s3 + $0xe8] sm:$0xff]
    %v104 = vld [vmem:[%s3 + $0xf0] sm:$0xff]
    %v105 = vld [vmem:[%s3 + $0xf8] sm:$0xff]
    %v106 = vld [vmem:[%s5] sm:$0xff]
    %v107 = vld [vmem:[%s5 + $0x8] sm:$0xff]
    %v108 = vld [vmem:[%s8] sm:$0xff]
    %v109 = vld [vmem:[%s8 + $0x8] sm:$0xff]
    %v112 = vcombine.high %v40, %v40
    %v114 = vunpack.c.l.s4 1966171168
    %v115 = vunpack.c.0.s8 %v114
    %v116 = vlaneseq
    %v117 = vshrl.u32 %v116, 7
    %v118 = vsub.s32 %v115, %v117
    %v119 = vrot.slane %v40, %v118
    %v121 = vunpack.c.l.s4 1966171168
    %v122 = vunpack.c.0.s8 %v121
    %v123 = vlaneseq
    %v124 = vshrl.u32 %v123, 7
    %v125 = vsub.s32 %v122, %v124
    %v126 = vrot.slane %v112, %v125
    %v127 = vcombine.high %v119, %v119
    %v128 = vcombine.high %v126, %v126
    %v130 = vunpack.c.l.s4 1966171168
    %v131 = vunpack.c.0.s8 %v130
    %v132 = vlaneseq
    %v133 = vshrl.u32 %v132, 7
    %v134 = vsub.s32 %v131, %v133
    %v135 = vrot.slane %v119, %v134
    %v137 = vunpack.c.l.s4 1966171168
    %v138 = vunpack.c.0.s8 %v137
    %v139 = vlaneseq
    %v140 = vshrl.u32 %v139, 7
    %v141 = vsub.s32 %v138, %v140
    %v142 = vrot.slane %v126, %v141
    %v144 = vunpack.c.l.s4 1966171168
    %v145 = vunpack.c.0.s8 %v144
    %v146 = vlaneseq
    %v147 = vshrl.u32 %v146, 7
    %v148 = vsub.s32 %v145, %v147
    %v149 = vrot.slane %v127, %v148
    %v151 = vunpack.c.l.s4 1966171168
    %v152 = vunpack.c.0.s8 %v151
    %v153 = vlaneseq
    %v154 = vshrl.u32 %v153, 7
    %v155 = vsub.s32 %v152, %v154
    %v156 = vrot.slane %v128, %v155
    %v157 = vcombine.high %v135, %v135
    %v158 = vcombine.high %v142, %v142
    %v159 = vcombine.high %v149, %v149
    %v160 = vcombine.high %v156, %v156
    %v161 = vcombine.high %v41, %v41
    %v163 = vunpack.c.l.s4 1966171168
    %v164 = vunpack.c.0.s8 %v163
    %v165 = vlaneseq
    %v166 = vshrl.u32 %v165, 7
    %v167 = vsub.s32 %v164, %v166
    %v168 = vrot.slane %v41, %v167
    %v170 = vunpack.c.l.s4 1966171168
    %v171 = vunpack.c.0.s8 %v170
    %v172 = vlaneseq
    %v173 = vshrl.u32 %v172, 7
    %v174 = vsub.s32 %v171, %v173
    %v175 = vrot.slane %v161, %v174
    %v176 = vcombine.high %v168, %v168
    %v177 = vcombine.high %v175, %v175
    %v179 = vunpack.c.l.s4 1966171168
    %v180 = vunpack.c.0.s8 %v179
    %v181 = vlaneseq
    %v182 = vshrl.u32 %v181, 7
    %v183 = vsub.s32 %v180, %v182
    %v184 = vrot.slane %v168, %v183
    %v186 = vunpack.c.l.s4 1966171168
    %v187 = vunpack.c.0.s8 %v186
    %v188 = vlaneseq
    %v189 = vshrl.u32 %v188, 7
    %v190 = vsub.s32 %v187, %v189
    %v191 = vrot.slane %v175, %v190
    %v193 = vunpack.c.l.s4 1966171168
    %v194 = vunpack.c.0.s8 %v193
    %v195 = vlaneseq
    %v196 = vshrl.u32 %v195, 7
    %v197 = vsub.s32 %v194, %v196
    %v198 = vrot.slane %v176, %v197
    %v200 = vunpack.c.l.s4 1966171168
    %v201 = vunpack.c.0.s8 %v200
    %v202 = vlaneseq
    %v203 = vshrl.u32 %v202, 7
    %v204 = vsub.s32 %v201, %v203
    %v205 = vrot.slane %v177, %v204
    %v206 = vcombine.high %v184, %v184
    %v207 = vcombine.high %v191, %v191
    %v208 = vcombine.high %v198, %v198
    %v209 = vcombine.high %v205, %v205
    %v210 = vlaneseq
    %v211 = vshrl.u32 %v210, 7
    %v212 = vsub.s32 0, %v211
    %v213 = vrot.slane %v135, %v212
    %v214 = vlaneseq
    %v215 = vshrl.u32 %v214, 7
    %v216 = vsub.s32 0, %v215
    %v217 = vrot.slane %v149, %v216
    %v218 = vlaneseq
    %v219 = vshrl.u32 %v218, 7
    %v220 = vsub.s32 0, %v219
    %v221 = vrot.slane %v157, %v220
    %v222 = vlaneseq
    %v223 = vshrl.u32 %v222, 7
    %v224 = vsub.s32 0, %v223
    %v225 = vrot.slane %v159, %v224
    %v226 = vlaneseq
    %v227 = vshrl.u32 %v226, 7
    %v228 = vsub.s32 0, %v227
    %v229 = vrot.slane %v142, %v228
    %v230 = vlaneseq
    %v231 = vshrl.u32 %v230, 7
    %v232 = vsub.s32 0, %v231
    %v233 = vrot.slane %v156, %v232
    %v234 = vlaneseq
    %v235 = vshrl.u32 %v234, 7
    %v236 = vsub.s32 0, %v235
    %v237 = vrot.slane %v158, %v236
    %v238 = vlaneseq
    %v239 = vshrl.u32 %v238, 7
    %v240 = vsub.s32 0, %v239
    %v241 = vrot.slane %v160, %v240
    %v242 = vlaneseq
    %v243 = vshrl.u32 %v242, 7
    %v244 = vsub.s32 0, %v243
    %v245 = vrot.slane %v184, %v244
    %v246 = vlaneseq
    %v247 = vshrl.u32 %v246, 7
    %v248 = vsub.s32 0, %v247
    %v249 = vrot.slane %v198, %v248
    %v250 = vlaneseq
    %v251 = vshrl.u32 %v250, 7
    %v252 = vsub.s32 0, %v251
    %v253 = vrot.slane %v206, %v252
    %v254 = vlaneseq
    %v255 = vshrl.u32 %v254, 7
    %v256 = vsub.s32 0, %v255
    %v257 = vrot.slane %v208, %v256
    %v258 = vlaneseq
    %v259 = vshrl.u32 %v258, 7
    %v260 = vsub.s32 0, %v259
    %v261 = vrot.slane %v191, %v260
    %v262 = vlaneseq
    %v263 = vshrl.u32 %v262, 7
    %v264 = vsub.s32 0, %v263
    %v265 = vrot.slane %v205, %v264
    %v266 = vlaneseq
    %v267 = vshrl.u32 %v266, 7
    %v268 = vsub.s32 0, %v267
    %v269 = vrot.slane %v207, %v268
    %v270 = vlaneseq
    %v271 = vshrl.u32 %v270, 7
    %v272 = vsub.s32 0, %v271
    %v273 = vrot.slane %v209, %v272
    %v290 = vmul.f32 %v42, %v213
    %v291 = vmul.f32 %v43, %v213
    %v292 = vmul.f32 %v44, %v217
    %v293 = vmul.f32 %v45, %v217
    %v294 = vmul.f32 %v46, %v221
    %v295 = vmul.f32 %v47, %v221
    %v296 = vmul.f32 %v48, %v225
    %v297 = vmul.f32 %v49, %v225
    %v298 = vmul.f32 %v50, %v229
    %v299 = vmul.f32 %v51, %v229
    %v300 = vmul.f32 %v52, %v233
    %v301 = vmul.f32 %v53, %v233
    %v302 = vmul.f32 %v54, %v237
    %v303 = vmul.f32 %v55, %v237
    %v304 = vmul.f32 %v56, %v241
    %v305 = vmul.f32 %v57, %v241
    %v306 = vmul.f32 %v58, %v245
    %v307 = vmul.f32 %v59, %v245
    %v308 = vmul.f32 %v60, %v249
    %v309 = vmul.f32 %v61, %v249
    %v310 = vmul.f32 %v62, %v253
    %v311 = vmul.f32 %v63, %v253
    %v312 = vmul.f32 %v64, %v257
    %v313 = vmul.f32 %v65, %v257
    %v314 = vmul.f32 %v66, %v261
    %v315 = vmul.f32 %v67, %v261
    %v316 = vmul.f32 %v68, %v265
    %v317 = vmul.f32 %v69, %v265
    %v318 = vmul.f32 %v70, %v269
    %v319 = vmul.f32 %v71, %v269
    %v320 = vmul.f32 %v72, %v273
    %v321 = vmul.f32 %v73, %v273
    %vm322 = vcmask 261120
    %v323 = vsel %vm322, %v290, 0.0
    %324 = vadd.xlane.f32.xlu0 %v323
    %v325 = vpop.xlane.xlu0 %324
    %v326 = vsel %vm322, %v291, 0.0
    %327 = vadd.xlane.f32.xlu0 %v326
    %v328 = vpop.xlane.xlu0 %327
    %v329 = vsel %vm322, %v292, 0.0
    %330 = vadd.xlane.f32.xlu0 %v329
    %v331 = vpop.xlane.xlu0 %330
    %v332 = vsel %vm322, %v293, 0.0
    %333 = vadd.xlane.f32.xlu0 %v332
    %v334 = vpop.xlane.xlu0 %333
    %v335 = vsel %vm322, %v294, 0.0
    %336 = vadd.xlane.f32.xlu0 %v335
    %v337 = vpop.xlane.xlu0 %336
    %v338 = vsel %vm322, %v295, 0.0
    %339 = vadd.xlane.f32.xlu0 %v338
    %v340 = vpop.xlane.xlu0 %339
    %v341 = vsel %vm322, %v296, 0.0
    %342 = vadd.xlane.f32.xlu0 %v341
    %v343 = vpop.xlane.xlu0 %342
    %v344 = vsel %vm322, %v297, 0.0
    %345 = vadd.xlane.f32.xlu0 %v344
    %v346 = vpop.xlane.xlu0 %345
    %v347 = vsel %vm322, %v298, 0.0
    %348 = vadd.xlane.f32.xlu0 %v347
    %v349 = vpop.xlane.xlu0 %348
    %v350 = vsel %vm322, %v299, 0.0
    %351 = vadd.xlane.f32.xlu0 %v350
    %v352 = vpop.xlane.xlu0 %351
    %v353 = vsel %vm322, %v300, 0.0
    %354 = vadd.xlane.f32.xlu0 %v353
    %v355 = vpop.xlane.xlu0 %354
    %v356 = vsel %vm322, %v301, 0.0
    %357 = vadd.xlane.f32.xlu0 %v356
    %v358 = vpop.xlane.xlu0 %357
    %v359 = vsel %vm322, %v302, 0.0
    %360 = vadd.xlane.f32.xlu0 %v359
    %v361 = vpop.xlane.xlu0 %360
    %v362 = vsel %vm322, %v303, 0.0
    %363 = vadd.xlane.f32.xlu0 %v362
    %v364 = vpop.xlane.xlu0 %363
    %v365 = vsel %vm322, %v304, 0.0
    %366 = vadd.xlane.f32.xlu0 %v365
    %v367 = vpop.xlane.xlu0 %366
    %v368 = vsel %vm322, %v305, 0.0
    %369 = vadd.xlane.f32.xlu0 %v368
    %v370 = vpop.xlane.xlu0 %369
    %v371 = vsel %vm322, %v306, 0.0
    %372 = vadd.xlane.f32.xlu0 %v371
    %v373 = vpop.xlane.xlu0 %372
    %v374 = vsel %vm322, %v307, 0.0
    %375 = vadd.xlane.f32.xlu0 %v374
    %v376 = vpop.xlane.xlu0 %375
    %v377 = vsel %vm322, %v308, 0.0
    %378 = vadd.xlane.f32.xlu0 %v377
    %v379 = vpop.xlane.xlu0 %378
    %v380 = vsel %vm322, %v309, 0.0
    %381 = vadd.xlane.f32.xlu0 %v380
    %v382 = vpop.xlane.xlu0 %381
    %v383 = vsel %vm322, %v310, 0.0
    %384 = vadd.xlane.f32.xlu0 %v383
    %v385 = vpop.xlane.xlu0 %384
    %v386 = vsel %vm322, %v311, 0.0
    %387 = vadd.xlane.f32.xlu0 %v386
    %v388 = vpop.xlane.xlu0 %387
    %v389 = vsel %vm322, %v312, 0.0
    %390 = vadd.xlane.f32.xlu0 %v389
    %v391 = vpop.xlane.xlu0 %390
    %v392 = vsel %vm322, %v313, 0.0
    %393 = vadd.xlane.f32.xlu0 %v392
    %v394 = vpop.xlane.xlu0 %393
    %v395 = vsel %vm322, %v314, 0.0
    %396 = vadd.xlane.f32.xlu0 %v395
    %v397 = vpop.xlane.xlu0 %396
    %v398 = vsel %vm322, %v315, 0.0
    %399 = vadd.xlane.f32.xlu0 %v398
    %v400 = vpop.xlane.xlu0 %399
    %v401 = vsel %vm322, %v316, 0.0
    %402 = vadd.xlane.f32.xlu0 %v401
    %v403 = vpop.xlane.xlu0 %402
    %v404 = vsel %vm322, %v317, 0.0
    %405 = vadd.xlane.f32.xlu0 %v404
    %v406 = vpop.xlane.xlu0 %405
    %v407 = vsel %vm322, %v318, 0.0
    %408 = vadd.xlane.f32.xlu0 %v407
    %v409 = vpop.xlane.xlu0 %408
    %v410 = vsel %vm322, %v319, 0.0
    %411 = vadd.xlane.f32.xlu0 %v410
    %v412 = vpop.xlane.xlu0 %411
    %v413 = vsel %vm322, %v320, 0.0
    %414 = vadd.xlane.f32.xlu0 %v413
    %v415 = vpop.xlane.xlu0 %414
    %v416 = vsel %vm322, %v321, 0.0
    %417 = vadd.xlane.f32.xlu0 %v416
    %v418 = vpop.xlane.xlu0 %417
    %vm419 = vcmp.gt.f32.partialorder %v106, 0.0
    %vm420 = vcmp.gt.f32.partialorder %v107, 0.0
    %v453 = vlaneseq
    %v454 = vand.u32 %v453, 127
    %v455 = vlaneseq
    %v456 = vshrl.u32 %v455, 7
    %v457 = vsub.s32 %v454, %v456
    %v458 = vrot.slane %v325, %v457
    %v459 = vadd.s32 %v454, 4294967288
    %v460 = vlaneseq
    %v461 = vshrl.u32 %v460, 7
    %v462 = vsub.s32 %v459, %v461
    %v463 = vrot.slane %v328, %v462
    %vm464 = vcmask 130112
    %v465 = vsel %vm464, %v463, %v458
    %v466 = vlaneseq
    %v467 = vshrl.u32 %v466, 7
    %v468 = vsub.s32 %v454, %v467
    %v469 = vrot.slane %v331, %v468
    %v470 = vlaneseq
    %v471 = vshrl.u32 %v470, 7
    %v472 = vsub.s32 %v459, %v471
    %v473 = vrot.slane %v334, %v472
    %v474 = vsel %vm464, %v473, %v469
    %v475 = vlaneseq
    %v476 = vshrl.u32 %v475, 7
    %v477 = vsub.s32 %v454, %v476
    %v478 = vrot.slane %v337, %v477
    %v479 = vlaneseq
    %v480 = vshrl.u32 %v479, 7
    %v481 = vsub.s32 %v459, %v480
    %v482 = vrot.slane %v340, %v481
    %v483 = vsel %vm464, %v482, %v478
    %v484 = vlaneseq
    %v485 = vshrl.u32 %v484, 7
    %v486 = vsub.s32 %v454, %v485
    %v487 = vrot.slane %v343, %v486
    %v488 = vlaneseq
    %v489 = vshrl.u32 %v488, 7
    %v490 = vsub.s32 %v459, %v489
    %v491 = vrot.slane %v346, %v490
    %v492 = vsel %vm464, %v491, %v487
    %v493 = vlaneseq
    %v494 = vshrl.u32 %v493, 7
    %v495 = vsub.s32 %v454, %v494
    %v496 = vrot.slane %v349, %v495
    %v497 = vlaneseq
    %v498 = vshrl.u32 %v497, 7
    %v499 = vsub.s32 %v459, %v498
    %v500 = vrot.slane %v352, %v499
    %v501 = vsel %vm464, %v500, %v496
    %v502 = vlaneseq
    %v503 = vshrl.u32 %v502, 7
    %v504 = vsub.s32 %v454, %v503
    %v505 = vrot.slane %v355, %v504
    %v506 = vlaneseq
    %v507 = vshrl.u32 %v506, 7
    %v508 = vsub.s32 %v459, %v507
    %v509 = vrot.slane %v358, %v508
    %v510 = vsel %vm464, %v509, %v505
    %v511 = vlaneseq
    %v512 = vshrl.u32 %v511, 7
    %v513 = vsub.s32 %v454, %v512
    %v514 = vrot.slane %v361, %v513
    %v515 = vlaneseq
    %v516 = vshrl.u32 %v515, 7
    %v517 = vsub.s32 %v459, %v516
    %v518 = vrot.slane %v364, %v517
    %v519 = vsel %vm464, %v518, %v514
    %v520 = vlaneseq
    %v521 = vshrl.u32 %v520, 7
    %v522 = vsub.s32 %v454, %v521
    %v523 = vrot.slane %v367, %v522
    %v524 = vlaneseq
    %v525 = vshrl.u32 %v524, 7
    %v526 = vsub.s32 %v459, %v525
    %v527 = vrot.slane %v370, %v526
    %v528 = vsel %vm464, %v527, %v523
    %v529 = vlaneseq
    %v530 = vshrl.u32 %v529, 7
    %v531 = vsub.s32 %v454, %v530
    %v532 = vrot.slane %v373, %v531
    %v533 = vlaneseq
    %v534 = vshrl.u32 %v533, 7
    %v535 = vsub.s32 %v459, %v534
    %v536 = vrot.slane %v376, %v535
    %v537 = vsel %vm464, %v536, %v532
    %v538 = vlaneseq
    %v539 = vshrl.u32 %v538, 7
    %v540 = vsub.s32 %v454, %v539
    %v541 = vrot.slane %v379, %v540
    %v542 = vlaneseq
    %v543 = vshrl.u32 %v542, 7
    %v544 = vsub.s32 %v459, %v543
    %v545 = vrot.slane %v382, %v544
    %v546 = vsel %vm464, %v545, %v541
    %v547 = vlaneseq
    %v548 = vshrl.u32 %v547, 7
    %v549 = vsub.s32 %v454, %v548
    %v550 = vrot.slane %v385, %v549
    %v551 = vlaneseq
    %v552 = vshrl.u32 %v551, 7
    %v553 = vsub.s32 %v459, %v552
    %v554 = vrot.slane %v388, %v553
    %v555 = vsel %vm464, %v554, %v550
    %v556 = vlaneseq
    %v557 = vshrl.u32 %v556, 7
    %v558 = vsub.s32 %v454, %v557
    %v559 = vrot.slane %v391, %v558
    %v560 = vlaneseq
    %v561 = vshrl.u32 %v560, 7
    %v562 = vsub.s32 %v459, %v561
    %v563 = vrot.slane %v394, %v562
    %v564 = vsel %vm464, %v563, %v559
    %v565 = vlaneseq
    %v566 = vshrl.u32 %v565, 7
    %v567 = vsub.s32 %v454, %v566
    %v568 = vrot.slane %v397, %v567
    %v569 = vlaneseq
    %v570 = vshrl.u32 %v569, 7
    %v571 = vsub.s32 %v459, %v570
    %v572 = vrot.slane %v400, %v571
    %v573 = vsel %vm464, %v572, %v568
    %v574 = vlaneseq
    %v575 = vshrl.u32 %v574, 7
    %v576 = vsub.s32 %v454, %v575
    %v577 = vrot.slane %v403, %v576
    %v578 = vlaneseq
    %v579 = vshrl.u32 %v578, 7
    %v580 = vsub.s32 %v459, %v579
    %v581 = vrot.slane %v406, %v580
    %v582 = vsel %vm464, %v581, %v577
    %v583 = vlaneseq
    %v584 = vshrl.u32 %v583, 7
    %v585 = vsub.s32 %v454, %v584
    %v586 = vrot.slane %v409, %v585
    %v587 = vlaneseq
    %v588 = vshrl.u32 %v587, 7
    %v589 = vsub.s32 %v459, %v588
    %v590 = vrot.slane %v412, %v589
    %v591 = vsel %vm464, %v590, %v586
    %v592 = vlaneseq
    %v593 = vshrl.u32 %v592, 7
    %v594 = vsub.s32 %v454, %v593
    %v595 = vrot.slane %v415, %v594
    %v596 = vlaneseq
    %v597 = vshrl.u32 %v596, 7
    %v598 = vsub.s32 %v459, %v597
    %v599 = vrot.slane %v418, %v598
    %v600 = vsel %vm464, %v599, %v595
    %vm601 = vcmask 1041409
    %v602 = vsel %vm601, %v474, %v465
    %vm603 = vcmask 1042434
    %v604 = vsel %vm603, %v483, %v602
    %vm605 = vcmask 1043459
    %v606 = vsel %vm605, %v492, %v604
    %vm607 = vcmask 1044484
    %v608 = vsel %vm607, %v501, %v606
    %vm609 = vcmask 1045509
    %v610 = vsel %vm609, %v510, %v608
    %vm611 = vcmask 1046534
    %v612 = vsel %vm611, %v519, %v610
    %vm613 = vcmask 1047559
    %v614 = vsel %vm613, %v528, %v612
    %v615 = vsel %vm601, %v546, %v537
    %v616 = vsel %vm603, %v555, %v615
    %v617 = vsel %vm605, %v564, %v616
    %v618 = vsel %vm607, %v573, %v617
    %v619 = vsel %vm609, %v582, %v618
    %v620 = vsel %vm611, %v591, %v619
    %v621 = vsel %vm613, %v600, %v620
    %v624 = vadd.f32 %v38, %v614
    %v625 = vadd.f32 %v39, %v621
    %v626 = vsel %vm419, %v624, -1e+30
    %v627 = vsel %vm420, %v625, -1e+30
    %vm628 = vcmask 130048
    %v629 = vsel %vm628, %v626, -inf
    %630 = vmax.xlane.f32.xlu0 %v629
    %v631 = vpop.xlane.xlu0 %630
    %v632 = vsel %vm628, %v627, -inf
    %633 = vmax.xlane.f32.xlu0 %v632
    %v634 = vpop.xlane.xlu0 %633
    %v635 = vsub.f32 %v626, %v631
    %v636 = vsub.f32 %v627, %v634
    %v637 = vmul.f32 %v635, 1.442695
    %v638 = vpow.pop %v637
    %v639 = vmul.f32 %v636, 1.442695
    %v640 = vpow.pop %v639
    %v641 = vmul.f32 %v638, %v106
    %v642 = vmul.f32 %v640, %v107
    %v643 = vsel %vm628, %v641, 0.0
    %644 = vadd.xlane.f32.xlu0 %v643
    %v645 = vpop.xlane.xlu0 %644
    %v646 = vsel %vm628, %v642, 0.0
    %647 = vadd.xlane.f32.xlu0 %v646
    %v648 = vpop.xlane.xlu0 %647
    %vm649 = vcmp.gt.f32.partialorder %v645, 0.0
    %vm650 = vcmp.gt.f32.partialorder %v648, 0.0
    %v651 = vsel %vm649, %v645, 1.0
    %v652 = vsel %vm650, %v648, 1.0
    %v653 = vrcp.pop %v651
    %v654 = vmul.f32 %v641, %v653
    %v655 = vrcp.pop %v652
    %v656 = vmul.f32 %v642, %v655
    %v657 = vlaneseq
    %v658 = vshrl.u32 %v657, 7
    %v659 = vsub.s32 0, %v658
    %v660 = vrot.slane %v654, %v659
    %662 = vbcast.lane.b32.xlu0 %v660, 256
    %v663 = vpop.permute.xlu0 %662
    %s665 = sor.u32 256, 8
    %666 = vbcast.lane.b32.xlu0 %v660, %s665
    %v667 = vpop.permute.xlu0 %666
    %v668 = vlaneseq
    %v669 = vshrl.u32 %v668, 7
    %v670 = vsub.s32 1, %v669
    %v671 = vrot.slane %v654, %v670
    %673 = vbcast.lane.b32.xlu0 %v671, 256
    %v674 = vpop.permute.xlu0 %673
    %s676 = sor.u32 256, 8
    %677 = vbcast.lane.b32.xlu0 %v671, %s676
    %v678 = vpop.permute.xlu0 %677
    %v679 = vlaneseq
    %v680 = vshrl.u32 %v679, 7
    %v681 = vsub.s32 2, %v680
    %v682 = vrot.slane %v654, %v681
    %684 = vbcast.lane.b32.xlu0 %v682, 256
    %v685 = vpop.permute.xlu0 %684
    %s687 = sor.u32 256, 8
    %688 = vbcast.lane.b32.xlu0 %v682, %s687
    %v689 = vpop.permute.xlu0 %688
    %v690 = vlaneseq
    %v691 = vshrl.u32 %v690, 7
    %v692 = vsub.s32 3, %v691
    %v693 = vrot.slane %v654, %v692
    %695 = vbcast.lane.b32.xlu0 %v693, 256
    %v696 = vpop.permute.xlu0 %695
    %s698 = sor.u32 256, 8
    %699 = vbcast.lane.b32.xlu0 %v693, %s698
    %v700 = vpop.permute.xlu0 %699
    %v701 = vlaneseq
    %v702 = vshrl.u32 %v701, 7
    %v703 = vsub.s32 4, %v702
    %v704 = vrot.slane %v654, %v703
    %706 = vbcast.lane.b32.xlu0 %v704, 256
    %v707 = vpop.permute.xlu0 %706
    %s709 = sor.u32 256, 8
    %710 = vbcast.lane.b32.xlu0 %v704, %s709
    %v711 = vpop.permute.xlu0 %710
    %v712 = vlaneseq
    %v713 = vshrl.u32 %v712, 7
    %v714 = vsub.s32 5, %v713
    %v715 = vrot.slane %v654, %v714
    %717 = vbcast.lane.b32.xlu0 %v715, 256
    %v718 = vpop.permute.xlu0 %717
    %s720 = sor.u32 256, 8
    %721 = vbcast.lane.b32.xlu0 %v715, %s720
    %v722 = vpop.permute.xlu0 %721
    %v723 = vlaneseq
    %v724 = vshrl.u32 %v723, 7
    %v725 = vsub.s32 6, %v724
    %v726 = vrot.slane %v654, %v725
    %728 = vbcast.lane.b32.xlu0 %v726, 256
    %v729 = vpop.permute.xlu0 %728
    %s731 = sor.u32 256, 8
    %732 = vbcast.lane.b32.xlu0 %v726, %s731
    %v733 = vpop.permute.xlu0 %732
    %v734 = vlaneseq
    %v735 = vshrl.u32 %v734, 7
    %v736 = vsub.s32 7, %v735
    %v737 = vrot.slane %v654, %v736
    %739 = vbcast.lane.b32.xlu0 %v737, 256
    %v740 = vpop.permute.xlu0 %739
    %s742 = sor.u32 256, 8
    %743 = vbcast.lane.b32.xlu0 %v737, %s742
    %v744 = vpop.permute.xlu0 %743
    %v745 = vlaneseq
    %v746 = vshrl.u32 %v745, 7
    %v747 = vsub.s32 0, %v746
    %v748 = vrot.slane %v656, %v747
    %750 = vbcast.lane.b32.xlu0 %v748, 256
    %v751 = vpop.permute.xlu0 %750
    %s753 = sor.u32 256, 8
    %754 = vbcast.lane.b32.xlu0 %v748, %s753
    %v755 = vpop.permute.xlu0 %754
    %v756 = vlaneseq
    %v757 = vshrl.u32 %v756, 7
    %v758 = vsub.s32 1, %v757
    %v759 = vrot.slane %v656, %v758
    %761 = vbcast.lane.b32.xlu0 %v759, 256
    %v762 = vpop.permute.xlu0 %761
    %s764 = sor.u32 256, 8
    %765 = vbcast.lane.b32.xlu0 %v759, %s764
    %v766 = vpop.permute.xlu0 %765
    %v767 = vlaneseq
    %v768 = vshrl.u32 %v767, 7
    %v769 = vsub.s32 2, %v768
    %v770 = vrot.slane %v656, %v769
    %772 = vbcast.lane.b32.xlu0 %v770, 256
    %v773 = vpop.permute.xlu0 %772
    %s775 = sor.u32 256, 8
    %776 = vbcast.lane.b32.xlu0 %v770, %s775
    %v777 = vpop.permute.xlu0 %776
    %v778 = vlaneseq
    %v779 = vshrl.u32 %v778, 7
    %v780 = vsub.s32 3, %v779
    %v781 = vrot.slane %v656, %v780
    %783 = vbcast.lane.b32.xlu0 %v781, 256
    %v784 = vpop.permute.xlu0 %783
    %s786 = sor.u32 256, 8
    %787 = vbcast.lane.b32.xlu0 %v781, %s786
    %v788 = vpop.permute.xlu0 %787
    %v789 = vlaneseq
    %v790 = vshrl.u32 %v789, 7
    %v791 = vsub.s32 4, %v790
    %v792 = vrot.slane %v656, %v791
    %794 = vbcast.lane.b32.xlu0 %v792, 256
    %v795 = vpop.permute.xlu0 %794
    %s797 = sor.u32 256, 8
    %798 = vbcast.lane.b32.xlu0 %v792, %s797
    %v799 = vpop.permute.xlu0 %798
    %v800 = vlaneseq
    %v801 = vshrl.u32 %v800, 7
    %v802 = vsub.s32 5, %v801
    %v803 = vrot.slane %v656, %v802
    %805 = vbcast.lane.b32.xlu0 %v803, 256
    %v806 = vpop.permute.xlu0 %805
    %s808 = sor.u32 256, 8
    %809 = vbcast.lane.b32.xlu0 %v803, %s808
    %v810 = vpop.permute.xlu0 %809
    %v811 = vlaneseq
    %v812 = vshrl.u32 %v811, 7
    %v813 = vsub.s32 6, %v812
    %v814 = vrot.slane %v656, %v813
    %816 = vbcast.lane.b32.xlu0 %v814, 256
    %v817 = vpop.permute.xlu0 %816
    %s819 = sor.u32 256, 8
    %820 = vbcast.lane.b32.xlu0 %v814, %s819
    %v821 = vpop.permute.xlu0 %820
    %v822 = vlaneseq
    %v823 = vshrl.u32 %v822, 7
    %v824 = vsub.s32 7, %v823
    %v825 = vrot.slane %v656, %v824
    %827 = vbcast.lane.b32.xlu0 %v825, 256
    %v828 = vpop.permute.xlu0 %827
    %s830 = sor.u32 256, 8
    %831 = vbcast.lane.b32.xlu0 %v825, %s830
    %v832 = vpop.permute.xlu0 %831
    %v833 = vmul.f32 %v663, %v74
    %v834 = vmul.f32 %v667, %v75
    %v835 = vmul.f32 %v674, %v76
    %v836 = vmul.f32 %v678, %v77
    %v837 = vmul.f32 %v685, %v78
    %v838 = vmul.f32 %v689, %v79
    %v839 = vmul.f32 %v696, %v80
    %v840 = vmul.f32 %v700, %v81
    %v841 = vmul.f32 %v707, %v82
    %v842 = vmul.f32 %v711, %v83
    %v843 = vmul.f32 %v718, %v84
    %v844 = vmul.f32 %v722, %v85
    %v845 = vmul.f32 %v729, %v86
    %v846 = vmul.f32 %v733, %v87
    %v847 = vmul.f32 %v740, %v88
    %v848 = vmul.f32 %v744, %v89
    %v849 = vmul.f32 %v751, %v90
    %v850 = vmul.f32 %v755, %v91
    %v851 = vmul.f32 %v762, %v92
    %v852 = vmul.f32 %v766, %v93
    %v853 = vmul.f32 %v773, %v94
    %v854 = vmul.f32 %v777, %v95
    %v855 = vmul.f32 %v784, %v96
    %v856 = vmul.f32 %v788, %v97
    %v857 = vmul.f32 %v795, %v98
    %v858 = vmul.f32 %v799, %v99
    %v859 = vmul.f32 %v806, %v100
    %v860 = vmul.f32 %v810, %v101
    %v861 = vmul.f32 %v817, %v102
    %v862 = vmul.f32 %v821, %v103
    %v863 = vmul.f32 %v828, %v104
    %v864 = vmul.f32 %v832, %v105
    %v865 = vmul.f32 %v833, %v108
    %v866 = vmul.f32 %v834, %v109
    %v867 = vmul.f32 %v835, %v108
    %v868 = vmul.f32 %v836, %v109
    %v869 = vmul.f32 %v837, %v108
    %v870 = vmul.f32 %v838, %v109
    %v871 = vmul.f32 %v839, %v108
    %v872 = vmul.f32 %v840, %v109
    %v873 = vmul.f32 %v841, %v108
    %v874 = vmul.f32 %v842, %v109
    %v875 = vmul.f32 %v843, %v108
    %v876 = vmul.f32 %v844, %v109
    %v877 = vmul.f32 %v845, %v108
    %v878 = vmul.f32 %v846, %v109
    %v879 = vmul.f32 %v847, %v108
    %v880 = vmul.f32 %v848, %v109
    %v881 = vmul.f32 %v849, %v108
    %v882 = vmul.f32 %v850, %v109
    %v883 = vmul.f32 %v851, %v108
    %v884 = vmul.f32 %v852, %v109
    %v885 = vmul.f32 %v853, %v108
    %v886 = vmul.f32 %v854, %v109
    %v887 = vmul.f32 %v855, %v108
    %v888 = vmul.f32 %v856, %v109
    %v889 = vmul.f32 %v857, %v108
    %v890 = vmul.f32 %v858, %v109
    %v891 = vmul.f32 %v859, %v108
    %v892 = vmul.f32 %v860, %v109
    %v893 = vmul.f32 %v861, %v108
    %v894 = vmul.f32 %v862, %v109
    %v895 = vmul.f32 %v863, %v108
    %v896 = vmul.f32 %v864, %v109
    %v897 = vsel %vm322, %v865, 0.0
    %v898 = vsel %vm322, %v866, 0.0
    %v899 = vadd.f32 %v897, %v898
    %v900 = vrot.slane %v899, 4
    %v901 = vadd.f32 %v899, %v900
    %v902 = vrot.slane %v901, 2
    %v903 = vadd.f32 %v901, %v902
    %v904 = vrot.slane %v903, 1
    %v905 = vadd.f32 %v903, %v904
    %v906 = vsel %vm322, %v867, 0.0
    %v907 = vsel %vm322, %v868, 0.0
    %v908 = vadd.f32 %v906, %v907
    %v909 = vrot.slane %v908, 4
    %v910 = vadd.f32 %v908, %v909
    %v911 = vrot.slane %v910, 2
    %v912 = vadd.f32 %v910, %v911
    %v913 = vrot.slane %v912, 1
    %v914 = vadd.f32 %v912, %v913
    %v915 = vsel %vm322, %v869, 0.0
    %v916 = vsel %vm322, %v870, 0.0
    %v917 = vadd.f32 %v915, %v916
    %v918 = vrot.slane %v917, 4
    %v919 = vadd.f32 %v917, %v918
    %v920 = vrot.slane %v919, 2
    %v921 = vadd.f32 %v919, %v920
    %v922 = vrot.slane %v921, 1
    %v923 = vadd.f32 %v921, %v922
    %v924 = vsel %vm322, %v871, 0.0
    %v925 = vsel %vm322, %v872, 0.0
    %v926 = vadd.f32 %v924, %v925
    %v927 = vrot.slane %v926, 4
    %v928 = vadd.f32 %v926, %v927
    %v929 = vrot.slane %v928, 2
    %v930 = vadd.f32 %v928, %v929
    %v931 = vrot.slane %v930, 1
    %v932 = vadd.f32 %v930, %v931
    %v933 = vsel %vm322, %v873, 0.0
    %v934 = vsel %vm322, %v874, 0.0
    %v935 = vadd.f32 %v933, %v934
    %v936 = vrot.slane %v935, 4
    %v937 = vadd.f32 %v935, %v936
    %v938 = vrot.slane %v937, 2
    %v939 = vadd.f32 %v937, %v938
    %v940 = vrot.slane %v939, 1
    %v941 = vadd.f32 %v939, %v940
    %v942 = vsel %vm322, %v875, 0.0
    %v943 = vsel %vm322, %v876, 0.0
    %v944 = vadd.f32 %v942, %v943
    %v945 = vrot.slane %v944, 4
    %v946 = vadd.f32 %v944, %v945
    %v947 = vrot.slane %v946, 2
    %v948 = vadd.f32 %v946, %v947
    %v949 = vrot.slane %v948, 1
    %v950 = vadd.f32 %v948, %v949
    %v951 = vsel %vm322, %v877, 0.0
    %v952 = vsel %vm322, %v878, 0.0
    %v953 = vadd.f32 %v951, %v952
    %v954 = vrot.slane %v953, 4
    %v955 = vadd.f32 %v953, %v954
    %v956 = vrot.slane %v955, 2
    %v957 = vadd.f32 %v955, %v956
    %v958 = vrot.slane %v957, 1
    %v959 = vadd.f32 %v957, %v958
    %v960 = vsel %vm322, %v879, 0.0
    %v961 = vsel %vm322, %v880, 0.0
    %v962 = vadd.f32 %v960, %v961
    %v963 = vrot.slane %v962, 4
    %v964 = vadd.f32 %v962, %v963
    %v965 = vrot.slane %v964, 2
    %v966 = vadd.f32 %v964, %v965
    %v967 = vrot.slane %v966, 1
    %v968 = vadd.f32 %v966, %v967
    %v969 = vsel %vm322, %v881, 0.0
    %v970 = vsel %vm322, %v882, 0.0
    %v971 = vadd.f32 %v969, %v970
    %v972 = vrot.slane %v971, 4
    %v973 = vadd.f32 %v971, %v972
    %v974 = vrot.slane %v973, 2
    %v975 = vadd.f32 %v973, %v974
    %v976 = vrot.slane %v975, 1
    %v977 = vadd.f32 %v975, %v976
    %v978 = vsel %vm322, %v883, 0.0
    %v979 = vsel %vm322, %v884, 0.0
    %v980 = vadd.f32 %v978, %v979
    %v981 = vrot.slane %v980, 4
    %v982 = vadd.f32 %v980, %v981
    %v983 = vrot.slane %v982, 2
    %v984 = vadd.f32 %v982, %v983
    %v985 = vrot.slane %v984, 1
    %v986 = vadd.f32 %v984, %v985
    %v987 = vsel %vm322, %v885, 0.0
    %v988 = vsel %vm322, %v886, 0.0
    %v989 = vadd.f32 %v987, %v988
    %v990 = vrot.slane %v989, 4
    %v991 = vadd.f32 %v989, %v990
    %v992 = vrot.slane %v991, 2
    %v993 = vadd.f32 %v991, %v992
    %v994 = vrot.slane %v993, 1
    %v995 = vadd.f32 %v993, %v994
    %v996 = vsel %vm322, %v887, 0.0
    %v997 = vsel %vm322, %v888, 0.0
    %v998 = vadd.f32 %v996, %v997
    %v999 = vrot.slane %v998, 4
    %v1000 = vadd.f32 %v998, %v999
    %v1001 = vrot.slane %v1000, 2
    %v1002 = vadd.f32 %v1000, %v1001
    %v1003 = vrot.slane %v1002, 1
    %v1004 = vadd.f32 %v1002, %v1003
    %v1005 = vsel %vm322, %v889, 0.0
    %v1006 = vsel %vm322, %v890, 0.0
    %v1007 = vadd.f32 %v1005, %v1006
    %v1008 = vrot.slane %v1007, 4
    %v1009 = vadd.f32 %v1007, %v1008
    %v1010 = vrot.slane %v1009, 2
    %v1011 = vadd.f32 %v1009, %v1010
    %v1012 = vrot.slane %v1011, 1
    %v1013 = vadd.f32 %v1011, %v1012
    %v1014 = vsel %vm322, %v891, 0.0
    %v1015 = vsel %vm322, %v892, 0.0
    %v1016 = vadd.f32 %v1014, %v1015
    %v1017 = vrot.slane %v1016, 4
    %v1018 = vadd.f32 %v1016, %v1017
    %v1019 = vrot.slane %v1018, 2
    %v1020 = vadd.f32 %v1018, %v1019
    %v1021 = vrot.slane %v1020, 1
    %v1022 = vadd.f32 %v1020, %v1021
    %v1023 = vsel %vm322, %v893, 0.0
    %v1024 = vsel %vm322, %v894, 0.0
    %v1025 = vadd.f32 %v1023, %v1024
    %v1026 = vrot.slane %v1025, 4
    %v1027 = vadd.f32 %v1025, %v1026
    %v1028 = vrot.slane %v1027, 2
    %v1029 = vadd.f32 %v1027, %v1028
    %v1030 = vrot.slane %v1029, 1
    %v1031 = vadd.f32 %v1029, %v1030
    %v1032 = vsel %vm322, %v895, 0.0
    %v1033 = vsel %vm322, %v896, 0.0
    %v1034 = vadd.f32 %v1032, %v1033
    %v1035 = vrot.slane %v1034, 4
    %v1036 = vadd.f32 %v1034, %v1035
    %v1037 = vrot.slane %v1036, 2
    %v1038 = vadd.f32 %v1036, %v1037
    %v1039 = vrot.slane %v1038, 1
    %v1040 = vadd.f32 %v1038, %v1039
    %v1041 = vld [vmem:[%s6] sm:$0xff]
    %v1042 = vld [vmem:[%s6 + $0x8] sm:$0xff]
    %v1059 = vsel %vm601, %v914, %v905
    %v1060 = vsel %vm603, %v923, %v1059
    %v1061 = vsel %vm605, %v932, %v1060
    %v1062 = vsel %vm607, %v941, %v1061
    %v1063 = vsel %vm609, %v950, %v1062
    %v1064 = vsel %vm611, %v959, %v1063
    %v1065 = vsel %vm613, %v968, %v1064
    %v1066 = vsel %vm601, %v986, %v977
    %v1067 = vsel %vm603, %v995, %v1066
    %v1068 = vsel %vm605, %v1004, %v1067
    %v1069 = vsel %vm607, %v1013, %v1068
    %v1070 = vsel %vm609, %v1022, %v1069
    %v1071 = vsel %vm611, %v1031, %v1070
    %v1072 = vsel %vm613, %v1040, %v1071
    %v1075 = vadd.f32 %v1041, %v1065
    %v1076 = vadd.f32 %v1042, %v1072
    %1077 = vst.msk [vmem:[#allocation2] sm:$0xff] %vm322, %v1075
    %1078 = vst.msk [vmem:[#allocation2 + $0x8] sm:$0xff] %vm322, %v1076
    %v1079 = vld [vmem:[%s4] sm:$0x7]
    %v1080 = vld [vmem:[%s4 + $0x4] sm:$0x7]
    %v1081 = vld [vmem:[%s4 + $0x8] sm:$0x7]
    %v1082 = vld [vmem:[%s4 + $0xc] sm:$0x7]
    %v1083 = vld [vmem:[%s4 + $0x10] sm:$0x7]
    %v1084 = vld [vmem:[%s4 + $0x14] sm:$0x7]
    %v1085 = vld [vmem:[%s4 + $0x18] sm:$0x7]
    %v1086 = vld [vmem:[%s4 + $0x1c] sm:$0x7]
    %v1087 = vld [vmem:[%s4 + $0x20] sm:$0x7]
    %v1088 = vld [vmem:[%s4 + $0x24] sm:$0x7]
    %v1089 = vld [vmem:[%s4 + $0x28] sm:$0x7]
    %v1090 = vld [vmem:[%s4 + $0x2c] sm:$0x7]
    %v1091 = vld [vmem:[%s4 + $0x30] sm:$0x7]
    %v1092 = vld [vmem:[%s4 + $0x34] sm:$0x7]
    %v1093 = vld [vmem:[%s4 + $0x38] sm:$0x7]
    %v1094 = vld [vmem:[%s4 + $0x3c] sm:$0x7]
    %v1095 = vld [vmem:[%s7] sm:$0xff]
    %v1096 = vld [vmem:[%s7 + $0x8] sm:$0xff]
    %v1097 = vld [vmem:[%s7 + $0x10] sm:$0xff]
    %v1098 = vld [vmem:[%s7 + $0x18] sm:$0xff]
    %v1099 = vld [vmem:[%s7 + $0x20] sm:$0xff]
    %v1100 = vld [vmem:[%s7 + $0x28] sm:$0xff]
    %v1101 = vld [vmem:[%s9] sm:$0x1]
    %v1102 = vlaneseq
    %v1103 = vshrl.u32 %v1102, 7
    %v1104 = vsub.s32 0, %v1103
    %v1105 = vrot.slane %v1079, %v1104
    %1107 = vbcast.lane.b32.xlu0 %v1105, 256
    %v1108 = vpop.permute.xlu0 %1107
    %s1110 = sor.u32 256, 8
    %1111 = vbcast.lane.b32.xlu0 %v1105, %s1110
    %v1112 = vpop.permute.xlu0 %1111
    %v1113 = vlaneseq
    %v1114 = vshrl.u32 %v1113, 7
    %v1115 = vsub.s32 0, %v1114
    %v1116 = vrot.slane %v1080, %v1115
    %1118 = vbcast.lane.b32.xlu0 %v1116, 256
    %v1119 = vpop.permute.xlu0 %1118
    %s1121 = sor.u32 256, 8
    %1122 = vbcast.lane.b32.xlu0 %v1116, %s1121
    %v1123 = vpop.permute.xlu0 %1122
    %v1124 = vlaneseq
    %v1125 = vshrl.u32 %v1124, 7
    %v1126 = vsub.s32 0, %v1125
    %v1127 = vrot.slane %v1081, %v1126
    %1129 = vbcast.lane.b32.xlu0 %v1127, 256
    %v1130 = vpop.permute.xlu0 %1129
    %s1132 = sor.u32 256, 8
    %1133 = vbcast.lane.b32.xlu0 %v1127, %s1132
    %v1134 = vpop.permute.xlu0 %1133
    %v1135 = vlaneseq
    %v1136 = vshrl.u32 %v1135, 7
    %v1137 = vsub.s32 0, %v1136
    %v1138 = vrot.slane %v1082, %v1137
    %1140 = vbcast.lane.b32.xlu0 %v1138, 256
    %v1141 = vpop.permute.xlu0 %1140
    %s1143 = sor.u32 256, 8
    %1144 = vbcast.lane.b32.xlu0 %v1138, %s1143
    %v1145 = vpop.permute.xlu0 %1144
    %v1146 = vlaneseq
    %v1147 = vshrl.u32 %v1146, 7
    %v1148 = vsub.s32 0, %v1147
    %v1149 = vrot.slane %v1083, %v1148
    %1151 = vbcast.lane.b32.xlu0 %v1149, 256
    %v1152 = vpop.permute.xlu0 %1151
    %s1154 = sor.u32 256, 8
    %1155 = vbcast.lane.b32.xlu0 %v1149, %s1154
    %v1156 = vpop.permute.xlu0 %1155
    %v1157 = vlaneseq
    %v1158 = vshrl.u32 %v1157, 7
    %v1159 = vsub.s32 0, %v1158
    %v1160 = vrot.slane %v1084, %v1159
    %1162 = vbcast.lane.b32.xlu0 %v1160, 256
    %v1163 = vpop.permute.xlu0 %1162
    %s1165 = sor.u32 256, 8
    %1166 = vbcast.lane.b32.xlu0 %v1160, %s1165
    %v1167 = vpop.permute.xlu0 %1166
    %v1168 = vlaneseq
    %v1169 = vshrl.u32 %v1168, 7
    %v1170 = vsub.s32 0, %v1169
    %v1171 = vrot.slane %v1085, %v1170
    %1173 = vbcast.lane.b32.xlu0 %v1171, 256
    %v1174 = vpop.permute.xlu0 %1173
    %s1176 = sor.u32 256, 8
    %1177 = vbcast.lane.b32.xlu0 %v1171, %s1176
    %v1178 = vpop.permute.xlu0 %1177
    %v1179 = vlaneseq
    %v1180 = vshrl.u32 %v1179, 7
    %v1181 = vsub.s32 0, %v1180
    %v1182 = vrot.slane %v1086, %v1181
    %1184 = vbcast.lane.b32.xlu0 %v1182, 256
    %v1185 = vpop.permute.xlu0 %1184
    %s1187 = sor.u32 256, 8
    %1188 = vbcast.lane.b32.xlu0 %v1182, %s1187
    %v1189 = vpop.permute.xlu0 %1188
    %v1190 = vlaneseq
    %v1191 = vshrl.u32 %v1190, 7
    %v1192 = vsub.s32 0, %v1191
    %v1193 = vrot.slane %v1087, %v1192
    %1195 = vbcast.lane.b32.xlu0 %v1193, 256
    %v1196 = vpop.permute.xlu0 %1195
    %s1198 = sor.u32 256, 8
    %1199 = vbcast.lane.b32.xlu0 %v1193, %s1198
    %v1200 = vpop.permute.xlu0 %1199
    %v1201 = vlaneseq
    %v1202 = vshrl.u32 %v1201, 7
    %v1203 = vsub.s32 0, %v1202
    %v1204 = vrot.slane %v1088, %v1203
    %1206 = vbcast.lane.b32.xlu0 %v1204, 256
    %v1207 = vpop.permute.xlu0 %1206
    %s1209 = sor.u32 256, 8
    %1210 = vbcast.lane.b32.xlu0 %v1204, %s1209
    %v1211 = vpop.permute.xlu0 %1210
    %v1212 = vlaneseq
    %v1213 = vshrl.u32 %v1212, 7
    %v1214 = vsub.s32 0, %v1213
    %v1215 = vrot.slane %v1089, %v1214
    %1217 = vbcast.lane.b32.xlu0 %v1215, 256
    %v1218 = vpop.permute.xlu0 %1217
    %s1220 = sor.u32 256, 8
    %1221 = vbcast.lane.b32.xlu0 %v1215, %s1220
    %v1222 = vpop.permute.xlu0 %1221
    %v1223 = vlaneseq
    %v1224 = vshrl.u32 %v1223, 7
    %v1225 = vsub.s32 0, %v1224
    %v1226 = vrot.slane %v1090, %v1225
    %1228 = vbcast.lane.b32.xlu0 %v1226, 256
    %v1229 = vpop.permute.xlu0 %1228
    %s1231 = sor.u32 256, 8
    %1232 = vbcast.lane.b32.xlu0 %v1226, %s1231
    %v1233 = vpop.permute.xlu0 %1232
    %v1234 = vlaneseq
    %v1235 = vshrl.u32 %v1234, 7
    %v1236 = vsub.s32 0, %v1235
    %v1237 = vrot.slane %v1091, %v1236
    %1239 = vbcast.lane.b32.xlu0 %v1237, 256
    %v1240 = vpop.permute.xlu0 %1239
    %s1242 = sor.u32 256, 8
    %1243 = vbcast.lane.b32.xlu0 %v1237, %s1242
    %v1244 = vpop.permute.xlu0 %1243
    %v1245 = vlaneseq
    %v1246 = vshrl.u32 %v1245, 7
    %v1247 = vsub.s32 0, %v1246
    %v1248 = vrot.slane %v1092, %v1247
    %1250 = vbcast.lane.b32.xlu0 %v1248, 256
    %v1251 = vpop.permute.xlu0 %1250
    %s1253 = sor.u32 256, 8
    %1254 = vbcast.lane.b32.xlu0 %v1248, %s1253
    %v1255 = vpop.permute.xlu0 %1254
    %v1256 = vlaneseq
    %v1257 = vshrl.u32 %v1256, 7
    %v1258 = vsub.s32 0, %v1257
    %v1259 = vrot.slane %v1093, %v1258
    %1261 = vbcast.lane.b32.xlu0 %v1259, 256
    %v1262 = vpop.permute.xlu0 %1261
    %s1264 = sor.u32 256, 8
    %1265 = vbcast.lane.b32.xlu0 %v1259, %s1264
    %v1266 = vpop.permute.xlu0 %1265
    %v1267 = vlaneseq
    %v1268 = vshrl.u32 %v1267, 7
    %v1269 = vsub.s32 0, %v1268
    %v1270 = vrot.slane %v1094, %v1269
    %1272 = vbcast.lane.b32.xlu0 %v1270, 256
    %v1273 = vpop.permute.xlu0 %1272
    %s1275 = sor.u32 256, 8
    %1276 = vbcast.lane.b32.xlu0 %v1270, %s1275
    %v1277 = vpop.permute.xlu0 %1276
    %v1278 = vmul.f32 %v1108, %v865
    %v1279 = vmul.f32 %v1112, %v866
    %v1280 = vmul.f32 %v1119, %v867
    %v1281 = vmul.f32 %v1123, %v868
    %v1282 = vmul.f32 %v1130, %v869
    %v1283 = vmul.f32 %v1134, %v870
    %v1284 = vmul.f32 %v1141, %v871
    %v1285 = vmul.f32 %v1145, %v872
    %v1286 = vmul.f32 %v1152, %v873
    %v1287 = vmul.f32 %v1156, %v874
    %v1288 = vmul.f32 %v1163, %v875
    %v1289 = vmul.f32 %v1167, %v876
    %v1290 = vmul.f32 %v1174, %v877
    %v1291 = vmul.f32 %v1178, %v878
    %v1292 = vmul.f32 %v1185, %v879
    %v1293 = vmul.f32 %v1189, %v880
    %v1294 = vmul.f32 %v1196, %v881
    %v1295 = vmul.f32 %v1200, %v882
    %v1296 = vmul.f32 %v1207, %v883
    %v1297 = vmul.f32 %v1211, %v884
    %v1298 = vmul.f32 %v1218, %v885
    %v1299 = vmul.f32 %v1222, %v886
    %v1300 = vmul.f32 %v1229, %v887
    %v1301 = vmul.f32 %v1233, %v888
    %v1302 = vmul.f32 %v1240, %v889
    %v1303 = vmul.f32 %v1244, %v890
    %v1304 = vmul.f32 %v1251, %v891
    %v1305 = vmul.f32 %v1255, %v892
    %v1306 = vmul.f32 %v1262, %v893
    %v1307 = vmul.f32 %v1266, %v894
    %v1308 = vmul.f32 %v1273, %v895
    %v1309 = vmul.f32 %v1277, %v896
    %v1310 = vsel %vm322, %v1278, 0.0
    %v1311 = vsel %vm322, %v1279, 0.0
    %v1312 = vadd.f32 %v1310, %v1311
    %v1313 = vrot.slane %v1312, 4
    %v1314 = vadd.f32 %v1312, %v1313
    %v1315 = vrot.slane %v1314, 2
    %v1316 = vadd.f32 %v1314, %v1315
    %v1317 = vrot.slane %v1316, 1
    %v1318 = vadd.f32 %v1316, %v1317
    %v1319 = vsel %vm322, %v1280, 0.0
    %v1320 = vsel %vm322, %v1281, 0.0
    %v1321 = vadd.f32 %v1319, %v1320
    %v1322 = vrot.slane %v1321, 4
    %v1323 = vadd.f32 %v1321, %v1322
    %v1324 = vrot.slane %v1323, 2
    %v1325 = vadd.f32 %v1323, %v1324
    %v1326 = vrot.slane %v1325, 1
    %v1327 = vadd.f32 %v1325, %v1326
    %v1328 = vsel %vm322, %v1282, 0.0
    %v1329 = vsel %vm322, %v1283, 0.0
    %v1330 = vadd.f32 %v1328, %v1329
    %v1331 = vrot.slane %v1330, 4
    %v1332 = vadd.f32 %v1330, %v1331
    %v1333 = vrot.slane %v1332, 2
    %v1334 = vadd.f32 %v1332, %v1333
    %v1335 = vrot.slane %v1334, 1
    %v1336 = vadd.f32 %v1334, %v1335
    %v1337 = vsel %vm322, %v1284, 0.0
    %v1338 = vsel %vm322, %v1285, 0.0
    %v1339 = vadd.f32 %v1337, %v1338
    %v1340 = vrot.slane %v1339, 4
    %v1341 = vadd.f32 %v1339, %v1340
    %v1342 = vrot.slane %v1341, 2
    %v1343 = vadd.f32 %v1341, %v1342
    %v1344 = vrot.slane %v1343, 1
    %v1345 = vadd.f32 %v1343, %v1344
    %v1346 = vsel %vm322, %v1286, 0.0
    %v1347 = vsel %vm322, %v1287, 0.0
    %v1348 = vadd.f32 %v1346, %v1347
    %v1349 = vrot.slane %v1348, 4
    %v1350 = vadd.f32 %v1348, %v1349
    %v1351 = vrot.slane %v1350, 2
    %v1352 = vadd.f32 %v1350, %v1351
    %v1353 = vrot.slane %v1352, 1
    %v1354 = vadd.f32 %v1352, %v1353
    %v1355 = vsel %vm322, %v1288, 0.0
    %v1356 = vsel %vm322, %v1289, 0.0
    %v1357 = vadd.f32 %v1355, %v1356
    %v1358 = vrot.slane %v1357, 4
    %v1359 = vadd.f32 %v1357, %v1358
    %v1360 = vrot.slane %v1359, 2
    %v1361 = vadd.f32 %v1359, %v1360
    %v1362 = vrot.slane %v1361, 1
    %v1363 = vadd.f32 %v1361, %v1362
    %v1364 = vsel %vm322, %v1290, 0.0
    %v1365 = vsel %vm322, %v1291, 0.0
    %v1366 = vadd.f32 %v1364, %v1365
    %v1367 = vrot.slane %v1366, 4
    %v1368 = vadd.f32 %v1366, %v1367
    %v1369 = vrot.slane %v1368, 2
    %v1370 = vadd.f32 %v1368, %v1369
    %v1371 = vrot.slane %v1370, 1
    %v1372 = vadd.f32 %v1370, %v1371
    %v1373 = vsel %vm322, %v1292, 0.0
    %v1374 = vsel %vm322, %v1293, 0.0
    %v1375 = vadd.f32 %v1373, %v1374
    %v1376 = vrot.slane %v1375, 4
    %v1377 = vadd.f32 %v1375, %v1376
    %v1378 = vrot.slane %v1377, 2
    %v1379 = vadd.f32 %v1377, %v1378
    %v1380 = vrot.slane %v1379, 1
    %v1381 = vadd.f32 %v1379, %v1380
    %v1382 = vsel %vm322, %v1294, 0.0
    %v1383 = vsel %vm322, %v1295, 0.0
    %v1384 = vadd.f32 %v1382, %v1383
    %v1385 = vrot.slane %v1384, 4
    %v1386 = vadd.f32 %v1384, %v1385
    %v1387 = vrot.slane %v1386, 2
    %v1388 = vadd.f32 %v1386, %v1387
    %v1389 = vrot.slane %v1388, 1
    %v1390 = vadd.f32 %v1388, %v1389
    %v1391 = vsel %vm322, %v1296, 0.0
    %v1392 = vsel %vm322, %v1297, 0.0
    %v1393 = vadd.f32 %v1391, %v1392
    %v1394 = vrot.slane %v1393, 4
    %v1395 = vadd.f32 %v1393, %v1394
    %v1396 = vrot.slane %v1395, 2
    %v1397 = vadd.f32 %v1395, %v1396
    %v1398 = vrot.slane %v1397, 1
    %v1399 = vadd.f32 %v1397, %v1398
    %v1400 = vsel %vm322, %v1298, 0.0
    %v1401 = vsel %vm322, %v1299, 0.0
    %v1402 = vadd.f32 %v1400, %v1401
    %v1403 = vrot.slane %v1402, 4
    %v1404 = vadd.f32 %v1402, %v1403
    %v1405 = vrot.slane %v1404, 2
    %v1406 = vadd.f32 %v1404, %v1405
    %v1407 = vrot.slane %v1406, 1
    %v1408 = vadd.f32 %v1406, %v1407
    %v1409 = vsel %vm322, %v1300, 0.0
    %v1410 = vsel %vm322, %v1301, 0.0
    %v1411 = vadd.f32 %v1409, %v1410
    %v1412 = vrot.slane %v1411, 4
    %v1413 = vadd.f32 %v1411, %v1412
    %v1414 = vrot.slane %v1413, 2
    %v1415 = vadd.f32 %v1413, %v1414
    %v1416 = vrot.slane %v1415, 1
    %v1417 = vadd.f32 %v1415, %v1416
    %v1418 = vsel %vm322, %v1302, 0.0
    %v1419 = vsel %vm322, %v1303, 0.0
    %v1420 = vadd.f32 %v1418, %v1419
    %v1421 = vrot.slane %v1420, 4
    %v1422 = vadd.f32 %v1420, %v1421
    %v1423 = vrot.slane %v1422, 2
    %v1424 = vadd.f32 %v1422, %v1423
    %v1425 = vrot.slane %v1424, 1
    %v1426 = vadd.f32 %v1424, %v1425
    %v1427 = vsel %vm322, %v1304, 0.0
    %v1428 = vsel %vm322, %v1305, 0.0
    %v1429 = vadd.f32 %v1427, %v1428
    %v1430 = vrot.slane %v1429, 4
    %v1431 = vadd.f32 %v1429, %v1430
    %v1432 = vrot.slane %v1431, 2
    %v1433 = vadd.f32 %v1431, %v1432
    %v1434 = vrot.slane %v1433, 1
    %v1435 = vadd.f32 %v1433, %v1434
    %v1436 = vsel %vm322, %v1306, 0.0
    %v1437 = vsel %vm322, %v1307, 0.0
    %v1438 = vadd.f32 %v1436, %v1437
    %v1439 = vrot.slane %v1438, 4
    %v1440 = vadd.f32 %v1438, %v1439
    %v1441 = vrot.slane %v1440, 2
    %v1442 = vadd.f32 %v1440, %v1441
    %v1443 = vrot.slane %v1442, 1
    %v1444 = vadd.f32 %v1442, %v1443
    %v1445 = vsel %vm322, %v1308, 0.0
    %v1446 = vsel %vm322, %v1309, 0.0
    %v1447 = vadd.f32 %v1445, %v1446
    %v1448 = vrot.slane %v1447, 4
    %v1449 = vadd.f32 %v1447, %v1448
    %v1450 = vrot.slane %v1449, 2
    %v1451 = vadd.f32 %v1449, %v1450
    %v1452 = vrot.slane %v1451, 1
    %v1453 = vadd.f32 %v1451, %v1452
    %v1470 = vsel %vm601, %v1327, %v1318
    %v1471 = vsel %vm603, %v1336, %v1470
    %v1472 = vsel %vm605, %v1345, %v1471
    %v1473 = vsel %vm607, %v1354, %v1472
    %v1474 = vsel %vm609, %v1363, %v1473
    %v1475 = vsel %vm611, %v1372, %v1474
    %v1476 = vsel %vm613, %v1381, %v1475
    %v1477 = vsel %vm601, %v1399, %v1390
    %v1478 = vsel %vm603, %v1408, %v1477
    %v1479 = vsel %vm605, %v1417, %v1478
    %v1480 = vsel %vm607, %v1426, %v1479
    %v1481 = vsel %vm609, %v1435, %v1480
    %v1482 = vsel %vm611, %v1444, %v1481
    %v1483 = vsel %vm613, %v1453, %v1482
    %v1486 = vadd.f32 %v1095, %v1476
    %v1487 = vadd.f32 %v1096, %v1483
    %v1488 = vlaneseq
    %v1489 = vshrl.u32 %v1488, 7
    %v1490 = vsub.s32 1, %v1489
    %v1491 = vrot.slane %v1079, %v1490
    %1493 = vbcast.lane.b32.xlu0 %v1491, 256
    %v1494 = vpop.permute.xlu0 %1493
    %s1496 = sor.u32 256, 8
    %1497 = vbcast.lane.b32.xlu0 %v1491, %s1496
    %v1498 = vpop.permute.xlu0 %1497
    %v1499 = vlaneseq
    %v1500 = vshrl.u32 %v1499, 7
    %v1501 = vsub.s32 1, %v1500
    %v1502 = vrot.slane %v1080, %v1501
    %1504 = vbcast.lane.b32.xlu0 %v1502, 256
    %v1505 = vpop.permute.xlu0 %1504
    %s1507 = sor.u32 256, 8
    %1508 = vbcast.lane.b32.xlu0 %v1502, %s1507
    %v1509 = vpop.permute.xlu0 %1508
    %v1510 = vlaneseq
    %v1511 = vshrl.u32 %v1510, 7
    %v1512 = vsub.s32 1, %v1511
    %v1513 = vrot.slane %v1081, %v1512
    %1515 = vbcast.lane.b32.xlu0 %v1513, 256
    %v1516 = vpop.permute.xlu0 %1515
    %s1518 = sor.u32 256, 8
    %1519 = vbcast.lane.b32.xlu0 %v1513, %s1518
    %v1520 = vpop.permute.xlu0 %1519
    %v1521 = vlaneseq
    %v1522 = vshrl.u32 %v1521, 7
    %v1523 = vsub.s32 1, %v1522
    %v1524 = vrot.slane %v1082, %v1523
    %1526 = vbcast.lane.b32.xlu0 %v1524, 256
    %v1527 = vpop.permute.xlu0 %1526
    %s1529 = sor.u32 256, 8
    %1530 = vbcast.lane.b32.xlu0 %v1524, %s1529
    %v1531 = vpop.permute.xlu0 %1530
    %v1532 = vlaneseq
    %v1533 = vshrl.u32 %v1532, 7
    %v1534 = vsub.s32 1, %v1533
    %v1535 = vrot.slane %v1083, %v1534
    %1537 = vbcast.lane.b32.xlu0 %v1535, 256
    %v1538 = vpop.permute.xlu0 %1537
    %s1540 = sor.u32 256, 8
    %1541 = vbcast.lane.b32.xlu0 %v1535, %s1540
    %v1542 = vpop.permute.xlu0 %1541
    %v1543 = vlaneseq
    %v1544 = vshrl.u32 %v1543, 7
    %v1545 = vsub.s32 1, %v1544
    %v1546 = vrot.slane %v1084, %v1545
    %1548 = vbcast.lane.b32.xlu0 %v1546, 256
    %v1549 = vpop.permute.xlu0 %1548
    %s1551 = sor.u32 256, 8
    %1552 = vbcast.lane.b32.xlu0 %v1546, %s1551
    %v1553 = vpop.permute.xlu0 %1552
    %v1554 = vlaneseq
    %v1555 = vshrl.u32 %v1554, 7
    %v1556 = vsub.s32 1, %v1555
    %v1557 = vrot.slane %v1085, %v1556
    %1559 = vbcast.lane.b32.xlu0 %v1557, 256
    %v1560 = vpop.permute.xlu0 %1559
    %s1562 = sor.u32 256, 8
    %1563 = vbcast.lane.b32.xlu0 %v1557, %s1562
    %v1564 = vpop.permute.xlu0 %1563
    %v1565 = vlaneseq
    %v1566 = vshrl.u32 %v1565, 7
    %v1567 = vsub.s32 1, %v1566
    %v1568 = vrot.slane %v1086, %v1567
    %1570 = vbcast.lane.b32.xlu0 %v1568, 256
    %v1571 = vpop.permute.xlu0 %1570
    %s1573 = sor.u32 256, 8
    %1574 = vbcast.lane.b32.xlu0 %v1568, %s1573
    %v1575 = vpop.permute.xlu0 %1574
    %v1576 = vlaneseq
    %v1577 = vshrl.u32 %v1576, 7
    %v1578 = vsub.s32 1, %v1577
    %v1579 = vrot.slane %v1087, %v1578
    %1581 = vbcast.lane.b32.xlu0 %v1579, 256
    %v1582 = vpop.permute.xlu0 %1581
    %s1584 = sor.u32 256, 8
    %1585 = vbcast.lane.b32.xlu0 %v1579, %s1584
    %v1586 = vpop.permute.xlu0 %1585
    %v1587 = vlaneseq
    %v1588 = vshrl.u32 %v1587, 7
    %v1589 = vsub.s32 1, %v1588
    %v1590 = vrot.slane %v1088, %v1589
    %1592 = vbcast.lane.b32.xlu0 %v1590, 256
    %v1593 = vpop.permute.xlu0 %1592
    %s1595 = sor.u32 256, 8
    %1596 = vbcast.lane.b32.xlu0 %v1590, %s1595
    %v1597 = vpop.permute.xlu0 %1596
    %v1598 = vlaneseq
    %v1599 = vshrl.u32 %v1598, 7
    %v1600 = vsub.s32 1, %v1599
    %v1601 = vrot.slane %v1089, %v1600
    %1603 = vbcast.lane.b32.xlu0 %v1601, 256
    %v1604 = vpop.permute.xlu0 %1603
    %s1606 = sor.u32 256, 8
    %1607 = vbcast.lane.b32.xlu0 %v1601, %s1606
    %v1608 = vpop.permute.xlu0 %1607
    %v1609 = vlaneseq
    %v1610 = vshrl.u32 %v1609, 7
    %v1611 = vsub.s32 1, %v1610
    %v1612 = vrot.slane %v1090, %v1611
    %1614 = vbcast.lane.b32.xlu0 %v1612, 256
    %v1615 = vpop.permute.xlu0 %1614
    %s1617 = sor.u32 256, 8
    %1618 = vbcast.lane.b32.xlu0 %v1612, %s1617
    %v1619 = vpop.permute.xlu0 %1618
    %v1620 = vlaneseq
    %v1621 = vshrl.u32 %v1620, 7
    %v1622 = vsub.s32 1, %v1621
    %v1623 = vrot.slane %v1091, %v1622
    %1625 = vbcast.lane.b32.xlu0 %v1623, 256
    %v1626 = vpop.permute.xlu0 %1625
    %s1628 = sor.u32 256, 8
    %1629 = vbcast.lane.b32.xlu0 %v1623, %s1628
    %v1630 = vpop.permute.xlu0 %1629
    %v1631 = vlaneseq
    %v1632 = vshrl.u32 %v1631, 7
    %v1633 = vsub.s32 1, %v1632
    %v1634 = vrot.slane %v1092, %v1633
    %1636 = vbcast.lane.b32.xlu0 %v1634, 256
    %v1637 = vpop.permute.xlu0 %1636
    %s1639 = sor.u32 256, 8
    %1640 = vbcast.lane.b32.xlu0 %v1634, %s1639
    %v1641 = vpop.permute.xlu0 %1640
    %v1642 = vlaneseq
    %v1643 = vshrl.u32 %v1642, 7
    %v1644 = vsub.s32 1, %v1643
    %v1645 = vrot.slane %v1093, %v1644
    %1647 = vbcast.lane.b32.xlu0 %v1645, 256
    %v1648 = vpop.permute.xlu0 %1647
    %s1650 = sor.u32 256, 8
    %1651 = vbcast.lane.b32.xlu0 %v1645, %s1650
    %v1652 = vpop.permute.xlu0 %1651
    %v1653 = vlaneseq
    %v1654 = vshrl.u32 %v1653, 7
    %v1655 = vsub.s32 1, %v1654
    %v1656 = vrot.slane %v1094, %v1655
    %1658 = vbcast.lane.b32.xlu0 %v1656, 256
    %v1659 = vpop.permute.xlu0 %1658
    %s1661 = sor.u32 256, 8
    %1662 = vbcast.lane.b32.xlu0 %v1656, %s1661
    %v1663 = vpop.permute.xlu0 %1662
    %v1664 = vmul.f32 %v1494, %v865
    %v1665 = vmul.f32 %v1498, %v866
    %v1666 = vmul.f32 %v1505, %v867
    %v1667 = vmul.f32 %v1509, %v868
    %v1668 = vmul.f32 %v1516, %v869
    %v1669 = vmul.f32 %v1520, %v870
    %v1670 = vmul.f32 %v1527, %v871
    %v1671 = vmul.f32 %v1531, %v872
    %v1672 = vmul.f32 %v1538, %v873
    %v1673 = vmul.f32 %v1542, %v874
    %v1674 = vmul.f32 %v1549, %v875
    %v1675 = vmul.f32 %v1553, %v876
    %v1676 = vmul.f32 %v1560, %v877
    %v1677 = vmul.f32 %v1564, %v878
    %v1678 = vmul.f32 %v1571, %v879
    %v1679 = vmul.f32 %v1575, %v880
    %v1680 = vmul.f32 %v1582, %v881
    %v1681 = vmul.f32 %v1586, %v882
    %v1682 = vmul.f32 %v1593, %v883
    %v1683 = vmul.f32 %v1597, %v884
    %v1684 = vmul.f32 %v1604, %v885
    %v1685 = vmul.f32 %v1608, %v886
    %v1686 = vmul.f32 %v1615, %v887
    %v1687 = vmul.f32 %v1619, %v888
    %v1688 = vmul.f32 %v1626, %v889
    %v1689 = vmul.f32 %v1630, %v890
    %v1690 = vmul.f32 %v1637, %v891
    %v1691 = vmul.f32 %v1641, %v892
    %v1692 = vmul.f32 %v1648, %v893
    %v1693 = vmul.f32 %v1652, %v894
    %v1694 = vmul.f32 %v1659, %v895
    %v1695 = vmul.f32 %v1663, %v896
    %v1696 = vsel %vm322, %v1664, 0.0
    %v1697 = vsel %vm322, %v1665, 0.0
    %v1698 = vadd.f32 %v1696, %v1697
    %v1699 = vrot.slane %v1698, 4
    %v1700 = vadd.f32 %v1698, %v1699
    %v1701 = vrot.slane %v1700, 2
    %v1702 = vadd.f32 %v1700, %v1701
    %v1703 = vrot.slane %v1702, 1
    %v1704 = vadd.f32 %v1702, %v1703
    %v1705 = vsel %vm322, %v1666, 0.0
    %v1706 = vsel %vm322, %v1667, 0.0
    %v1707 = vadd.f32 %v1705, %v1706
    %v1708 = vrot.slane %v1707, 4
    %v1709 = vadd.f32 %v1707, %v1708
    %v1710 = vrot.slane %v1709, 2
    %v1711 = vadd.f32 %v1709, %v1710
    %v1712 = vrot.slane %v1711, 1
    %v1713 = vadd.f32 %v1711, %v1712
    %v1714 = vsel %vm322, %v1668, 0.0
    %v1715 = vsel %vm322, %v1669, 0.0
    %v1716 = vadd.f32 %v1714, %v1715
    %v1717 = vrot.slane %v1716, 4
    %v1718 = vadd.f32 %v1716, %v1717
    %v1719 = vrot.slane %v1718, 2
    %v1720 = vadd.f32 %v1718, %v1719
    %v1721 = vrot.slane %v1720, 1
    %v1722 = vadd.f32 %v1720, %v1721
    %v1723 = vsel %vm322, %v1670, 0.0
    %v1724 = vsel %vm322, %v1671, 0.0
    %v1725 = vadd.f32 %v1723, %v1724
    %v1726 = vrot.slane %v1725, 4
    %v1727 = vadd.f32 %v1725, %v1726
    %v1728 = vrot.slane %v1727, 2
    %v1729 = vadd.f32 %v1727, %v1728
    %v1730 = vrot.slane %v1729, 1
    %v1731 = vadd.f32 %v1729, %v1730
    %v1732 = vsel %vm322, %v1672, 0.0
    %v1733 = vsel %vm322, %v1673, 0.0
    %v1734 = vadd.f32 %v1732, %v1733
    %v1735 = vrot.slane %v1734, 4
    %v1736 = vadd.f32 %v1734, %v1735
    %v1737 = vrot.slane %v1736, 2
    %v1738 = vadd.f32 %v1736, %v1737
    %v1739 = vrot.slane %v1738, 1
    %v1740 = vadd.f32 %v1738, %v1739
    %v1741 = vsel %vm322, %v1674, 0.0
    %v1742 = vsel %vm322, %v1675, 0.0
    %v1743 = vadd.f32 %v1741, %v1742
    %v1744 = vrot.slane %v1743, 4
    %v1745 = vadd.f32 %v1743, %v1744
    %v1746 = vrot.slane %v1745, 2
    %v1747 = vadd.f32 %v1745, %v1746
    %v1748 = vrot.slane %v1747, 1
    %v1749 = vadd.f32 %v1747, %v1748
    %v1750 = vsel %vm322, %v1676, 0.0
    %v1751 = vsel %vm322, %v1677, 0.0
    %v1752 = vadd.f32 %v1750, %v1751
    %v1753 = vrot.slane %v1752, 4
    %v1754 = vadd.f32 %v1752, %v1753
    %v1755 = vrot.slane %v1754, 2
    %v1756 = vadd.f32 %v1754, %v1755
    %v1757 = vrot.slane %v1756, 1
    %v1758 = vadd.f32 %v1756, %v1757
    %v1759 = vsel %vm322, %v1678, 0.0
    %v1760 = vsel %vm322, %v1679, 0.0
    %v1761 = vadd.f32 %v1759, %v1760
    %v1762 = vrot.slane %v1761, 4
    %v1763 = vadd.f32 %v1761, %v1762
    %v1764 = vrot.slane %v1763, 2
    %v1765 = vadd.f32 %v1763, %v1764
    %v1766 = vrot.slane %v1765, 1
    %v1767 = vadd.f32 %v1765, %v1766
    %v1768 = vsel %vm322, %v1680, 0.0
    %v1769 = vsel %vm322, %v1681, 0.0
    %v1770 = vadd.f32 %v1768, %v1769
    %v1771 = vrot.slane %v1770, 4
    %v1772 = vadd.f32 %v1770, %v1771
    %v1773 = vrot.slane %v1772, 2
    %v1774 = vadd.f32 %v1772, %v1773
    %v1775 = vrot.slane %v1774, 1
    %v1776 = vadd.f32 %v1774, %v1775
    %v1777 = vsel %vm322, %v1682, 0.0
    %v1778 = vsel %vm322, %v1683, 0.0
    %v1779 = vadd.f32 %v1777, %v1778
    %v1780 = vrot.slane %v1779, 4
    %v1781 = vadd.f32 %v1779, %v1780
    %v1782 = vrot.slane %v1781, 2
    %v1783 = vadd.f32 %v1781, %v1782
    %v1784 = vrot.slane %v1783, 1
    %v1785 = vadd.f32 %v1783, %v1784
    %v1786 = vsel %vm322, %v1684, 0.0
    %v1787 = vsel %vm322, %v1685, 0.0
    %v1788 = vadd.f32 %v1786, %v1787
    %v1789 = vrot.slane %v1788, 4
    %v1790 = vadd.f32 %v1788, %v1789
    %v1791 = vrot.slane %v1790, 2
    %v1792 = vadd.f32 %v1790, %v1791
    %v1793 = vrot.slane %v1792, 1
    %v1794 = vadd.f32 %v1792, %v1793
    %v1795 = vsel %vm322, %v1686, 0.0
    %v1796 = vsel %vm322, %v1687, 0.0
    %v1797 = vadd.f32 %v1795, %v1796
    %v1798 = vrot.slane %v1797, 4
    %v1799 = vadd.f32 %v1797, %v1798
    %v1800 = vrot.slane %v1799, 2
    %v1801 = vadd.f32 %v1799, %v1800
    %v1802 = vrot.slane %v1801, 1
    %v1803 = vadd.f32 %v1801, %v1802
    %v1804 = vsel %vm322, %v1688, 0.0
    %v1805 = vsel %vm322, %v1689, 0.0
    %v1806 = vadd.f32 %v1804, %v1805
    %v1807 = vrot.slane %v1806, 4
    %v1808 = vadd.f32 %v1806, %v1807
    %v1809 = vrot.slane %v1808, 2
    %v1810 = vadd.f32 %v1808, %v1809
    %v1811 = vrot.slane %v1810, 1
    %v1812 = vadd.f32 %v1810, %v1811
    %v1813 = vsel %vm322, %v1690, 0.0
    %v1814 = vsel %vm322, %v1691, 0.0
    %v1815 = vadd.f32 %v1813, %v1814
    %v1816 = vrot.slane %v1815, 4
    %v1817 = vadd.f32 %v1815, %v1816
    %v1818 = vrot.slane %v1817, 2
    %v1819 = vadd.f32 %v1817, %v1818
    %v1820 = vrot.slane %v1819, 1
    %v1821 = vadd.f32 %v1819, %v1820
    %v1822 = vsel %vm322, %v1692, 0.0
    %v1823 = vsel %vm322, %v1693, 0.0
    %v1824 = vadd.f32 %v1822, %v1823
    %v1825 = vrot.slane %v1824, 4
    %v1826 = vadd.f32 %v1824, %v1825
    %v1827 = vrot.slane %v1826, 2
    %v1828 = vadd.f32 %v1826, %v1827
    %v1829 = vrot.slane %v1828, 1
    %v1830 = vadd.f32 %v1828, %v1829
    %v1831 = vsel %vm322, %v1694, 0.0
    %v1832 = vsel %vm322, %v1695, 0.0
    %v1833 = vadd.f32 %v1831, %v1832
    %v1834 = vrot.slane %v1833, 4
    %v1835 = vadd.f32 %v1833, %v1834
    %v1836 = vrot.slane %v1835, 2
    %v1837 = vadd.f32 %v1835, %v1836
    %v1838 = vrot.slane %v1837, 1
    %v1839 = vadd.f32 %v1837, %v1838
    %v1856 = vsel %vm601, %v1713, %v1704
    %v1857 = vsel %vm603, %v1722, %v1856
    %v1858 = vsel %vm605, %v1731, %v1857
    %v1859 = vsel %vm607, %v1740, %v1858
    %v1860 = vsel %vm609, %v1749, %v1859
    %v1861 = vsel %vm611, %v1758, %v1860
    %v1862 = vsel %vm613, %v1767, %v1861
    %v1863 = vsel %vm601, %v1785, %v1776
    %v1864 = vsel %vm603, %v1794, %v1863
    %v1865 = vsel %vm605, %v1803, %v1864
    %v1866 = vsel %vm607, %v1812, %v1865
    %v1867 = vsel %vm609, %v1821, %v1866
    %v1868 = vsel %vm611, %v1830, %v1867
    %v1869 = vsel %vm613, %v1839, %v1868
    %v1872 = vadd.f32 %v1097, %v1862
    %v1873 = vadd.f32 %v1098, %v1869
    %v1874 = vlaneseq
    %v1875 = vshrl.u32 %v1874, 7
    %v1876 = vsub.s32 2, %v1875
    %v1877 = vrot.slane %v1079, %v1876
    %1879 = vbcast.lane.b32.xlu0 %v1877, 256
    %v1880 = vpop.permute.xlu0 %1879
    %s1882 = sor.u32 256, 8
    %1883 = vbcast.lane.b32.xlu0 %v1877, %s1882
    %v1884 = vpop.permute.xlu0 %1883
    %v1885 = vlaneseq
    %v1886 = vshrl.u32 %v1885, 7
    %v1887 = vsub.s32 2, %v1886
    %v1888 = vrot.slane %v1080, %v1887
    %1890 = vbcast.lane.b32.xlu0 %v1888, 256
    %v1891 = vpop.permute.xlu0 %1890
    %s1893 = sor.u32 256, 8
    %1894 = vbcast.lane.b32.xlu0 %v1888, %s1893
    %v1895 = vpop.permute.xlu0 %1894
    %v1896 = vlaneseq
    %v1897 = vshrl.u32 %v1896, 7
    %v1898 = vsub.s32 2, %v1897
    %v1899 = vrot.slane %v1081, %v1898
    %1901 = vbcast.lane.b32.xlu0 %v1899, 256
    %v1902 = vpop.permute.xlu0 %1901
    %s1904 = sor.u32 256, 8
    %1905 = vbcast.lane.b32.xlu0 %v1899, %s1904
    %v1906 = vpop.permute.xlu0 %1905
    %v1907 = vlaneseq
    %v1908 = vshrl.u32 %v1907, 7
    %v1909 = vsub.s32 2, %v1908
    %v1910 = vrot.slane %v1082, %v1909
    %1912 = vbcast.lane.b32.xlu0 %v1910, 256
    %v1913 = vpop.permute.xlu0 %1912
    %s1915 = sor.u32 256, 8
    %1916 = vbcast.lane.b32.xlu0 %v1910, %s1915
    %v1917 = vpop.permute.xlu0 %1916
    %v1918 = vlaneseq
    %v1919 = vshrl.u32 %v1918, 7
    %v1920 = vsub.s32 2, %v1919
    %v1921 = vrot.slane %v1083, %v1920
    %1923 = vbcast.lane.b32.xlu0 %v1921, 256
    %v1924 = vpop.permute.xlu0 %1923
    %s1926 = sor.u32 256, 8
    %1927 = vbcast.lane.b32.xlu0 %v1921, %s1926
    %v1928 = vpop.permute.xlu0 %1927
    %v1929 = vlaneseq
    %v1930 = vshrl.u32 %v1929, 7
    %v1931 = vsub.s32 2, %v1930
    %v1932 = vrot.slane %v1084, %v1931
    %1934 = vbcast.lane.b32.xlu0 %v1932, 256
    %v1935 = vpop.permute.xlu0 %1934
    %s1937 = sor.u32 256, 8
    %1938 = vbcast.lane.b32.xlu0 %v1932, %s1937
    %v1939 = vpop.permute.xlu0 %1938
    %v1940 = vlaneseq
    %v1941 = vshrl.u32 %v1940, 7
    %v1942 = vsub.s32 2, %v1941
    %v1943 = vrot.slane %v1085, %v1942
    %1945 = vbcast.lane.b32.xlu0 %v1943, 256
    %v1946 = vpop.permute.xlu0 %1945
    %s1948 = sor.u32 256, 8
    %1949 = vbcast.lane.b32.xlu0 %v1943, %s1948
    %v1950 = vpop.permute.xlu0 %1949
    %v1951 = vlaneseq
    %v1952 = vshrl.u32 %v1951, 7
    %v1953 = vsub.s32 2, %v1952
    %v1954 = vrot.slane %v1086, %v1953
    %1956 = vbcast.lane.b32.xlu0 %v1954, 256
    %v1957 = vpop.permute.xlu0 %1956
    %s1959 = sor.u32 256, 8
    %1960 = vbcast.lane.b32.xlu0 %v1954, %s1959
    %v1961 = vpop.permute.xlu0 %1960
    %v1962 = vlaneseq
    %v1963 = vshrl.u32 %v1962, 7
    %v1964 = vsub.s32 2, %v1963
    %v1965 = vrot.slane %v1087, %v1964
    %1967 = vbcast.lane.b32.xlu0 %v1965, 256
    %v1968 = vpop.permute.xlu0 %1967
    %s1970 = sor.u32 256, 8
    %1971 = vbcast.lane.b32.xlu0 %v1965, %s1970
    %v1972 = vpop.permute.xlu0 %1971
    %v1973 = vlaneseq
    %v1974 = vshrl.u32 %v1973, 7
    %v1975 = vsub.s32 2, %v1974
    %v1976 = vrot.slane %v1088, %v1975
    %1978 = vbcast.lane.b32.xlu0 %v1976, 256
    %v1979 = vpop.permute.xlu0 %1978
    %s1981 = sor.u32 256, 8
    %1982 = vbcast.lane.b32.xlu0 %v1976, %s1981
    %v1983 = vpop.permute.xlu0 %1982
    %v1984 = vlaneseq
    %v1985 = vshrl.u32 %v1984, 7
    %v1986 = vsub.s32 2, %v1985
    %v1987 = vrot.slane %v1089, %v1986
    %1989 = vbcast.lane.b32.xlu0 %v1987, 256
    %v1990 = vpop.permute.xlu0 %1989
    %s1992 = sor.u32 256, 8
    %1993 = vbcast.lane.b32.xlu0 %v1987, %s1992
    %v1994 = vpop.permute.xlu0 %1993
    %v1995 = vlaneseq
    %v1996 = vshrl.u32 %v1995, 7
    %v1997 = vsub.s32 2, %v1996
    %v1998 = vrot.slane %v1090, %v1997
    %2000 = vbcast.lane.b32.xlu0 %v1998, 256
    %v2001 = vpop.permute.xlu0 %2000
    %s2003 = sor.u32 256, 8
    %2004 = vbcast.lane.b32.xlu0 %v1998, %s2003
    %v2005 = vpop.permute.xlu0 %2004
    %v2006 = vlaneseq
    %v2007 = vshrl.u32 %v2006, 7
    %v2008 = vsub.s32 2, %v2007
    %v2009 = vrot.slane %v1091, %v2008
    %2011 = vbcast.lane.b32.xlu0 %v2009, 256
    %v2012 = vpop.permute.xlu0 %2011
    %s2014 = sor.u32 256, 8
    %2015 = vbcast.lane.b32.xlu0 %v2009, %s2014
    %v2016 = vpop.permute.xlu0 %2015
    %v2017 = vlaneseq
    %v2018 = vshrl.u32 %v2017, 7
    %v2019 = vsub.s32 2, %v2018
    %v2020 = vrot.slane %v1092, %v2019
    %2022 = vbcast.lane.b32.xlu0 %v2020, 256
    %v2023 = vpop.permute.xlu0 %2022
    %s2025 = sor.u32 256, 8
    %2026 = vbcast.lane.b32.xlu0 %v2020, %s2025
    %v2027 = vpop.permute.xlu0 %2026
    %v2028 = vlaneseq
    %v2029 = vshrl.u32 %v2028, 7
    %v2030 = vsub.s32 2, %v2029
    %v2031 = vrot.slane %v1093, %v2030
    %2033 = vbcast.lane.b32.xlu0 %v2031, 256
    %v2034 = vpop.permute.xlu0 %2033
    %s2036 = sor.u32 256, 8
    %2037 = vbcast.lane.b32.xlu0 %v2031, %s2036
    %v2038 = vpop.permute.xlu0 %2037
    %v2039 = vlaneseq
    %v2040 = vshrl.u32 %v2039, 7
    %v2041 = vsub.s32 2, %v2040
    %v2042 = vrot.slane %v1094, %v2041
    %2044 = vbcast.lane.b32.xlu0 %v2042, 256
    %v2045 = vpop.permute.xlu0 %2044
    %s2047 = sor.u32 256, 8
    %2048 = vbcast.lane.b32.xlu0 %v2042, %s2047
    %v2049 = vpop.permute.xlu0 %2048
    %v2050 = vmul.f32 %v1880, %v865
    %v2051 = vmul.f32 %v1884, %v866
    %v2052 = vmul.f32 %v1891, %v867
    %v2053 = vmul.f32 %v1895, %v868
    %v2054 = vmul.f32 %v1902, %v869
    %v2055 = vmul.f32 %v1906, %v870
    %v2056 = vmul.f32 %v1913, %v871
    %v2057 = vmul.f32 %v1917, %v872
    %v2058 = vmul.f32 %v1924, %v873
    %v2059 = vmul.f32 %v1928, %v874
    %v2060 = vmul.f32 %v1935, %v875
    %v2061 = vmul.f32 %v1939, %v876
    %v2062 = vmul.f32 %v1946, %v877
    %v2063 = vmul.f32 %v1950, %v878
    %v2064 = vmul.f32 %v1957, %v879
    %v2065 = vmul.f32 %v1961, %v880
    %v2066 = vmul.f32 %v1968, %v881
    %v2067 = vmul.f32 %v1972, %v882
    %v2068 = vmul.f32 %v1979, %v883
    %v2069 = vmul.f32 %v1983, %v884
    %v2070 = vmul.f32 %v1990, %v885
    %v2071 = vmul.f32 %v1994, %v886
    %v2072 = vmul.f32 %v2001, %v887
    %v2073 = vmul.f32 %v2005, %v888
    %v2074 = vmul.f32 %v2012, %v889
    %v2075 = vmul.f32 %v2016, %v890
    %v2076 = vmul.f32 %v2023, %v891
    %v2077 = vmul.f32 %v2027, %v892
    %v2078 = vmul.f32 %v2034, %v893
    %v2079 = vmul.f32 %v2038, %v894
    %v2080 = vmul.f32 %v2045, %v895
    %v2081 = vmul.f32 %v2049, %v896
    %v2082 = vsel %vm322, %v2050, 0.0
    %v2083 = vsel %vm322, %v2051, 0.0
    %v2084 = vadd.f32 %v2082, %v2083
    %v2085 = vrot.slane %v2084, 4
    %v2086 = vadd.f32 %v2084, %v2085
    %v2087 = vrot.slane %v2086, 2
    %v2088 = vadd.f32 %v2086, %v2087
    %v2089 = vrot.slane %v2088, 1
    %v2090 = vadd.f32 %v2088, %v2089
    %v2091 = vsel %vm322, %v2052, 0.0
    %v2092 = vsel %vm322, %v2053, 0.0
    %v2093 = vadd.f32 %v2091, %v2092
    %v2094 = vrot.slane %v2093, 4
    %v2095 = vadd.f32 %v2093, %v2094
    %v2096 = vrot.slane %v2095, 2
    %v2097 = vadd.f32 %v2095, %v2096
    %v2098 = vrot.slane %v2097, 1
    %v2099 = vadd.f32 %v2097, %v2098
    %v2100 = vsel %vm322, %v2054, 0.0
    %v2101 = vsel %vm322, %v2055, 0.0
    %v2102 = vadd.f32 %v2100, %v2101
    %v2103 = vrot.slane %v2102, 4
    %v2104 = vadd.f32 %v2102, %v2103
    %v2105 = vrot.slane %v2104, 2
    %v2106 = vadd.f32 %v2104, %v2105
    %v2107 = vrot.slane %v2106, 1
    %v2108 = vadd.f32 %v2106, %v2107
    %v2109 = vsel %vm322, %v2056, 0.0
    %v2110 = vsel %vm322, %v2057, 0.0
    %v2111 = vadd.f32 %v2109, %v2110
    %v2112 = vrot.slane %v2111, 4
    %v2113 = vadd.f32 %v2111, %v2112
    %v2114 = vrot.slane %v2113, 2
    %v2115 = vadd.f32 %v2113, %v2114
    %v2116 = vrot.slane %v2115, 1
    %v2117 = vadd.f32 %v2115, %v2116
    %v2118 = vsel %vm322, %v2058, 0.0
    %v2119 = vsel %vm322, %v2059, 0.0
    %v2120 = vadd.f32 %v2118, %v2119
    %v2121 = vrot.slane %v2120, 4
    %v2122 = vadd.f32 %v2120, %v2121
    %v2123 = vrot.slane %v2122, 2
    %v2124 = vadd.f32 %v2122, %v2123
    %v2125 = vrot.slane %v2124, 1
    %v2126 = vadd.f32 %v2124, %v2125
    %v2127 = vsel %vm322, %v2060, 0.0
    %v2128 = vsel %vm322, %v2061, 0.0
    %v2129 = vadd.f32 %v2127, %v2128
    %v2130 = vrot.slane %v2129, 4
    %v2131 = vadd.f32 %v2129, %v2130
    %v2132 = vrot.slane %v2131, 2
    %v2133 = vadd.f32 %v2131, %v2132
    %v2134 = vrot.slane %v2133, 1
    %v2135 = vadd.f32 %v2133, %v2134
    %v2136 = vsel %vm322, %v2062, 0.0
    %v2137 = vsel %vm322, %v2063, 0.0
    %v2138 = vadd.f32 %v2136, %v2137
    %v2139 = vrot.slane %v2138, 4
    %v2140 = vadd.f32 %v2138, %v2139
    %v2141 = vrot.slane %v2140, 2
    %v2142 = vadd.f32 %v2140, %v2141
    %v2143 = vrot.slane %v2142, 1
    %v2144 = vadd.f32 %v2142, %v2143
    %v2145 = vsel %vm322, %v2064, 0.0
    %v2146 = vsel %vm322, %v2065, 0.0
    %v2147 = vadd.f32 %v2145, %v2146
    %v2148 = vrot.slane %v2147, 4
    %v2149 = vadd.f32 %v2147, %v2148
    %v2150 = vrot.slane %v2149, 2
    %v2151 = vadd.f32 %v2149, %v2150
    %v2152 = vrot.slane %v2151, 1
    %v2153 = vadd.f32 %v2151, %v2152
    %v2154 = vsel %vm322, %v2066, 0.0
    %v2155 = vsel %vm322, %v2067, 0.0
    %v2156 = vadd.f32 %v2154, %v2155
    %v2157 = vrot.slane %v2156, 4
    %v2158 = vadd.f32 %v2156, %v2157
    %v2159 = vrot.slane %v2158, 2
    %v2160 = vadd.f32 %v2158, %v2159
    %v2161 = vrot.slane %v2160, 1
    %v2162 = vadd.f32 %v2160, %v2161
    %v2163 = vsel %vm322, %v2068, 0.0
    %v2164 = vsel %vm322, %v2069, 0.0
    %v2165 = vadd.f32 %v2163, %v2164
    %v2166 = vrot.slane %v2165, 4
    %v2167 = vadd.f32 %v2165, %v2166
    %v2168 = vrot.slane %v2167, 2
    %v2169 = vadd.f32 %v2167, %v2168
    %v2170 = vrot.slane %v2169, 1
    %v2171 = vadd.f32 %v2169, %v2170
    %v2172 = vsel %vm322, %v2070, 0.0
    %v2173 = vsel %vm322, %v2071, 0.0
    %v2174 = vadd.f32 %v2172, %v2173
    %v2175 = vrot.slane %v2174, 4
    %v2176 = vadd.f32 %v2174, %v2175
    %v2177 = vrot.slane %v2176, 2
    %v2178 = vadd.f32 %v2176, %v2177
    %v2179 = vrot.slane %v2178, 1
    %v2180 = vadd.f32 %v2178, %v2179
    %v2181 = vsel %vm322, %v2072, 0.0
    %v2182 = vsel %vm322, %v2073, 0.0
    %v2183 = vadd.f32 %v2181, %v2182
    %v2184 = vrot.slane %v2183, 4
    %v2185 = vadd.f32 %v2183, %v2184
    %v2186 = vrot.slane %v2185, 2
    %v2187 = vadd.f32 %v2185, %v2186
    %v2188 = vrot.slane %v2187, 1
    %v2189 = vadd.f32 %v2187, %v2188
    %v2190 = vsel %vm322, %v2074, 0.0
    %v2191 = vsel %vm322, %v2075, 0.0
    %v2192 = vadd.f32 %v2190, %v2191
    %v2193 = vrot.slane %v2192, 4
    %v2194 = vadd.f32 %v2192, %v2193
    %v2195 = vrot.slane %v2194, 2
    %v2196 = vadd.f32 %v2194, %v2195
    %v2197 = vrot.slane %v2196, 1
    %v2198 = vadd.f32 %v2196, %v2197
    %v2199 = vsel %vm322, %v2076, 0.0
    %v2200 = vsel %vm322, %v2077, 0.0
    %v2201 = vadd.f32 %v2199, %v2200
    %v2202 = vrot.slane %v2201, 4
    %v2203 = vadd.f32 %v2201, %v2202
    %v2204 = vrot.slane %v2203, 2
    %v2205 = vadd.f32 %v2203, %v2204
    %v2206 = vrot.slane %v2205, 1
    %v2207 = vadd.f32 %v2205, %v2206
    %v2208 = vsel %vm322, %v2078, 0.0
    %v2209 = vsel %vm322, %v2079, 0.0
    %v2210 = vadd.f32 %v2208, %v2209
    %v2211 = vrot.slane %v2210, 4
    %v2212 = vadd.f32 %v2210, %v2211
    %v2213 = vrot.slane %v2212, 2
    %v2214 = vadd.f32 %v2212, %v2213
    %v2215 = vrot.slane %v2214, 1
    %v2216 = vadd.f32 %v2214, %v2215
    %v2217 = vsel %vm322, %v2080, 0.0
    %v2218 = vsel %vm322, %v2081, 0.0
    %v2219 = vadd.f32 %v2217, %v2218
    %v2220 = vrot.slane %v2219, 4
    %v2221 = vadd.f32 %v2219, %v2220
    %v2222 = vrot.slane %v2221, 2
    %v2223 = vadd.f32 %v2221, %v2222
    %v2224 = vrot.slane %v2223, 1
    %v2225 = vadd.f32 %v2223, %v2224
    %v2242 = vsel %vm601, %v2099, %v2090
    %v2243 = vsel %vm603, %v2108, %v2242
    %v2244 = vsel %vm605, %v2117, %v2243
    %v2245 = vsel %vm607, %v2126, %v2244
    %v2246 = vsel %vm609, %v2135, %v2245
    %v2247 = vsel %vm611, %v2144, %v2246
    %v2248 = vsel %vm613, %v2153, %v2247
    %v2249 = vsel %vm601, %v2171, %v2162
    %v2250 = vsel %vm603, %v2180, %v2249
    %v2251 = vsel %vm605, %v2189, %v2250
    %v2252 = vsel %vm607, %v2198, %v2251
    %v2253 = vsel %vm609, %v2207, %v2252
    %v2254 = vsel %vm611, %v2216, %v2253
    %v2255 = vsel %vm613, %v2225, %v2254
    %v2258 = vadd.f32 %v1099, %v2248
    %v2259 = vadd.f32 %v1100, %v2255
    %v2260 = vsel %vm322, %v1486, 0.0
    %2261 = vadd.xlane.f32.xlu0 %v2260
    %v2262 = vpop.xlane.xlu0 %2261
    %v2263 = vsel %vm322, %v1487, 0.0
    %2264 = vadd.xlane.f32.xlu0 %v2263
    %v2265 = vpop.xlane.xlu0 %2264
    %v2266 = vrcp.pop 32.0
    %v2267 = vmul.f32 %v2262, %v2266
    %v2268 = vmul.f32 %v2265, %v2266
    %v2269 = vsub.f32 %v1486, %v2267
    %v2270 = vsub.f32 %v1487, %v2268
    %v2271 = vmul.f32 %v2269, %v2269
    %v2272 = vmul.f32 %v2270, %v2270
    %v2273 = vadd.f32 %v2271, 0.0
    %v2274 = vadd.f32 %v2272, 0.0
    %v2275 = vsel %vm322, %v1872, 0.0
    %2276 = vadd.xlane.f32.xlu0 %v2275
    %v2277 = vpop.xlane.xlu0 %2276
    %v2278 = vsel %vm322, %v1873, 0.0
    %2279 = vadd.xlane.f32.xlu0 %v2278
    %v2280 = vpop.xlane.xlu0 %2279
    %v2281 = vmul.f32 %v2277, %v2266
    %v2282 = vmul.f32 %v2280, %v2266
    %v2283 = vsub.f32 %v1872, %v2281
    %v2284 = vsub.f32 %v1873, %v2282
    %v2285 = vmul.f32 %v2283, %v2283
    %v2286 = vmul.f32 %v2284, %v2284
    %v2287 = vadd.f32 %v2273, %v2285
    %v2288 = vadd.f32 %v2274, %v2286
    %v2289 = vsel %vm322, %v2258, 0.0
    %2290 = vadd.xlane.f32.xlu0 %v2289
    %v2291 = vpop.xlane.xlu0 %2290
    %v2292 = vsel %vm322, %v2259, 0.0
    %2293 = vadd.xlane.f32.xlu0 %v2292
    %v2294 = vpop.xlane.xlu0 %2293
    %v2295 = vmul.f32 %v2291, %v2266
    %v2296 = vmul.f32 %v2294, %v2266
    %v2297 = vsub.f32 %v2258, %v2295
    %v2298 = vsub.f32 %v2259, %v2296
    %v2299 = vmul.f32 %v2297, %v2297
    %v2300 = vmul.f32 %v2298, %v2298
    %v2301 = vadd.f32 %v2287, %v2299
    %v2302 = vadd.f32 %v2288, %v2300
    %v2303 = vsel %vm322, %v2301, 0.0
    %2304 = vadd.xlane.f32.xlu0 %v2303
    %v2305 = vpop.xlane.xlu0 %2304
    %v2306 = vsel %vm322, %v2302, 0.0
    %2307 = vadd.xlane.f32.xlu0 %v2306
    %v2308 = vpop.xlane.xlu0 %2307
    %v2309 = vmul.f32 %v2305, %v2266
    %v2310 = vmul.f32 %v2308, %v2266
    %v2311 = vadd.f32 %v2309, 1e-05
    %v2312 = vadd.f32 %v2310, 1e-05
    %v2313 = vrsqrt.pop %v2311
    %v2314 = vrsqrt.pop %v2312
    %v2316 = vlaneseq
    %v2317 = vshrl.u32 %v2316, 7
    %v2318 = vsub.s32 0, %v2317
    %v2319 = vrot.slane %v1101, %v2318
    %v2321 = vmul.f32 %v2313, %v2319
    %v2322 = vmul.f32 %v2314, %v2319
    %v2323 = vmul.f32 %v2269, %v2321
    %v2324 = vmul.f32 %v2270, %v2322
    %2325 = vst.msk [vmem:[%s11] sm:$0xff] %vm322, %v2323
    %2326 = vst.msk [vmem:[%s11 + $0x8] sm:$0xff] %vm322, %v2324
    %v2327 = vmul.f32 %v2283, %v2321
    %v2328 = vmul.f32 %v2284, %v2322
    %s2329 = scalar_lea.vmem %s11, 16
    %2330 = vst.msk [vmem:[%s2329] sm:$0xff] %vm322, %v2327
    %2331 = vst.msk [vmem:[%s2329 + $0x8] sm:$0xff] %vm322, %v2328
    %v2332 = vmul.f32 %v2297, %v2321
    %v2333 = vmul.f32 %v2298, %v2322
    %s2334 = scalar_lea.vmem %s11, 32
    %2335 = vst.msk [vmem:[%s2334] sm:$0xff] %vm322, %v2332
    %2336 = vst.msk [vmem:[%s2334 + $0x8] sm:$0xff] %vm322, %v2333
    // Predicated region
    $region42: #{clofnet_forward.10} parent=1 // pred_check
      _
    $region43: #{clofnet_forward.10} parent=1 // pred_check_branch
      %2338 = sbr.rel (0) target = $region45
    $region44: #{clofnet_forward.10} parent=1 // pred_region
      %s2340 = ssub.s32 256, 256
      %2341 = vsyncadd [#allocation3], %s2340
      %s2342 = sshll.u32 [#allocation2], 4
      %s2343 = int_to_ptr.vmem [resolvable:$true] %s2342
      %2348 = dma.vmem_to_hbm [thread:$0]  %s2343, 256, %s10, [#allocation3], 128, 128, 8
    $region45: #{clofnet_forward.10} parent=1 // pred_fallthru
      _
    // Predicated region
    $region46: #{clofnet_forward.10} parent=1 // pred_check
      _
    $region47: #{clofnet_forward.10} parent=1 // pred_check_branch
      %2350 = sbr.rel (0) target = $region49
    $region48: #{clofnet_forward.10} parent=1 // pred_region
      _
    $region49: #{clofnet_forward.10} parent=1 // pred_fallthru
      _
    // Predicated region
    $region50: #{clofnet_forward.10} parent=1 // pred_check
      _
    $region51: #{clofnet_forward.10} parent=1 // pred_check_branch
      %2352 = sbr.rel (0) target = $region53
    $region52: #{clofnet_forward.10} parent=1 // pred_region
      %2353 = dma.done [#allocation3], 256
    $region53: #{clofnet_forward.10} parent=1 // pred_fallthru
      _
    // Predicated region
    $region54: #{clofnet_forward.10} parent=1 // pred_check
      _
    $region55: #{clofnet_forward.10} parent=1 // pred_check_branch
      %2355 = sbr.rel (0) target = $region57
    $region56: #{clofnet_forward.10} parent=1 // pred_region
      _
    $region57: #{clofnet_forward.10} parent=1 // pred_fallthru
      _
    %2356 = vsyncpa [#allocation3], 1

</llo_original>
